<compile_context>
chip_gen: v6e
topology: v6e:2x2x1
jax: 0.10.0
libtpu: 0.0.40
codegen_flags: <defaults>
</compile_context>

<pallas_src>
import math
import functools

import jax
import jax.numpy as jnp
from jax import lax
from jax.experimental import pallas as pl
from jax.experimental.pallas import tpu as pltpu


LANE = 128          # lane tile
BATCH_ALIGN = 16    # bf16 (16, 128) sublane packing


def _round_up(x, m):
    return (x + m - 1) // m * m


def _device_kind():
    try:
        return jax.devices()[0].device_kind.lower()
    except Exception:  # pragma: no cover
        return ""


# ----------------------------------------------------------------------------
# Gate math (gi/gh are f32, each gate owns a full Hp lane tile)
# ----------------------------------------------------------------------------

def _gates(gi, gh, h_prev, bhn, Hp):
    """PyTorch GRU gate math.  gi already contains b_ih (+ b_hh for r,z)."""
    r = jax.nn.sigmoid(gi[:, 0 * Hp:1 * Hp] + gh[:, 0 * Hp:1 * Hp])
    z = jax.nn.sigmoid(gi[:, 1 * Hp:2 * Hp] + gh[:, 1 * Hp:2 * Hp])
    n = jnp.tanh(gi[:, 2 * Hp:3 * Hp] + r * (gh[:, 2 * Hp:3 * Hp] + bhn))
    return (1.0 - z) * n + z * h_prev


def _pick_unroll(T, Bt):
    if Bt >= 128:
        return 2                 # avoid vreg spills at large M
    return True if T <= 32 else 4


# ----------------------------------------------------------------------------
# Pallas kernels
# ----------------------------------------------------------------------------

def _bigru_layer_kernel(x_ref,
                        wih_f_ref, wih_b_ref, whh_ref,
                        bgi_f_ref, bgi_b_ref, bhn_f_ref, bhn_b_ref,
                        out_ref,
                        gi_f_ref, gi_b_ref):
    """Fused bidirectional GRU layer: x (T,Bt,Din) -> out (T,Bt,2*Hp).

    whh_ref is either (2*Hp, 6*Hp) block-diagonal (fused fwd+bwd matmul, used
    on 256-deep MXUs) or (2, Hp, 3*Hp) stacked (separate matmuls).
    """
    T, Bt, Din = x_ref.shape
    Hp = bhn_f_ref.shape[1]
    fused = (len(whh_ref.shape) == 2)

    # -- hoisted input projection: one big MXU matmul per direction ----------
    x2 = x_ref[...].reshape(T * Bt, Din)                     # bf16
    gi_f = jnp.dot(x2, wih_f_ref[...], preferred_element_type=jnp.float32)
    gi_b = jnp.dot(x2, wih_b_ref[...], preferred_element_type=jnp.float32)
    gi_f_ref[...] = (gi_f + bgi_f_ref[...]).reshape(T, Bt, 3 * Hp).astype(gi_f_ref.dtype)
    gi_b_ref[...] = (gi_b + bgi_b_ref[...]).reshape(T, Bt, 3 * Hp).astype(gi_b_ref.dtype)

    # n-gate hidden bias: broadcast ONCE outside the loop (no per-iter bcast)
    bhn_f = jnp.broadcast_to(bhn_f_ref[...], (Bt, Hp))
    bhn_b = jnp.broadcast_to(bhn_b_ref[...], (Bt, Hp))

    unroll = _pick_unroll(T, Bt)

    if fused:
        whh_fb = whh_ref[...]                                # (2Hp, 6Hp) bf16

        def step(t, h_cat):
            tb = T - 1 - t
            gh = jnp.dot(h_cat.astype(whh_fb.dtype), whh_fb,
                         preferred_element_type=jnp.float32)   # (Bt, 6Hp)
            h_f = _gates(gi_f_ref[t].astype(jnp.float32), gh[:, :3 * Hp],
                         h_cat[:, :Hp], bhn_f, Hp)
            h_b = _gates(gi_b_ref[tb].astype(jnp.float32), gh[:, 3 * Hp:],
                         h_cat[:, Hp:], bhn_b, Hp)
            out_ref[t, :, 0:Hp] = h_f.astype(out_ref.dtype)
            out_ref[tb, :, Hp:2 * Hp] = h_b.astype(out_ref.dtype)
            return jnp.concatenate([h_f, h_b], axis=-1)

        lax.fori_loop(0, T, step, jnp.zeros((Bt, 2 * Hp), jnp.float32),
                      unroll=unroll)
    else:
        whh_f = whh_ref[0]                                   # (Hp, 3Hp) bf16
        whh_b = whh_ref[1]

        def step(t, carry):
            h_f_prev, h_b_prev = carry
            tb = T - 1 - t
            gh_f = jnp.dot(h_f_prev.astype(whh_f.dtype), whh_f,
                           preferred_element_type=jnp.float32)
            gh_b = jnp.dot(h_b_prev.astype(whh_b.dtype), whh_b,
                           preferred_element_type=jnp.float32)
            h_f = _gates(gi_f_ref[t].astype(jnp.float32), gh_f,
                         h_f_prev, bhn_f, Hp)
            h_b = _gates(gi_b_ref[tb].astype(jnp.float32), gh_b,
                         h_b_prev, bhn_b, Hp)
            out_ref[t, :, 0:Hp] = h_f.astype(out_ref.dtype)
            out_ref[tb, :, Hp:2 * Hp] = h_b.astype(out_ref.dtype)
            return (h_f, h_b)

        h0 = jnp.zeros((Bt, Hp), jnp.float32)
        lax.fori_loop(0, T, step, (h0, h0), unroll=unroll)


def _bigru_last_head_kernel(x_ref,
                            wih_f_ref, wih_b_ref, whh_ref,
                            bgi_f_ref, bgi_b_ref, bhn_f_ref, bhn_b_ref,
                            wfc_f_ref, wfc_b_ref, bfc_ref,
                            y_ref,
                            gi_f_ref):
    """Last BiGRU layer fused with the Linear head.

    The head consumes only out[:, -1, :] = [h_fwd(T-1), h_bwd after its FIRST
    step (only x[T-1] processed, from h0 = 0)], so the backward direction is
    a single GRU step (gh == 0) and no (T,B,2H) output goes to HBM.
    whh_ref is stacked (2, Hp, 3*Hp); only the fwd slab is matmul'd.
    """
    T, Bt, Din = x_ref.shape
    Hp = bhn_f_ref.shape[1]

    # forward-direction input projection for all timesteps (one matmul)
    x2 = x_ref[...].reshape(T * Bt, Din)
    gi_f = jnp.dot(x2, wih_f_ref[...], preferred_element_type=jnp.float32)
    gi_f_ref[...] = (gi_f + bgi_f_ref[...]).reshape(T, Bt, 3 * Hp).astype(gi_f_ref.dtype)

    bhn_f = jnp.broadcast_to(bhn_f_ref[...], (Bt, Hp))
    bhn_b = jnp.broadcast_to(bhn_b_ref[...], (Bt, Hp))
    whh_f = whh_ref[0]

    def step(t, h_prev):
        gh = jnp.dot(h_prev.astype(whh_f.dtype), whh_f,
                     preferred_element_type=jnp.float32)
        return _gates(gi_f_ref[t].astype(jnp.float32), gh, h_prev, bhn_f, Hp)

    h_f = lax.fori_loop(0, T, step, jnp.zeros((Bt, Hp), jnp.float32),
                        unroll=_pick_unroll(T, Bt))

    # backward direction: one step from h0 = 0 on x[T-1]  (gh is exactly 0)
    gi_b_last = (jnp.dot(x_ref[T - 1], wih_b_ref[...],
                         preferred_element_type=jnp.float32) + bgi_b_ref[...])
    h_b = _gates(gi_b_last, jnp.zeros((Bt, 3 * Hp), jnp.float32),
                 jnp.zeros((Bt, Hp), jnp.float32), bhn_b, Hp)

    # fused fc head: y = h_f @ Wfc_f + h_b @ Wfc_b + b_fc
    y = (jnp.dot(h_f.astype(wfc_f_ref.dtype), wfc_f_ref[...],
                 preferred_element_type=jnp.float32)
         + jnp.dot(h_b.astype(wfc_b_ref.dtype), wfc_b_ref[...],
                   preferred_element_type=jnp.float32)
         + bfc_ref[...])
    y_ref[...] = y.astype(y_ref.dtype)


# ----------------------------------------------------------------------------
# pallas_call wrappers
# ----------------------------------------------------------------------------

def _full_spec(shape):
    """Grid-invariant operand: full array, same block for every grid step."""
    return pl.BlockSpec(shape, lambda b: (0,) * len(shape))


def bigru_layer(x, lp, *, batch_tile, vmem_limit):
    """x: (T, Bp, Din) bf16 -> (T, Bp, 2*Hp) bf16 (fused fwd+bwd)."""
    T, Bp, Din = x.shape
    Hp = lp["bhn_f"].shape[1]
    nb = Bp // batch_tile
    return pl.pallas_call(
        _bigru_layer_kernel,
        out_shape=jax.ShapeDtypeStruct((T, Bp, 2 * Hp), x.dtype),
        grid=(nb,),
        in_specs=[
            pl.BlockSpec((T, batch_tile, Din), lambda b: (0, b, 0)),
            _full_spec(lp["wih_f"].shape), _full_spec(lp["wih_b"].shape),
            _full_spec(lp["whh"].shape),
            _full_spec(lp["bgi_f"].shape), _full_spec(lp["bgi_b"].shape),
            _full_spec(lp["bhn_f"].shape), _full_spec(lp["bhn_b"].shape),
        ],
        out_specs=pl.BlockSpec((T, batch_tile, 2 * Hp), lambda b: (0, b, 0)),
        scratch_shapes=[
            pltpu.VMEM((T, batch_tile, 3 * Hp), jnp.bfloat16),   # gi fwd (bf16)
            pltpu.VMEM((T, batch_tile, 3 * Hp), jnp.bfloat16),   # gi bwd (bf16)
        ],
        compiler_params=pltpu.CompilerParams(
            dimension_semantics=("parallel",),
            vmem_limit_bytes=vmem_limit),
    )(x, lp["wih_f"], lp["wih_b"], lp["whh"],
      lp["bgi_f"], lp["bgi_b"], lp["bhn_f"], lp["bhn_b"])


def bigru_last_layer_head(x, lp, wfc_f, wfc_b, bfc, *, batch_tile, vmem_limit):
    """Last layer + fc head: x (T, Bp, Din) bf16 -> (Bp, Op) f32."""
    T, Bp, Din = x.shape
    Hp = lp["bhn_f"].shape[1]
    Op = wfc_f.shape[1]
    nb = Bp // batch_tile
    return pl.pallas_call(
        _bigru_last_head_kernel,
        out_shape=jax.ShapeDtypeStruct((Bp, Op), jnp.float32),
        grid=(nb,),
        in_specs=[
            pl.BlockSpec((T, batch_tile, Din), lambda b: (0, b, 0)),
            _full_spec(lp["wih_f"].shape), _full_spec(lp["wih_b"].shape),
            _full_spec(lp["whh"].shape),
            _full_spec(lp["bgi_f"].shape), _full_spec(lp["bgi_b"].shape),
            _full_spec(lp["bhn_f"].shape), _full_spec(lp["bhn_b"].shape),
            _full_spec(wfc_f.shape), _full_spec(wfc_b.shape),
            _full_spec(bfc.shape),
        ],
        out_specs=pl.BlockSpec((batch_tile, Op), lambda b: (b, 0)),
        scratch_shapes=[
            pltpu.VMEM((T, batch_tile, 3 * Hp), jnp.bfloat16),   # gi fwd (bf16)
        ],
        compiler_params=pltpu.CompilerParams(
            dimension_semantics=("parallel",),
            vmem_limit_bytes=vmem_limit),
    )(x, lp["wih_f"], lp["wih_b"], lp["whh"],
      lp["bgi_f"], lp["bgi_b"], lp["bhn_f"], lp["bhn_b"],
      wfc_f, wfc_b, bfc)


def bigru_forward(x, prepared, cfg):
    """x: (B, T, input_dim) f32 -> (B, output_dim) f32."""
    B, T, D = x.shape
    Bp, bt, Dp0 = cfg["Bp"], cfg["batch_tile"], cfg["Dp0"]

    x_t = jnp.transpose(x, (1, 0, 2))                     # time-major (T,B,D)
    # pad batch rows AND input lanes (lane-dense layer-0 block, K=128 matmul)
    x_t = jnp.pad(x_t, ((0, 0), (0, Bp - B), (0, Dp0 - D))).astype(jnp.bfloat16)

    layer_in = x_t
    layers = prepared["layers"]
    for lp in layers[:-1]:
        layer_in = bigru_layer(layer_in, lp, batch_tile=bt,
                               vmem_limit=cfg["vmem_limit"])
    y = bigru_last_layer_head(layer_in, layers[-1],
                              prepared["wfc_f"], prepared["wfc_b"],
                              prepared["bfc"], batch_tile=bt,
                              vmem_limit=cfg["vmem_limit"])
    return y[:B, :cfg["output_dim"]]


# ----------------------------------------------------------------------------
# Tiling plan: VMEM-budget-derived batch_tile, MXU-M target, explicit limit
# ----------------------------------------------------------------------------

def _plan_tiling(B, T, Hp, Dp0, Op, kind):
    dmax = max(Dp0, 2 * Hp)
    # dynamic bytes per (t, batch-row) inside the intermediate-layer kernel
    per_tb = (2 * 3 * Hp * 2        # bf16 gi fwd + bwd scratch
              + 2 * dmax * 2        # double-buffered bf16 x block
              + 2 * 2 * Hp * 2)     # double-buffered bf16 out block
    # grid-invariant weights/biases (assume double-buffered) + slack
    fixed = (2 * 2 * (dmax * 3 * Hp + 2 * Hp * 3 * Hp) * 2
             + 2 * 2 * Hp * Op * 2 + (2 << 20))

    is_v7 = "v7" in kind
    new_gen = ("v6" in kind) or is_v7
    vmem_limit = (48 << 20) if is_v7 else (96 << 20)   # 64 MiB vs 128 MiB phys
    budget = vmem_limit - fixed
    target_m = 256 if new_gen else 128                 # MXU row fill

    b_cap = _round_up(max(B, BATCH_ALIGN), BATCH_ALIGN)
    bt = BATCH_ALIGN
    while (bt * 2 <= target_m and bt * 2 <= b_cap
           and T * (bt * 2) * per_tb <= budget):
        bt *= 2
    # v7x: make sure the 'parallel' batch axis has >= 2 tiles for 2 TensorCores
    if is_v7 and _round_up(max(B, BATCH_ALIGN), bt) // bt < 2 and bt >= 2 * BATCH_ALIGN:
        bt //= 2
    Bp = _round_up(max(B, BATCH_ALIGN), bt)
    return bt, Bp, vmem_limit


# ----------------------------------------------------------------------------
# Parameter preparation: (16,128)-friendly gate-aligned layout, bf16 weights,
# folded biases, optional fwd/bwd block-diagonal Whh fusion (256-deep MXUs)
# ----------------------------------------------------------------------------

def _pad_gate_cols(w, H, Hp):
    """(R, 3H) -> (R, 3*Hp): each gate block at a 128-lane-aligned offset."""
    R = w.shape[0]
    out = jnp.zeros((R, 3 * Hp), w.dtype)
    for g in range(3):
        out = out.at[:, g * Hp:g * Hp + H].set(w[:, g * H:(g + 1) * H])
    return out


def _pad_rows_bidir(w, H, Hp):
    """(2H, C) -> (2*Hp, C): fwd rows at [0:H], bwd rows at [Hp:Hp+H]."""
    C = w.shape[1]
    out = jnp.zeros((2 * Hp, C), w.dtype)
    out = out.at[:H, :].set(w[:H, :])
    out = out.at[Hp:Hp + H, :].set(w[H:, :])
    return out


def prepare_params(params, hidden_dim, output_dim, batch, seq_len,
                   compute_dtype=jnp.bfloat16):
    H = hidden_dim
    num_layers = len(params["layers"])
    input_dim = params["layers"][0]["wih_f"].shape[0]

    Hp = _round_up(max(H, LANE), LANE)
    Op = _round_up(max(output_dim, LANE), LANE)
    Dp0 = _round_up(max(input_dim, LANE), LANE)

    kind = _device_kind()
    new_gen = ("v6" in kind) or ("v7" in kind)
    # Fuse fwd+bwd recurrent matmul into one K=2*Hp=256 matmul only where the
    # MXU is 256 deep AND 2*Hp fills it exactly (v6e/v7x, Hp == 128).
    fuse_dirs = new_gen and (Hp == LANE)

    batch_tile, Bp, vmem_limit = _plan_tiling(batch, seq_len, Hp, Dp0, Op, kind)

    layers = []
    for li, lp in enumerate(params["layers"]):
        d_in = lp["wih_f"].shape[0]
        plp = {}
        whh_padded = {}
        for tag in ("f", "b"):
            wih = lp[f"wih_{tag}"]            # (d_in, 3H)
            whh = lp[f"whh_{tag}"]            # (H, 3H)
            bih = lp[f"bih_{tag}"]            # (1, 3H)
            bhh = lp[f"bhh_{tag}"]            # (1, 3H)

            wih_p = _pad_gate_cols(wih, H, Hp)
            whh_p = _pad_gate_cols(whh, H, Hp)
            bih_p = _pad_gate_cols(bih, H, Hp)
            bhh_p = _pad_gate_cols(bhh, H, Hp)

            if li == 0:
                # pad the true-input rows up to 128 lanes (x is lane-padded)
                wih_rows = jnp.zeros((Dp0, 3 * Hp), wih.dtype).at[:d_in].set(wih_p)
            else:
                # rows index the previous layer's padded (fwd ++ bwd) output
                wih_rows = _pad_rows_bidir(wih_p, H, Hp)

            whh_rows = jnp.zeros((Hp, 3 * Hp), whh.dtype).at[:H].set(whh_p)

            # fold b_ih fully and the r/z parts of b_hh into the precomputed
            # input projection; keep the n-gate hidden bias for the loop.
            bgi = bih_p.at[:, :2 * Hp].add(bhh_p[:, :2 * Hp])
            bhn = bhh_p[:, 2 * Hp:]

            plp[f"wih_{tag}"] = wih_rows.astype(compute_dtype)
            plp[f"bgi_{tag}"] = bgi.astype(jnp.float32)
            plp[f"bhn_{tag}"] = bhn.astype(jnp.float32)
            whh_padded[tag] = whh_rows

        is_last = (li == num_layers - 1)
        if fuse_dirs and not is_last:
            # block-diag(Whh_f, Whh_b): (2Hp, 6Hp), one matmul per step
            whh_fb = jnp.zeros((2 * Hp, 6 * Hp), jnp.float32)
            whh_fb = whh_fb.at[:Hp, :3 * Hp].set(whh_padded["f"])
            whh_fb = whh_fb.at[Hp:, 3 * Hp:].set(whh_padded["b"])
            plp["whh"] = whh_fb.astype(compute_dtype)
        else:
            plp["whh"] = jnp.stack([whh_padded["f"], whh_padded["b"]],
                                   axis=0).astype(compute_dtype)
        layers.append(plp)

    w_fc, b_fc = params["w_fc"], params["b_fc"]          # (2H, O), (1, O)
    wfc_f = jnp.zeros((Hp, Op), jnp.float32).at[:H, :output_dim].set(w_fc[:H])
    wfc_b = jnp.zeros((Hp, Op), jnp.float32).at[:H, :output_dim].set(w_fc[H:])
    bfc = jnp.zeros((1, Op), jnp.float32).at[:, :output_dim].set(b_fc)

    prepared = {
        "layers": layers,
        "wfc_f": wfc_f.astype(compute_dtype),
        "wfc_b": wfc_b.astype(compute_dtype),
        "bfc": bfc,
    }
    cfg = {"Bp": Bp, "batch_tile": batch_tile, "Dp0": Dp0,
           "output_dim": output_dim, "vmem_limit": vmem_limit}
    return prepared, cfg


# ----------------------------------------------------------------------------
# Pure-JAX f32 reference (PyTorch GRU semantics) for correctness check
# ----------------------------------------------------------------------------

def _gru_dir_ref(x_tbd, w_ih, w_hh, b_ih, b_hh):
    B = x_tbd.shape[1]
    H = w_hh.shape[0]

    def step(h, x_t):
        gi = x_t @ w_ih + b_ih
        gh = h @ w_hh + b_hh
        r = jax.nn.sigmoid(gi[:, :H] + gh[:, :H])
        z = jax.nn.sigmoid(gi[:, H:2 * H] + gh[:, H:2 * H])
        n = jnp.tanh(gi[:, 2 * H:] + r * gh[:, 2 * H:])
        h_new = (1.0 - z) * n + z * h
        return h_new, h_new

    h0 = jnp.zeros((B, H), jnp.float32)
    _, ys = lax.scan(step, h0, x_tbd)
    return ys


def bigru_forward_ref(x, params):
    x_t = jnp.transpose(x, (1, 0, 2))
    layer_in = x_t
    for lp in params["layers"]:
        fwd = _gru_dir_ref(layer_in, lp["wih_f"], lp["whh_f"],
                           lp["bih_f"], lp["bhh_f"])
        bwd = jnp.flip(
            _gru_dir_ref(jnp.flip(layer_in, axis=0), lp["wih_b"],
                         lp["whh_b"], lp["bih_b"], lp["bhh_b"]),
            axis=0)
        layer_in = jnp.concatenate([fwd, bwd], axis=-1)
    return layer_in[-1] @ params["w_fc"] + params["b_fc"]


# ----------------------------------------------------------------------------
# Deterministic parameter init (PyTorch-style uniform(-1/sqrt(H), 1/sqrt(H)))
# ----------------------------------------------------------------------------

def init_params(key, input_dim, hidden_dim, num_layers, output_dim):
    k = 1.0 / math.sqrt(hidden_dim)
    layers = []
    for layer in range(num_layers):
        d_in = input_dim if layer == 0 else 2 * hidden_dim
        lp = {}
        for tag in ("f", "b"):
            key, k1, k2, k3, k4 = jax.random.split(key, 5)
            lp[f"wih_{tag}"] = jax.random.uniform(
                k1, (d_in, 3 * hidden_dim), jnp.float32, -k, k)
            lp[f"whh_{tag}"] = jax.random.uniform(
                k2, (hidden_dim, 3 * hidden_dim), jnp.float32, -k, k)
            lp[f"bih_{tag}"] = jax.random.uniform(
                k3, (1, 3 * hidden_dim), jnp.float32, -k, k)
            lp[f"bhh_{tag}"] = jax.random.uniform(
                k4, (1, 3 * hidden_dim), jnp.float32, -k, k)
        layers.append(lp)

    key, k1, k2 = jax.random.split(key, 3)
    kfc = 1.0 / math.sqrt(2 * hidden_dim)
    w_fc = jax.random.uniform(k1, (2 * hidden_dim, output_dim),
                              jnp.float32, -kfc, kfc)
    b_fc = jax.random.uniform(k2, (1, output_dim), jnp.float32, -kfc, kfc)
    return {"layers": layers, "w_fc": w_fc, "b_fc": b_fc}


# ----------------------------------------------------------------------------
# Main
# ----------------------------------------------------------------------------

if __name__ == "__main__":
    batch = 2
    seq = 8
    input_dim = 4
    hidden_dim = 64
    num_layers = 2
    output_dim = 1

    root = jax.random.PRNGKey(0)
    kx, kp = jax.random.split(root)
    x = jax.random.normal(kx, (batch, seq, input_dim), jnp.float32)
    params = init_params(kp, input_dim, hidden_dim, num_layers, output_dim)
    prepared, cfg = prepare_params(params, hidden_dim, output_dim,
                                   batch, seq)

    fwd = jax.jit(functools.partial(bigru_forward, cfg=cfg))
    y = jax.block_until_ready(fwd(x, prepared))

    y_ref = jax.block_until_ready(bigru_forward_ref(x, params))

    assert y.shape == (batch, output_dim), y.shape
    # bf16 MXU matmuls + bf16 gi scratch (f32 gate sums / state) -> loose tol.
    err = jnp.max(jnp.abs(y - y_ref))
    assert jnp.allclose(y, y_ref, atol=5e-2, rtol=5e-2), (y, y_ref, err)

    print("KERNEL_OK")
</pallas_src>

<mosaic_0001>
module attributes {stable_mosaic.version = 11 : i64} {
  func.func @_bigru_layer_kernel(%arg0: i32, %arg1: memref<8x16x128xbf16, #tpu.memory_space<vmem>>, %arg2: memref<128x384xbf16, #tpu.memory_space<vmem>>, %arg3: memref<128x384xbf16, #tpu.memory_space<vmem>>, %arg4: memref<2x128x384xbf16, #tpu.memory_space<vmem>>, %arg5: memref<1x384xf32, #tpu.memory_space<vmem>>, %arg6: memref<1x384xf32, #tpu.memory_space<vmem>>, %arg7: memref<1x128xf32, #tpu.memory_space<vmem>>, %arg8: memref<1x128xf32, #tpu.memory_space<vmem>>, %arg9: memref<8x16x256xbf16, #tpu.memory_space<vmem>>, %arg10: memref<8x16x384xbf16, #tpu.memory_space<vmem>>, %arg11: memref<8x16x384xbf16, #tpu.memory_space<vmem>>) attributes {dimension_semantics = [#tpu.dimension_semantics<parallel>], iteration_bounds = array<i64: 1>, scalar_prefetch = 0 : i64, scratch_operands = 2 : i64, tpu.core_type = #tpu.core_type<tc>, window_params = [{transform_indices = @transform_0, window_bounds = array<i64: 8, 16, 128>}, {pipeline_mode = #tpu.pipeline_mode<synchronous>, transform_indices = @transform_1, window_bounds = array<i64: 128, 384>}, {pipeline_mode = #tpu.pipeline_mode<synchronous>, transform_indices = @transform_2, window_bounds = array<i64: 128, 384>}, {pipeline_mode = #tpu.pipeline_mode<synchronous>, transform_indices = @transform_3, window_bounds = array<i64: 2, 128, 384>}, {pipeline_mode = #tpu.pipeline_mode<synchronous>, transform_indices = @transform_4, window_bounds = array<i64: 1, 384>}, {pipeline_mode = #tpu.pipeline_mode<synchronous>, transform_indices = @transform_5, window_bounds = array<i64: 1, 384>}, {pipeline_mode = #tpu.pipeline_mode<synchronous>, transform_indices = @transform_6, window_bounds = array<i64: 1, 128>}, {pipeline_mode = #tpu.pipeline_mode<synchronous>, transform_indices = @transform_7, window_bounds = array<i64: 1, 128>}, {transform_indices = @transform_8, window_bounds = array<i64: 8, 16, 256>}]} {
    %c0 = arith.constant 0 : index
    %c0_0 = arith.constant 0 : index
    %c0_1 = arith.constant 0 : index
    %0 = vector.load %arg1[%c0, %c0_0, %c0_1] : memref<8x16x128xbf16, #tpu.memory_space<vmem>>, vector<8x16x128xbf16>
    %1 = vector.shape_cast %0 : vector<8x16x128xbf16> to vector<128x128xbf16>
    %c0_2 = arith.constant 0 : index
    %c0_3 = arith.constant 0 : index
    %2 = vector.load %arg2[%c0_2, %c0_3] : memref<128x384xbf16, #tpu.memory_space<vmem>>, vector<128x384xbf16>
    %cst = arith.constant dense<0.000000e+00> : vector<128x384xf32>
    %3 = tpu.matmul %1, %2, %cst {dimension_numbers = #tpu.dot_dimension_numbers<[1], [0], [0], [1], [0, 0, 1, 1], [], []>} : vector<128x128xbf16>, vector<128x384xbf16>, vector<128x384xf32> -> vector<128x384xf32>
    %c0_4 = arith.constant 0 : index
    %c0_5 = arith.constant 0 : index
    %4 = vector.load %arg3[%c0_4, %c0_5] : memref<128x384xbf16, #tpu.memory_space<vmem>>, vector<128x384xbf16>
    %cst_6 = arith.constant dense<0.000000e+00> : vector<128x384xf32>
    %5 = tpu.matmul %1, %4, %cst_6 {dimension_numbers = #tpu.dot_dimension_numbers<[1], [0], [0], [1], [0, 0, 1, 1], [], []>} : vector<128x128xbf16>, vector<128x384xbf16>, vector<128x384xf32> -> vector<128x384xf32>
    %c0_7 = arith.constant 0 : index
    %c0_8 = arith.constant 0 : index
    %6 = vector.load %arg5[%c0_7, %c0_8] : memref<1x384xf32, #tpu.memory_space<vmem>>, vector<1x384xf32>
    %7 = vector.broadcast %6 : vector<1x384xf32> to vector<128x384xf32>
    %8 = arith.addf %3, %7 : vector<128x384xf32>
    %9 = vector.shape_cast %8 : vector<128x384xf32> to vector<8x16x384xf32>
    %10 = arith.truncf %9 : vector<8x16x384xf32> to vector<8x16x384xbf16>
    %c0_9 = arith.constant 0 : index
    %c0_10 = arith.constant 0 : index
    %c0_11 = arith.constant 0 : index
    %11 = vector.load %arg10[%c0_9, %c0_10, %c0_11] : memref<8x16x384xbf16, #tpu.memory_space<vmem>>, vector<8x16x384xbf16>
    tpu.vector_store %arg10[%c0_9, %c0_10, %c0_11], %10 {strides = array<i32>} : memref<8x16x384xbf16, #tpu.memory_space<vmem>>, vector<8x16x384xbf16>,
    %c0_12 = arith.constant 0 : index
    %c0_13 = arith.constant 0 : index
    %12 = vector.load %arg6[%c0_12, %c0_13] : memref<1x384xf32, #tpu.memory_space<vmem>>, vector<1x384xf32>
    %13 = vector.broadcast %12 : vector<1x384xf32> to vector<128x384xf32>
    %14 = arith.addf %5, %13 : vector<128x384xf32>
    %15 = vector.shape_cast %14 : vector<128x384xf32> to vector<8x16x384xf32>
    %16 = arith.truncf %15 : vector<8x16x384xf32> to vector<8x16x384xbf16>
    %c0_14 = arith.constant 0 : index
    %c0_15 = arith.constant 0 : index
    %c0_16 = arith.constant 0 : index
    %17 = vector.load %arg11[%c0_14, %c0_15, %c0_16] : memref<8x16x384xbf16, #tpu.memory_space<vmem>>, vector<8x16x384xbf16>
    tpu.vector_store %arg11[%c0_14, %c0_15, %c0_16], %16 {strides = array<i32>} : memref<8x16x384xbf16, #tpu.memory_space<vmem>>, vector<8x16x384xbf16>,
    %c0_17 = arith.constant 0 : index
    %c0_18 = arith.constant 0 : index
    %18 = vector.load %arg7[%c0_17, %c0_18] : memref<1x128xf32, #tpu.memory_space<vmem>>, vector<1x128xf32>
    %19 = vector.shape_cast %18 : vector<1x128xf32> to vector<1x128xf32>
    %20 = vector.broadcast %19 : vector<1x128xf32> to vector<16x128xf32>
    %c0_19 = arith.constant 0 : index
    %c0_20 = arith.constant 0 : index
    %21 = vector.load %arg8[%c0_19, %c0_20] : memref<1x128xf32, #tpu.memory_space<vmem>>, vector<1x128xf32>
    %22 = vector.shape_cast %21 : vector<1x128xf32> to vector<1x128xf32>
    %23 = vector.broadcast %22 : vector<1x128xf32> to vector<16x128xf32>
    %c0_21 = arith.constant 0 : index
    %c0_22 = arith.constant 0 : index
    %c0_23 = arith.constant 0 : index
    %24 = vector.load %arg4[%c0_21, %c0_22, %c0_23] : memref<2x128x384xbf16, #tpu.memory_space<vmem>>, vector<1x128x384xbf16>
    %25 = vector.shape_cast %24 : vector<1x128x384xbf16> to vector<128x384xbf16>
    %c1 = arith.constant 1 : index
    %c0_24 = arith.constant 0 : index
    %c0_25 = arith.constant 0 : index
    %26 = vector.load %arg4[%c1, %c0_24, %c0_25] : memref<2x128x384xbf16, #tpu.memory_space<vmem>>, vector<1x128x384xbf16>
    %27 = vector.shape_cast %26 : vector<1x128x384xbf16> to vector<128x384xbf16>
    %cst_26 = arith.constant 0.000000e+00 : f32
    %28 = vector.broadcast %cst_26 : f32 to vector<16x128xf32>
    %c0_i32 = arith.constant 0 : i32
    %c7_i32 = arith.constant 7 : i32
    %29 = arith.subi %c7_i32, %c0_i32 : i32
    %30 = arith.truncf %28 : vector<16x128xf32> to vector<16x128xbf16>
    %cst_27 = arith.constant dense<0.000000e+00> : vector<16x384xf32>
    %31 = tpu.matmul %30, %25, %cst_27 {dimension_numbers = #tpu.dot_dimension_numbers<[1], [0], [0], [1], [0, 0, 1, 1], [], []>} : vector<16x128xbf16>, vector<128x384xbf16>, vector<16x384xf32> -> vector<16x384xf32>
    %32 = arith.truncf %28 : vector<16x128xf32> to vector<16x128xbf16>
    %cst_28 = arith.constant dense<0.000000e+00> : vector<16x384xf32>
    %33 = tpu.matmul %32, %27, %cst_28 {dimension_numbers = #tpu.dot_dimension_numbers<[1], [0], [0], [1], [0, 0, 1, 1], [], []>} : vector<16x128xbf16>, vector<128x384xbf16>, vector<16x384xf32> -> vector<16x384xf32>
    %34 = arith.index_cast %c0_i32 : i32 to index
    %c0_29 = arith.constant 0 : index
    %c0_30 = arith.constant 0 : index
    %35 = vector.load %arg10[%34, %c0_29, %c0_30] : memref<8x16x384xbf16, #tpu.memory_space<vmem>>, vector<1x16x384xbf16>
    %36 = vector.shape_cast %35 : vector<1x16x384xbf16> to vector<16x384xbf16>
    %37 = arith.extf %36 : vector<16x384xbf16> to vector<16x384xf32>
    %38 = vector.extract_strided_slice %37 {offsets = [0, 0], sizes = [16, 128], strides = [1, 1]} : vector<16x384xf32> to vector<16x128xf32>
    %39 = vector.extract_strided_slice %31 {offsets = [0, 0], sizes = [16, 128], strides = [1, 1]} : vector<16x384xf32> to vector<16x128xf32>
    %40 = arith.addf %38, %39 : vector<16x128xf32>
    %41 = arith.negf %40 : vector<16x128xf32>
    %42 = math.exp %41 : vector<16x128xf32>
    %cst_31 = arith.constant 1.000000e+00 : f32
    %43 = vector.broadcast %cst_31 : f32 to vector<16x128xf32>
    %44 = arith.addf %43, %42 : vector<16x128xf32>
    %45 = arith.divf %43, %44 : vector<16x128xf32>
    %46 = vector.extract_strided_slice %37 {offsets = [0, 128], sizes = [16, 128], strides = [1, 1]} : vector<16x384xf32> to vector<16x128xf32>
    %47 = vector.extract_strided_slice %31 {offsets = [0, 128], sizes = [16, 128], strides = [1, 1]} : vector<16x384xf32> to vector<16x128xf32>
    %48 = arith.addf %46, %47 : vector<16x128xf32>
    %49 = arith.negf %48 : vector<16x128xf32>
    %50 = math.exp %49 : vector<16x128xf32>
    %cst_32 = arith.constant 1.000000e+00 : f32
    %51 = vector.broadcast %cst_32 : f32 to vector<16x128xf32>
    %52 = arith.addf %51, %50 : vector<16x128xf32>
    %53 = arith.divf %51, %52 : vector<16x128xf32>
    %54 = vector.extract_strided_slice %37 {offsets = [0, 256], sizes = [16, 128], strides = [1, 1]} : vector<16x384xf32> to vector<16x128xf32>
    %55 = vector.extract_strided_slice %31 {offsets = [0, 256], sizes = [16, 128], strides = [1, 1]} : vector<16x384xf32> to vector<16x128xf32>
    %56 = arith.addf %55, %20 : vector<16x128xf32>
    %57 = arith.mulf %45, %56 : vector<16x128xf32>
    %58 = arith.addf %54, %57 : vector<16x128xf32>
    %59 = math.tanh %58 : vector<16x128xf32>
    %cst_33 = arith.constant 1.000000e+00 : f32
    %60 = vector.broadcast %cst_33 : f32 to vector<16x128xf32>
    %61 = arith.subf %60, %53 : vector<16x128xf32>
    %62 = arith.mulf %61, %59 : vector<16x128xf32>
    %63 = arith.mulf %53, %28 : vector<16x128xf32>
    %64 = arith.addf %62, %63 : vector<16x128xf32>
    %65 = arith.index_cast %29 : i32 to index
    %c0_34 = arith.constant 0 : index
    %c0_35 = arith.constant 0 : index
    %66 = vector.load %arg11[%65, %c0_34, %c0_35] : memref<8x16x384xbf16, #tpu.memory_space<vmem>>, vector<1x16x384xbf16>
    %67 = vector.shape_cast %66 : vector<1x16x384xbf16> to vector<16x384xbf16>
    %68 = arith.extf %67 : vector<16x384xbf16> to vector<16x384xf32>
    %69 = vector.extract_strided_slice %68 {offsets = [0, 0], sizes = [16, 128], strides = [1, 1]} : vector<16x384xf32> to vector<16x128xf32>
    %70 = vector.extract_strided_slice %33 {offsets = [0, 0], sizes = [16, 128], strides = [1, 1]} : vector<16x384xf32> to vector<16x128xf32>
    %71 = arith.addf %69, %70 : vector<16x128xf32>
    %72 = arith.negf %71 : vector<16x128xf32>
    %73 = math.exp %72 : vector<16x128xf32>
    %cst_36 = arith.constant 1.000000e+00 : f32
    %74 = vector.broadcast %cst_36 : f32 to vector<16x128xf32>
    %75 = arith.addf %74, %73 : vector<16x128xf32>
    %76 = arith.divf %74, %75 : vector<16x128xf32>
    %77 = vector.extract_strided_slice %68 {offsets = [0, 128], sizes = [16, 128], strides = [1, 1]} : vector<16x384xf32> to vector<16x128xf32>
    %78 = vector.extract_strided_slice %33 {offsets = [0, 128], sizes = [16, 128], strides = [1, 1]} : vector<16x384xf32> to vector<16x128xf32>
    %79 = arith.addf %77, %78 : vector<16x128xf32>
    %80 = arith.negf %79 : vector<16x128xf32>
    %81 = math.exp %80 : vector<16x128xf32>
    %cst_37 = arith.constant 1.000000e+00 : f32
    %82 = vector.broadcast %cst_37 : f32 to vector<16x128xf32>
    %83 = arith.addf %82, %81 : vector<16x128xf32>
    %84 = arith.divf %82, %83 : vector<16x128xf32>
    %85 = vector.extract_strided_slice %68 {offsets = [0, 256], sizes = [16, 128], strides = [1, 1]} : vector<16x384xf32> to vector<16x128xf32>
    %86 = vector.extract_strided_slice %33 {offsets = [0, 256], sizes = [16, 128], strides = [1, 1]} : vector<16x384xf32> to vector<16x128xf32>
    %87 = arith.addf %86, %23 : vector<16x128xf32>
    %88 = arith.mulf %76, %87 : vector<16x128xf32>
    %89 = arith.addf %85, %88 : vector<16x128xf32>
    %90 = math.tanh %89 : vector<16x128xf32>
    %cst_38 = arith.constant 1.000000e+00 : f32
    %91 = vector.broadcast %cst_38 : f32 to vector<16x128xf32>
    %92 = arith.subf %91, %84 : vector<16x128xf32>
    %93 = arith.mulf %92, %90 : vector<16x128xf32>
    %94 = arith.mulf %84, %28 : vector<16x128xf32>
    %95 = arith.addf %93, %94 : vector<16x128xf32>
    %96 = arith.truncf %64 : vector<16x128xf32> to vector<16x128xbf16>
    %97 = arith.index_cast %c0_i32 : i32 to index
    %c0_39 = arith.constant 0 : index
    %c0_40 = arith.constant 0 : index
    %98 = vector.load %arg9[%97, %c0_39, %c0_40] : memref<8x16x256xbf16, #tpu.memory_space<vmem>>, vector<1x16x128xbf16>
    %99 = vector.shape_cast %98 : vector<1x16x128xbf16> to vector<16x128xbf16>
    %100 = vector.shape_cast %96 : vector<16x128xbf16> to vector<1x16x128xbf16>
    tpu.vector_store %arg9[%97, %c0_39, %c0_40], %100 {strides = array<i32>} : memref<8x16x256xbf16, #tpu.memory_space<vmem>>, vector<1x16x128xbf16>,
    %101 = arith.truncf %95 : vector<16x128xf32> to vector<16x128xbf16>
    %102 = arith.index_cast %29 : i32 to index
    %c0_41 = arith.constant 0 : index
    %c128 = arith.constant 128 : index
    %103 = vector.load %arg9[%102, %c0_41, %c128] : memref<8x16x256xbf16, #tpu.memory_space<vmem>>, vector<1x16x128xbf16>
    %104 = vector.shape_cast %103 : vector<1x16x128xbf16> to vector<16x128xbf16>
    %105 = vector.shape_cast %101 : vector<16x128xbf16> to vector<1x16x128xbf16>
    tpu.vector_store %arg9[%102, %c0_41, %c128], %105 {strides = array<i32>} : memref<8x16x256xbf16, #tpu.memory_space<vmem>>, vector<1x16x128xbf16>,
    %c1_i32 = arith.constant 1 : i32
    %c7_i32_42 = arith.constant 7 : i32
    %106 = arith.subi %c7_i32_42, %c1_i32 : i32
    %107 = arith.truncf %64 : vector<16x128xf32> to vector<16x128xbf16>
    %cst_43 = arith.constant dense<0.000000e+00> : vector<16x384xf32>
    %108 = tpu.matmul %107, %25, %cst_43 {dimension_numbers = #tpu.dot_dimension_numbers<[1], [0], [0], [1], [0, 0, 1, 1], [], []>} : vector<16x128xbf16>, vector<128x384xbf16>, vector<16x384xf32> -> vector<16x384xf32>
    %109 = arith.truncf %95 : vector<16x128xf32> to vector<16x128xbf16>
    %cst_44 = arith.constant dense<0.000000e+00> : vector<16x384xf32>
    %110 = tpu.matmul %109, %27, %cst_44 {dimension_numbers = #tpu.dot_dimension_numbers<[1], [0], [0], [1], [0, 0, 1, 1], [], []>} : vector<16x128xbf16>, vector<128x384xbf16>, vector<16x384xf32> -> vector<16x384xf32>
    %111 = arith.index_cast %c1_i32 : i32 to index
    %c0_45 = arith.constant 0 : index
    %c0_46 = arith.constant 0 : index
    %112 = vector.load %arg10[%111, %c0_45, %c0_46] : memref<8x16x384xbf16, #tpu.memory_space<vmem>>, vector<1x16x384xbf16>
    %113 = vector.shape_cast %112 : vector<1x16x384xbf16> to vector<16x384xbf16>
    %114 = arith.extf %113 : vector<16x384xbf16> to vector<16x384xf32>
    %115 = vector.extract_strided_slice %114 {offsets = [0, 0], sizes = [16, 128], strides = [1, 1]} : vector<16x384xf32> to vector<16x128xf32>
    %116 = vector.extract_strided_slice %108 {offsets = [0, 0], sizes = [16, 128], strides = [1, 1]} : vector<16x384xf32> to vector<16x128xf32>
    %117 = arith.addf %115, %116 : vector<16x128xf32>
    %118 = arith.negf %117 : vector<16x128xf32>
    %119 = math.exp %118 : vector<16x128xf32>
    %cst_47 = arith.constant 1.000000e+00 : f32
    %120 = vector.broadcast %cst_47 : f32 to vector<16x128xf32>
    %121 = arith.addf %120, %119 : vector<16x128xf32>
    %122 = arith.divf %120, %121 : vector<16x128xf32>
    %123 = vector.extract_strided_slice %114 {offsets = [0, 128], sizes = [16, 128], strides = [1, 1]} : vector<16x384xf32> to vector<16x128xf32>
    %124 = vector.extract_strided_slice %108 {offsets = [0, 128], sizes = [16, 128], strides = [1, 1]} : vector<16x384xf32> to vector<16x128xf32>
    %125 = arith.addf %123, %124 : vector<16x128xf32>
    %126 = arith.negf %125 : vector<16x128xf32>
    %127 = math.exp %126 : vector<16x128xf32>
    %cst_48 = arith.constant 1.000000e+00 : f32
    %128 = vector.broadcast %cst_48 : f32 to vector<16x128xf32>
    %129 = arith.addf %128, %127 : vector<16x128xf32>
    %130 = arith.divf %128, %129 : vector<16x128xf32>
    %131 = vector.extract_strided_slice %114 {offsets = [0, 256], sizes = [16, 128], strides = [1, 1]} : vector<16x384xf32> to vector<16x128xf32>
    %132 = vector.extract_strided_slice %108 {offsets = [0, 256], sizes = [16, 128], strides = [1, 1]} : vector<16x384xf32> to vector<16x128xf32>
    %133 = arith.addf %132, %20 : vector<16x128xf32>
    %134 = arith.mulf %122, %133 : vector<16x128xf32>
    %135 = arith.addf %131, %134 : vector<16x128xf32>
    %136 = math.tanh %135 : vector<16x128xf32>
    %cst_49 = arith.constant 1.000000e+00 : f32
    %137 = vector.broadcast %cst_49 : f32 to vector<16x128xf32>
    %138 = arith.subf %137, %130 : vector<16x128xf32>
    %139 = arith.mulf %138, %136 : vector<16x128xf32>
    %140 = arith.mulf %130, %64 : vector<16x128xf32>
    %141 = arith.addf %139, %140 : vector<16x128xf32>
    %142 = arith.index_cast %106 : i32 to index
    %c0_50 = arith.constant 0 : index
    %c0_51 = arith.constant 0 : index
    %143 = vector.load %arg11[%142, %c0_50, %c0_51] : memref<8x16x384xbf16, #tpu.memory_space<vmem>>, vector<1x16x384xbf16>
    %144 = vector.shape_cast %143 : vector<1x16x384xbf16> to vector<16x384xbf16>
    %145 = arith.extf %144 : vector<16x384xbf16> to vector<16x384xf32>
    %146 = vector.extract_strided_slice %145 {offsets = [0, 0], sizes = [16, 128], strides = [1, 1]} : vector<16x384xf32> to vector<16x128xf32>
    %147 = vector.extract_strided_slice %110 {offsets = [0, 0], sizes = [16, 128], strides = [1, 1]} : vector<16x384xf32> to vector<16x128xf32>
    %148 = arith.addf %146, %147 : vector<16x128xf32>
    %149 = arith.negf %148 : vector<16x128xf32>
    %150 = math.exp %149 : vector<16x128xf32>
    %cst_52 = arith.constant 1.000000e+00 : f32
    %151 = vector.broadcast %cst_52 : f32 to vector<16x128xf32>
    %152 = arith.addf %151, %150 : vector<16x128xf32>
    %153 = arith.divf %151, %152 : vector<16x128xf32>
    %154 = vector.extract_strided_slice %145 {offsets = [0, 128], sizes = [16, 128], strides = [1, 1]} : vector<16x384xf32> to vector<16x128xf32>
    %155 = vector.extract_strided_slice %110 {offsets = [0, 128], sizes = [16, 128], strides = [1, 1]} : vector<16x384xf32> to vector<16x128xf32>
    %156 = arith.addf %154, %155 : vector<16x128xf32>
    %157 = arith.negf %156 : vector<16x128xf32>
    %158 = math.exp %157 : vector<16x128xf32>
    %cst_53 = arith.constant 1.000000e+00 : f32
    %159 = vector.broadcast %cst_53 : f32 to vector<16x128xf32>
    %160 = arith.addf %159, %158 : vector<16x128xf32>
    %161 = arith.divf %159, %160 : vector<16x128xf32>
    %162 = vector.extract_strided_slice %145 {offsets = [0, 256], sizes = [16, 128], strides = [1, 1]} : vector<16x384xf32> to vector<16x128xf32>
    %163 = vector.extract_strided_slice %110 {offsets = [0, 256], sizes = [16, 128], strides = [1, 1]} : vector<16x384xf32> to vector<16x128xf32>
    %164 = arith.addf %163, %23 : vector<16x128xf32>
    %165 = arith.mulf %153, %164 : vector<16x128xf32>
    %166 = arith.addf %162, %165 : vector<16x128xf32>
    %167 = math.tanh %166 : vector<16x128xf32>
    %cst_54 = arith.constant 1.000000e+00 : f32
    %168 = vector.broadcast %cst_54 : f32 to vector<16x128xf32>
    %169 = arith.subf %168, %161 : vector<16x128xf32>
    %170 = arith.mulf %169, %167 : vector<16x128xf32>
    %171 = arith.mulf %161, %95 : vector<16x128xf32>
    %172 = arith.addf %170, %171 : vector<16x128xf32>
    %173 = arith.truncf %141 : vector<16x128xf32> to vector<16x128xbf16>
    %174 = arith.index_cast %c1_i32 : i32 to index
    %c0_55 = arith.constant 0 : index
    %c0_56 = arith.constant 0 : index
    %175 = vector.load %arg9[%174, %c0_55, %c0_56] : memref<8x16x256xbf16, #tpu.memory_space<vmem>>, vector<1x16x128xbf16>
    %176 = vector.shape_cast %175 : vector<1x16x128xbf16> to vector<16x128xbf16>
    %177 = vector.shape_cast %173 : vector<16x128xbf16> to vector<1x16x128xbf16>
    tpu.vector_store %arg9[%174, %c0_55, %c0_56], %177 {strides = array<i32>} : memref<8x16x256xbf16, #tpu.memory_space<vmem>>, vector<1x16x128xbf16>,
    %178 = arith.truncf %172 : vector<16x128xf32> to vector<16x128xbf16>
    %179 = arith.index_cast %106 : i32 to index
    %c0_57 = arith.constant 0 : index
    %c128_58 = arith.constant 128 : index
    %180 = vector.load %arg9[%179, %c0_57, %c128_58] : memref<8x16x256xbf16, #tpu.memory_space<vmem>>, vector<1x16x128xbf16>
    %181 = vector.shape_cast %180 : vector<1x16x128xbf16> to vector<16x128xbf16>
    %182 = vector.shape_cast %178 : vector<16x128xbf16> to vector<1x16x128xbf16>
    tpu.vector_store %arg9[%179, %c0_57, %c128_58], %182 {strides = array<i32>} : memref<8x16x256xbf16, #tpu.memory_space<vmem>>, vector<1x16x128xbf16>,
    %c2_i32 = arith.constant 2 : i32
    %c7_i32_59 = arith.constant 7 : i32
    %183 = arith.subi %c7_i32_59, %c2_i32 : i32
    %184 = arith.truncf %141 : vector<16x128xf32> to vector<16x128xbf16>
    %cst_60 = arith.constant dense<0.000000e+00> : vector<16x384xf32>
    %185 = tpu.matmul %184, %25, %cst_60 {dimension_numbers = #tpu.dot_dimension_numbers<[1], [0], [0], [1], [0, 0, 1, 1], [], []>} : vector<16x128xbf16>, vector<128x384xbf16>, vector<16x384xf32> -> vector<16x384xf32>
    %186 = arith.truncf %172 : vector<16x128xf32> to vector<16x128xbf16>
    %cst_61 = arith.constant dense<0.000000e+00> : vector<16x384xf32>
    %187 = tpu.matmul %186, %27, %cst_61 {dimension_numbers = #tpu.dot_dimension_numbers<[1], [0], [0], [1], [0, 0, 1, 1], [], []>} : vector<16x128xbf16>, vector<128x384xbf16>, vector<16x384xf32> -> vector<16x384xf32>
    %188 = arith.index_cast %c2_i32 : i32 to index
    %c0_62 = arith.constant 0 : index
    %c0_63 = arith.constant 0 : index
    %189 = vector.load %arg10[%188, %c0_62, %c0_63] : memref<8x16x384xbf16, #tpu.memory_space<vmem>>, vector<1x16x384xbf16>
    %190 = vector.shape_cast %189 : vector<1x16x384xbf16> to vector<16x384xbf16>
    %191 = arith.extf %190 : vector<16x384xbf16> to vector<16x384xf32>
    %192 = vector.extract_strided_slice %191 {offsets = [0, 0], sizes = [16, 128], strides = [1, 1]} : vector<16x384xf32> to vector<16x128xf32>
    %193 = vector.extract_strided_slice %185 {offsets = [0, 0], sizes = [16, 128], strides = [1, 1]} : vector<16x384xf32> to vector<16x128xf32>
    %194 = arith.addf %192, %193 : vector<16x128xf32>
    %195 = arith.negf %194 : vector<16x128xf32>
    %196 = math.exp %195 : vector<16x128xf32>
    %cst_64 = arith.constant 1.000000e+00 : f32
    %197 = vector.broadcast %cst_64 : f32 to vector<16x128xf32>
    %198 = arith.addf %197, %196 : vector<16x128xf32>
    %199 = arith.divf %197, %198 : vector<16x128xf32>
    %200 = vector.extract_strided_slice %191 {offsets = [0, 128], sizes = [16, 128], strides = [1, 1]} : vector<16x384xf32> to vector<16x128xf32>
    %201 = vector.extract_strided_slice %185 {offsets = [0, 128], sizes = [16, 128], strides = [1, 1]} : vector<16x384xf32> to vector<16x128xf32>
    %202 = arith.addf %200, %201 : vector<16x128xf32>
    %203 = arith.negf %202 : vector<16x128xf32>
    %204 = math.exp %203 : vector<16x128xf32>
    %cst_65 = arith.constant 1.000000e+00 : f32
    %205 = vector.broadcast %cst_65 : f32 to vector<16x128xf32>
    %206 = arith.addf %205, %204 : vector<16x128xf32>
    %207 = arith.divf %205, %206 : vector<16x128xf32>
    %208 = vector.extract_strided_slice %191 {offsets = [0, 256], sizes = [16, 128], strides = [1, 1]} : vector<16x384xf32> to vector<16x128xf32>
    %209 = vector.extract_strided_slice %185 {offsets = [0, 256], sizes = [16, 128], strides = [1, 1]} : vector<16x384xf32> to vector<16x128xf32>
    %210 = arith.addf %209, %20 : vector<16x128xf32>
    %211 = arith.mulf %199, %210 : vector<16x128xf32>
    %212 = arith.addf %208, %211 : vector<16x128xf32>
    %213 = math.tanh %212 : vector<16x128xf32>
    %cst_66 = arith.constant 1.000000e+00 : f32
    %214 = vector.broadcast %cst_66 : f32 to vector<16x128xf32>
    %215 = arith.subf %214, %207 : vector<16x128xf32>
    %216 = arith.mulf %215, %213 : vector<16x128xf32>
    %217 = arith.mulf %207, %141 : vector<16x128xf32>
    %218 = arith.addf %216, %217 : vector<16x128xf32>
    %219 = arith.index_cast %183 : i32 to index
    %c0_67 = arith.constant 0 : index
    %c0_68 = arith.constant 0 : index
    %220 = vector.load %arg11[%219, %c0_67, %c0_68] : memref<8x16x384xbf16, #tpu.memory_space<vmem>>, vector<1x16x384xbf16>
    %221 = vector.shape_cast %220 : vector<1x16x384xbf16> to vector<16x384xbf16>
    %222 = arith.extf %221 : vector<16x384xbf16> to vector<16x384xf32>
    %223 = vector.extract_strided_slice %222 {offsets = [0, 0], sizes = [16, 128], strides = [1, 1]} : vector<16x384xf32> to vector<16x128xf32>
    %224 = vector.extract_strided_slice %187 {offsets = [0, 0], sizes = [16, 128], strides = [1, 1]} : vector<16x384xf32> to vector<16x128xf32>
    %225 = arith.addf %223, %224 : vector<16x128xf32>
    %226 = arith.negf %225 : vector<16x128xf32>
    %227 = math.exp %226 : vector<16x128xf32>
    %cst_69 = arith.constant 1.000000e+00 : f32
    %228 = vector.broadcast %cst_69 : f32 to vector<16x128xf32>
    %229 = arith.addf %228, %227 : vector<16x128xf32>
    %230 = arith.divf %228, %229 : vector<16x128xf32>
    %231 = vector.extract_strided_slice %222 {offsets = [0, 128], sizes = [16, 128], strides = [1, 1]} : vector<16x384xf32> to vector<16x128xf32>
    %232 = vector.extract_strided_slice %187 {offsets = [0, 128], sizes = [16, 128], strides = [1, 1]} : vector<16x384xf32> to vector<16x128xf32>
    %233 = arith.addf %231, %232 : vector<16x128xf32>
    %234 = arith.negf %233 : vector<16x128xf32>
    %235 = math.exp %234 : vector<16x128xf32>
    %cst_70 = arith.constant 1.000000e+00 : f32
    %236 = vector.broadcast %cst_70 : f32 to vector<16x128xf32>
    %237 = arith.addf %236, %235 : vector<16x128xf32>
    %238 = arith.divf %236, %237 : vector<16x128xf32>
    %239 = vector.extract_strided_slice %222 {offsets = [0, 256], sizes = [16, 128], strides = [1, 1]} : vector<16x384xf32> to vector<16x128xf32>
    %240 = vector.extract_strided_slice %187 {offsets = [0, 256], sizes = [16, 128], strides = [1, 1]} : vector<16x384xf32> to vector<16x128xf32>
    %241 = arith.addf %240, %23 : vector<16x128xf32>
    %242 = arith.mulf %230, %241 : vector<16x128xf32>
    %243 = arith.addf %239, %242 : vector<16x128xf32>
    %244 = math.tanh %243 : vector<16x128xf32>
    %cst_71 = arith.constant 1.000000e+00 : f32
    %245 = vector.broadcast %cst_71 : f32 to vector<16x128xf32>
    %246 = arith.subf %245, %238 : vector<16x128xf32>
    %247 = arith.mulf %246, %244 : vector<16x128xf32>
    %248 = arith.mulf %238, %172 : vector<16x128xf32>
    %249 = arith.addf %247, %248 : vector<16x128xf32>
    %250 = arith.truncf %218 : vector<16x128xf32> to vector<16x128xbf16>
    %251 = arith.index_cast %c2_i32 : i32 to index
    %c0_72 = arith.constant 0 : index
    %c0_73 = arith.constant 0 : index
    %252 = vector.load %arg9[%251, %c0_72, %c0_73] : memref<8x16x256xbf16, #tpu.memory_space<vmem>>, vector<1x16x128xbf16>
    %253 = vector.shape_cast %252 : vector<1x16x128xbf16> to vector<16x128xbf16>
    %254 = vector.shape_cast %250 : vector<16x128xbf16> to vector<1x16x128xbf16>
    tpu.vector_store %arg9[%251, %c0_72, %c0_73], %254 {strides = array<i32>} : memref<8x16x256xbf16, #tpu.memory_space<vmem>>, vector<1x16x128xbf16>,
    %255 = arith.truncf %249 : vector<16x128xf32> to vector<16x128xbf16>
    %256 = arith.index_cast %183 : i32 to index
    %c0_74 = arith.constant 0 : index
    %c128_75 = arith.constant 128 : index
    %257 = vector.load %arg9[%256, %c0_74, %c128_75] : memref<8x16x256xbf16, #tpu.memory_space<vmem>>, vector<1x16x128xbf16>
    %258 = vector.shape_cast %257 : vector<1x16x128xbf16> to vector<16x128xbf16>
    %259 = vector.shape_cast %255 : vector<16x128xbf16> to vector<1x16x128xbf16>
    tpu.vector_store %arg9[%256, %c0_74, %c128_75], %259 {strides = array<i32>} : memref<8x16x256xbf16, #tpu.memory_space<vmem>>, vector<1x16x128xbf16>,
    %c3_i32 = arith.constant 3 : i32
    %c7_i32_76 = arith.constant 7 : i32
    %260 = arith.subi %c7_i32_76, %c3_i32 : i32
    %261 = arith.truncf %218 : vector<16x128xf32> to vector<16x128xbf16>
    %cst_77 = arith.constant dense<0.000000e+00> : vector<16x384xf32>
    %262 = tpu.matmul %261, %25, %cst_77 {dimension_numbers = #tpu.dot_dimension_numbers<[1], [0], [0], [1], [0, 0, 1, 1], [], []>} : vector<16x128xbf16>, vector<128x384xbf16>, vector<16x384xf32> -> vector<16x384xf32>
    %263 = arith.truncf %249 : vector<16x128xf32> to vector<16x128xbf16>
    %cst_78 = arith.constant dense<0.000000e+00> : vector<16x384xf32>
    %264 = tpu.matmul %263, %27, %cst_78 {dimension_numbers = #tpu.dot_dimension_numbers<[1], [0], [0], [1], [0, 0, 1, 1], [], []>} : vector<16x128xbf16>, vector<128x384xbf16>, vector<16x384xf32> -> vector<16x384xf32>
    %265 = arith.index_cast %c3_i32 : i32 to index
    %c0_79 = arith.constant 0 : index
    %c0_80 = arith.constant 0 : index
    %266 = vector.load %arg10[%265, %c0_79, %c0_80] : memref<8x16x384xbf16, #tpu.memory_space<vmem>>, vector<1x16x384xbf16>
    %267 = vector.shape_cast %266 : vector<1x16x384xbf16> to vector<16x384xbf16>
    %268 = arith.extf %267 : vector<16x384xbf16> to vector<16x384xf32>
    %269 = vector.extract_strided_slice %268 {offsets = [0, 0], sizes = [16, 128], strides = [1, 1]} : vector<16x384xf32> to vector<16x128xf32>
    %270 = vector.extract_strided_slice %262 {offsets = [0, 0], sizes = [16, 128], strides = [1, 1]} : vector<16x384xf32> to vector<16x128xf32>
    %271 = arith.addf %269, %270 : vector<16x128xf32>
    %272 = arith.negf %271 : vector<16x128xf32>
    %273 = math.exp %272 : vector<16x128xf32>
    %cst_81 = arith.constant 1.000000e+00 : f32
    %274 = vector.broadcast %cst_81 : f32 to vector<16x128xf32>
    %275 = arith.addf %274, %273 : vector<16x128xf32>
    %276 = arith.divf %274, %275 : vector<16x128xf32>
    %277 = vector.extract_strided_slice %268 {offsets = [0, 128], sizes = [16, 128], strides = [1, 1]} : vector<16x384xf32> to vector<16x128xf32>
    %278 = vector.extract_strided_slice %262 {offsets = [0, 128], sizes = [16, 128], strides = [1, 1]} : vector<16x384xf32> to vector<16x128xf32>
    %279 = arith.addf %277, %278 : vector<16x128xf32>
    %280 = arith.negf %279 : vector<16x128xf32>
    %281 = math.exp %280 : vector<16x128xf32>
    %cst_82 = arith.constant 1.000000e+00 : f32
    %282 = vector.broadcast %cst_82 : f32 to vector<16x128xf32>
    %283 = arith.addf %282, %281 : vector<16x128xf32>
    %284 = arith.divf %282, %283 : vector<16x128xf32>
    %285 = vector.extract_strided_slice %268 {offsets = [0, 256], sizes = [16, 128], strides = [1, 1]} : vector<16x384xf32> to vector<16x128xf32>
    %286 = vector.extract_strided_slice %262 {offsets = [0, 256], sizes = [16, 128], strides = [1, 1]} : vector<16x384xf32> to vector<16x128xf32>
    %287 = arith.addf %286, %20 : vector<16x128xf32>
    %288 = arith.mulf %276, %287 : vector<16x128xf32>
    %289 = arith.addf %285, %288 : vector<16x128xf32>
    %290 = math.tanh %289 : vector<16x128xf32>
    %cst_83 = arith.constant 1.000000e+00 : f32
    %291 = vector.broadcast %cst_83 : f32 to vector<16x128xf32>
    %292 = arith.subf %291, %284 : vector<16x128xf32>
    %293 = arith.mulf %292, %290 : vector<16x128xf32>
    %294 = arith.mulf %284, %218 : vector<16x128xf32>
    %295 = arith.addf %293, %294 : vector<16x128xf32>
    %296 = arith.index_cast %260 : i32 to index
    %c0_84 = arith.constant 0 : index
    %c0_85 = arith.constant 0 : index
    %297 = vector.load %arg11[%296, %c0_84, %c0_85] : memref<8x16x384xbf16, #tpu.memory_space<vmem>>, vector<1x16x384xbf16>
    %298 = vector.shape_cast %297 : vector<1x16x384xbf16> to vector<16x384xbf16>
    %299 = arith.extf %298 : vector<16x384xbf16> to vector<16x384xf32>
    %300 = vector.extract_strided_slice %299 {offsets = [0, 0], sizes = [16, 128], strides = [1, 1]} : vector<16x384xf32> to vector<16x128xf32>
    %301 = vector.extract_strided_slice %264 {offsets = [0, 0], sizes = [16, 128], strides = [1, 1]} : vector<16x384xf32> to vector<16x128xf32>
    %302 = arith.addf %300, %301 : vector<16x128xf32>
    %303 = arith.negf %302 : vector<16x128xf32>
    %304 = math.exp %303 : vector<16x128xf32>
    %cst_86 = arith.constant 1.000000e+00 : f32
    %305 = vector.broadcast %cst_86 : f32 to vector<16x128xf32>
    %306 = arith.addf %305, %304 : vector<16x128xf32>
    %307 = arith.divf %305, %306 : vector<16x128xf32>
    %308 = vector.extract_strided_slice %299 {offsets = [0, 128], sizes = [16, 128], strides = [1, 1]} : vector<16x384xf32> to vector<16x128xf32>
    %309 = vector.extract_strided_slice %264 {offsets = [0, 128], sizes = [16, 128], strides = [1, 1]} : vector<16x384xf32> to vector<16x128xf32>
    %310 = arith.addf %308, %309 : vector<16x128xf32>
    %311 = arith.negf %310 : vector<16x128xf32>
    %312 = math.exp %311 : vector<16x128xf32>
    %cst_87 = arith.constant 1.000000e+00 : f32
    %313 = vector.broadcast %cst_87 : f32 to vector<16x128xf32>
    %314 = arith.addf %313, %312 : vector<16x128xf32>
    %315 = arith.divf %313, %314 : vector<16x128xf32>
    %316 = vector.extract_strided_slice %299 {offsets = [0, 256], sizes = [16, 128], strides = [1, 1]} : vector<16x384xf32> to vector<16x128xf32>
    %317 = vector.extract_strided_slice %264 {offsets = [0, 256], sizes = [16, 128], strides = [1, 1]} : vector<16x384xf32> to vector<16x128xf32>
    %318 = arith.addf %317, %23 : vector<16x128xf32>
    %319 = arith.mulf %307, %318 : vector<16x128xf32>
    %320 = arith.addf %316, %319 : vector<16x128xf32>
    %321 = math.tanh %320 : vector<16x128xf32>
    %cst_88 = arith.constant 1.000000e+00 : f32
    %322 = vector.broadcast %cst_88 : f32 to vector<16x128xf32>
    %323 = arith.subf %322, %315 : vector<16x128xf32>
    %324 = arith.mulf %323, %321 : vector<16x128xf32>
    %325 = arith.mulf %315, %249 : vector<16x128xf32>
    %326 = arith.addf %324, %325 : vector<16x128xf32>
    %327 = arith.truncf %295 : vector<16x128xf32> to vector<16x128xbf16>
    %328 = arith.index_cast %c3_i32 : i32 to index
    %c0_89 = arith.constant 0 : index
    %c0_90 = arith.constant 0 : index
    %329 = vector.load %arg9[%328, %c0_89, %c0_90] : memref<8x16x256xbf16, #tpu.memory_space<vmem>>, vector<1x16x128xbf16>
    %330 = vector.shape_cast %329 : vector<1x16x128xbf16> to vector<16x128xbf16>
    %331 = vector.shape_cast %327 : vector<16x128xbf16> to vector<1x16x128xbf16>
    tpu.vector_store %arg9[%328, %c0_89, %c0_90], %331 {strides = array<i32>} : memref<8x16x256xbf16, #tpu.memory_space<vmem>>, vector<1x16x128xbf16>,
    %332 = arith.truncf %326 : vector<16x128xf32> to vector<16x128xbf16>
    %333 = arith.index_cast %260 : i32 to index
    %c0_91 = arith.constant 0 : index
    %c128_92 = arith.constant 128 : index
    %334 = vector.load %arg9[%333, %c0_91, %c128_92] : memref<8x16x256xbf16, #tpu.memory_space<vmem>>, vector<1x16x128xbf16>
    %335 = vector.shape_cast %334 : vector<1x16x128xbf16> to vector<16x128xbf16>
    %336 = vector.shape_cast %332 : vector<16x128xbf16> to vector<1x16x128xbf16>
    tpu.vector_store %arg9[%333, %c0_91, %c128_92], %336 {strides = array<i32>} : memref<8x16x256xbf16, #tpu.memory_space<vmem>>, vector<1x16x128xbf16>,
    %c4_i32 = arith.constant 4 : i32
    %c7_i32_93 = arith.constant 7 : i32
    %337 = arith.subi %c7_i32_93, %c4_i32 : i32
    %338 = arith.truncf %295 : vector<16x128xf32> to vector<16x128xbf16>
    %cst_94 = arith.constant dense<0.000000e+00> : vector<16x384xf32>
    %339 = tpu.matmul %338, %25, %cst_94 {dimension_numbers = #tpu.dot_dimension_numbers<[1], [0], [0], [1], [0, 0, 1, 1], [], []>} : vector<16x128xbf16>, vector<128x384xbf16>, vector<16x384xf32> -> vector<16x384xf32>
    %340 = arith.truncf %326 : vector<16x128xf32> to vector<16x128xbf16>
    %cst_95 = arith.constant dense<0.000000e+00> : vector<16x384xf32>
    %341 = tpu.matmul %340, %27, %cst_95 {dimension_numbers = #tpu.dot_dimension_numbers<[1], [0], [0], [1], [0, 0, 1, 1], [], []>} : vector<16x128xbf16>, vector<128x384xbf16>, vector<16x384xf32> -> vector<16x384xf32>
    %342 = arith.index_cast %c4_i32 : i32 to index
    %c0_96 = arith.constant 0 : index
    %c0_97 = arith.constant 0 : index
    %343 = vector.load %arg10[%342, %c0_96, %c0_97] : memref<8x16x384xbf16, #tpu.memory_space<vmem>>, vector<1x16x384xbf16>
    %344 = vector.shape_cast %343 : vector<1x16x384xbf16> to vector<16x384xbf16>
    %345 = arith.extf %344 : vector<16x384xbf16> to vector<16x384xf32>
    %346 = vector.extract_strided_slice %345 {offsets = [0, 0], sizes = [16, 128], strides = [1, 1]} : vector<16x384xf32> to vector<16x128xf32>
    %347 = vector.extract_strided_slice %339 {offsets = [0, 0], sizes = [16, 128], strides = [1, 1]} : vector<16x384xf32> to vector<16x128xf32>
    %348 = arith.addf %346, %347 : vector<16x128xf32>
    %349 = arith.negf %348 : vector<16x128xf32>
    %350 = math.exp %349 : vector<16x128xf32>
    %cst_98 = arith.constant 1.000000e+00 : f32
    %351 = vector.broadcast %cst_98 : f32 to vector<16x128xf32>
    %352 = arith.addf %351, %350 : vector<16x128xf32>
    %353 = arith.divf %351, %352 : vector<16x128xf32>
    %354 = vector.extract_strided_slice %345 {offsets = [0, 128], sizes = [16, 128], strides = [1, 1]} : vector<16x384xf32> to vector<16x128xf32>
    %355 = vector.extract_strided_slice %339 {offsets = [0, 128], sizes = [16, 128], strides = [1, 1]} : vector<16x384xf32> to vector<16x128xf32>
    %356 = arith.addf %354, %355 : vector<16x128xf32>
    %357 = arith.negf %356 : vector<16x128xf32>
    %358 = math.exp %357 : vector<16x128xf32>
    %cst_99 = arith.constant 1.000000e+00 : f32
    %359 = vector.broadcast %cst_99 : f32 to vector<16x128xf32>
    %360 = arith.addf %359, %358 : vector<16x128xf32>
    %361 = arith.divf %359, %360 : vector<16x128xf32>
    %362 = vector.extract_strided_slice %345 {offsets = [0, 256], sizes = [16, 128], strides = [1, 1]} : vector<16x384xf32> to vector<16x128xf32>
    %363 = vector.extract_strided_slice %339 {offsets = [0, 256], sizes = [16, 128], strides = [1, 1]} : vector<16x384xf32> to vector<16x128xf32>
    %364 = arith.addf %363, %20 : vector<16x128xf32>
    %365 = arith.mulf %353, %364 : vector<16x128xf32>
    %366 = arith.addf %362, %365 : vector<16x128xf32>
    %367 = math.tanh %366 : vector<16x128xf32>
    %cst_100 = arith.constant 1.000000e+00 : f32
    %368 = vector.broadcast %cst_100 : f32 to vector<16x128xf32>
    %369 = arith.subf %368, %361 : vector<16x128xf32>
    %370 = arith.mulf %369, %367 : vector<16x128xf32>
    %371 = arith.mulf %361, %295 : vector<16x128xf32>
    %372 = arith.addf %370, %371 : vector<16x128xf32>
    %373 = arith.index_cast %337 : i32 to index
    %c0_101 = arith.constant 0 : index
    %c0_102 = arith.constant 0 : index
    %374 = vector.load %arg11[%373, %c0_101, %c0_102] : memref<8x16x384xbf16, #tpu.memory_space<vmem>>, vector<1x16x384xbf16>
    %375 = vector.shape_cast %374 : vector<1x16x384xbf16> to vector<16x384xbf16>
    %376 = arith.extf %375 : vector<16x384xbf16> to vector<16x384xf32>
    %377 = vector.extract_strided_slice %376 {offsets = [0, 0], sizes = [16, 128], strides = [1, 1]} : vector<16x384xf32> to vector<16x128xf32>
    %378 = vector.extract_strided_slice %341 {offsets = [0, 0], sizes = [16, 128], strides = [1, 1]} : vector<16x384xf32> to vector<16x128xf32>
    %379 = arith.addf %377, %378 : vector<16x128xf32>
    %380 = arith.negf %379 : vector<16x128xf32>
    %381 = math.exp %380 : vector<16x128xf32>
    %cst_103 = arith.constant 1.000000e+00 : f32
    %382 = vector.broadcast %cst_103 : f32 to vector<16x128xf32>
    %383 = arith.addf %382, %381 : vector<16x128xf32>
    %384 = arith.divf %382, %383 : vector<16x128xf32>
    %385 = vector.extract_strided_slice %376 {offsets = [0, 128], sizes = [16, 128], strides = [1, 1]} : vector<16x384xf32> to vector<16x128xf32>
    %386 = vector.extract_strided_slice %341 {offsets = [0, 128], sizes = [16, 128], strides = [1, 1]} : vector<16x384xf32> to vector<16x128xf32>
    %387 = arith.addf %385, %386 : vector<16x128xf32>
    %388 = arith.negf %387 : vector<16x128xf32>
    %389 = math.exp %388 : vector<16x128xf32>
    %cst_104 = arith.constant 1.000000e+00 : f32
    %390 = vector.broadcast %cst_104 : f32 to vector<16x128xf32>
    %391 = arith.addf %390, %389 : vector<16x128xf32>
    %392 = arith.divf %390, %391 : vector<16x128xf32>
    %393 = vector.extract_strided_slice %376 {offsets = [0, 256], sizes = [16, 128], strides = [1, 1]} : vector<16x384xf32> to vector<16x128xf32>
    %394 = vector.extract_strided_slice %341 {offsets = [0, 256], sizes = [16, 128], strides = [1, 1]} : vector<16x384xf32> to vector<16x128xf32>
    %395 = arith.addf %394, %23 : vector<16x128xf32>
    %396 = arith.mulf %384, %395 : vector<16x128xf32>
    %397 = arith.addf %393, %396 : vector<16x128xf32>
    %398 = math.tanh %397 : vector<16x128xf32>
    %cst_105 = arith.constant 1.000000e+00 : f32
    %399 = vector.broadcast %cst_105 : f32 to vector<16x128xf32>
    %400 = arith.subf %399, %392 : vector<16x128xf32>
    %401 = arith.mulf %400, %398 : vector<16x128xf32>
    %402 = arith.mulf %392, %326 : vector<16x128xf32>
    %403 = arith.addf %401, %402 : vector<16x128xf32>
    %404 = arith.truncf %372 : vector<16x128xf32> to vector<16x128xbf16>
    %405 = arith.index_cast %c4_i32 : i32 to index
    %c0_106 = arith.constant 0 : index
    %c0_107 = arith.constant 0 : index
    %406 = vector.load %arg9[%405, %c0_106, %c0_107] : memref<8x16x256xbf16, #tpu.memory_space<vmem>>, vector<1x16x128xbf16>
    %407 = vector.shape_cast %406 : vector<1x16x128xbf16> to vector<16x128xbf16>
    %408 = vector.shape_cast %404 : vector<16x128xbf16> to vector<1x16x128xbf16>
    tpu.vector_store %arg9[%405, %c0_106, %c0_107], %408 {strides = array<i32>} : memref<8x16x256xbf16, #tpu.memory_space<vmem>>, vector<1x16x128xbf16>,
    %409 = arith.truncf %403 : vector<16x128xf32> to vector<16x128xbf16>
    %410 = arith.index_cast %337 : i32 to index
    %c0_108 = arith.constant 0 : index
    %c128_109 = arith.constant 128 : index
    %411 = vector.load %arg9[%410, %c0_108, %c128_109] : memref<8x16x256xbf16, #tpu.memory_space<vmem>>, vector<1x16x128xbf16>
    %412 = vector.shape_cast %411 : vector<1x16x128xbf16> to vector<16x128xbf16>
    %413 = vector.shape_cast %409 : vector<16x128xbf16> to vector<1x16x128xbf16>
    tpu.vector_store %arg9[%410, %c0_108, %c128_109], %413 {strides = array<i32>} : memref<8x16x256xbf16, #tpu.memory_space<vmem>>, vector<1x16x128xbf16>,
    %c5_i32 = arith.constant 5 : i32
    %c7_i32_110 = arith.constant 7 : i32
    %414 = arith.subi %c7_i32_110, %c5_i32 : i32
    %415 = arith.truncf %372 : vector<16x128xf32> to vector<16x128xbf16>
    %cst_111 = arith.constant dense<0.000000e+00> : vector<16x384xf32>
    %416 = tpu.matmul %415, %25, %cst_111 {dimension_numbers = #tpu.dot_dimension_numbers<[1], [0], [0], [1], [0, 0, 1, 1], [], []>} : vector<16x128xbf16>, vector<128x384xbf16>, vector<16x384xf32> -> vector<16x384xf32>
    %417 = arith.truncf %403 : vector<16x128xf32> to vector<16x128xbf16>
    %cst_112 = arith.constant dense<0.000000e+00> : vector<16x384xf32>
    %418 = tpu.matmul %417, %27, %cst_112 {dimension_numbers = #tpu.dot_dimension_numbers<[1], [0], [0], [1], [0, 0, 1, 1], [], []>} : vector<16x128xbf16>, vector<128x384xbf16>, vector<16x384xf32> -> vector<16x384xf32>
    %419 = arith.index_cast %c5_i32 : i32 to index
    %c0_113 = arith.constant 0 : index
    %c0_114 = arith.constant 0 : index
    %420 = vector.load %arg10[%419, %c0_113, %c0_114] : memref<8x16x384xbf16, #tpu.memory_space<vmem>>, vector<1x16x384xbf16>
    %421 = vector.shape_cast %420 : vector<1x16x384xbf16> to vector<16x384xbf16>
    %422 = arith.extf %421 : vector<16x384xbf16> to vector<16x384xf32>
    %423 = vector.extract_strided_slice %422 {offsets = [0, 0], sizes = [16, 128], strides = [1, 1]} : vector<16x384xf32> to vector<16x128xf32>
    %424 = vector.extract_strided_slice %416 {offsets = [0, 0], sizes = [16, 128], strides = [1, 1]} : vector<16x384xf32> to vector<16x128xf32>
    %425 = arith.addf %423, %424 : vector<16x128xf32>
    %426 = arith.negf %425 : vector<16x128xf32>
    %427 = math.exp %426 : vector<16x128xf32>
    %cst_115 = arith.constant 1.000000e+00 : f32
    %428 = vector.broadcast %cst_115 : f32 to vector<16x128xf32>
    %429 = arith.addf %428, %427 : vector<16x128xf32>
    %430 = arith.divf %428, %429 : vector<16x128xf32>
    %431 = vector.extract_strided_slice %422 {offsets = [0, 128], sizes = [16, 128], strides = [1, 1]} : vector<16x384xf32> to vector<16x128xf32>
    %432 = vector.extract_strided_slice %416 {offsets = [0, 128], sizes = [16, 128], strides = [1, 1]} : vector<16x384xf32> to vector<16x128xf32>
    %433 = arith.addf %431, %432 : vector<16x128xf32>
    %434 = arith.negf %433 : vector<16x128xf32>
    %435 = math.exp %434 : vector<16x128xf32>
    %cst_116 = arith.constant 1.000000e+00 : f32
    %436 = vector.broadcast %cst_116 : f32 to vector<16x128xf32>
    %437 = arith.addf %436, %435 : vector<16x128xf32>
    %438 = arith.divf %436, %437 : vector<16x128xf32>
    %439 = vector.extract_strided_slice %422 {offsets = [0, 256], sizes = [16, 128], strides = [1, 1]} : vector<16x384xf32> to vector<16x128xf32>
    %440 = vector.extract_strided_slice %416 {offsets = [0, 256], sizes = [16, 128], strides = [1, 1]} : vector<16x384xf32> to vector<16x128xf32>
    %441 = arith.addf %440, %20 : vector<16x128xf32>
    %442 = arith.mulf %430, %441 : vector<16x128xf32>
    %443 = arith.addf %439, %442 : vector<16x128xf32>
    %444 = math.tanh %443 : vector<16x128xf32>
    %cst_117 = arith.constant 1.000000e+00 : f32
    %445 = vector.broadcast %cst_117 : f32 to vector<16x128xf32>
    %446 = arith.subf %445, %438 : vector<16x128xf32>
    %447 = arith.mulf %446, %444 : vector<16x128xf32>
    %448 = arith.mulf %438, %372 : vector<16x128xf32>
    %449 = arith.addf %447, %448 : vector<16x128xf32>
    %450 = arith.index_cast %414 : i32 to index
    %c0_118 = arith.constant 0 : index
    %c0_119 = arith.constant 0 : index
    %451 = vector.load %arg11[%450, %c0_118, %c0_119] : memref<8x16x384xbf16, #tpu.memory_space<vmem>>, vector<1x16x384xbf16>
    %452 = vector.shape_cast %451 : vector<1x16x384xbf16> to vector<16x384xbf16>
    %453 = arith.extf %452 : vector<16x384xbf16> to vector<16x384xf32>
    %454 = vector.extract_strided_slice %453 {offsets = [0, 0], sizes = [16, 128], strides = [1, 1]} : vector<16x384xf32> to vector<16x128xf32>
    %455 = vector.extract_strided_slice %418 {offsets = [0, 0], sizes = [16, 128], strides = [1, 1]} : vector<16x384xf32> to vector<16x128xf32>
    %456 = arith.addf %454, %455 : vector<16x128xf32>
    %457 = arith.negf %456 : vector<16x128xf32>
    %458 = math.exp %457 : vector<16x128xf32>
    %cst_120 = arith.constant 1.000000e+00 : f32
    %459 = vector.broadcast %cst_120 : f32 to vector<16x128xf32>
    %460 = arith.addf %459, %458 : vector<16x128xf32>
    %461 = arith.divf %459, %460 : vector<16x128xf32>
    %462 = vector.extract_strided_slice %453 {offsets = [0, 128], sizes = [16, 128], strides = [1, 1]} : vector<16x384xf32> to vector<16x128xf32>
    %463 = vector.extract_strided_slice %418 {offsets = [0, 128], sizes = [16, 128], strides = [1, 1]} : vector<16x384xf32> to vector<16x128xf32>
    %464 = arith.addf %462, %463 : vector<16x128xf32>
    %465 = arith.negf %464 : vector<16x128xf32>
    %466 = math.exp %465 : vector<16x128xf32>
    %cst_121 = arith.constant 1.000000e+00 : f32
    %467 = vector.broadcast %cst_121 : f32 to vector<16x128xf32>
    %468 = arith.addf %467, %466 : vector<16x128xf32>
    %469 = arith.divf %467, %468 : vector<16x128xf32>
    %470 = vector.extract_strided_slice %453 {offsets = [0, 256], sizes = [16, 128], strides = [1, 1]} : vector<16x384xf32> to vector<16x128xf32>
    %471 = vector.extract_strided_slice %418 {offsets = [0, 256], sizes = [16, 128], strides = [1, 1]} : vector<16x384xf32> to vector<16x128xf32>
    %472 = arith.addf %471, %23 : vector<16x128xf32>
    %473 = arith.mulf %461, %472 : vector<16x128xf32>
    %474 = arith.addf %470, %473 : vector<16x128xf32>
    %475 = math.tanh %474 : vector<16x128xf32>
    %cst_122 = arith.constant 1.000000e+00 : f32
    %476 = vector.broadcast %cst_122 : f32 to vector<16x128xf32>
    %477 = arith.subf %476, %469 : vector<16x128xf32>
    %478 = arith.mulf %477, %475 : vector<16x128xf32>
    %479 = arith.mulf %469, %403 : vector<16x128xf32>
    %480 = arith.addf %478, %479 : vector<16x128xf32>
    %481 = arith.truncf %449 : vector<16x128xf32> to vector<16x128xbf16>
    %482 = arith.index_cast %c5_i32 : i32 to index
    %c0_123 = arith.constant 0 : index
    %c0_124 = arith.constant 0 : index
    %483 = vector.load %arg9[%482, %c0_123, %c0_124] : memref<8x16x256xbf16, #tpu.memory_space<vmem>>, vector<1x16x128xbf16>
    %484 = vector.shape_cast %483 : vector<1x16x128xbf16> to vector<16x128xbf16>
    %485 = vector.shape_cast %481 : vector<16x128xbf16> to vector<1x16x128xbf16>
    tpu.vector_store %arg9[%482, %c0_123, %c0_124], %485 {strides = array<i32>} : memref<8x16x256xbf16, #tpu.memory_space<vmem>>, vector<1x16x128xbf16>,
    %486 = arith.truncf %480 : vector<16x128xf32> to vector<16x128xbf16>
    %487 = arith.index_cast %414 : i32 to index
    %c0_125 = arith.constant 0 : index
    %c128_126 = arith.constant 128 : index
    %488 = vector.load %arg9[%487, %c0_125, %c128_126] : memref<8x16x256xbf16, #tpu.memory_space<vmem>>, vector<1x16x128xbf16>
    %489 = vector.shape_cast %488 : vector<1x16x128xbf16> to vector<16x128xbf16>
    %490 = vector.shape_cast %486 : vector<16x128xbf16> to vector<1x16x128xbf16>
    tpu.vector_store %arg9[%487, %c0_125, %c128_126], %490 {strides = array<i32>} : memref<8x16x256xbf16, #tpu.memory_space<vmem>>, vector<1x16x128xbf16>,
    %c6_i32 = arith.constant 6 : i32
    %c7_i32_127 = arith.constant 7 : i32
    %491 = arith.subi %c7_i32_127, %c6_i32 : i32
    %492 = arith.truncf %449 : vector<16x128xf32> to vector<16x128xbf16>
    %cst_128 = arith.constant dense<0.000000e+00> : vector<16x384xf32>
    %493 = tpu.matmul %492, %25, %cst_128 {dimension_numbers = #tpu.dot_dimension_numbers<[1], [0], [0], [1], [0, 0, 1, 1], [], []>} : vector<16x128xbf16>, vector<128x384xbf16>, vector<16x384xf32> -> vector<16x384xf32>
    %494 = arith.truncf %480 : vector<16x128xf32> to vector<16x128xbf16>
    %cst_129 = arith.constant dense<0.000000e+00> : vector<16x384xf32>
    %495 = tpu.matmul %494, %27, %cst_129 {dimension_numbers = #tpu.dot_dimension_numbers<[1], [0], [0], [1], [0, 0, 1, 1], [], []>} : vector<16x128xbf16>, vector<128x384xbf16>, vector<16x384xf32> -> vector<16x384xf32>
    %496 = arith.index_cast %c6_i32 : i32 to index
    %c0_130 = arith.constant 0 : index
    %c0_131 = arith.constant 0 : index
    %497 = vector.load %arg10[%496, %c0_130, %c0_131] : memref<8x16x384xbf16, #tpu.memory_space<vmem>>, vector<1x16x384xbf16>
    %498 = vector.shape_cast %497 : vector<1x16x384xbf16> to vector<16x384xbf16>
    %499 = arith.extf %498 : vector<16x384xbf16> to vector<16x384xf32>
    %500 = vector.extract_strided_slice %499 {offsets = [0, 0], sizes = [16, 128], strides = [1, 1]} : vector<16x384xf32> to vector<16x128xf32>
    %501 = vector.extract_strided_slice %493 {offsets = [0, 0], sizes = [16, 128], strides = [1, 1]} : vector<16x384xf32> to vector<16x128xf32>
    %502 = arith.addf %500, %501 : vector<16x128xf32>
    %503 = arith.negf %502 : vector<16x128xf32>
    %504 = math.exp %503 : vector<16x128xf32>
    %cst_132 = arith.constant 1.000000e+00 : f32
    %505 = vector.broadcast %cst_132 : f32 to vector<16x128xf32>
    %506 = arith.addf %505, %504 : vector<16x128xf32>
    %507 = arith.divf %505, %506 : vector<16x128xf32>
    %508 = vector.extract_strided_slice %499 {offsets = [0, 128], sizes = [16, 128], strides = [1, 1]} : vector<16x384xf32> to vector<16x128xf32>
    %509 = vector.extract_strided_slice %493 {offsets = [0, 128], sizes = [16, 128], strides = [1, 1]} : vector<16x384xf32> to vector<16x128xf32>
    %510 = arith.addf %508, %509 : vector<16x128xf32>
    %511 = arith.negf %510 : vector<16x128xf32>
    %512 = math.exp %511 : vector<16x128xf32>
    %cst_133 = arith.constant 1.000000e+00 : f32
    %513 = vector.broadcast %cst_133 : f32 to vector<16x128xf32>
    %514 = arith.addf %513, %512 : vector<16x128xf32>
    %515 = arith.divf %513, %514 : vector<16x128xf32>
    %516 = vector.extract_strided_slice %499 {offsets = [0, 256], sizes = [16, 128], strides = [1, 1]} : vector<16x384xf32> to vector<16x128xf32>
    %517 = vector.extract_strided_slice %493 {offsets = [0, 256], sizes = [16, 128], strides = [1, 1]} : vector<16x384xf32> to vector<16x128xf32>
    %518 = arith.addf %517, %20 : vector<16x128xf32>
    %519 = arith.mulf %507, %518 : vector<16x128xf32>
    %520 = arith.addf %516, %519 : vector<16x128xf32>
    %521 = math.tanh %520 : vector<16x128xf32>
    %cst_134 = arith.constant 1.000000e+00 : f32
    %522 = vector.broadcast %cst_134 : f32 to vector<16x128xf32>
    %523 = arith.subf %522, %515 : vector<16x128xf32>
    %524 = arith.mulf %523, %521 : vector<16x128xf32>
    %525 = arith.mulf %515, %449 : vector<16x128xf32>
    %526 = arith.addf %524, %525 : vector<16x128xf32>
    %527 = arith.index_cast %491 : i32 to index
    %c0_135 = arith.constant 0 : index
    %c0_136 = arith.constant 0 : index
    %528 = vector.load %arg11[%527, %c0_135, %c0_136] : memref<8x16x384xbf16, #tpu.memory_space<vmem>>, vector<1x16x384xbf16>
    %529 = vector.shape_cast %528 : vector<1x16x384xbf16> to vector<16x384xbf16>
    %530 = arith.extf %529 : vector<16x384xbf16> to vector<16x384xf32>
    %531 = vector.extract_strided_slice %530 {offsets = [0, 0], sizes = [16, 128], strides = [1, 1]} : vector<16x384xf32> to vector<16x128xf32>
    %532 = vector.extract_strided_slice %495 {offsets = [0, 0], sizes = [16, 128], strides = [1, 1]} : vector<16x384xf32> to vector<16x128xf32>
    %533 = arith.addf %531, %532 : vector<16x128xf32>
    %534 = arith.negf %533 : vector<16x128xf32>
    %535 = math.exp %534 : vector<16x128xf32>
    %cst_137 = arith.constant 1.000000e+00 : f32
    %536 = vector.broadcast %cst_137 : f32 to vector<16x128xf32>
    %537 = arith.addf %536, %535 : vector<16x128xf32>
    %538 = arith.divf %536, %537 : vector<16x128xf32>
    %539 = vector.extract_strided_slice %530 {offsets = [0, 128], sizes = [16, 128], strides = [1, 1]} : vector<16x384xf32> to vector<16x128xf32>
    %540 = vector.extract_strided_slice %495 {offsets = [0, 128], sizes = [16, 128], strides = [1, 1]} : vector<16x384xf32> to vector<16x128xf32>
    %541 = arith.addf %539, %540 : vector<16x128xf32>
    %542 = arith.negf %541 : vector<16x128xf32>
    %543 = math.exp %542 : vector<16x128xf32>
    %cst_138 = arith.constant 1.000000e+00 : f32
    %544 = vector.broadcast %cst_138 : f32 to vector<16x128xf32>
    %545 = arith.addf %544, %543 : vector<16x128xf32>
    %546 = arith.divf %544, %545 : vector<16x128xf32>
    %547 = vector.extract_strided_slice %530 {offsets = [0, 256], sizes = [16, 128], strides = [1, 1]} : vector<16x384xf32> to vector<16x128xf32>
    %548 = vector.extract_strided_slice %495 {offsets = [0, 256], sizes = [16, 128], strides = [1, 1]} : vector<16x384xf32> to vector<16x128xf32>
    %549 = arith.addf %548, %23 : vector<16x128xf32>
    %550 = arith.mulf %538, %549 : vector<16x128xf32>
    %551 = arith.addf %547, %550 : vector<16x128xf32>
    %552 = math.tanh %551 : vector<16x128xf32>
    %cst_139 = arith.constant 1.000000e+00 : f32
    %553 = vector.broadcast %cst_139 : f32 to vector<16x128xf32>
    %554 = arith.subf %553, %546 : vector<16x128xf32>
    %555 = arith.mulf %554, %552 : vector<16x128xf32>
    %556 = arith.mulf %546, %480 : vector<16x128xf32>
    %557 = arith.addf %555, %556 : vector<16x128xf32>
    %558 = arith.truncf %526 : vector<16x128xf32> to vector<16x128xbf16>
    %559 = arith.index_cast %c6_i32 : i32 to index
    %c0_140 = arith.constant 0 : index
    %c0_141 = arith.constant 0 : index
    %560 = vector.load %arg9[%559, %c0_140, %c0_141] : memref<8x16x256xbf16, #tpu.memory_space<vmem>>, vector<1x16x128xbf16>
    %561 = vector.shape_cast %560 : vector<1x16x128xbf16> to vector<16x128xbf16>
    %562 = vector.shape_cast %558 : vector<16x128xbf16> to vector<1x16x128xbf16>
    tpu.vector_store %arg9[%559, %c0_140, %c0_141], %562 {strides = array<i32>} : memref<8x16x256xbf16, #tpu.memory_space<vmem>>, vector<1x16x128xbf16>,
    %563 = arith.truncf %557 : vector<16x128xf32> to vector<16x128xbf16>
    %564 = arith.index_cast %491 : i32 to index
    %c0_142 = arith.constant 0 : index
    %c128_143 = arith.constant 128 : index
    %565 = vector.load %arg9[%564, %c0_142, %c128_143] : memref<8x16x256xbf16, #tpu.memory_space<vmem>>, vector<1x16x128xbf16>
    %566 = vector.shape_cast %565 : vector<1x16x128xbf16> to vector<16x128xbf16>
    %567 = vector.shape_cast %563 : vector<16x128xbf16> to vector<1x16x128xbf16>
    tpu.vector_store %arg9[%564, %c0_142, %c128_143], %567 {strides = array<i32>} : memref<8x16x256xbf16, #tpu.memory_space<vmem>>, vector<1x16x128xbf16>,
    %c7_i32_144 = arith.constant 7 : i32
    %c7_i32_145 = arith.constant 7 : i32
    %568 = arith.subi %c7_i32_145, %c7_i32_144 : i32
    %569 = arith.truncf %526 : vector<16x128xf32> to vector<16x128xbf16>
    %cst_146 = arith.constant dense<0.000000e+00> : vector<16x384xf32>
    %570 = tpu.matmul %569, %25, %cst_146 {dimension_numbers = #tpu.dot_dimension_numbers<[1], [0], [0], [1], [0, 0, 1, 1], [], []>} : vector<16x128xbf16>, vector<128x384xbf16>, vector<16x384xf32> -> vector<16x384xf32>
    %571 = arith.truncf %557 : vector<16x128xf32> to vector<16x128xbf16>
    %cst_147 = arith.constant dense<0.000000e+00> : vector<16x384xf32>
    %572 = tpu.matmul %571, %27, %cst_147 {dimension_numbers = #tpu.dot_dimension_numbers<[1], [0], [0], [1], [0, 0, 1, 1], [], []>} : vector<16x128xbf16>, vector<128x384xbf16>, vector<16x384xf32> -> vector<16x384xf32>
    %573 = arith.index_cast %c7_i32_144 : i32 to index
    %c0_148 = arith.constant 0 : index
    %c0_149 = arith.constant 0 : index
    %574 = vector.load %arg10[%573, %c0_148, %c0_149] : memref<8x16x384xbf16, #tpu.memory_space<vmem>>, vector<1x16x384xbf16>
    %575 = vector.shape_cast %574 : vector<1x16x384xbf16> to vector<16x384xbf16>
    %576 = arith.extf %575 : vector<16x384xbf16> to vector<16x384xf32>
    %577 = vector.extract_strided_slice %576 {offsets = [0, 0], sizes = [16, 128], strides = [1, 1]} : vector<16x384xf32> to vector<16x128xf32>
    %578 = vector.extract_strided_slice %570 {offsets = [0, 0], sizes = [16, 128], strides = [1, 1]} : vector<16x384xf32> to vector<16x128xf32>
    %579 = arith.addf %577, %578 : vector<16x128xf32>
    %580 = arith.negf %579 : vector<16x128xf32>
    %581 = math.exp %580 : vector<16x128xf32>
    %cst_150 = arith.constant 1.000000e+00 : f32
    %582 = vector.broadcast %cst_150 : f32 to vector<16x128xf32>
    %583 = arith.addf %582, %581 : vector<16x128xf32>
    %584 = arith.divf %582, %583 : vector<16x128xf32>
    %585 = vector.extract_strided_slice %576 {offsets = [0, 128], sizes = [16, 128], strides = [1, 1]} : vector<16x384xf32> to vector<16x128xf32>
    %586 = vector.extract_strided_slice %570 {offsets = [0, 128], sizes = [16, 128], strides = [1, 1]} : vector<16x384xf32> to vector<16x128xf32>
    %587 = arith.addf %585, %586 : vector<16x128xf32>
    %588 = arith.negf %587 : vector<16x128xf32>
    %589 = math.exp %588 : vector<16x128xf32>
    %cst_151 = arith.constant 1.000000e+00 : f32
    %590 = vector.broadcast %cst_151 : f32 to vector<16x128xf32>
    %591 = arith.addf %590, %589 : vector<16x128xf32>
    %592 = arith.divf %590, %591 : vector<16x128xf32>
    %593 = vector.extract_strided_slice %576 {offsets = [0, 256], sizes = [16, 128], strides = [1, 1]} : vector<16x384xf32> to vector<16x128xf32>
    %594 = vector.extract_strided_slice %570 {offsets = [0, 256], sizes = [16, 128], strides = [1, 1]} : vector<16x384xf32> to vector<16x128xf32>
    %595 = arith.addf %594, %20 : vector<16x128xf32>
    %596 = arith.mulf %584, %595 : vector<16x128xf32>
    %597 = arith.addf %593, %596 : vector<16x128xf32>
    %598 = math.tanh %597 : vector<16x128xf32>
    %cst_152 = arith.constant 1.000000e+00 : f32
    %599 = vector.broadcast %cst_152 : f32 to vector<16x128xf32>
    %600 = arith.subf %599, %592 : vector<16x128xf32>
    %601 = arith.mulf %600, %598 : vector<16x128xf32>
    %602 = arith.mulf %592, %526 : vector<16x128xf32>
    %603 = arith.addf %601, %602 : vector<16x128xf32>
    %604 = arith.index_cast %568 : i32 to index
    %c0_153 = arith.constant 0 : index
    %c0_154 = arith.constant 0 : index
    %605 = vector.load %arg11[%604, %c0_153, %c0_154] : memref<8x16x384xbf16, #tpu.memory_space<vmem>>, vector<1x16x384xbf16>
    %606 = vector.shape_cast %605 : vector<1x16x384xbf16> to vector<16x384xbf16>
    %607 = arith.extf %606 : vector<16x384xbf16> to vector<16x384xf32>
    %608 = vector.extract_strided_slice %607 {offsets = [0, 0], sizes = [16, 128], strides = [1, 1]} : vector<16x384xf32> to vector<16x128xf32>
    %609 = vector.extract_strided_slice %572 {offsets = [0, 0], sizes = [16, 128], strides = [1, 1]} : vector<16x384xf32> to vector<16x128xf32>
    %610 = arith.addf %608, %609 : vector<16x128xf32>
    %611 = arith.negf %610 : vector<16x128xf32>
    %612 = math.exp %611 : vector<16x128xf32>
    %cst_155 = arith.constant 1.000000e+00 : f32
    %613 = vector.broadcast %cst_155 : f32 to vector<16x128xf32>
    %614 = arith.addf %613, %612 : vector<16x128xf32>
    %615 = arith.divf %613, %614 : vector<16x128xf32>
    %616 = vector.extract_strided_slice %607 {offsets = [0, 128], sizes = [16, 128], strides = [1, 1]} : vector<16x384xf32> to vector<16x128xf32>
    %617 = vector.extract_strided_slice %572 {offsets = [0, 128], sizes = [16, 128], strides = [1, 1]} : vector<16x384xf32> to vector<16x128xf32>
    %618 = arith.addf %616, %617 : vector<16x128xf32>
    %619 = arith.negf %618 : vector<16x128xf32>
    %620 = math.exp %619 : vector<16x128xf32>
    %cst_156 = arith.constant 1.000000e+00 : f32
    %621 = vector.broadcast %cst_156 : f32 to vector<16x128xf32>
    %622 = arith.addf %621, %620 : vector<16x128xf32>
    %623 = arith.divf %621, %622 : vector<16x128xf32>
    %624 = vector.extract_strided_slice %607 {offsets = [0, 256], sizes = [16, 128], strides = [1, 1]} : vector<16x384xf32> to vector<16x128xf32>
    %625 = vector.extract_strided_slice %572 {offsets = [0, 256], sizes = [16, 128], strides = [1, 1]} : vector<16x384xf32> to vector<16x128xf32>
    %626 = arith.addf %625, %23 : vector<16x128xf32>
    %627 = arith.mulf %615, %626 : vector<16x128xf32>
    %628 = arith.addf %624, %627 : vector<16x128xf32>
    %629 = math.tanh %628 : vector<16x128xf32>
    %cst_157 = arith.constant 1.000000e+00 : f32
    %630 = vector.broadcast %cst_157 : f32 to vector<16x128xf32>
    %631 = arith.subf %630, %623 : vector<16x128xf32>
    %632 = arith.mulf %631, %629 : vector<16x128xf32>
    %633 = arith.mulf %623, %557 : vector<16x128xf32>
    %634 = arith.addf %632, %633 : vector<16x128xf32>
    %635 = arith.truncf %603 : vector<16x128xf32> to vector<16x128xbf16>
    %636 = arith.index_cast %c7_i32_144 : i32 to index
    %c0_158 = arith.constant 0 : index
    %c0_159 = arith.constant 0 : index
    %637 = vector.load %arg9[%636, %c0_158, %c0_159] : memref<8x16x256xbf16, #tpu.memory_space<vmem>>, vector<1x16x128xbf16>
    %638 = vector.shape_cast %637 : vector<1x16x128xbf16> to vector<16x128xbf16>
    %639 = vector.shape_cast %635 : vector<16x128xbf16> to vector<1x16x128xbf16>
    tpu.vector_store %arg9[%636, %c0_158, %c0_159], %639 {strides = array<i32>} : memref<8x16x256xbf16, #tpu.memory_space<vmem>>, vector<1x16x128xbf16>,
    %640 = arith.truncf %634 : vector<16x128xf32> to vector<16x128xbf16>
    %641 = arith.index_cast %568 : i32 to index
    %c0_160 = arith.constant 0 : index
    %c128_161 = arith.constant 128 : index
    %642 = vector.load %arg9[%641, %c0_160, %c128_161] : memref<8x16x256xbf16, #tpu.memory_space<vmem>>, vector<1x16x128xbf16>
    %643 = vector.shape_cast %642 : vector<1x16x128xbf16> to vector<16x128xbf16>
    %644 = vector.shape_cast %640 : vector<16x128xbf16> to vector<1x16x128xbf16>
    tpu.vector_store %arg9[%641, %c0_160, %c128_161], %644 {strides = array<i32>} : memref<8x16x256xbf16, #tpu.memory_space<vmem>>, vector<1x16x128xbf16>,
    %c8_i32 = arith.constant 8 : i32
    return
  }
  func.func @transform_0(%arg0: i32) -> (i32, i32, i32) {
    %c0_i32 = arith.constant 0 : i32
    %c0_i32_0 = arith.constant 0 : i32
    %c0_i32_1 = arith.constant 0 : i32
    return %c0_i32, %arg0, %c0_i32_0 : i32, i32, i32
  }
  func.func @transform_1(%arg0: i32) -> (i32, i32) {
    %c0_i32 = arith.constant 0 : i32
    %c0_i32_0 = arith.constant 0 : i32
    %c0_i32_1 = arith.constant 0 : i32
    return %c0_i32, %c0_i32_0 : i32, i32
  }
  func.func @transform_2(%arg0: i32) -> (i32, i32) {
    %c0_i32 = arith.constant 0 : i32
    %c0_i32_0 = arith.constant 0 : i32
    %c0_i32_1 = arith.constant 0 : i32
    return %c0_i32, %c0_i32_0 : i32, i32
  }
  func.func @transform_3(%arg0: i32) -> (i32, i32, i32) {
    %c0_i32 = arith.constant 0 : i32
    %c0_i32_0 = arith.constant 0 : i32
    %c0_i32_1 = arith.constant 0 : i32
    %c0_i32_2 = arith.constant 0 : i32
    return %c0_i32, %c0_i32_0, %c0_i32_1 : i32, i32, i32
  }
  func.func @transform_4(%arg0: i32) -> (i32, i32) {
    %c0_i32 = arith.constant 0 : i32
    %c0_i32_0 = arith.constant 0 : i32
    %c0_i32_1 = arith.constant 0 : i32
    return %c0_i32, %c0_i32_0 : i32, i32
  }
  func.func @transform_5(%arg0: i32) -> (i32, i32) {
    %c0_i32 = arith.constant 0 : i32
    %c0_i32_0 = arith.constant 0 : i32
    %c0_i32_1 = arith.constant 0 : i32
    return %c0_i32, %c0_i32_0 : i32, i32
  }
  func.func @transform_6(%arg0: i32) -> (i32, i32) {
    %c0_i32 = arith.constant 0 : i32
    %c0_i32_0 = arith.constant 0 : i32
    %c0_i32_1 = arith.constant 0 : i32
    return %c0_i32, %c0_i32_0 : i32, i32
  }
  func.func @transform_7(%arg0: i32) -> (i32, i32) {
    %c0_i32 = arith.constant 0 : i32
    %c0_i32_0 = arith.constant 0 : i32
    %c0_i32_1 = arith.constant 0 : i32
    return %c0_i32, %c0_i32_0 : i32, i32
  }
  func.func @transform_8(%arg0: i32) -> (i32, i32, i32) {
    %c0_i32 = arith.constant 0 : i32
    %c0_i32_0 = arith.constant 0 : i32
    %c0_i32_1 = arith.constant 0 : i32
    return %c0_i32, %arg0, %c0_i32_0 : i32, i32, i32
  }
}

module attributes {stable_mosaic.version = 11 : i64} {
  func.func @_bigru_last_head_kernel(%arg0: i32, %arg1: memref<8x16x256xbf16, #tpu.memory_space<vmem>>, %arg2: memref<256x384xbf16, #tpu.memory_space<vmem>>, %arg3: memref<256x384xbf16, #tpu.memory_space<vmem>>, %arg4: memref<2x128x384xbf16, #tpu.memory_space<vmem>>, %arg5: memref<1x384xf32, #tpu.memory_space<vmem>>, %arg6: memref<1x384xf32, #tpu.memory_space<vmem>>, %arg7: memref<1x128xf32, #tpu.memory_space<vmem>>, %arg8: memref<1x128xf32, #tpu.memory_space<vmem>>, %arg9: memref<128x128xbf16, #tpu.memory_space<vmem>>, %arg10: memref<128x128xbf16, #tpu.memory_space<vmem>>, %arg11: memref<1x128xf32, #tpu.memory_space<vmem>>, %arg12: memref<16x128xf32, #tpu.memory_space<vmem>>, %arg13: memref<8x16x384xbf16, #tpu.memory_space<vmem>>) attributes {dimension_semantics = [#tpu.dimension_semantics<parallel>], iteration_bounds = array<i64: 1>, scalar_prefetch = 0 : i64, scratch_operands = 1 : i64, tpu.core_type = #tpu.core_type<tc>, window_params = [{transform_indices = @transform_0, window_bounds = array<i64: 8, 16, 256>}, {pipeline_mode = #tpu.pipeline_mode<synchronous>, transform_indices = @transform_1, window_bounds = array<i64: 256, 384>}, {pipeline_mode = #tpu.pipeline_mode<synchronous>, transform_indices = @transform_2, window_bounds = array<i64: 256, 384>}, {pipeline_mode = #tpu.pipeline_mode<synchronous>, transform_indices = @transform_3, window_bounds = array<i64: 2, 128, 384>}, {pipeline_mode = #tpu.pipeline_mode<synchronous>, transform_indices = @transform_4, window_bounds = array<i64: 1, 384>}, {pipeline_mode = #tpu.pipeline_mode<synchronous>, transform_indices = @transform_5, window_bounds = array<i64: 1, 384>}, {pipeline_mode = #tpu.pipeline_mode<synchronous>, transform_indices = @transform_6, window_bounds = array<i64: 1, 128>}, {pipeline_mode = #tpu.pipeline_mode<synchronous>, transform_indices = @transform_7, window_bounds = array<i64: 1, 128>}, {pipeline_mode = #tpu.pipeline_mode<synchronous>, transform_indices = @transform_8, window_bounds = array<i64: 128, 128>}, {pipeline_mode = #tpu.pipeline_mode<synchronous>, transform_indices = @transform_9, window_bounds = array<i64: 128, 128>}, {pipeline_mode = #tpu.pipeline_mode<synchronous>, transform_indices = @transform_10, window_bounds = array<i64: 1, 128>}, {transform_indices = @transform_11, window_bounds = array<i64: 16, 128>}]} {
    %c0 = arith.constant 0 : index
    %c0_0 = arith.constant 0 : index
    %c0_1 = arith.constant 0 : index
    %0 = vector.load %arg1[%c0, %c0_0, %c0_1] : memref<8x16x256xbf16, #tpu.memory_space<vmem>>, vector<8x16x256xbf16>
    %1 = vector.shape_cast %0 : vector<8x16x256xbf16> to vector<128x256xbf16>
    %c0_2 = arith.constant 0 : index
    %c0_3 = arith.constant 0 : index
    %2 = vector.load %arg2[%c0_2, %c0_3] : memref<256x384xbf16, #tpu.memory_space<vmem>>, vector<256x384xbf16>
    %cst = arith.constant dense<0.000000e+00> : vector<128x384xf32>
    %3 = tpu.matmul %1, %2, %cst {dimension_numbers = #tpu.dot_dimension_numbers<[1], [0], [0], [1], [0, 0, 1, 1], [], []>} : vector<128x256xbf16>, vector<256x384xbf16>, vector<128x384xf32> -> vector<128x384xf32>
    %c0_4 = arith.constant 0 : index
    %c0_5 = arith.constant 0 : index
    %4 = vector.load %arg5[%c0_4, %c0_5] : memref<1x384xf32, #tpu.memory_space<vmem>>, vector<1x384xf32>
    %5 = vector.broadcast %4 : vector<1x384xf32> to vector<128x384xf32>
    %6 = arith.addf %3, %5 : vector<128x384xf32>
    %7 = vector.shape_cast %6 : vector<128x384xf32> to vector<8x16x384xf32>
    %8 = arith.truncf %7 : vector<8x16x384xf32> to vector<8x16x384xbf16>
    %c0_6 = arith.constant 0 : index
    %c0_7 = arith.constant 0 : index
    %c0_8 = arith.constant 0 : index
    %9 = vector.load %arg13[%c0_6, %c0_7, %c0_8] : memref<8x16x384xbf16, #tpu.memory_space<vmem>>, vector<8x16x384xbf16>
    tpu.vector_store %arg13[%c0_6, %c0_7, %c0_8], %8 {strides = array<i32>} : memref<8x16x384xbf16, #tpu.memory_space<vmem>>, vector<8x16x384xbf16>,
    %c0_9 = arith.constant 0 : index
    %c0_10 = arith.constant 0 : index
    %10 = vector.load %arg7[%c0_9, %c0_10] : memref<1x128xf32, #tpu.memory_space<vmem>>, vector<1x128xf32>
    %11 = vector.shape_cast %10 : vector<1x128xf32> to vector<1x128xf32>
    %12 = vector.broadcast %11 : vector<1x128xf32> to vector<16x128xf32>
    %c0_11 = arith.constant 0 : index
    %c0_12 = arith.constant 0 : index
    %13 = vector.load %arg8[%c0_11, %c0_12] : memref<1x128xf32, #tpu.memory_space<vmem>>, vector<1x128xf32>
    %14 = vector.shape_cast %13 : vector<1x128xf32> to vector<1x128xf32>
    %15 = vector.broadcast %14 : vector<1x128xf32> to vector<16x128xf32>
    %c0_13 = arith.constant 0 : index
    %c0_14 = arith.constant 0 : index
    %c0_15 = arith.constant 0 : index
    %16 = vector.load %arg4[%c0_13, %c0_14, %c0_15] : memref<2x128x384xbf16, #tpu.memory_space<vmem>>, vector<1x128x384xbf16>
    %17 = vector.shape_cast %16 : vector<1x128x384xbf16> to vector<128x384xbf16>
    %cst_16 = arith.constant 0.000000e+00 : f32
    %18 = vector.broadcast %cst_16 : f32 to vector<16x128xf32>
    %c0_i32 = arith.constant 0 : i32
    %19 = arith.truncf %18 : vector<16x128xf32> to vector<16x128xbf16>
    %cst_17 = arith.constant dense<0.000000e+00> : vector<16x384xf32>
    %20 = tpu.matmul %19, %17, %cst_17 {dimension_numbers = #tpu.dot_dimension_numbers<[1], [0], [0], [1], [0, 0, 1, 1], [], []>} : vector<16x128xbf16>, vector<128x384xbf16>, vector<16x384xf32> -> vector<16x384xf32>
    %21 = arith.index_cast %c0_i32 : i32 to index
    %c0_18 = arith.constant 0 : index
    %c0_19 = arith.constant 0 : index
    %22 = vector.load %arg13[%21, %c0_18, %c0_19] : memref<8x16x384xbf16, #tpu.memory_space<vmem>>, vector<1x16x384xbf16>
    %23 = vector.shape_cast %22 : vector<1x16x384xbf16> to vector<16x384xbf16>
    %24 = arith.extf %23 : vector<16x384xbf16> to vector<16x384xf32>
    %25 = vector.extract_strided_slice %24 {offsets = [0, 0], sizes = [16, 128], strides = [1, 1]} : vector<16x384xf32> to vector<16x128xf32>
    %26 = vector.extract_strided_slice %20 {offsets = [0, 0], sizes = [16, 128], strides = [1, 1]} : vector<16x384xf32> to vector<16x128xf32>
    %27 = arith.addf %25, %26 : vector<16x128xf32>
    %28 = arith.negf %27 : vector<16x128xf32>
    %29 = math.exp %28 : vector<16x128xf32>
    %cst_20 = arith.constant 1.000000e+00 : f32
    %30 = vector.broadcast %cst_20 : f32 to vector<16x128xf32>
    %31 = arith.addf %30, %29 : vector<16x128xf32>
    %32 = arith.divf %30, %31 : vector<16x128xf32>
    %33 = vector.extract_strided_slice %24 {offsets = [0, 128], sizes = [16, 128], strides = [1, 1]} : vector<16x384xf32> to vector<16x128xf32>
    %34 = vector.extract_strided_slice %20 {offsets = [0, 128], sizes = [16, 128], strides = [1, 1]} : vector<16x384xf32> to vector<16x128xf32>
    %35 = arith.addf %33, %34 : vector<16x128xf32>
    %36 = arith.negf %35 : vector<16x128xf32>
    %37 = math.exp %36 : vector<16x128xf32>
    %cst_21 = arith.constant 1.000000e+00 : f32
    %38 = vector.broadcast %cst_21 : f32 to vector<16x128xf32>
    %39 = arith.addf %38, %37 : vector<16x128xf32>
    %40 = arith.divf %38, %39 : vector<16x128xf32>
    %41 = vector.extract_strided_slice %24 {offsets = [0, 256], sizes = [16, 128], strides = [1, 1]} : vector<16x384xf32> to vector<16x128xf32>
    %42 = vector.extract_strided_slice %20 {offsets = [0, 256], sizes = [16, 128], strides = [1, 1]} : vector<16x384xf32> to vector<16x128xf32>
    %43 = arith.addf %42, %12 : vector<16x128xf32>
    %44 = arith.mulf %32, %43 : vector<16x128xf32>
    %45 = arith.addf %41, %44 : vector<16x128xf32>
    %46 = math.tanh %45 : vector<16x128xf32>
    %cst_22 = arith.constant 1.000000e+00 : f32
    %47 = vector.broadcast %cst_22 : f32 to vector<16x128xf32>
    %48 = arith.subf %47, %40 : vector<16x128xf32>
    %49 = arith.mulf %48, %46 : vector<16x128xf32>
    %50 = arith.mulf %40, %18 : vector<16x128xf32>
    %51 = arith.addf %49, %50 : vector<16x128xf32>
    %c1_i32 = arith.constant 1 : i32
    %52 = arith.truncf %51 : vector<16x128xf32> to vector<16x128xbf16>
    %cst_23 = arith.constant dense<0.000000e+00> : vector<16x384xf32>
    %53 = tpu.matmul %52, %17, %cst_23 {dimension_numbers = #tpu.dot_dimension_numbers<[1], [0], [0], [1], [0, 0, 1, 1], [], []>} : vector<16x128xbf16>, vector<128x384xbf16>, vector<16x384xf32> -> vector<16x384xf32>
    %54 = arith.index_cast %c1_i32 : i32 to index
    %c0_24 = arith.constant 0 : index
    %c0_25 = arith.constant 0 : index
    %55 = vector.load %arg13[%54, %c0_24, %c0_25] : memref<8x16x384xbf16, #tpu.memory_space<vmem>>, vector<1x16x384xbf16>
    %56 = vector.shape_cast %55 : vector<1x16x384xbf16> to vector<16x384xbf16>
    %57 = arith.extf %56 : vector<16x384xbf16> to vector<16x384xf32>
    %58 = vector.extract_strided_slice %57 {offsets = [0, 0], sizes = [16, 128], strides = [1, 1]} : vector<16x384xf32> to vector<16x128xf32>
    %59 = vector.extract_strided_slice %53 {offsets = [0, 0], sizes = [16, 128], strides = [1, 1]} : vector<16x384xf32> to vector<16x128xf32>
    %60 = arith.addf %58, %59 : vector<16x128xf32>
    %61 = arith.negf %60 : vector<16x128xf32>
    %62 = math.exp %61 : vector<16x128xf32>
    %cst_26 = arith.constant 1.000000e+00 : f32
    %63 = vector.broadcast %cst_26 : f32 to vector<16x128xf32>
    %64 = arith.addf %63, %62 : vector<16x128xf32>
    %65 = arith.divf %63, %64 : vector<16x128xf32>
    %66 = vector.extract_strided_slice %57 {offsets = [0, 128], sizes = [16, 128], strides = [1, 1]} : vector<16x384xf32> to vector<16x128xf32>
    %67 = vector.extract_strided_slice %53 {offsets = [0, 128], sizes = [16, 128], strides = [1, 1]} : vector<16x384xf32> to vector<16x128xf32>
    %68 = arith.addf %66, %67 : vector<16x128xf32>
    %69 = arith.negf %68 : vector<16x128xf32>
    %70 = math.exp %69 : vector<16x128xf32>
    %cst_27 = arith.constant 1.000000e+00 : f32
    %71 = vector.broadcast %cst_27 : f32 to vector<16x128xf32>
    %72 = arith.addf %71, %70 : vector<16x128xf32>
    %73 = arith.divf %71, %72 : vector<16x128xf32>
    %74 = vector.extract_strided_slice %57 {offsets = [0, 256], sizes = [16, 128], strides = [1, 1]} : vector<16x384xf32> to vector<16x128xf32>
    %75 = vector.extract_strided_slice %53 {offsets = [0, 256], sizes = [16, 128], strides = [1, 1]} : vector<16x384xf32> to vector<16x128xf32>
    %76 = arith.addf %75, %12 : vector<16x128xf32>
    %77 = arith.mulf %65, %76 : vector<16x128xf32>
    %78 = arith.addf %74, %77 : vector<16x128xf32>
    %79 = math.tanh %78 : vector<16x128xf32>
    %cst_28 = arith.constant 1.000000e+00 : f32
    %80 = vector.broadcast %cst_28 : f32 to vector<16x128xf32>
    %81 = arith.subf %80, %73 : vector<16x128xf32>
    %82 = arith.mulf %81, %79 : vector<16x128xf32>
    %83 = arith.mulf %73, %51 : vector<16x128xf32>
    %84 = arith.addf %82, %83 : vector<16x128xf32>
    %c2_i32 = arith.constant 2 : i32
    %85 = arith.truncf %84 : vector<16x128xf32> to vector<16x128xbf16>
    %cst_29 = arith.constant dense<0.000000e+00> : vector<16x384xf32>
    %86 = tpu.matmul %85, %17, %cst_29 {dimension_numbers = #tpu.dot_dimension_numbers<[1], [0], [0], [1], [0, 0, 1, 1], [], []>} : vector<16x128xbf16>, vector<128x384xbf16>, vector<16x384xf32> -> vector<16x384xf32>
    %87 = arith.index_cast %c2_i32 : i32 to index
    %c0_30 = arith.constant 0 : index
    %c0_31 = arith.constant 0 : index
    %88 = vector.load %arg13[%87, %c0_30, %c0_31] : memref<8x16x384xbf16, #tpu.memory_space<vmem>>, vector<1x16x384xbf16>
    %89 = vector.shape_cast %88 : vector<1x16x384xbf16> to vector<16x384xbf16>
    %90 = arith.extf %89 : vector<16x384xbf16> to vector<16x384xf32>
    %91 = vector.extract_strided_slice %90 {offsets = [0, 0], sizes = [16, 128], strides = [1, 1]} : vector<16x384xf32> to vector<16x128xf32>
    %92 = vector.extract_strided_slice %86 {offsets = [0, 0], sizes = [16, 128], strides = [1, 1]} : vector<16x384xf32> to vector<16x128xf32>
    %93 = arith.addf %91, %92 : vector<16x128xf32>
    %94 = arith.negf %93 : vector<16x128xf32>
    %95 = math.exp %94 : vector<16x128xf32>
    %cst_32 = arith.constant 1.000000e+00 : f32
    %96 = vector.broadcast %cst_32 : f32 to vector<16x128xf32>
    %97 = arith.addf %96, %95 : vector<16x128xf32>
    %98 = arith.divf %96, %97 : vector<16x128xf32>
    %99 = vector.extract_strided_slice %90 {offsets = [0, 128], sizes = [16, 128], strides = [1, 1]} : vector<16x384xf32> to vector<16x128xf32>
    %100 = vector.extract_strided_slice %86 {offsets = [0, 128], sizes = [16, 128], strides = [1, 1]} : vector<16x384xf32> to vector<16x128xf32>
    %101 = arith.addf %99, %100 : vector<16x128xf32>
    %102 = arith.negf %101 : vector<16x128xf32>
    %103 = math.exp %102 : vector<16x128xf32>
    %cst_33 = arith.constant 1.000000e+00 : f32
    %104 = vector.broadcast %cst_33 : f32 to vector<16x128xf32>
    %105 = arith.addf %104, %103 : vector<16x128xf32>
    %106 = arith.divf %104, %105 : vector<16x128xf32>
    %107 = vector.extract_strided_slice %90 {offsets = [0, 256], sizes = [16, 128], strides = [1, 1]} : vector<16x384xf32> to vector<16x128xf32>
    %108 = vector.extract_strided_slice %86 {offsets = [0, 256], sizes = [16, 128], strides = [1, 1]} : vector<16x384xf32> to vector<16x128xf32>
    %109 = arith.addf %108, %12 : vector<16x128xf32>
    %110 = arith.mulf %98, %109 : vector<16x128xf32>
    %111 = arith.addf %107, %110 : vector<16x128xf32>
    %112 = math.tanh %111 : vector<16x128xf32>
    %cst_34 = arith.constant 1.000000e+00 : f32
    %113 = vector.broadcast %cst_34 : f32 to vector<16x128xf32>
    %114 = arith.subf %113, %106 : vector<16x128xf32>
    %115 = arith.mulf %114, %112 : vector<16x128xf32>
    %116 = arith.mulf %106, %84 : vector<16x128xf32>
    %117 = arith.addf %115, %116 : vector<16x128xf32>
    %c3_i32 = arith.constant 3 : i32
    %118 = arith.truncf %117 : vector<16x128xf32> to vector<16x128xbf16>
    %cst_35 = arith.constant dense<0.000000e+00> : vector<16x384xf32>
    %119 = tpu.matmul %118, %17, %cst_35 {dimension_numbers = #tpu.dot_dimension_numbers<[1], [0], [0], [1], [0, 0, 1, 1], [], []>} : vector<16x128xbf16>, vector<128x384xbf16>, vector<16x384xf32> -> vector<16x384xf32>
    %120 = arith.index_cast %c3_i32 : i32 to index
    %c0_36 = arith.constant 0 : index
    %c0_37 = arith.constant 0 : index
    %121 = vector.load %arg13[%120, %c0_36, %c0_37] : memref<8x16x384xbf16, #tpu.memory_space<vmem>>, vector<1x16x384xbf16>
    %122 = vector.shape_cast %121 : vector<1x16x384xbf16> to vector<16x384xbf16>
    %123 = arith.extf %122 : vector<16x384xbf16> to vector<16x384xf32>
    %124 = vector.extract_strided_slice %123 {offsets = [0, 0], sizes = [16, 128], strides = [1, 1]} : vector<16x384xf32> to vector<16x128xf32>
    %125 = vector.extract_strided_slice %119 {offsets = [0, 0], sizes = [16, 128], strides = [1, 1]} : vector<16x384xf32> to vector<16x128xf32>
    %126 = arith.addf %124, %125 : vector<16x128xf32>
    %127 = arith.negf %126 : vector<16x128xf32>
    %128 = math.exp %127 : vector<16x128xf32>
    %cst_38 = arith.constant 1.000000e+00 : f32
    %129 = vector.broadcast %cst_38 : f32 to vector<16x128xf32>
    %130 = arith.addf %129, %128 : vector<16x128xf32>
    %131 = arith.divf %129, %130 : vector<16x128xf32>
    %132 = vector.extract_strided_slice %123 {offsets = [0, 128], sizes = [16, 128], strides = [1, 1]} : vector<16x384xf32> to vector<16x128xf32>
    %133 = vector.extract_strided_slice %119 {offsets = [0, 128], sizes = [16, 128], strides = [1, 1]} : vector<16x384xf32> to vector<16x128xf32>
    %134 = arith.addf %132, %133 : vector<16x128xf32>
    %135 = arith.negf %134 : vector<16x128xf32>
    %136 = math.exp %135 : vector<16x128xf32>
    %cst_39 = arith.constant 1.000000e+00 : f32
    %137 = vector.broadcast %cst_39 : f32 to vector<16x128xf32>
    %138 = arith.addf %137, %136 : vector<16x128xf32>
    %139 = arith.divf %137, %138 : vector<16x128xf32>
    %140 = vector.extract_strided_slice %123 {offsets = [0, 256], sizes = [16, 128], strides = [1, 1]} : vector<16x384xf32> to vector<16x128xf32>
    %141 = vector.extract_strided_slice %119 {offsets = [0, 256], sizes = [16, 128], strides = [1, 1]} : vector<16x384xf32> to vector<16x128xf32>
    %142 = arith.addf %141, %12 : vector<16x128xf32>
    %143 = arith.mulf %131, %142 : vector<16x128xf32>
    %144 = arith.addf %140, %143 : vector<16x128xf32>
    %145 = math.tanh %144 : vector<16x128xf32>
    %cst_40 = arith.constant 1.000000e+00 : f32
    %146 = vector.broadcast %cst_40 : f32 to vector<16x128xf32>
    %147 = arith.subf %146, %139 : vector<16x128xf32>
    %148 = arith.mulf %147, %145 : vector<16x128xf32>
    %149 = arith.mulf %139, %117 : vector<16x128xf32>
    %150 = arith.addf %148, %149 : vector<16x128xf32>
    %c4_i32 = arith.constant 4 : i32
    %151 = arith.truncf %150 : vector<16x128xf32> to vector<16x128xbf16>
    %cst_41 = arith.constant dense<0.000000e+00> : vector<16x384xf32>
    %152 = tpu.matmul %151, %17, %cst_41 {dimension_numbers = #tpu.dot_dimension_numbers<[1], [0], [0], [1], [0, 0, 1, 1], [], []>} : vector<16x128xbf16>, vector<128x384xbf16>, vector<16x384xf32> -> vector<16x384xf32>
    %153 = arith.index_cast %c4_i32 : i32 to index
    %c0_42 = arith.constant 0 : index
    %c0_43 = arith.constant 0 : index
    %154 = vector.load %arg13[%153, %c0_42, %c0_43] : memref<8x16x384xbf16, #tpu.memory_space<vmem>>, vector<1x16x384xbf16>
    %155 = vector.shape_cast %154 : vector<1x16x384xbf16> to vector<16x384xbf16>
    %156 = arith.extf %155 : vector<16x384xbf16> to vector<16x384xf32>
    %157 = vector.extract_strided_slice %156 {offsets = [0, 0], sizes = [16, 128], strides = [1, 1]} : vector<16x384xf32> to vector<16x128xf32>
    %158 = vector.extract_strided_slice %152 {offsets = [0, 0], sizes = [16, 128], strides = [1, 1]} : vector<16x384xf32> to vector<16x128xf32>
    %159 = arith.addf %157, %158 : vector<16x128xf32>
    %160 = arith.negf %159 : vector<16x128xf32>
    %161 = math.exp %160 : vector<16x128xf32>
    %cst_44 = arith.constant 1.000000e+00 : f32
    %162 = vector.broadcast %cst_44 : f32 to vector<16x128xf32>
    %163 = arith.addf %162, %161 : vector<16x128xf32>
    %164 = arith.divf %162, %163 : vector<16x128xf32>
    %165 = vector.extract_strided_slice %156 {offsets = [0, 128], sizes = [16, 128], strides = [1, 1]} : vector<16x384xf32> to vector<16x128xf32>
    %166 = vector.extract_strided_slice %152 {offsets = [0, 128], sizes = [16, 128], strides = [1, 1]} : vector<16x384xf32> to vector<16x128xf32>
    %167 = arith.addf %165, %166 : vector<16x128xf32>
    %168 = arith.negf %167 : vector<16x128xf32>
    %169 = math.exp %168 : vector<16x128xf32>
    %cst_45 = arith.constant 1.000000e+00 : f32
    %170 = vector.broadcast %cst_45 : f32 to vector<16x128xf32>
    %171 = arith.addf %170, %169 : vector<16x128xf32>
    %172 = arith.divf %170, %171 : vector<16x128xf32>
    %173 = vector.extract_strided_slice %156 {offsets = [0, 256], sizes = [16, 128], strides = [1, 1]} : vector<16x384xf32> to vector<16x128xf32>
    %174 = vector.extract_strided_slice %152 {offsets = [0, 256], sizes = [16, 128], strides = [1, 1]} : vector<16x384xf32> to vector<16x128xf32>
    %175 = arith.addf %174, %12 : vector<16x128xf32>
    %176 = arith.mulf %164, %175 : vector<16x128xf32>
    %177 = arith.addf %173, %176 : vector<16x128xf32>
    %178 = math.tanh %177 : vector<16x128xf32>
    %cst_46 = arith.constant 1.000000e+00 : f32
    %179 = vector.broadcast %cst_46 : f32 to vector<16x128xf32>
    %180 = arith.subf %179, %172 : vector<16x128xf32>
    %181 = arith.mulf %180, %178 : vector<16x128xf32>
    %182 = arith.mulf %172, %150 : vector<16x128xf32>
    %183 = arith.addf %181, %182 : vector<16x128xf32>
    %c5_i32 = arith.constant 5 : i32
    %184 = arith.truncf %183 : vector<16x128xf32> to vector<16x128xbf16>
    %cst_47 = arith.constant dense<0.000000e+00> : vector<16x384xf32>
    %185 = tpu.matmul %184, %17, %cst_47 {dimension_numbers = #tpu.dot_dimension_numbers<[1], [0], [0], [1], [0, 0, 1, 1], [], []>} : vector<16x128xbf16>, vector<128x384xbf16>, vector<16x384xf32> -> vector<16x384xf32>
    %186 = arith.index_cast %c5_i32 : i32 to index
    %c0_48 = arith.constant 0 : index
    %c0_49 = arith.constant 0 : index
    %187 = vector.load %arg13[%186, %c0_48, %c0_49] : memref<8x16x384xbf16, #tpu.memory_space<vmem>>, vector<1x16x384xbf16>
    %188 = vector.shape_cast %187 : vector<1x16x384xbf16> to vector<16x384xbf16>
    %189 = arith.extf %188 : vector<16x384xbf16> to vector<16x384xf32>
    %190 = vector.extract_strided_slice %189 {offsets = [0, 0], sizes = [16, 128], strides = [1, 1]} : vector<16x384xf32> to vector<16x128xf32>
    %191 = vector.extract_strided_slice %185 {offsets = [0, 0], sizes = [16, 128], strides = [1, 1]} : vector<16x384xf32> to vector<16x128xf32>
    %192 = arith.addf %190, %191 : vector<16x128xf32>
    %193 = arith.negf %192 : vector<16x128xf32>
    %194 = math.exp %193 : vector<16x128xf32>
    %cst_50 = arith.constant 1.000000e+00 : f32
    %195 = vector.broadcast %cst_50 : f32 to vector<16x128xf32>
    %196 = arith.addf %195, %194 : vector<16x128xf32>
    %197 = arith.divf %195, %196 : vector<16x128xf32>
    %198 = vector.extract_strided_slice %189 {offsets = [0, 128], sizes = [16, 128], strides = [1, 1]} : vector<16x384xf32> to vector<16x128xf32>
    %199 = vector.extract_strided_slice %185 {offsets = [0, 128], sizes = [16, 128], strides = [1, 1]} : vector<16x384xf32> to vector<16x128xf32>
    %200 = arith.addf %198, %199 : vector<16x128xf32>
    %201 = arith.negf %200 : vector<16x128xf32>
    %202 = math.exp %201 : vector<16x128xf32>
    %cst_51 = arith.constant 1.000000e+00 : f32
    %203 = vector.broadcast %cst_51 : f32 to vector<16x128xf32>
    %204 = arith.addf %203, %202 : vector<16x128xf32>
    %205 = arith.divf %203, %204 : vector<16x128xf32>
    %206 = vector.extract_strided_slice %189 {offsets = [0, 256], sizes = [16, 128], strides = [1, 1]} : vector<16x384xf32> to vector<16x128xf32>
    %207 = vector.extract_strided_slice %185 {offsets = [0, 256], sizes = [16, 128], strides = [1, 1]} : vector<16x384xf32> to vector<16x128xf32>
    %208 = arith.addf %207, %12 : vector<16x128xf32>
    %209 = arith.mulf %197, %208 : vector<16x128xf32>
    %210 = arith.addf %206, %209 : vector<16x128xf32>
    %211 = math.tanh %210 : vector<16x128xf32>
    %cst_52 = arith.constant 1.000000e+00 : f32
    %212 = vector.broadcast %cst_52 : f32 to vector<16x128xf32>
    %213 = arith.subf %212, %205 : vector<16x128xf32>
    %214 = arith.mulf %213, %211 : vector<16x128xf32>
    %215 = arith.mulf %205, %183 : vector<16x128xf32>
    %216 = arith.addf %214, %215 : vector<16x128xf32>
    %c6_i32 = arith.constant 6 : i32
    %217 = arith.truncf %216 : vector<16x128xf32> to vector<16x128xbf16>
    %cst_53 = arith.constant dense<0.000000e+00> : vector<16x384xf32>
    %218 = tpu.matmul %217, %17, %cst_53 {dimension_numbers = #tpu.dot_dimension_numbers<[1], [0], [0], [1], [0, 0, 1, 1], [], []>} : vector<16x128xbf16>, vector<128x384xbf16>, vector<16x384xf32> -> vector<16x384xf32>
    %219 = arith.index_cast %c6_i32 : i32 to index
    %c0_54 = arith.constant 0 : index
    %c0_55 = arith.constant 0 : index
    %220 = vector.load %arg13[%219, %c0_54, %c0_55] : memref<8x16x384xbf16, #tpu.memory_space<vmem>>, vector<1x16x384xbf16>
    %221 = vector.shape_cast %220 : vector<1x16x384xbf16> to vector<16x384xbf16>
    %222 = arith.extf %221 : vector<16x384xbf16> to vector<16x384xf32>
    %223 = vector.extract_strided_slice %222 {offsets = [0, 0], sizes = [16, 128], strides = [1, 1]} : vector<16x384xf32> to vector<16x128xf32>
    %224 = vector.extract_strided_slice %218 {offsets = [0, 0], sizes = [16, 128], strides = [1, 1]} : vector<16x384xf32> to vector<16x128xf32>
    %225 = arith.addf %223, %224 : vector<16x128xf32>
    %226 = arith.negf %225 : vector<16x128xf32>
    %227 = math.exp %226 : vector<16x128xf32>
    %cst_56 = arith.constant 1.000000e+00 : f32
    %228 = vector.broadcast %cst_56 : f32 to vector<16x128xf32>
    %229 = arith.addf %228, %227 : vector<16x128xf32>
    %230 = arith.divf %228, %229 : vector<16x128xf32>
    %231 = vector.extract_strided_slice %222 {offsets = [0, 128], sizes = [16, 128], strides = [1, 1]} : vector<16x384xf32> to vector<16x128xf32>
    %232 = vector.extract_strided_slice %218 {offsets = [0, 128], sizes = [16, 128], strides = [1, 1]} : vector<16x384xf32> to vector<16x128xf32>
    %233 = arith.addf %231, %232 : vector<16x128xf32>
    %234 = arith.negf %233 : vector<16x128xf32>
    %235 = math.exp %234 : vector<16x128xf32>
    %cst_57 = arith.constant 1.000000e+00 : f32
    %236 = vector.broadcast %cst_57 : f32 to vector<16x128xf32>
    %237 = arith.addf %236, %235 : vector<16x128xf32>
    %238 = arith.divf %236, %237 : vector<16x128xf32>
    %239 = vector.extract_strided_slice %222 {offsets = [0, 256], sizes = [16, 128], strides = [1, 1]} : vector<16x384xf32> to vector<16x128xf32>
    %240 = vector.extract_strided_slice %218 {offsets = [0, 256], sizes = [16, 128], strides = [1, 1]} : vector<16x384xf32> to vector<16x128xf32>
    %241 = arith.addf %240, %12 : vector<16x128xf32>
    %242 = arith.mulf %230, %241 : vector<16x128xf32>
    %243 = arith.addf %239, %242 : vector<16x128xf32>
    %244 = math.tanh %243 : vector<16x128xf32>
    %cst_58 = arith.constant 1.000000e+00 : f32
    %245 = vector.broadcast %cst_58 : f32 to vector<16x128xf32>
    %246 = arith.subf %245, %238 : vector<16x128xf32>
    %247 = arith.mulf %246, %244 : vector<16x128xf32>
    %248 = arith.mulf %238, %216 : vector<16x128xf32>
    %249 = arith.addf %247, %248 : vector<16x128xf32>
    %c7_i32 = arith.constant 7 : i32
    %250 = arith.truncf %249 : vector<16x128xf32> to vector<16x128xbf16>
    %cst_59 = arith.constant dense<0.000000e+00> : vector<16x384xf32>
    %251 = tpu.matmul %250, %17, %cst_59 {dimension_numbers = #tpu.dot_dimension_numbers<[1], [0], [0], [1], [0, 0, 1, 1], [], []>} : vector<16x128xbf16>, vector<128x384xbf16>, vector<16x384xf32> -> vector<16x384xf32>
    %252 = arith.index_cast %c7_i32 : i32 to index
    %c0_60 = arith.constant 0 : index
    %c0_61 = arith.constant 0 : index
    %253 = vector.load %arg13[%252, %c0_60, %c0_61] : memref<8x16x384xbf16, #tpu.memory_space<vmem>>, vector<1x16x384xbf16>
    %254 = vector.shape_cast %253 : vector<1x16x384xbf16> to vector<16x384xbf16>
    %255 = arith.extf %254 : vector<16x384xbf16> to vector<16x384xf32>
    %256 = vector.extract_strided_slice %255 {offsets = [0, 0], sizes = [16, 128], strides = [1, 1]} : vector<16x384xf32> to vector<16x128xf32>
    %257 = vector.extract_strided_slice %251 {offsets = [0, 0], sizes = [16, 128], strides = [1, 1]} : vector<16x384xf32> to vector<16x128xf32>
    %258 = arith.addf %256, %257 : vector<16x128xf32>
    %259 = arith.negf %258 : vector<16x128xf32>
    %260 = math.exp %259 : vector<16x128xf32>
    %cst_62 = arith.constant 1.000000e+00 : f32
    %261 = vector.broadcast %cst_62 : f32 to vector<16x128xf32>
    %262 = arith.addf %261, %260 : vector<16x128xf32>
    %263 = arith.divf %261, %262 : vector<16x128xf32>
    %264 = vector.extract_strided_slice %255 {offsets = [0, 128], sizes = [16, 128], strides = [1, 1]} : vector<16x384xf32> to vector<16x128xf32>
    %265 = vector.extract_strided_slice %251 {offsets = [0, 128], sizes = [16, 128], strides = [1, 1]} : vector<16x384xf32> to vector<16x128xf32>
    %266 = arith.addf %264, %265 : vector<16x128xf32>
    %267 = arith.negf %266 : vector<16x128xf32>
    %268 = math.exp %267 : vector<16x128xf32>
    %cst_63 = arith.constant 1.000000e+00 : f32
    %269 = vector.broadcast %cst_63 : f32 to vector<16x128xf32>
    %270 = arith.addf %269, %268 : vector<16x128xf32>
    %271 = arith.divf %269, %270 : vector<16x128xf32>
    %272 = vector.extract_strided_slice %255 {offsets = [0, 256], sizes = [16, 128], strides = [1, 1]} : vector<16x384xf32> to vector<16x128xf32>
    %273 = vector.extract_strided_slice %251 {offsets = [0, 256], sizes = [16, 128], strides = [1, 1]} : vector<16x384xf32> to vector<16x128xf32>
    %274 = arith.addf %273, %12 : vector<16x128xf32>
    %275 = arith.mulf %263, %274 : vector<16x128xf32>
    %276 = arith.addf %272, %275 : vector<16x128xf32>
    %277 = math.tanh %276 : vector<16x128xf32>
    %cst_64 = arith.constant 1.000000e+00 : f32
    %278 = vector.broadcast %cst_64 : f32 to vector<16x128xf32>
    %279 = arith.subf %278, %271 : vector<16x128xf32>
    %280 = arith.mulf %279, %277 : vector<16x128xf32>
    %281 = arith.mulf %271, %249 : vector<16x128xf32>
    %282 = arith.addf %280, %281 : vector<16x128xf32>
    %c8_i32 = arith.constant 8 : i32
    %c7 = arith.constant 7 : index
    %c0_65 = arith.constant 0 : index
    %c0_66 = arith.constant 0 : index
    %283 = vector.load %arg1[%c7, %c0_65, %c0_66] : memref<8x16x256xbf16, #tpu.memory_space<vmem>>, vector<1x16x256xbf16>
    %284 = vector.shape_cast %283 : vector<1x16x256xbf16> to vector<16x256xbf16>
    %c0_67 = arith.constant 0 : index
    %c0_68 = arith.constant 0 : index
    %285 = vector.load %arg3[%c0_67, %c0_68] : memref<256x384xbf16, #tpu.memory_space<vmem>>, vector<256x384xbf16>
    %cst_69 = arith.constant dense<0.000000e+00> : vector<16x384xf32>
    %286 = tpu.matmul %284, %285, %cst_69 {dimension_numbers = #tpu.dot_dimension_numbers<[1], [0], [0], [1], [0, 0, 1, 1], [], []>} : vector<16x256xbf16>, vector<256x384xbf16>, vector<16x384xf32> -> vector<16x384xf32>
    %c0_70 = arith.constant 0 : index
    %c0_71 = arith.constant 0 : index
    %287 = vector.load %arg6[%c0_70, %c0_71] : memref<1x384xf32, #tpu.memory_space<vmem>>, vector<1x384xf32>
    %288 = vector.broadcast %287 : vector<1x384xf32> to vector<16x384xf32>
    %289 = arith.addf %286, %288 : vector<16x384xf32>
    %cst_72 = arith.constant 0.000000e+00 : f32
    %290 = vector.broadcast %cst_72 : f32 to vector<16x384xf32>
    %cst_73 = arith.constant 0.000000e+00 : f32
    %291 = vector.broadcast %cst_73 : f32 to vector<16x128xf32>
    %292 = vector.extract_strided_slice %289 {offsets = [0, 0], sizes = [16, 128], strides = [1, 1]} : vector<16x384xf32> to vector<16x128xf32>
    %293 = vector.extract_strided_slice %290 {offsets = [0, 0], sizes = [16, 128], strides = [1, 1]} : vector<16x384xf32> to vector<16x128xf32>
    %294 = arith.addf %292, %293 : vector<16x128xf32>
    %295 = arith.negf %294 : vector<16x128xf32>
    %296 = math.exp %295 : vector<16x128xf32>
    %cst_74 = arith.constant 1.000000e+00 : f32
    %297 = vector.broadcast %cst_74 : f32 to vector<16x128xf32>
    %298 = arith.addf %297, %296 : vector<16x128xf32>
    %299 = arith.divf %297, %298 : vector<16x128xf32>
    %300 = vector.extract_strided_slice %289 {offsets = [0, 128], sizes = [16, 128], strides = [1, 1]} : vector<16x384xf32> to vector<16x128xf32>
    %301 = vector.extract_strided_slice %290 {offsets = [0, 128], sizes = [16, 128], strides = [1, 1]} : vector<16x384xf32> to vector<16x128xf32>
    %302 = arith.addf %300, %301 : vector<16x128xf32>
    %303 = arith.negf %302 : vector<16x128xf32>
    %304 = math.exp %303 : vector<16x128xf32>
    %cst_75 = arith.constant 1.000000e+00 : f32
    %305 = vector.broadcast %cst_75 : f32 to vector<16x128xf32>
    %306 = arith.addf %305, %304 : vector<16x128xf32>
    %307 = arith.divf %305, %306 : vector<16x128xf32>
    %308 = vector.extract_strided_slice %289 {offsets = [0, 256], sizes = [16, 128], strides = [1, 1]} : vector<16x384xf32> to vector<16x128xf32>
    %309 = vector.extract_strided_slice %290 {offsets = [0, 256], sizes = [16, 128], strides = [1, 1]} : vector<16x384xf32> to vector<16x128xf32>
    %310 = arith.addf %309, %15 : vector<16x128xf32>
    %311 = arith.mulf %299, %310 : vector<16x128xf32>
    %312 = arith.addf %308, %311 : vector<16x128xf32>
    %313 = math.tanh %312 : vector<16x128xf32>
    %cst_76 = arith.constant 1.000000e+00 : f32
    %314 = vector.broadcast %cst_76 : f32 to vector<16x128xf32>
    %315 = arith.subf %314, %307 : vector<16x128xf32>
    %316 = arith.mulf %315, %313 : vector<16x128xf32>
    %317 = arith.mulf %307, %291 : vector<16x128xf32>
    %318 = arith.addf %316, %317 : vector<16x128xf32>
    %319 = arith.truncf %282 : vector<16x128xf32> to vector<16x128xbf16>
    %c0_77 = arith.constant 0 : index
    %c0_78 = arith.constant 0 : index
    %320 = vector.load %arg9[%c0_77, %c0_78] : memref<128x128xbf16, #tpu.memory_space<vmem>>, vector<128x128xbf16>
    %cst_79 = arith.constant dense<0.000000e+00> : vector<16x128xf32>
    %321 = tpu.matmul %319, %320, %cst_79 {dimension_numbers = #tpu.dot_dimension_numbers<[1], [0], [0], [1], [0, 0, 1, 1], [], []>} : vector<16x128xbf16>, vector<128x128xbf16>, vector<16x128xf32> -> vector<16x128xf32>
    %322 = arith.truncf %318 : vector<16x128xf32> to vector<16x128xbf16>
    %c0_80 = arith.constant 0 : index
    %c0_81 = arith.constant 0 : index
    %323 = vector.load %arg10[%c0_80, %c0_81] : memref<128x128xbf16, #tpu.memory_space<vmem>>, vector<128x128xbf16>
    %cst_82 = arith.constant dense<0.000000e+00> : vector<16x128xf32>
    %324 = tpu.matmul %322, %323, %cst_82 {dimension_numbers = #tpu.dot_dimension_numbers<[1], [0], [0], [1], [0, 0, 1, 1], [], []>} : vector<16x128xbf16>, vector<128x128xbf16>, vector<16x128xf32> -> vector<16x128xf32>
    %325 = arith.addf %321, %324 : vector<16x128xf32>
    %c0_83 = arith.constant 0 : index
    %c0_84 = arith.constant 0 : index
    %326 = vector.load %arg11[%c0_83, %c0_84] : memref<1x128xf32, #tpu.memory_space<vmem>>, vector<1x128xf32>
    %327 = vector.broadcast %326 : vector<1x128xf32> to vector<16x128xf32>
    %328 = arith.addf %325, %327 : vector<16x128xf32>
    %c0_85 = arith.constant 0 : index
    %c0_86 = arith.constant 0 : index
    %329 = vector.load %arg12[%c0_85, %c0_86] : memref<16x128xf32, #tpu.memory_space<vmem>>, vector<16x128xf32>
    tpu.vector_store %arg12[%c0_85, %c0_86], %328 {strides = array<i32>} : memref<16x128xf32, #tpu.memory_space<vmem>>, vector<16x128xf32>,
    return
  }
  func.func @transform_0(%arg0: i32) -> (i32, i32, i32) {
    %c0_i32 = arith.constant 0 : i32
    %c0_i32_0 = arith.constant 0 : i32
    %c0_i32_1 = arith.constant 0 : i32
    return %c0_i32, %arg0, %c0_i32_0 : i32, i32, i32
  }
  func.func @transform_1(%arg0: i32) -> (i32, i32) {
    %c0_i32 = arith.constant 0 : i32
    %c0_i32_0 = arith.constant 0 : i32
    %c0_i32_1 = arith.constant 0 : i32
    return %c0_i32, %c0_i32_0 : i32, i32
  }
  func.func @transform_2(%arg0: i32) -> (i32, i32) {
    %c0_i32 = arith.constant 0 : i32
    %c0_i32_0 = arith.constant 0 : i32
    %c0_i32_1 = arith.constant 0 : i32
    return %c0_i32, %c0_i32_0 : i32, i32
  }
  func.func @transform_3(%arg0: i32) -> (i32, i32, i32) {
    %c0_i32 = arith.constant 0 : i32
    %c0_i32_0 = arith.constant 0 : i32
    %c0_i32_1 = arith.constant 0 : i32
    %c0_i32_2 = arith.constant 0 : i32
    return %c0_i32, %c0_i32_0, %c0_i32_1 : i32, i32, i32
  }
  func.func @transform_4(%arg0: i32) -> (i32, i32) {
    %c0_i32 = arith.constant 0 : i32
    %c0_i32_0 = arith.constant 0 : i32
    %c0_i32_1 = arith.constant 0 : i32
    return %c0_i32, %c0_i32_0 : i32, i32
  }
  func.func @transform_5(%arg0: i32) -> (i32, i32) {
    %c0_i32 = arith.constant 0 : i32
    %c0_i32_0 = arith.constant 0 : i32
    %c0_i32_1 = arith.constant 0 : i32
    return %c0_i32, %c0_i32_0 : i32, i32
  }
  func.func @transform_6(%arg0: i32) -> (i32, i32) {
    %c0_i32 = arith.constant 0 : i32
    %c0_i32_0 = arith.constant 0 : i32
    %c0_i32_1 = arith.constant 0 : i32
    return %c0_i32, %c0_i32_0 : i32, i32
  }
  func.func @transform_7(%arg0: i32) -> (i32, i32) {
    %c0_i32 = arith.constant 0 : i32
    %c0_i32_0 = arith.constant 0 : i32
    %c0_i32_1 = arith.constant 0 : i32
    return %c0_i32, %c0_i32_0 : i32, i32
  }
  func.func @transform_8(%arg0: i32) -> (i32, i32) {
    %c0_i32 = arith.constant 0 : i32
    %c0_i32_0 = arith.constant 0 : i32
    %c0_i32_1 = arith.constant 0 : i32
    return %c0_i32, %c0_i32_0 : i32, i32
  }
  func.func @transform_9(%arg0: i32) -> (i32, i32) {
    %c0_i32 = arith.constant 0 : i32
    %c0_i32_0 = arith.constant 0 : i32
    %c0_i32_1 = arith.constant 0 : i32
    return %c0_i32, %c0_i32_0 : i32, i32
  }
  func.func @transform_10(%arg0: i32) -> (i32, i32) {
    %c0_i32 = arith.constant 0 : i32
    %c0_i32_0 = arith.constant 0 : i32
    %c0_i32_1 = arith.constant 0 : i32
    return %c0_i32, %c0_i32_0 : i32, i32
  }
  func.func @transform_11(%arg0: i32) -> (i32, i32) {
    %c0_i32 = arith.constant 0 : i32
    %c0_i32_0 = arith.constant 0 : i32
    return %arg0, %c0_i32 : i32, i32
  }
}

</mosaic_0001>

<llo_original>
// kernel: bigru_forward.2
$region0: #{bigru_forward.2}
  #allocation0 [shape = 'u32[]', space=smem, size = 0x4, offset = 0x4, fixed_abs, tag = 'smem constant byte address 0x4 - core index']
  #allocation1 [shape = 'u32[144,128]{1,0:T(1,128)}', space=vmem, size = 0x12000, scoped, tag = 'internal scratch']
  #allocation2 [shape = 'bf16[8,16,384]{2,1,0:T(8,128)(2,1)}', space=vmem, size = 0x18000, scoped, tag = 'scratch operand']
  #allocation3 [shape = 'bf16[8,16,384]{2,1,0:T(8,128)(2,1)}', space=vmem, size = 0x18000, scoped, tag = 'scratch operand']
  %s0 = inlined_call_operand.vmem [shape: bf16[8,16,128], index: 0, kind: input, shape index: {}]
  %s1 = inlined_call_operand.hbm [shape: bf16[128,384], index: 1, kind: input, shape index: {}]
  %s2 = inlined_call_operand.hbm [shape: bf16[128,384], index: 2, kind: input, shape index: {}]
  %s3 = inlined_call_operand.hbm [shape: bf16[2,128,384], index: 3, kind: input, shape index: {}]
  %s4 = inlined_call_operand.vmem [shape: f32[1,384], index: 4, kind: input, shape index: {}]
  %s5 = inlined_call_operand.vmem [shape: f32[1,384], index: 5, kind: input, shape index: {}]
  %s6 = inlined_call_operand.vmem [shape: f32[1,128], index: 6, kind: input, shape index: {}]
  %s7 = inlined_call_operand.vmem [shape: f32[1,128], index: 7, kind: input, shape index: {}]
  %s8 = inlined_call_operand.vmem [shape: bf16[8,16,256], index: 8, kind: output, shape index: {}]
  %s9 = sld [smem:[#allocation0]]
  $region54: #{bigru_forward.2} parent=0
    _
  %s11 = ssub.s32 1, %s9
  %s12 = scalar_select 0, %s11, %s9
  $region1: #{bigru_forward.2} parent=0
    #allocation4 [shape = 'u8[98304]{0}', space=vmem, size = 0x18000, scoped, tag = 'input window, operand 1, single buffered']
    #allocation5 [shape = 's32[1]{0}', space=sflag, size = 0x4, scoped, tag = 'scoped memory for bigru_forward.2']
    #allocation6 [shape = 'u8[98304]{0}', space=vmem, size = 0x18000, scoped, tag = 'input window, operand 2, single buffered']
    #allocation7 [shape = 's32[1]{0}', space=sflag, size = 0x4, scoped, tag = 'scoped memory for bigru_forward.2']
    #allocation8 [shape = 'u8[196608]{0}', space=vmem, size = 0x30000, scoped, tag = 'input window, operand 3, single buffered']
    %13 = vsyncpa [#allocation5], 0
    %14 = vsyncpa [#allocation7], 0
    // Predicated region
    $region2: #{bigru_forward.2} parent=1 // pred_check
      _
    $region3: #{bigru_forward.2} parent=1 // pred_check_branch
      %16 = sbr.rel (0) target = $region5
    $region4: #{bigru_forward.2} parent=1 // pred_region
      _
    $region5: #{bigru_forward.2} parent=1 // pred_fallthru
      _
    // Predicated region
    $region6: #{bigru_forward.2} parent=1 // pred_check
      _
    $region7: #{bigru_forward.2} parent=1 // pred_check_branch
      %18 = sbr.rel (0) target = $region9
    $region8: #{bigru_forward.2} parent=1 // pred_region
      %s20 = ssub.s32 3072, 3072
      %21 = vsyncadd [#allocation5], %s20
      %s22 = sshll.u32 [#allocation4], 4
      %s23 = int_to_ptr.vmem [resolvable:$true] %s22
      %28 = dma.hbm_to_vmem [thread:$0]  %s1, 3072, %s23, [#allocation5], 192, 192, 12
    $region9: #{bigru_forward.2} parent=1 // pred_fallthru
      _
    // Predicated region
    $region10: #{bigru_forward.2} parent=1 // pred_check
      _
    $region11: #{bigru_forward.2} parent=1 // pred_check_branch
      %30 = sbr.rel (0) target = $region13
    $region12: #{bigru_forward.2} parent=1 // pred_region
      %s32 = ssub.s32 3072, 3072
      %33 = vsyncadd [#allocation7], %s32
      %s34 = sshll.u32 [#allocation6], 4
      %s35 = int_to_ptr.vmem [resolvable:$true] %s34
      %40 = dma.hbm_to_vmem [thread:$0]  %s2, 3072, %s35, [#allocation7], 192, 192, 12
    $region13: #{bigru_forward.2} parent=1 // pred_fallthru
      _
    // Predicated region
    $region14: #{bigru_forward.2} parent=1 // pred_check
      _
    $region15: #{bigru_forward.2} parent=1 // pred_check_branch
      %42 = sbr.rel (0) target = $region17
    $region16: #{bigru_forward.2} parent=1 // pred_region
      %s44 = ssub.s32 6144, 6144
      %45 = vsyncadd [#allocation7], %s44
      %s46 = sshll.u32 [#allocation8], 4
      %s47 = int_to_ptr.vmem [resolvable:$true] %s46
      %52 = dma.hbm_to_vmem [thread:$0]  %s3, 6144, %s47, [#allocation7], 192, 192, 12
    $region17: #{bigru_forward.2} parent=1 // pred_fallthru
      _
    // Predicated region
    $region18: #{bigru_forward.2} parent=1 // pred_check
      _
    $region19: #{bigru_forward.2} parent=1 // pred_check_branch
      %54 = sbr.rel (0) target = $region21
    $region20: #{bigru_forward.2} parent=1 // pred_region
      _
    $region21: #{bigru_forward.2} parent=1 // pred_fallthru
      _
    // Predicated region
    $region22: #{bigru_forward.2} parent=1 // pred_check
      _
    $region23: #{bigru_forward.2} parent=1 // pred_check_branch
      %56 = sbr.rel (0) target = $region25
    $region24: #{bigru_forward.2} parent=1 // pred_region
      _
    $region25: #{bigru_forward.2} parent=1 // pred_fallthru
      _
    // Predicated region
    $region26: #{bigru_forward.2} parent=1 // pred_check
      _
    $region27: #{bigru_forward.2} parent=1 // pred_check_branch
      %58 = sbr.rel (0) target = $region29
    $region28: #{bigru_forward.2} parent=1 // pred_region
      _
    $region29: #{bigru_forward.2} parent=1 // pred_fallthru
      _
    // Predicated region
    $region30: #{bigru_forward.2} parent=1 // pred_check
      _
    $region31: #{bigru_forward.2} parent=1 // pred_check_branch
      %60 = sbr.rel (0) target = $region33
    $region32: #{bigru_forward.2} parent=1 // pred_region
      _
    $region33: #{bigru_forward.2} parent=1 // pred_fallthru
      _
    // Predicated region
    $region34: #{bigru_forward.2} parent=1 // pred_check
      _
    $region35: #{bigru_forward.2} parent=1 // pred_check_branch
      %62 = sbr.rel (0) target = $region37
    $region36: #{bigru_forward.2} parent=1 // pred_region
      %63 = dma.done [#allocation5], 3072
    $region37: #{bigru_forward.2} parent=1 // pred_fallthru
      _
    // Predicated region
    $region38: #{bigru_forward.2} parent=1 // pred_check
      _
    $region39: #{bigru_forward.2} parent=1 // pred_check_branch
      %65 = sbr.rel (0) target = $region41
    $region40: #{bigru_forward.2} parent=1 // pred_region
      %66 = dma.done [#allocation7], 3072
    $region41: #{bigru_forward.2} parent=1 // pred_fallthru
      _
    // Predicated region
    $region42: #{bigru_forward.2} parent=1 // pred_check
      _
    $region43: #{bigru_forward.2} parent=1 // pred_check_branch
      %68 = sbr.rel (0) target = $region45
    $region44: #{bigru_forward.2} parent=1 // pred_region
      %69 = dma.done [#allocation7], 6144
    $region45: #{bigru_forward.2} parent=1 // pred_fallthru
      _
    %v71 = vld [vmem:[%s0] sm:$0xf]
    %v72 = vld [vmem:[%s0 + $0x4] sm:$0xf]
    %v73 = vld [vmem:[%s0 + $0x8] sm:$0xf]
    %v74 = vld [vmem:[%s0 + $0xc] sm:$0xf]
    %v75 = vld [vmem:[%s0 + $0x10] sm:$0xf]
    %v76 = vld [vmem:[%s0 + $0x14] sm:$0xf]
    %v77 = vld [vmem:[%s0 + $0x18] sm:$0xf]
    %v78 = vld [vmem:[%s0 + $0x1c] sm:$0xf]
    %v79 = vld [vmem:[%s0 + $0x20] sm:$0xf]
    %v80 = vld [vmem:[%s0 + $0x24] sm:$0xf]
    %v81 = vld [vmem:[%s0 + $0x28] sm:$0xf]
    %v82 = vld [vmem:[%s0 + $0x2c] sm:$0xf]
    %v83 = vld [vmem:[%s0 + $0x30] sm:$0xf]
    %v84 = vld [vmem:[%s0 + $0x34] sm:$0xf]
    %v85 = vld [vmem:[%s0 + $0x38] sm:$0xf]
    %v86 = vld [vmem:[%s0 + $0x3c] sm:$0xf]
    %v87 = vld [vmem:[#allocation4] sm:$0xff]
    %v88 = vld [vmem:[#allocation4 + $0x8] sm:$0xf]
    %v89 = vld [vmem:[#allocation4 + $0xc] sm:$0xff]
    %v90 = vld [vmem:[#allocation4 + $0x14] sm:$0xf]
    %v91 = vld [vmem:[#allocation4 + $0x18] sm:$0xff]
    %v92 = vld [vmem:[#allocation4 + $0x20] sm:$0xf]
    %v93 = vld [vmem:[#allocation4 + $0x24] sm:$0xff]
    %v94 = vld [vmem:[#allocation4 + $0x2c] sm:$0xf]
    %v95 = vld [vmem:[#allocation4 + $0x30] sm:$0xff]
    %v96 = vld [vmem:[#allocation4 + $0x38] sm:$0xf]
    %v97 = vld [vmem:[#allocation4 + $0x3c] sm:$0xff]
    %v98 = vld [vmem:[#allocation4 + $0x44] sm:$0xf]
    %v99 = vld [vmem:[#allocation4 + $0x48] sm:$0xff]
    %v100 = vld [vmem:[#allocation4 + $0x50] sm:$0xf]
    %v101 = vld [vmem:[#allocation4 + $0x54] sm:$0xff]
    %v102 = vld [vmem:[#allocation4 + $0x5c] sm:$0xf]
    %v103 = vld [vmem:[#allocation4 + $0x60] sm:$0xff]
    %v104 = vld [vmem:[#allocation4 + $0x68] sm:$0xf]
    %v105 = vld [vmem:[#allocation4 + $0x6c] sm:$0xff]
    %v106 = vld [vmem:[#allocation4 + $0x74] sm:$0xf]
    %v107 = vld [vmem:[#allocation4 + $0x78] sm:$0xff]
    %v108 = vld [vmem:[#allocation4 + $0x80] sm:$0xf]
    %v109 = vld [vmem:[#allocation4 + $0x84] sm:$0xff]
    %v110 = vld [vmem:[#allocation4 + $0x8c] sm:$0xf]
    %v111 = vld [vmem:[#allocation4 + $0x90] sm:$0xff]
    %v112 = vld [vmem:[#allocation4 + $0x98] sm:$0xf]
    %v113 = vld [vmem:[#allocation4 + $0x9c] sm:$0xff]
    %v114 = vld [vmem:[#allocation4 + $0xa4] sm:$0xf]
    %v115 = vld [vmem:[#allocation4 + $0xa8] sm:$0xff]
    %v116 = vld [vmem:[#allocation4 + $0xb0] sm:$0xf]
    %v117 = vld [vmem:[#allocation4 + $0xb4] sm:$0xff]
    %v118 = vld [vmem:[#allocation4 + $0xbc] sm:$0xf]
    %v119 = vld [vmem:[#allocation6] sm:$0xff]
    %v120 = vld [vmem:[#allocation6 + $0x8] sm:$0xf]
    %v121 = vld [vmem:[#allocation6 + $0xc] sm:$0xff]
    %v122 = vld [vmem:[#allocation6 + $0x14] sm:$0xf]
    %v123 = vld [vmem:[#allocation6 + $0x18] sm:$0xff]
    %v124 = vld [vmem:[#allocation6 + $0x20] sm:$0xf]
    %v125 = vld [vmem:[#allocation6 + $0x24] sm:$0xff]
    %v126 = vld [vmem:[#allocation6 + $0x2c] sm:$0xf]
    %v127 = vld [vmem:[#allocation6 + $0x30] sm:$0xff]
    %v128 = vld [vmem:[#allocation6 + $0x38] sm:$0xf]
    %v129 = vld [vmem:[#allocation6 + $0x3c] sm:$0xff]
    %v130 = vld [vmem:[#allocation6 + $0x44] sm:$0xf]
    %v131 = vld [vmem:[#allocation6 + $0x48] sm:$0xff]
    %v132 = vld [vmem:[#allocation6 + $0x50] sm:$0xf]
    %v133 = vld [vmem:[#allocation6 + $0x54] sm:$0xff]
    %v134 = vld [vmem:[#allocation6 + $0x5c] sm:$0xf]
    %v135 = vld [vmem:[#allocation6 + $0x60] sm:$0xff]
    %v136 = vld [vmem:[#allocation6 + $0x68] sm:$0xf]
    %v137 = vld [vmem:[#allocation6 + $0x6c] sm:$0xff]
    %v138 = vld [vmem:[#allocation6 + $0x74] sm:$0xf]
    %v139 = vld [vmem:[#allocation6 + $0x78] sm:$0xff]
    %v140 = vld [vmem:[#allocation6 + $0x80] sm:$0xf]
    %v141 = vld [vmem:[#allocation6 + $0x84] sm:$0xff]
    %v142 = vld [vmem:[#allocation6 + $0x8c] sm:$0xf]
    %v143 = vld [vmem:[#allocation6 + $0x90] sm:$0xff]
    %v144 = vld [vmem:[#allocation6 + $0x98] sm:$0xf]
    %v145 = vld [vmem:[#allocation6 + $0x9c] sm:$0xff]
    %v146 = vld [vmem:[#allocation6 + $0xa4] sm:$0xf]
    %v147 = vld [vmem:[#allocation6 + $0xa8] sm:$0xff]
    %v148 = vld [vmem:[#allocation6 + $0xb0] sm:$0xf]
    %v149 = vld [vmem:[#allocation6 + $0xb4] sm:$0xff]
    %v150 = vld [vmem:[#allocation6 + $0xbc] sm:$0xf]
    %v151 = vld [vmem:[%s4] sm:$0x7]
    %v153 = vlaneseq
    %v154 = vshrl.u32 %v153, 7
    %v155 = vsub.s32 0, %v154
    %v156 = vrot.slane %v151, %v155
    %v157 = vlaneseq
    %v158 = vshrl.u32 %v157, 7
    %v159 = vsub.s32 1, %v158
    %v160 = vrot.slane %v151, %v159
    %v161 = vlaneseq
    %v162 = vshrl.u32 %v161, 7
    %v163 = vsub.s32 2, %v162
    %v164 = vrot.slane %v151, %v163
    %v184 = vunpack.c.l.b16 %v71
    %v185 = vunpack.c.l.b16 %v72
    %v186 = vunpack.c.l.b16 %v73
    %v187 = vunpack.c.l.b16 %v74
    %v188 = vunpack.c.l.b16 %v75
    %v189 = vunpack.c.l.b16 %v76
    %v190 = vunpack.c.l.b16 %v77
    %v191 = vunpack.c.l.b16 %v78
    %v192 = vunpack.c.l.b16 %v79
    %v193 = vunpack.c.l.b16 %v80
    %v194 = vunpack.c.l.b16 %v81
    %v195 = vunpack.c.l.b16 %v82
    %v196 = vunpack.c.l.b16 %v83
    %v197 = vunpack.c.l.b16 %v84
    %v198 = vunpack.c.l.b16 %v85
    %v199 = vunpack.c.l.b16 %v86
    %v200 = vpack.c.b16 %v185, %v184
    %v201 = vpack.c.b16 %v187, %v186
    %v202 = vpack.c.b16 %v189, %v188
    %v203 = vpack.c.b16 %v191, %v190
    %v204 = vpack.c.b16 %v193, %v192
    %v205 = vpack.c.b16 %v195, %v194
    %v206 = vpack.c.b16 %v197, %v196
    %v207 = vpack.c.b16 %v199, %v198
    %v248 = vunpack.c.l.b16 %v87
    %v249 = vunpack.c.h.b16 %v87
    %v250 = vunpack.c.l.b16 %v88
    %v251 = vunpack.c.l.b16 %v89
    %v252 = vunpack.c.h.b16 %v89
    %v253 = vunpack.c.l.b16 %v90
    %v254 = vunpack.c.l.b16 %v91
    %v255 = vunpack.c.h.b16 %v91
    %v256 = vunpack.c.l.b16 %v92
    %v257 = vunpack.c.l.b16 %v93
    %v258 = vunpack.c.h.b16 %v93
    %v259 = vunpack.c.l.b16 %v94
    %v260 = vunpack.c.l.b16 %v95
    %v261 = vunpack.c.h.b16 %v95
    %v262 = vunpack.c.l.b16 %v96
    %v263 = vunpack.c.l.b16 %v97
    %v264 = vunpack.c.h.b16 %v97
    %v265 = vunpack.c.l.b16 %v98
    %v266 = vunpack.c.l.b16 %v99
    %v267 = vunpack.c.h.b16 %v99
    %v268 = vunpack.c.l.b16 %v100
    %v269 = vunpack.c.l.b16 %v101
    %v270 = vunpack.c.h.b16 %v101
    %v271 = vunpack.c.l.b16 %v102
    %v272 = vunpack.c.l.b16 %v103
    %v273 = vunpack.c.h.b16 %v103
    %v274 = vunpack.c.l.b16 %v104
    %v275 = vunpack.c.l.b16 %v105
    %v276 = vunpack.c.h.b16 %v105
    %v277 = vunpack.c.l.b16 %v106
    %v278 = vunpack.c.l.b16 %v107
    %v279 = vunpack.c.h.b16 %v107
    %v280 = vunpack.c.l.b16 %v108
    %v281 = vunpack.c.l.b16 %v109
    %v282 = vunpack.c.h.b16 %v109
    %v283 = vunpack.c.l.b16 %v110
    %v284 = vunpack.c.l.b16 %v111
    %v285 = vunpack.c.h.b16 %v111
    %v286 = vunpack.c.l.b16 %v112
    %v287 = vunpack.c.l.b16 %v113
    %v288 = vunpack.c.h.b16 %v113
    %v289 = vunpack.c.l.b16 %v114
    %v290 = vunpack.c.l.b16 %v115
    %v291 = vunpack.c.h.b16 %v115
    %v292 = vunpack.c.l.b16 %v116
    %v293 = vunpack.c.l.b16 %v117
    %v294 = vunpack.c.h.b16 %v117
    %v295 = vunpack.c.l.b16 %v118
    %v296 = vpack.c.b16 %v251, %v248
    %v297 = vpack.c.b16 %v252, %v249
    %v298 = vpack.c.b16 %v253, %v250
    %v299 = vpack.c.b16 %v257, %v254
    %v300 = vpack.c.b16 %v258, %v255
    %v301 = vpack.c.b16 %v259, %v256
    %v302 = vpack.c.b16 %v263, %v260
    %v303 = vpack.c.b16 %v264, %v261
    %v304 = vpack.c.b16 %v265, %v262
    %v305 = vpack.c.b16 %v269, %v266
    %v306 = vpack.c.b16 %v270, %v267
    %v307 = vpack.c.b16 %v271, %v268
    %v308 = vpack.c.b16 %v275, %v272
    %v309 = vpack.c.b16 %v276, %v273
    %v310 = vpack.c.b16 %v277, %v274
    %v311 = vpack.c.b16 %v281, %v278
    %v312 = vpack.c.b16 %v282, %v279
    %v313 = vpack.c.b16 %v283, %v280
    %v314 = vpack.c.b16 %v287, %v284
    %v315 = vpack.c.b16 %v288, %v285
    %v316 = vpack.c.b16 %v289, %v286
    %v317 = vpack.c.b16 %v293, %v290
    %v318 = vpack.c.b16 %v294, %v291
    %v319 = vpack.c.b16 %v295, %v292
    %344 = vmatprep.subr.bf16.mxu0 %v318
    %345 = vmatpush1.bf16.msra.mxu0 %v317
    %346 = vmatprep.subr.bf16.mxu0 %v315
    %347 = vmatpush1.bf16.msra.mxu0 %v314
    %348 = vmatprep.subr.bf16.mxu0 %v312
    %349 = vmatpush1.bf16.msra.mxu0 %v311
    %350 = vmatprep.subr.bf16.mxu0 %v309
    %351 = vmatpush1.bf16.msra.mxu0 %v308
    %352 = vmatprep.subr.bf16.mxu0 %v306
    %353 = vmatpush1.bf16.msra.mxu0 %v305
    %354 = vmatprep.subr.bf16.mxu0 %v303
    %355 = vmatpush1.bf16.msra.mxu0 %v302
    %356 = vmatprep.subr.bf16.mxu0 %v300
    %357 = vmatpush1.bf16.msra.mxu0 %v299
    %358 = vmatprep.subr.bf16.mxu0 %v297
    %359 = vmatpush1.bf16.msra.mxu0 %v296
    %360 = vmatprep.subr.bf16.mxu0 0
    %361 = vmatpush2.bf16.msra.mxu0 0
    %362 = vmatprep.subr.bf16.mxu0 0
    %363 = vmatpush2.bf16.msra.mxu0 0
    %364 = vmatprep.subr.bf16.mxu0 0
    %365 = vmatpush2.bf16.msra.mxu0 0
    %366 = vmatprep.subr.bf16.mxu0 0
    %367 = vmatpush2.bf16.msra.mxu0 0
    %368 = vmatprep.subr.bf16.mxu0 0
    %369 = vmatpush2.bf16.msra.mxu0 0
    %370 = vmatprep.subr.bf16.mxu0 0
    %371 = vmatpush2.bf16.msra.mxu0 0
    %372 = vmatprep.subr.bf16.mxu0 0
    %373 = vmatpush2.bf16.msra.mxu0 0
    %374 = vmatprep.subr.bf16.mxu0 0
    %375 = vmatpush2.bf16.msra.mxu0 0
    %376 = vmatprep.mubr.bf16.mxu0 0
    %377 = vmatmul.mubr.bf16.gmra.mxu0 %v200
    %v378 = vpop.f32.mrf.mxu0
    %v379 = vadd.f32 %v156, %v378
    %v380 = vpop.f32.mrf.mxu0
    %v381 = vadd.f32 %v160, %v380
    %v382 = vpop.f32.mrf.mxu0
    %v383 = vadd.f32 %v156, %v382
    %v384 = vpop.f32.mrf.mxu0
    %v385 = vadd.f32 %v160, %v384
    %386 = vmatprep.mubr.bf16.mxu0 0
    %387 = vmatmul.mubr.bf16.gmra.mxu0 %v201
    %v388 = vpop.f32.mrf.mxu0
    %v389 = vadd.f32 %v156, %v388
    %v390 = vpop.f32.mrf.mxu0
    %v391 = vadd.f32 %v160, %v390
    %v392 = vpop.f32.mrf.mxu0
    %v393 = vadd.f32 %v156, %v392
    %v394 = vpop.f32.mrf.mxu0
    %v395 = vadd.f32 %v160, %v394
    %396 = vmatprep.mubr.bf16.mxu0 0
    %397 = vmatmul.mubr.bf16.gmra.mxu0 %v202
    %v398 = vpop.f32.mrf.mxu0
    %v399 = vadd.f32 %v156, %v398
    %v400 = vpop.f32.mrf.mxu0
    %v401 = vadd.f32 %v160, %v400
    %v402 = vpop.f32.mrf.mxu0
    %v403 = vadd.f32 %v156, %v402
    %v404 = vpop.f32.mrf.mxu0
    %v405 = vadd.f32 %v160, %v404
    %406 = vmatprep.mubr.bf16.mxu0 0
    %407 = vmatmul.mubr.bf16.gmra.mxu0 %v203
    %v408 = vpop.f32.mrf.mxu0
    %v409 = vadd.f32 %v156, %v408
    %v410 = vpop.f32.mrf.mxu0
    %v411 = vadd.f32 %v160, %v410
    %v412 = vpop.f32.mrf.mxu0
    %v413 = vadd.f32 %v156, %v412
    %v414 = vpop.f32.mrf.mxu0
    %v415 = vadd.f32 %v160, %v414
    %416 = vmatprep.mubr.bf16.mxu0 0
    %417 = vmatmul.mubr.bf16.gmra.mxu0 %v204
    %v418 = vpop.f32.mrf.mxu0
    %v419 = vadd.f32 %v156, %v418
    %v420 = vpop.f32.mrf.mxu0
    %v421 = vadd.f32 %v160, %v420
    %v422 = vpop.f32.mrf.mxu0
    %v423 = vadd.f32 %v156, %v422
    %v424 = vpop.f32.mrf.mxu0
    %v425 = vadd.f32 %v160, %v424
    %426 = vmatprep.mubr.bf16.mxu0 0
    %427 = vmatmul.mubr.bf16.gmra.mxu0 %v205
    %v428 = vpop.f32.mrf.mxu0
    %v429 = vadd.f32 %v156, %v428
    %v430 = vpop.f32.mrf.mxu0
    %v431 = vadd.f32 %v160, %v430
    %v432 = vpop.f32.mrf.mxu0
    %v433 = vadd.f32 %v156, %v432
    %v434 = vpop.f32.mrf.mxu0
    %v435 = vadd.f32 %v160, %v434
    %436 = vmatprep.mubr.bf16.mxu0 0
    %437 = vmatmul.mubr.bf16.gmra.mxu0 %v206
    %v438 = vpop.f32.mrf.mxu0
    %v439 = vadd.f32 %v156, %v438
    %v440 = vpop.f32.mrf.mxu0
    %v441 = vadd.f32 %v160, %v440
    %v442 = vpop.f32.mrf.mxu0
    %v443 = vadd.f32 %v156, %v442
    %v444 = vpop.f32.mrf.mxu0
    %v445 = vadd.f32 %v160, %v444
    %446 = vmatprep.mubr.bf16.mxu0 0
    %447 = vmatmul.mubr.bf16.gmra.mxu0 %v207
    %v448 = vpop.f32.mrf.mxu0
    %v449 = vadd.f32 %v156, %v448
    %v450 = vpop.f32.mrf.mxu0
    %v451 = vadd.f32 %v160, %v450
    %v452 = vpop.f32.mrf.mxu0
    %v453 = vadd.f32 %v156, %v452
    %v454 = vpop.f32.mrf.mxu0
    %v455 = vadd.f32 %v160, %v454
    %456 = vdwg.mxu0
    %457 = vmatprep.subr.bf16.mxu0 0
    %458 = vmatpush1.bf16.msra.mxu0 %v319
    %459 = vmatprep.subr.bf16.mxu0 0
    %460 = vmatpush1.bf16.msra.mxu0 %v316
    %461 = vmatprep.subr.bf16.mxu0 0
    %462 = vmatpush1.bf16.msra.mxu0 %v313
    %463 = vmatprep.subr.bf16.mxu0 0
    %464 = vmatpush1.bf16.msra.mxu0 %v310
    %465 = vmatprep.subr.bf16.mxu0 0
    %466 = vmatpush1.bf16.msra.mxu0 %v307
    %467 = vmatprep.subr.bf16.mxu0 0
    %468 = vmatpush1.bf16.msra.mxu0 %v304
    %469 = vmatprep.subr.bf16.mxu0 0
    %470 = vmatpush1.bf16.msra.mxu0 %v301
    %471 = vmatprep.subr.bf16.mxu0 0
    %472 = vmatpush1.bf16.msra.mxu0 %v298
    %473 = vmatprep.subr.bf16.mxu0 0
    %474 = vmatpush2.bf16.msra.mxu0 0
    %475 = vmatprep.subr.bf16.mxu0 0
    %476 = vmatpush2.bf16.msra.mxu0 0
    %477 = vmatprep.subr.bf16.mxu0 0
    %478 = vmatpush2.bf16.msra.mxu0 0
    %479 = vmatprep.subr.bf16.mxu0 0
    %480 = vmatpush2.bf16.msra.mxu0 0
    %481 = vmatprep.subr.bf16.mxu0 0
    %482 = vmatpush2.bf16.msra.mxu0 0
    %483 = vmatprep.subr.bf16.mxu0 0
    %484 = vmatpush2.bf16.msra.mxu0 0
    %485 = vmatprep.subr.bf16.mxu0 0
    %486 = vmatpush2.bf16.msra.mxu0 0
    %487 = vmatprep.subr.bf16.mxu0 0
    %488 = vmatpush2.bf16.msra.mxu0 0
    %489 = vmatprep.mubr.bf16.mxu0 0
    %490 = vmatmul.mubr.bf16.gmra.mxu0 %v200
    %v491 = vpop.f32.mrf.mxu0
    %v492 = vadd.f32 %v164, %v491
    %v493 = vpop.f32.mrf.mxu0
    %v494 = vpop.f32.mrf.mxu0
    %v495 = vadd.f32 %v164, %v494
    %v496 = vpop.f32.mrf.mxu0
    %497 = vmatprep.mubr.bf16.mxu0 0
    %498 = vmatmul.mubr.bf16.gmra.mxu0 %v201
    %v499 = vpop.f32.mrf.mxu0
    %v500 = vadd.f32 %v164, %v499
    %v501 = vpop.f32.mrf.mxu0
    %v502 = vpop.f32.mrf.mxu0
    %v503 = vadd.f32 %v164, %v502
    %v504 = vpop.f32.mrf.mxu0
    %505 = vmatprep.mubr.bf16.mxu0 0
    %506 = vmatmul.mubr.bf16.gmra.mxu0 %v202
    %v507 = vpop.f32.mrf.mxu0
    %v508 = vadd.f32 %v164, %v507
    %v509 = vpop.f32.mrf.mxu0
    %v510 = vpop.f32.mrf.mxu0
    %v511 = vadd.f32 %v164, %v510
    %v512 = vpop.f32.mrf.mxu0
    %513 = vmatprep.mubr.bf16.mxu0 0
    %514 = vmatmul.mubr.bf16.gmra.mxu0 %v203
    %v515 = vpop.f32.mrf.mxu0
    %v516 = vadd.f32 %v164, %v515
    %v517 = vpop.f32.mrf.mxu0
    %v518 = vpop.f32.mrf.mxu0
    %v519 = vadd.f32 %v164, %v518
    %v520 = vpop.f32.mrf.mxu0
    %521 = vmatprep.mubr.bf16.mxu0 0
    %522 = vmatmul.mubr.bf16.gmra.mxu0 %v204
    %v523 = vpop.f32.mrf.mxu0
    %v524 = vadd.f32 %v164, %v523
    %v525 = vpop.f32.mrf.mxu0
    %v526 = vpop.f32.mrf.mxu0
    %v527 = vadd.f32 %v164, %v526
    %v528 = vpop.f32.mrf.mxu0
    %529 = vmatprep.mubr.bf16.mxu0 0
    %530 = vmatmul.mubr.bf16.gmra.mxu0 %v205
    %v531 = vpop.f32.mrf.mxu0
    %v532 = vadd.f32 %v164, %v531
    %v533 = vpop.f32.mrf.mxu0
    %v534 = vpop.f32.mrf.mxu0
    %v535 = vadd.f32 %v164, %v534
    %v536 = vpop.f32.mrf.mxu0
    %537 = vmatprep.mubr.bf16.mxu0 0
    %538 = vmatmul.mubr.bf16.gmra.mxu0 %v206
    %v539 = vpop.f32.mrf.mxu0
    %v540 = vadd.f32 %v164, %v539
    %v541 = vpop.f32.mrf.mxu0
    %v542 = vpop.f32.mrf.mxu0
    %v543 = vadd.f32 %v164, %v542
    %v544 = vpop.f32.mrf.mxu0
    %545 = vmatprep.mubr.bf16.mxu0 0
    %546 = vmatmul.mubr.bf16.gmra.mxu0 %v207
    %v547 = vpop.f32.mrf.mxu0
    %v548 = vadd.f32 %v164, %v547
    %v549 = vpop.f32.mrf.mxu0
    %v550 = vpop.f32.mrf.mxu0
    %v551 = vadd.f32 %v164, %v550
    %v552 = vpop.f32.mrf.mxu0
    %553 = vdwg.mxu0
    %v554 = vpack.c.bf16 %v383, %v379
    %v555 = vpack.c.bf16 %v385, %v381
    %v556 = vpack.c.bf16 %v495, %v492
    %v557 = vpack.c.bf16 %v393, %v389
    %v558 = vpack.c.bf16 %v395, %v391
    %v559 = vpack.c.bf16 %v503, %v500
    %v560 = vpack.c.bf16 %v403, %v399
    %v561 = vpack.c.bf16 %v405, %v401
    %v562 = vpack.c.bf16 %v511, %v508
    %v563 = vpack.c.bf16 %v413, %v409
    %v564 = vpack.c.bf16 %v415, %v411
    %v565 = vpack.c.bf16 %v519, %v516
    %v566 = vpack.c.bf16 %v423, %v419
    %v567 = vpack.c.bf16 %v425, %v421
    %v568 = vpack.c.bf16 %v527, %v524
    %v569 = vpack.c.bf16 %v433, %v429
    %v570 = vpack.c.bf16 %v435, %v431
    %v571 = vpack.c.bf16 %v535, %v532
    %v572 = vpack.c.bf16 %v443, %v439
    %v573 = vpack.c.bf16 %v445, %v441
    %v574 = vpack.c.bf16 %v543, %v540
    %v575 = vpack.c.bf16 %v453, %v449
    %v576 = vpack.c.bf16 %v455, %v451
    %v577 = vpack.c.bf16 %v551, %v548
    %v602 = vunpack.c.l.b16 %v554
    %v603 = vunpack.c.l.b16 %v555
    %v604 = vunpack.c.l.b16 %v556
    %v605 = vunpack.c.h.b16 %v554
    %v606 = vunpack.c.h.b16 %v555
    %v607 = vunpack.c.h.b16 %v556
    %v608 = vunpack.c.l.b16 %v557
    %v609 = vunpack.c.l.b16 %v558
    %v610 = vunpack.c.l.b16 %v559
    %v611 = vunpack.c.h.b16 %v557
    %v612 = vunpack.c.h.b16 %v558
    %v613 = vunpack.c.h.b16 %v559
    %v614 = vunpack.c.l.b16 %v560
    %v615 = vunpack.c.l.b16 %v561
    %v616 = vunpack.c.l.b16 %v562
    %v617 = vunpack.c.h.b16 %v560
    %v618 = vunpack.c.h.b16 %v561
    %v619 = vunpack.c.h.b16 %v562
    %v620 = vunpack.c.l.b16 %v563
    %v621 = vunpack.c.l.b16 %v564
    %v622 = vunpack.c.l.b16 %v565
    %v623 = vunpack.c.h.b16 %v563
    %v624 = vunpack.c.h.b16 %v564
    %v625 = vunpack.c.h.b16 %v565
    %v626 = vunpack.c.l.b16 %v566
    %v627 = vunpack.c.l.b16 %v567
    %v628 = vunpack.c.l.b16 %v568
    %v629 = vunpack.c.h.b16 %v566
    %v630 = vunpack.c.h.b16 %v567
    %v631 = vunpack.c.h.b16 %v568
    %v632 = vunpack.c.l.b16 %v569
    %v633 = vunpack.c.l.b16 %v570
    %v634 = vunpack.c.l.b16 %v571
    %v635 = vunpack.c.h.b16 %v569
    %v636 = vunpack.c.h.b16 %v570
    %v637 = vunpack.c.h.b16 %v571
    %v638 = vunpack.c.l.b16 %v572
    %v639 = vunpack.c.l.b16 %v573
    %v640 = vunpack.c.l.b16 %v574
    %v641 = vunpack.c.h.b16 %v572
    %v642 = vunpack.c.h.b16 %v573
    %v643 = vunpack.c.h.b16 %v574
    %v644 = vunpack.c.l.b16 %v575
    %v645 = vunpack.c.l.b16 %v576
    %v646 = vunpack.c.l.b16 %v577
    %v647 = vunpack.c.h.b16 %v575
    %v648 = vunpack.c.h.b16 %v576
    %v649 = vunpack.c.h.b16 %v577
    %v650 = vpack.c.b16 %v603, %v602
    %v651 = vpack.c.b16 %v604, %v604
    %v652 = vpack.c.b16 %v606, %v605
    %v653 = vpack.c.b16 %v607, %v607
    %v654 = vpack.c.b16 %v609, %v608
    %v655 = vpack.c.b16 %v610, %v610
    %v656 = vpack.c.b16 %v612, %v611
    %v657 = vpack.c.b16 %v613, %v613
    %v658 = vpack.c.b16 %v615, %v614
    %v659 = vpack.c.b16 %v616, %v616
    %v660 = vpack.c.b16 %v618, %v617
    %v661 = vpack.c.b16 %v619, %v619
    %v662 = vpack.c.b16 %v621, %v620
    %v663 = vpack.c.b16 %v622, %v622
    %v664 = vpack.c.b16 %v624, %v623
    %v665 = vpack.c.b16 %v625, %v625
    %v666 = vpack.c.b16 %v627, %v626
    %v667 = vpack.c.b16 %v628, %v628
    %v668 = vpack.c.b16 %v630, %v629
    %v669 = vpack.c.b16 %v631, %v631
    %v670 = vpack.c.b16 %v633, %v632
    %v671 = vpack.c.b16 %v634, %v634
    %v672 = vpack.c.b16 %v636, %v635
    %v673 = vpack.c.b16 %v637, %v637
    %v674 = vpack.c.b16 %v639, %v638
    %v675 = vpack.c.b16 %v640, %v640
    %v676 = vpack.c.b16 %v642, %v641
    %v677 = vpack.c.b16 %v643, %v643
    %v678 = vpack.c.b16 %v645, %v644
    %v679 = vpack.c.b16 %v646, %v646
    %v680 = vpack.c.b16 %v648, %v647
    %v681 = vpack.c.b16 %v649, %v649
    %714 = vst [vmem:[#allocation2] sm:$0xff] %v650
    %715 = vst [vmem:[#allocation2 + $0x8] sm:$0xf] %v651
    %716 = vst [vmem:[#allocation2 + $0xc] sm:$0xff] %v652
    %717 = vst [vmem:[#allocation2 + $0x14] sm:$0xf] %v653
    %718 = vst [vmem:[#allocation2 + $0x18] sm:$0xff] %v654
    %719 = vst [vmem:[#allocation2 + $0x20] sm:$0xf] %v655
    %720 = vst [vmem:[#allocation2 + $0x24] sm:$0xff] %v656
    %721 = vst [vmem:[#allocation2 + $0x2c] sm:$0xf] %v657
    %722 = vst [vmem:[#allocation2 + $0x30] sm:$0xff] %v658
    %723 = vst [vmem:[#allocation2 + $0x38] sm:$0xf] %v659
    %724 = vst [vmem:[#allocation2 + $0x3c] sm:$0xff] %v660
    %725 = vst [vmem:[#allocation2 + $0x44] sm:$0xf] %v661
    %726 = vst [vmem:[#allocation2 + $0x48] sm:$0xff] %v662
    %727 = vst [vmem:[#allocation2 + $0x50] sm:$0xf] %v663
    %728 = vst [vmem:[#allocation2 + $0x54] sm:$0xff] %v664
    %729 = vst [vmem:[#allocation2 + $0x5c] sm:$0xf] %v665
    %730 = vst [vmem:[#allocation2 + $0x60] sm:$0xff] %v666
    %731 = vst [vmem:[#allocation2 + $0x68] sm:$0xf] %v667
    %732 = vst [vmem:[#allocation2 + $0x6c] sm:$0xff] %v668
    %733 = vst [vmem:[#allocation2 + $0x74] sm:$0xf] %v669
    %734 = vst [vmem:[#allocation2 + $0x78] sm:$0xff] %v670
    %735 = vst [vmem:[#allocation2 + $0x80] sm:$0xf] %v671
    %736 = vst [vmem:[#allocation2 + $0x84] sm:$0xff] %v672
    %737 = vst [vmem:[#allocation2 + $0x8c] sm:$0xf] %v673
    %738 = vst [vmem:[#allocation2 + $0x90] sm:$0xff] %v674
    %739 = vst [vmem:[#allocation2 + $0x98] sm:$0xf] %v675
    %740 = vst [vmem:[#allocation2 + $0x9c] sm:$0xff] %v676
    %741 = vst [vmem:[#allocation2 + $0xa4] sm:$0xf] %v677
    %742 = vst [vmem:[#allocation2 + $0xa8] sm:$0xff] %v678
    %743 = vst [vmem:[#allocation2 + $0xb0] sm:$0xf] %v679
    %744 = vst [vmem:[#allocation2 + $0xb4] sm:$0xff] %v680
    %745 = vst [vmem:[#allocation2 + $0xbc] sm:$0xf] %v681
    %v746 = vld [vmem:[%s5] sm:$0x7]
    %v748 = vlaneseq
    %v749 = vshrl.u32 %v748, 7
    %v750 = vsub.s32 0, %v749
    %v751 = vrot.slane %v746, %v750
    %v752 = vlaneseq
    %v753 = vshrl.u32 %v752, 7
    %v754 = vsub.s32 1, %v753
    %v755 = vrot.slane %v746, %v754
    %v756 = vlaneseq
    %v757 = vshrl.u32 %v756, 7
    %v758 = vsub.s32 2, %v757
    %v759 = vrot.slane %v746, %v758
    %v795 = vunpack.c.l.b16 %v119
    %v796 = vunpack.c.h.b16 %v119
    %v797 = vunpack.c.l.b16 %v120
    %v798 = vunpack.c.l.b16 %v121
    %v799 = vunpack.c.h.b16 %v121
    %v800 = vunpack.c.l.b16 %v122
    %v801 = vunpack.c.l.b16 %v123
    %v802 = vunpack.c.h.b16 %v123
    %v803 = vunpack.c.l.b16 %v124
    %v804 = vunpack.c.l.b16 %v125
    %v805 = vunpack.c.h.b16 %v125
    %v806 = vunpack.c.l.b16 %v126
    %v807 = vunpack.c.l.b16 %v127
    %v808 = vunpack.c.h.b16 %v127
    %v809 = vunpack.c.l.b16 %v128
    %v810 = vunpack.c.l.b16 %v129
    %v811 = vunpack.c.h.b16 %v129
    %v812 = vunpack.c.l.b16 %v130
    %v813 = vunpack.c.l.b16 %v131
    %v814 = vunpack.c.h.b16 %v131
    %v815 = vunpack.c.l.b16 %v132
    %v816 = vunpack.c.l.b16 %v133
    %v817 = vunpack.c.h.b16 %v133
    %v818 = vunpack.c.l.b16 %v134
    %v819 = vunpack.c.l.b16 %v135
    %v820 = vunpack.c.h.b16 %v135
    %v821 = vunpack.c.l.b16 %v136
    %v822 = vunpack.c.l.b16 %v137
    %v823 = vunpack.c.h.b16 %v137
    %v824 = vunpack.c.l.b16 %v138
    %v825 = vunpack.c.l.b16 %v139
    %v826 = vunpack.c.h.b16 %v139
    %v827 = vunpack.c.l.b16 %v140
    %v828 = vunpack.c.l.b16 %v141
    %v829 = vunpack.c.h.b16 %v141
    %v830 = vunpack.c.l.b16 %v142
    %v831 = vunpack.c.l.b16 %v143
    %v832 = vunpack.c.h.b16 %v143
    %v833 = vunpack.c.l.b16 %v144
    %v834 = vunpack.c.l.b16 %v145
    %v835 = vunpack.c.h.b16 %v145
    %v836 = vunpack.c.l.b16 %v146
    %v837 = vunpack.c.l.b16 %v147
    %v838 = vunpack.c.h.b16 %v147
    %v839 = vunpack.c.l.b16 %v148
    %v840 = vunpack.c.l.b16 %v149
    %v841 = vunpack.c.h.b16 %v149
    %v842 = vunpack.c.l.b16 %v150
    %v843 = vpack.c.b16 %v798, %v795
    %v844 = vpack.c.b16 %v799, %v796
    %v845 = vpack.c.b16 %v800, %v797
    %v846 = vpack.c.b16 %v804, %v801
    %v847 = vpack.c.b16 %v805, %v802
    %v848 = vpack.c.b16 %v806, %v803
    %v849 = vpack.c.b16 %v810, %v807
    %v850 = vpack.c.b16 %v811, %v808
    %v851 = vpack.c.b16 %v812, %v809
    %v852 = vpack.c.b16 %v816, %v813
    %v853 = vpack.c.b16 %v817, %v814
    %v854 = vpack.c.b16 %v818, %v815
    %v855 = vpack.c.b16 %v822, %v819
    %v856 = vpack.c.b16 %v823, %v820
    %v857 = vpack.c.b16 %v824, %v821
    %v858 = vpack.c.b16 %v828, %v825
    %v859 = vpack.c.b16 %v829, %v826
    %v860 = vpack.c.b16 %v830, %v827
    %v861 = vpack.c.b16 %v834, %v831
    %v862 = vpack.c.b16 %v835, %v832
    %v863 = vpack.c.b16 %v836, %v833
    %v864 = vpack.c.b16 %v840, %v837
    %v865 = vpack.c.b16 %v841, %v838
    %v866 = vpack.c.b16 %v842, %v839
    %891 = vmatprep.subr.bf16.mxu0 %v865
    %892 = vmatpush1.bf16.msra.mxu0 %v864
    %893 = vmatprep.subr.bf16.mxu0 %v862
    %894 = vmatpush1.bf16.msra.mxu0 %v861
    %895 = vmatprep.subr.bf16.mxu0 %v859
    %896 = vmatpush1.bf16.msra.mxu0 %v858
    %897 = vmatprep.subr.bf16.mxu0 %v856
    %898 = vmatpush1.bf16.msra.mxu0 %v855
    %899 = vmatprep.subr.bf16.mxu0 %v853
    %900 = vmatpush1.bf16.msra.mxu0 %v852
    %901 = vmatprep.subr.bf16.mxu0 %v850
    %902 = vmatpush1.bf16.msra.mxu0 %v849
    %903 = vmatprep.subr.bf16.mxu0 %v847
    %904 = vmatpush1.bf16.msra.mxu0 %v846
    %905 = vmatprep.subr.bf16.mxu0 %v844
    %906 = vmatpush1.bf16.msra.mxu0 %v843
    %907 = vmatprep.subr.bf16.mxu0 0
    %908 = vmatpush2.bf16.msra.mxu0 0
    %909 = vmatprep.subr.bf16.mxu0 0
    %910 = vmatpush2.bf16.msra.mxu0 0
    %911 = vmatprep.subr.bf16.mxu0 0
    %912 = vmatpush2.bf16.msra.mxu0 0
    %913 = vmatprep.subr.bf16.mxu0 0
    %914 = vmatpush2.bf16.msra.mxu0 0
    %915 = vmatprep.subr.bf16.mxu0 0
    %916 = vmatpush2.bf16.msra.mxu0 0
    %917 = vmatprep.subr.bf16.mxu0 0
    %918 = vmatpush2.bf16.msra.mxu0 0
    %919 = vmatprep.subr.bf16.mxu0 0
    %920 = vmatpush2.bf16.msra.mxu0 0
    %921 = vmatprep.subr.bf16.mxu0 0
    %922 = vmatpush2.bf16.msra.mxu0 0
    %923 = vmatprep.mubr.bf16.mxu0 0
    %924 = vmatmul.mubr.bf16.gmra.mxu0 %v200
    %v925 = vpop.f32.mrf.mxu0
    %v926 = vadd.f32 %v751, %v925
    %v927 = vpop.f32.mrf.mxu0
    %v928 = vadd.f32 %v755, %v927
    %v929 = vpop.f32.mrf.mxu0
    %v930 = vadd.f32 %v751, %v929
    %v931 = vpop.f32.mrf.mxu0
    %v932 = vadd.f32 %v755, %v931
    %933 = vmatprep.mubr.bf16.mxu0 0
    %934 = vmatmul.mubr.bf16.gmra.mxu0 %v201
    %v935 = vpop.f32.mrf.mxu0
    %v936 = vadd.f32 %v751, %v935
    %v937 = vpop.f32.mrf.mxu0
    %v938 = vadd.f32 %v755, %v937
    %v939 = vpop.f32.mrf.mxu0
    %v940 = vadd.f32 %v751, %v939
    %v941 = vpop.f32.mrf.mxu0
    %v942 = vadd.f32 %v755, %v941
    %943 = vmatprep.mubr.bf16.mxu0 0
    %944 = vmatmul.mubr.bf16.gmra.mxu0 %v202
    %v945 = vpop.f32.mrf.mxu0
    %v946 = vadd.f32 %v751, %v945
    %v947 = vpop.f32.mrf.mxu0
    %v948 = vadd.f32 %v755, %v947
    %v949 = vpop.f32.mrf.mxu0
    %v950 = vadd.f32 %v751, %v949
    %v951 = vpop.f32.mrf.mxu0
    %v952 = vadd.f32 %v755, %v951
    %953 = vmatprep.mubr.bf16.mxu0 0
    %954 = vmatmul.mubr.bf16.gmra.mxu0 %v203
    %v955 = vpop.f32.mrf.mxu0
    %v956 = vadd.f32 %v751, %v955
    %v957 = vpop.f32.mrf.mxu0
    %v958 = vadd.f32 %v755, %v957
    %v959 = vpop.f32.mrf.mxu0
    %v960 = vadd.f32 %v751, %v959
    %v961 = vpop.f32.mrf.mxu0
    %v962 = vadd.f32 %v755, %v961
    %963 = vmatprep.mubr.bf16.mxu0 0
    %964 = vmatmul.mubr.bf16.gmra.mxu0 %v204
    %v965 = vpop.f32.mrf.mxu0
    %v966 = vadd.f32 %v751, %v965
    %v967 = vpop.f32.mrf.mxu0
    %v968 = vadd.f32 %v755, %v967
    %v969 = vpop.f32.mrf.mxu0
    %v970 = vadd.f32 %v751, %v969
    %v971 = vpop.f32.mrf.mxu0
    %v972 = vadd.f32 %v755, %v971
    %973 = vmatprep.mubr.bf16.mxu0 0
    %974 = vmatmul.mubr.bf16.gmra.mxu0 %v205
    %v975 = vpop.f32.mrf.mxu0
    %v976 = vadd.f32 %v751, %v975
    %v977 = vpop.f32.mrf.mxu0
    %v978 = vadd.f32 %v755, %v977
    %v979 = vpop.f32.mrf.mxu0
    %v980 = vadd.f32 %v751, %v979
    %v981 = vpop.f32.mrf.mxu0
    %v982 = vadd.f32 %v755, %v981
    %983 = vmatprep.mubr.bf16.mxu0 0
    %984 = vmatmul.mubr.bf16.gmra.mxu0 %v206
    %v985 = vpop.f32.mrf.mxu0
    %v986 = vadd.f32 %v751, %v985
    %v987 = vpop.f32.mrf.mxu0
    %v988 = vadd.f32 %v755, %v987
    %v989 = vpop.f32.mrf.mxu0
    %v990 = vadd.f32 %v751, %v989
    %v991 = vpop.f32.mrf.mxu0
    %v992 = vadd.f32 %v755, %v991
    %993 = vmatprep.mubr.bf16.mxu0 0
    %994 = vmatmul.mubr.bf16.gmra.mxu0 %v207
    %v995 = vpop.f32.mrf.mxu0
    %v996 = vadd.f32 %v751, %v995
    %v997 = vpop.f32.mrf.mxu0
    %v998 = vadd.f32 %v755, %v997
    %v999 = vpop.f32.mrf.mxu0
    %v1000 = vadd.f32 %v751, %v999
    %v1001 = vpop.f32.mrf.mxu0
    %v1002 = vadd.f32 %v755, %v1001
    %1003 = vdwg.mxu0
    %1004 = vmatprep.subr.bf16.mxu0 0
    %1005 = vmatpush1.bf16.msra.mxu0 %v866
    %1006 = vmatprep.subr.bf16.mxu0 0
    %1007 = vmatpush1.bf16.msra.mxu0 %v863
    %1008 = vmatprep.subr.bf16.mxu0 0
    %1009 = vmatpush1.bf16.msra.mxu0 %v860
    %1010 = vmatprep.subr.bf16.mxu0 0
    %1011 = vmatpush1.bf16.msra.mxu0 %v857
    %1012 = vmatprep.subr.bf16.mxu0 0
    %1013 = vmatpush1.bf16.msra.mxu0 %v854
    %1014 = vmatprep.subr.bf16.mxu0 0
    %1015 = vmatpush1.bf16.msra.mxu0 %v851
    %1016 = vmatprep.subr.bf16.mxu0 0
    %1017 = vmatpush1.bf16.msra.mxu0 %v848
    %1018 = vmatprep.subr.bf16.mxu0 0
    %1019 = vmatpush1.bf16.msra.mxu0 %v845
    %1020 = vmatprep.subr.bf16.mxu0 0
    %1021 = vmatpush2.bf16.msra.mxu0 0
    %1022 = vmatprep.subr.bf16.mxu0 0
    %1023 = vmatpush2.bf16.msra.mxu0 0
    %1024 = vmatprep.subr.bf16.mxu0 0
    %1025 = vmatpush2.bf16.msra.mxu0 0
    %1026 = vmatprep.subr.bf16.mxu0 0
    %1027 = vmatpush2.bf16.msra.mxu0 0
    %1028 = vmatprep.subr.bf16.mxu0 0
    %1029 = vmatpush2.bf16.msra.mxu0 0
    %1030 = vmatprep.subr.bf16.mxu0 0
    %1031 = vmatpush2.bf16.msra.mxu0 0
    %1032 = vmatprep.subr.bf16.mxu0 0
    %1033 = vmatpush2.bf16.msra.mxu0 0
    %1034 = vmatprep.subr.bf16.mxu0 0
    %1035 = vmatpush2.bf16.msra.mxu0 0
    %1036 = vmatprep.mubr.bf16.mxu0 0
    %1037 = vmatmul.mubr.bf16.gmra.mxu0 %v200
    %v1038 = vpop.f32.mrf.mxu0
    %v1039 = vadd.f32 %v759, %v1038
    %v1040 = vpop.f32.mrf.mxu0
    %v1041 = vpop.f32.mrf.mxu0
    %v1042 = vadd.f32 %v759, %v1041
    %v1043 = vpop.f32.mrf.mxu0
    %1044 = vmatprep.mubr.bf16.mxu0 0
    %1045 = vmatmul.mubr.bf16.gmra.mxu0 %v201
    %v1046 = vpop.f32.mrf.mxu0
    %v1047 = vadd.f32 %v759, %v1046
    %v1048 = vpop.f32.mrf.mxu0
    %v1049 = vpop.f32.mrf.mxu0
    %v1050 = vadd.f32 %v759, %v1049
    %v1051 = vpop.f32.mrf.mxu0
    %1052 = vmatprep.mubr.bf16.mxu0 0
    %1053 = vmatmul.mubr.bf16.gmra.mxu0 %v202
    %v1054 = vpop.f32.mrf.mxu0
    %v1055 = vadd.f32 %v759, %v1054
    %v1056 = vpop.f32.mrf.mxu0
    %v1057 = vpop.f32.mrf.mxu0
    %v1058 = vadd.f32 %v759, %v1057
    %v1059 = vpop.f32.mrf.mxu0
    %1060 = vmatprep.mubr.bf16.mxu0 0
    %1061 = vmatmul.mubr.bf16.gmra.mxu0 %v203
    %v1062 = vpop.f32.mrf.mxu0
    %v1063 = vadd.f32 %v759, %v1062
    %v1064 = vpop.f32.mrf.mxu0
    %v1065 = vpop.f32.mrf.mxu0
    %v1066 = vadd.f32 %v759, %v1065
    %v1067 = vpop.f32.mrf.mxu0
    %1068 = vmatprep.mubr.bf16.mxu0 0
    %1069 = vmatmul.mubr.bf16.gmra.mxu0 %v204
    %v1070 = vpop.f32.mrf.mxu0
    %v1071 = vadd.f32 %v759, %v1070
    %v1072 = vpop.f32.mrf.mxu0
    %v1073 = vpop.f32.mrf.mxu0
    %v1074 = vadd.f32 %v759, %v1073
    %v1075 = vpop.f32.mrf.mxu0
    %1076 = vmatprep.mubr.bf16.mxu0 0
    %1077 = vmatmul.mubr.bf16.gmra.mxu0 %v205
    %v1078 = vpop.f32.mrf.mxu0
    %v1079 = vadd.f32 %v759, %v1078
    %v1080 = vpop.f32.mrf.mxu0
    %v1081 = vpop.f32.mrf.mxu0
    %v1082 = vadd.f32 %v759, %v1081
    %v1083 = vpop.f32.mrf.mxu0
    %1084 = vmatprep.mubr.bf16.mxu0 0
    %1085 = vmatmul.mubr.bf16.gmra.mxu0 %v206
    %v1086 = vpop.f32.mrf.mxu0
    %v1087 = vadd.f32 %v759, %v1086
    %v1088 = vpop.f32.mrf.mxu0
    %v1089 = vpop.f32.mrf.mxu0
    %v1090 = vadd.f32 %v759, %v1089
    %v1091 = vpop.f32.mrf.mxu0
    %1092 = vmatprep.mubr.bf16.mxu0 0
    %1093 = vmatmul.mubr.bf16.gmra.mxu0 %v207
    %v1094 = vpop.f32.mrf.mxu0
    %v1095 = vadd.f32 %v759, %v1094
    %v1096 = vpop.f32.mrf.mxu0
    %v1097 = vpop.f32.mrf.mxu0
    %v1098 = vadd.f32 %v759, %v1097
    %v1099 = vpop.f32.mrf.mxu0
    %1100 = vdwg.mxu0
    %v1101 = vpack.c.bf16 %v930, %v926
    %v1102 = vpack.c.bf16 %v932, %v928
    %v1103 = vpack.c.bf16 %v1042, %v1039
    %v1104 = vpack.c.bf16 %v940, %v936
    %v1105 = vpack.c.bf16 %v942, %v938
    %v1106 = vpack.c.bf16 %v1050, %v1047
    %v1107 = vpack.c.bf16 %v950, %v946
    %v1108 = vpack.c.bf16 %v952, %v948
    %v1109 = vpack.c.bf16 %v1058, %v1055
    %v1110 = vpack.c.bf16 %v960, %v956
    %v1111 = vpack.c.bf16 %v962, %v958
    %v1112 = vpack.c.bf16 %v1066, %v1063
    %v1113 = vpack.c.bf16 %v970, %v966
    %v1114 = vpack.c.bf16 %v972, %v968
    %v1115 = vpack.c.bf16 %v1074, %v1071
    %v1116 = vpack.c.bf16 %v980, %v976
    %v1117 = vpack.c.bf16 %v982, %v978
    %v1118 = vpack.c.bf16 %v1082, %v1079
    %v1119 = vpack.c.bf16 %v990, %v986
    %v1120 = vpack.c.bf16 %v992, %v988
    %v1121 = vpack.c.bf16 %v1090, %v1087
    %v1122 = vpack.c.bf16 %v1000, %v996
    %v1123 = vpack.c.bf16 %v1002, %v998
    %v1124 = vpack.c.bf16 %v1098, %v1095
    %v1149 = vunpack.c.l.b16 %v1101
    %v1150 = vunpack.c.l.b16 %v1102
    %v1151 = vunpack.c.l.b16 %v1103
    %v1152 = vunpack.c.h.b16 %v1101
    %v1153 = vunpack.c.h.b16 %v1102
    %v1154 = vunpack.c.h.b16 %v1103
    %v1155 = vunpack.c.l.b16 %v1104
    %v1156 = vunpack.c.l.b16 %v1105
    %v1157 = vunpack.c.l.b16 %v1106
    %v1158 = vunpack.c.h.b16 %v1104
    %v1159 = vunpack.c.h.b16 %v1105
    %v1160 = vunpack.c.h.b16 %v1106
    %v1161 = vunpack.c.l.b16 %v1107
    %v1162 = vunpack.c.l.b16 %v1108
    %v1163 = vunpack.c.l.b16 %v1109
    %v1164 = vunpack.c.h.b16 %v1107
    %v1165 = vunpack.c.h.b16 %v1108
    %v1166 = vunpack.c.h.b16 %v1109
    %v1167 = vunpack.c.l.b16 %v1110
    %v1168 = vunpack.c.l.b16 %v1111
    %v1169 = vunpack.c.l.b16 %v1112
    %v1170 = vunpack.c.h.b16 %v1110
    %v1171 = vunpack.c.h.b16 %v1111
    %v1172 = vunpack.c.h.b16 %v1112
    %v1173 = vunpack.c.l.b16 %v1113
    %v1174 = vunpack.c.l.b16 %v1114
    %v1175 = vunpack.c.l.b16 %v1115
    %v1176 = vunpack.c.h.b16 %v1113
    %v1177 = vunpack.c.h.b16 %v1114
    %v1178 = vunpack.c.h.b16 %v1115
    %v1179 = vunpack.c.l.b16 %v1116
    %v1180 = vunpack.c.l.b16 %v1117
    %v1181 = vunpack.c.l.b16 %v1118
    %v1182 = vunpack.c.h.b16 %v1116
    %v1183 = vunpack.c.h.b16 %v1117
    %v1184 = vunpack.c.h.b16 %v1118
    %v1185 = vunpack.c.l.b16 %v1119
    %v1186 = vunpack.c.l.b16 %v1120
    %v1187 = vunpack.c.l.b16 %v1121
    %v1188 = vunpack.c.h.b16 %v1119
    %v1189 = vunpack.c.h.b16 %v1120
    %v1190 = vunpack.c.h.b16 %v1121
    %v1191 = vunpack.c.l.b16 %v1122
    %v1192 = vunpack.c.l.b16 %v1123
    %v1193 = vunpack.c.l.b16 %v1124
    %v1194 = vunpack.c.h.b16 %v1122
    %v1195 = vunpack.c.h.b16 %v1123
    %v1196 = vunpack.c.h.b16 %v1124
    %v1197 = vpack.c.b16 %v1150, %v1149
    %v1198 = vpack.c.b16 %v1151, %v1151
    %v1199 = vpack.c.b16 %v1153, %v1152
    %v1200 = vpack.c.b16 %v1154, %v1154
    %v1201 = vpack.c.b16 %v1156, %v1155
    %v1202 = vpack.c.b16 %v1157, %v1157
    %v1203 = vpack.c.b16 %v1159, %v1158
    %v1204 = vpack.c.b16 %v1160, %v1160
    %v1205 = vpack.c.b16 %v1162, %v1161
    %v1206 = vpack.c.b16 %v1163, %v1163
    %v1207 = vpack.c.b16 %v1165, %v1164
    %v1208 = vpack.c.b16 %v1166, %v1166
    %v1209 = vpack.c.b16 %v1168, %v1167
    %v1210 = vpack.c.b16 %v1169, %v1169
    %v1211 = vpack.c.b16 %v1171, %v1170
    %v1212 = vpack.c.b16 %v1172, %v1172
    %v1213 = vpack.c.b16 %v1174, %v1173
    %v1214 = vpack.c.b16 %v1175, %v1175
    %v1215 = vpack.c.b16 %v1177, %v1176
    %v1216 = vpack.c.b16 %v1178, %v1178
    %v1217 = vpack.c.b16 %v1180, %v1179
    %v1218 = vpack.c.b16 %v1181, %v1181
    %v1219 = vpack.c.b16 %v1183, %v1182
    %v1220 = vpack.c.b16 %v1184, %v1184
    %v1221 = vpack.c.b16 %v1186, %v1185
    %v1222 = vpack.c.b16 %v1187, %v1187
    %v1223 = vpack.c.b16 %v1189, %v1188
    %v1224 = vpack.c.b16 %v1190, %v1190
    %v1225 = vpack.c.b16 %v1192, %v1191
    %v1226 = vpack.c.b16 %v1193, %v1193
    %v1227 = vpack.c.b16 %v1195, %v1194
    %v1228 = vpack.c.b16 %v1196, %v1196
    %1261 = vst [vmem:[#allocation3] sm:$0xff] %v1197
    %1262 = vst [vmem:[#allocation3 + $0x8] sm:$0xf] %v1198
    %1263 = vst [vmem:[#allocation3 + $0xc] sm:$0xff] %v1199
    %1264 = vst [vmem:[#allocation3 + $0x14] sm:$0xf] %v1200
    %1265 = vst [vmem:[#allocation3 + $0x18] sm:$0xff] %v1201
    %1266 = vst [vmem:[#allocation3 + $0x20] sm:$0xf] %v1202
    %1267 = vst [vmem:[#allocation3 + $0x24] sm:$0xff] %v1203
    %1268 = vst [vmem:[#allocation3 + $0x2c] sm:$0xf] %v1204
    %1269 = vst [vmem:[#allocation3 + $0x30] sm:$0xff] %v1205
    %1270 = vst [vmem:[#allocation3 + $0x38] sm:$0xf] %v1206
    %1271 = vst [vmem:[#allocation3 + $0x3c] sm:$0xff] %v1207
    %1272 = vst [vmem:[#allocation3 + $0x44] sm:$0xf] %v1208
    %1273 = vst [vmem:[#allocation3 + $0x48] sm:$0xff] %v1209
    %1274 = vst [vmem:[#allocation3 + $0x50] sm:$0xf] %v1210
    %1275 = vst [vmem:[#allocation3 + $0x54] sm:$0xff] %v1211
    %1276 = vst [vmem:[#allocation3 + $0x5c] sm:$0xf] %v1212
    %1277 = vst [vmem:[#allocation3 + $0x60] sm:$0xff] %v1213
    %1278 = vst [vmem:[#allocation3 + $0x68] sm:$0xf] %v1214
    %1279 = vst [vmem:[#allocation3 + $0x6c] sm:$0xff] %v1215
    %1280 = vst [vmem:[#allocation3 + $0x74] sm:$0xf] %v1216
    %1281 = vst [vmem:[#allocation3 + $0x78] sm:$0xff] %v1217
    %1282 = vst [vmem:[#allocation3 + $0x80] sm:$0xf] %v1218
    %1283 = vst [vmem:[#allocation3 + $0x84] sm:$0xff] %v1219
    %1284 = vst [vmem:[#allocation3 + $0x8c] sm:$0xf] %v1220
    %1285 = vst [vmem:[#allocation3 + $0x90] sm:$0xff] %v1221
    %1286 = vst [vmem:[#allocation3 + $0x98] sm:$0xf] %v1222
    %1287 = vst [vmem:[#allocation3 + $0x9c] sm:$0xff] %v1223
    %1288 = vst [vmem:[#allocation3 + $0xa4] sm:$0xf] %v1224
    %1289 = vst [vmem:[#allocation3 + $0xa8] sm:$0xff] %v1225
    %1290 = vst [vmem:[#allocation3 + $0xb0] sm:$0xf] %v1226
    %1291 = vst [vmem:[#allocation3 + $0xb4] sm:$0xff] %v1227
    %1292 = vst [vmem:[#allocation3 + $0xbc] sm:$0xf] %v1228
    %v1293 = vld [vmem:[%s6] sm:$0x1]
    %v1295 = vlaneseq
    %v1296 = vshrl.u32 %v1295, 7
    %v1297 = vsub.s32 0, %v1296
    %v1298 = vrot.slane %v1293, %v1297
    %v1300 = vld [vmem:[%s7] sm:$0x1]
    %v1302 = vlaneseq
    %v1303 = vshrl.u32 %v1302, 7
    %v1304 = vsub.s32 0, %v1303
    %v1305 = vrot.slane %v1300, %v1304
    %v1307 = vld [vmem:[#allocation8] sm:$0xff]
    %v1308 = vld [vmem:[#allocation8 + $0x8] sm:$0xf]
    %v1309 = vld [vmem:[#allocation8 + $0xc] sm:$0xff]
    %v1310 = vld [vmem:[#allocation8 + $0x14] sm:$0xf]
    %v1311 = vld [vmem:[#allocation8 + $0x18] sm:$0xff]
    %v1312 = vld [vmem:[#allocation8 + $0x20] sm:$0xf]
    %v1313 = vld [vmem:[#allocation8 + $0x24] sm:$0xff]
    %v1314 = vld [vmem:[#allocation8 + $0x2c] sm:$0xf]
    %v1315 = vld [vmem:[#allocation8 + $0x30] sm:$0xff]
    %v1316 = vld [vmem:[#allocation8 + $0x38] sm:$0xf]
    %v1317 = vld [vmem:[#allocation8 + $0x3c] sm:$0xff]
    %v1318 = vld [vmem:[#allocation8 + $0x44] sm:$0xf]
    %v1319 = vld [vmem:[#allocation8 + $0x48] sm:$0xff]
    %v1320 = vld [vmem:[#allocation8 + $0x50] sm:$0xf]
    %v1321 = vld [vmem:[#allocation8 + $0x54] sm:$0xff]
    %v1322 = vld [vmem:[#allocation8 + $0x5c] sm:$0xf]
    %v1323 = vld [vmem:[#allocation8 + $0x60] sm:$0xff]
    %v1324 = vld [vmem:[#allocation8 + $0x68] sm:$0xf]
    %v1325 = vld [vmem:[#allocation8 + $0x6c] sm:$0xff]
    %v1326 = vld [vmem:[#allocation8 + $0x74] sm:$0xf]
    %v1327 = vld [vmem:[#allocation8 + $0x78] sm:$0xff]
    %v1328 = vld [vmem:[#allocation8 + $0x80] sm:$0xf]
    %v1329 = vld [vmem:[#allocation8 + $0x84] sm:$0xff]
    %v1330 = vld [vmem:[#allocation8 + $0x8c] sm:$0xf]
    %v1331 = vld [vmem:[#allocation8 + $0x90] sm:$0xff]
    %v1332 = vld [vmem:[#allocation8 + $0x98] sm:$0xf]
    %v1333 = vld [vmem:[#allocation8 + $0x9c] sm:$0xff]
    %v1334 = vld [vmem:[#allocation8 + $0xa4] sm:$0xf]
    %v1335 = vld [vmem:[#allocation8 + $0xa8] sm:$0xff]
    %v1336 = vld [vmem:[#allocation8 + $0xb0] sm:$0xf]
    %v1337 = vld [vmem:[#allocation8 + $0xb4] sm:$0xff]
    %v1338 = vld [vmem:[#allocation8 + $0xbc] sm:$0xf]
    %s1339 = scalar_lea.vmem [#allocation8], 192
    %v1340 = vld [vmem:[%s1339] sm:$0xff]
    %v1341 = vld [vmem:[%s1339 + $0x8] sm:$0xf]
    %v1342 = vld [vmem:[%s1339 + $0xc] sm:$0xff]
    %v1343 = vld [vmem:[%s1339 + $0x14] sm:$0xf]
    %v1344 = vld [vmem:[%s1339 + $0x18] sm:$0xff]
    %v1345 = vld [vmem:[%s1339 + $0x20] sm:$0xf]
    %v1346 = vld [vmem:[%s1339 + $0x24] sm:$0xff]
    %v1347 = vld [vmem:[%s1339 + $0x2c] sm:$0xf]
    %v1348 = vld [vmem:[%s1339 + $0x30] sm:$0xff]
    %v1349 = vld [vmem:[%s1339 + $0x38] sm:$0xf]
    %v1350 = vld [vmem:[%s1339 + $0x3c] sm:$0xff]
    %v1351 = vld [vmem:[%s1339 + $0x44] sm:$0xf]
    %v1352 = vld [vmem:[%s1339 + $0x48] sm:$0xff]
    %v1353 = vld [vmem:[%s1339 + $0x50] sm:$0xf]
    %v1354 = vld [vmem:[%s1339 + $0x54] sm:$0xff]
    %v1355 = vld [vmem:[%s1339 + $0x5c] sm:$0xf]
    %v1356 = vld [vmem:[%s1339 + $0x60] sm:$0xff]
    %v1357 = vld [vmem:[%s1339 + $0x68] sm:$0xf]
    %v1358 = vld [vmem:[%s1339 + $0x6c] sm:$0xff]
    %v1359 = vld [vmem:[%s1339 + $0x74] sm:$0xf]
    %v1360 = vld [vmem:[%s1339 + $0x78] sm:$0xff]
    %v1361 = vld [vmem:[%s1339 + $0x80] sm:$0xf]
    %v1362 = vld [vmem:[%s1339 + $0x84] sm:$0xff]
    %v1363 = vld [vmem:[%s1339 + $0x8c] sm:$0xf]
    %v1364 = vld [vmem:[%s1339 + $0x90] sm:$0xff]
    %v1365 = vld [vmem:[%s1339 + $0x98] sm:$0xf]
    %v1366 = vld [vmem:[%s1339 + $0x9c] sm:$0xff]
    %v1367 = vld [vmem:[%s1339 + $0xa4] sm:$0xf]
    %v1368 = vld [vmem:[%s1339 + $0xa8] sm:$0xff]
    %v1369 = vld [vmem:[%s1339 + $0xb0] sm:$0xf]
    %v1370 = vld [vmem:[%s1339 + $0xb4] sm:$0xff]
    %v1371 = vld [vmem:[%s1339 + $0xbc] sm:$0xf]
    %v1404 = vunpack.c.l.b16 %v1307
    %v1405 = vunpack.c.h.b16 %v1307
    %v1406 = vunpack.c.l.b16 %v1308
    %v1407 = vunpack.c.l.b16 %v1309
    %v1408 = vunpack.c.h.b16 %v1309
    %v1409 = vunpack.c.l.b16 %v1310
    %v1410 = vunpack.c.l.b16 %v1311
    %v1411 = vunpack.c.h.b16 %v1311
    %v1412 = vunpack.c.l.b16 %v1312
    %v1413 = vunpack.c.l.b16 %v1313
    %v1414 = vunpack.c.h.b16 %v1313
    %v1415 = vunpack.c.l.b16 %v1314
    %v1416 = vunpack.c.l.b16 %v1315
    %v1417 = vunpack.c.h.b16 %v1315
    %v1418 = vunpack.c.l.b16 %v1316
    %v1419 = vunpack.c.l.b16 %v1317
    %v1420 = vunpack.c.h.b16 %v1317
    %v1421 = vunpack.c.l.b16 %v1318
    %v1422 = vunpack.c.l.b16 %v1319
    %v1423 = vunpack.c.h.b16 %v1319
    %v1424 = vunpack.c.l.b16 %v1320
    %v1425 = vunpack.c.l.b16 %v1321
    %v1426 = vunpack.c.h.b16 %v1321
    %v1427 = vunpack.c.l.b16 %v1322
    %v1428 = vunpack.c.l.b16 %v1323
    %v1429 = vunpack.c.h.b16 %v1323
    %v1430 = vunpack.c.l.b16 %v1324
    %v1431 = vunpack.c.l.b16 %v1325
    %v1432 = vunpack.c.h.b16 %v1325
    %v1433 = vunpack.c.l.b16 %v1326
    %v1434 = vunpack.c.l.b16 %v1327
    %v1435 = vunpack.c.h.b16 %v1327
    %v1436 = vunpack.c.l.b16 %v1328
    %v1437 = vunpack.c.l.b16 %v1329
    %v1438 = vunpack.c.h.b16 %v1329
    %v1439 = vunpack.c.l.b16 %v1330
    %v1440 = vunpack.c.l.b16 %v1331
    %v1441 = vunpack.c.h.b16 %v1331
    %v1442 = vunpack.c.l.b16 %v1332
    %v1443 = vunpack.c.l.b16 %v1333
    %v1444 = vunpack.c.h.b16 %v1333
    %v1445 = vunpack.c.l.b16 %v1334
    %v1446 = vunpack.c.l.b16 %v1335
    %v1447 = vunpack.c.h.b16 %v1335
    %v1448 = vunpack.c.l.b16 %v1336
    %v1449 = vunpack.c.l.b16 %v1337
    %v1450 = vunpack.c.h.b16 %v1337
    %v1451 = vunpack.c.l.b16 %v1338
    %v1452 = vpack.c.b16 %v1407, %v1404
    %v1453 = vpack.c.b16 %v1408, %v1405
    %v1454 = vpack.c.b16 %v1409, %v1406
    %v1455 = vpack.c.b16 %v1413, %v1410
    %v1456 = vpack.c.b16 %v1414, %v1411
    %v1457 = vpack.c.b16 %v1415, %v1412
    %v1458 = vpack.c.b16 %v1419, %v1416
    %v1459 = vpack.c.b16 %v1420, %v1417
    %v1460 = vpack.c.b16 %v1421, %v1418
    %v1461 = vpack.c.b16 %v1425, %v1422
    %v1462 = vpack.c.b16 %v1426, %v1423
    %v1463 = vpack.c.b16 %v1427, %v1424
    %v1464 = vpack.c.b16 %v1431, %v1428
    %v1465 = vpack.c.b16 %v1432, %v1429
    %v1466 = vpack.c.b16 %v1433, %v1430
    %v1467 = vpack.c.b16 %v1437, %v1434
    %v1468 = vpack.c.b16 %v1438, %v1435
    %v1469 = vpack.c.b16 %v1439, %v1436
    %v1470 = vpack.c.b16 %v1443, %v1440
    %v1471 = vpack.c.b16 %v1444, %v1441
    %v1472 = vpack.c.b16 %v1445, %v1442
    %v1473 = vpack.c.b16 %v1449, %v1446
    %v1474 = vpack.c.b16 %v1450, %v1447
    %v1475 = vpack.c.b16 %v1451, %v1448
    %1500 = vmatprep.subr.bf16.mxu0 %v1474
    %1501 = vmatpush1.bf16.msra.mxu0 %v1473
    %1502 = vmatprep.subr.bf16.mxu0 %v1471
    %1503 = vmatpush1.bf16.msra.mxu0 %v1470
    %1504 = vmatprep.subr.bf16.mxu0 %v1468
    %1505 = vmatpush1.bf16.msra.mxu0 %v1467
    %1506 = vmatprep.subr.bf16.mxu0 %v1465
    %1507 = vmatpush1.bf16.msra.mxu0 %v1464
    %1508 = vmatprep.subr.bf16.mxu0 %v1462
    %1509 = vmatpush1.bf16.msra.mxu0 %v1461
    %1510 = vmatprep.subr.bf16.mxu0 %v1459
    %1511 = vmatpush1.bf16.msra.mxu0 %v1458
    %1512 = vmatprep.subr.bf16.mxu0 %v1456
    %1513 = vmatpush1.bf16.msra.mxu0 %v1455
    %1514 = vmatprep.subr.bf16.mxu0 %v1453
    %1515 = vmatpush1.bf16.msra.mxu0 %v1452
    %1516 = vmatprep.subr.bf16.mxu0 0
    %1517 = vmatpush2.bf16.msra.mxu0 0
    %1518 = vmatprep.subr.bf16.mxu0 0
    %1519 = vmatpush2.bf16.msra.mxu0 0
    %1520 = vmatprep.subr.bf16.mxu0 0
    %1521 = vmatpush2.bf16.msra.mxu0 0
    %1522 = vmatprep.subr.bf16.mxu0 0
    %1523 = vmatpush2.bf16.msra.mxu0 0
    %1524 = vmatprep.subr.bf16.mxu0 0
    %1525 = vmatpush2.bf16.msra.mxu0 0
    %1526 = vmatprep.subr.bf16.mxu0 0
    %1527 = vmatpush2.bf16.msra.mxu0 0
    %1528 = vmatprep.subr.bf16.mxu0 0
    %1529 = vmatpush2.bf16.msra.mxu0 0
    %1530 = vmatprep.subr.bf16.mxu0 0
    %1531 = vmatpush2.bf16.msra.mxu0 0
    %1532 = vmatprep.mubr.bf16.mxu0 0
    %1533 = vmatmul.mubr.bf16.gmra.mxu0 0
    %v1534 = vpop.f32.mrf.mxu0
    %v1535 = vadd.f32 0.0, %v1534
    %v1536 = vpop.f32.mrf.mxu0
    %v1537 = vadd.f32 0.0, %v1536
    %v1538 = vpop.f32.mrf.mxu0
    %v1539 = vadd.f32 0.0, %v1538
    %v1540 = vpop.f32.mrf.mxu0
    %v1541 = vadd.f32 0.0, %v1540
    %1542 = vdwg.mxu0
    %1543 = vmatprep.subr.bf16.mxu0 0
    %1544 = vmatpush1.bf16.msra.mxu0 %v1475
    %1545 = vmatprep.subr.bf16.mxu0 0
    %1546 = vmatpush1.bf16.msra.mxu0 %v1472
    %1547 = vmatprep.subr.bf16.mxu0 0
    %1548 = vmatpush1.bf16.msra.mxu0 %v1469
    %1549 = vmatprep.subr.bf16.mxu0 0
    %1550 = vmatpush1.bf16.msra.mxu0 %v1466
    %1551 = vmatprep.subr.bf16.mxu0 0
    %1552 = vmatpush1.bf16.msra.mxu0 %v1463
    %1553 = vmatprep.subr.bf16.mxu0 0
    %1554 = vmatpush1.bf16.msra.mxu0 %v1460
    %1555 = vmatprep.subr.bf16.mxu0 0
    %1556 = vmatpush1.bf16.msra.mxu0 %v1457
    %1557 = vmatprep.subr.bf16.mxu0 0
    %1558 = vmatpush1.bf16.msra.mxu0 %v1454
    %1559 = vmatprep.subr.bf16.mxu0 0
    %1560 = vmatpush2.bf16.msra.mxu0 0
    %1561 = vmatprep.subr.bf16.mxu0 0
    %1562 = vmatpush2.bf16.msra.mxu0 0
    %1563 = vmatprep.subr.bf16.mxu0 0
    %1564 = vmatpush2.bf16.msra.mxu0 0
    %1565 = vmatprep.subr.bf16.mxu0 0
    %1566 = vmatpush2.bf16.msra.mxu0 0
    %1567 = vmatprep.subr.bf16.mxu0 0
    %1568 = vmatpush2.bf16.msra.mxu0 0
    %1569 = vmatprep.subr.bf16.mxu0 0
    %1570 = vmatpush2.bf16.msra.mxu0 0
    %1571 = vmatprep.subr.bf16.mxu0 0
    %1572 = vmatpush2.bf16.msra.mxu0 0
    %1573 = vmatprep.subr.bf16.mxu0 0
    %1574 = vmatpush2.bf16.msra.mxu0 0
    %1575 = vmatprep.mubr.bf16.mxu0 0
    %1576 = vmatmul.mubr.bf16.gmra.mxu0 0
    %v1577 = vpop.f32.mrf.mxu0
    %v1578 = vadd.f32 0.0, %v1577
    %v1579 = vpop.f32.mrf.mxu0
    %v1580 = vpop.f32.mrf.mxu0
    %v1581 = vadd.f32 0.0, %v1580
    %v1582 = vpop.f32.mrf.mxu0
    %1583 = vdwg.mxu0
    %v1616 = vunpack.c.l.b16 %v1340
    %v1617 = vunpack.c.h.b16 %v1340
    %v1618 = vunpack.c.l.b16 %v1341
    %v1619 = vunpack.c.l.b16 %v1342
    %v1620 = vunpack.c.h.b16 %v1342
    %v1621 = vunpack.c.l.b16 %v1343
    %v1622 = vunpack.c.l.b16 %v1344
    %v1623 = vunpack.c.h.b16 %v1344
    %v1624 = vunpack.c.l.b16 %v1345
    %v1625 = vunpack.c.l.b16 %v1346
    %v1626 = vunpack.c.h.b16 %v1346
    %v1627 = vunpack.c.l.b16 %v1347
    %v1628 = vunpack.c.l.b16 %v1348
    %v1629 = vunpack.c.h.b16 %v1348
    %v1630 = vunpack.c.l.b16 %v1349
    %v1631 = vunpack.c.l.b16 %v1350
    %v1632 = vunpack.c.h.b16 %v1350
    %v1633 = vunpack.c.l.b16 %v1351
    %v1634 = vunpack.c.l.b16 %v1352
    %v1635 = vunpack.c.h.b16 %v1352
    %v1636 = vunpack.c.l.b16 %v1353
    %v1637 = vunpack.c.l.b16 %v1354
    %v1638 = vunpack.c.h.b16 %v1354
    %v1639 = vunpack.c.l.b16 %v1355
    %v1640 = vunpack.c.l.b16 %v1356
    %v1641 = vunpack.c.h.b16 %v1356
    %v1642 = vunpack.c.l.b16 %v1357
    %v1643 = vunpack.c.l.b16 %v1358
    %v1644 = vunpack.c.h.b16 %v1358
    %v1645 = vunpack.c.l.b16 %v1359
    %v1646 = vunpack.c.l.b16 %v1360
    %v1647 = vunpack.c.h.b16 %v1360
    %v1648 = vunpack.c.l.b16 %v1361
    %v1649 = vunpack.c.l.b16 %v1362
    %v1650 = vunpack.c.h.b16 %v1362
    %v1651 = vunpack.c.l.b16 %v1363
    %v1652 = vunpack.c.l.b16 %v1364
    %v1653 = vunpack.c.h.b16 %v1364
    %v1654 = vunpack.c.l.b16 %v1365
    %v1655 = vunpack.c.l.b16 %v1366
    %v1656 = vunpack.c.h.b16 %v1366
    %v1657 = vunpack.c.l.b16 %v1367
    %v1658 = vunpack.c.l.b16 %v1368
    %v1659 = vunpack.c.h.b16 %v1368
    %v1660 = vunpack.c.l.b16 %v1369
    %v1661 = vunpack.c.l.b16 %v1370
    %v1662 = vunpack.c.h.b16 %v1370
    %v1663 = vunpack.c.l.b16 %v1371
    %v1664 = vpack.c.b16 %v1619, %v1616
    %v1665 = vpack.c.b16 %v1620, %v1617
    %v1666 = vpack.c.b16 %v1621, %v1618
    %v1667 = vpack.c.b16 %v1625, %v1622
    %v1668 = vpack.c.b16 %v1626, %v1623
    %v1669 = vpack.c.b16 %v1627, %v1624
    %v1670 = vpack.c.b16 %v1631, %v1628
    %v1671 = vpack.c.b16 %v1632, %v1629
    %v1672 = vpack.c.b16 %v1633, %v1630
    %v1673 = vpack.c.b16 %v1637, %v1634
    %v1674 = vpack.c.b16 %v1638, %v1635
    %v1675 = vpack.c.b16 %v1639, %v1636
    %v1676 = vpack.c.b16 %v1643, %v1640
    %v1677 = vpack.c.b16 %v1644, %v1641
    %v1678 = vpack.c.b16 %v1645, %v1642
    %v1679 = vpack.c.b16 %v1649, %v1646
    %v1680 = vpack.c.b16 %v1650, %v1647
    %v1681 = vpack.c.b16 %v1651, %v1648
    %v1682 = vpack.c.b16 %v1655, %v1652
    %v1683 = vpack.c.b16 %v1656, %v1653
    %v1684 = vpack.c.b16 %v1657, %v1654
    %v1685 = vpack.c.b16 %v1661, %v1658
    %v1686 = vpack.c.b16 %v1662, %v1659
    %v1687 = vpack.c.b16 %v1663, %v1660
    %1712 = vmatprep.subr.bf16.mxu0 %v1686
    %1713 = vmatpush1.bf16.msra.mxu0 %v1685
    %1714 = vmatprep.subr.bf16.mxu0 %v1683
    %1715 = vmatpush1.bf16.msra.mxu0 %v1682
    %1716 = vmatprep.subr.bf16.mxu0 %v1680
    %1717 = vmatpush1.bf16.msra.mxu0 %v1679
    %1718 = vmatprep.subr.bf16.mxu0 %v1677
    %1719 = vmatpush1.bf16.msra.mxu0 %v1676
    %1720 = vmatprep.subr.bf16.mxu0 %v1674
    %1721 = vmatpush1.bf16.msra.mxu0 %v1673
    %1722 = vmatprep.subr.bf16.mxu0 %v1671
    %1723 = vmatpush1.bf16.msra.mxu0 %v1670
    %1724 = vmatprep.subr.bf16.mxu0 %v1668
    %1725 = vmatpush1.bf16.msra.mxu0 %v1667
    %1726 = vmatprep.subr.bf16.mxu0 %v1665
    %1727 = vmatpush1.bf16.msra.mxu0 %v1664
    %1728 = vmatprep.subr.bf16.mxu0 0
    %1729 = vmatpush2.bf16.msra.mxu0 0
    %1730 = vmatprep.subr.bf16.mxu0 0
    %1731 = vmatpush2.bf16.msra.mxu0 0
    %1732 = vmatprep.subr.bf16.mxu0 0
    %1733 = vmatpush2.bf16.msra.mxu0 0
    %1734 = vmatprep.subr.bf16.mxu0 0
    %1735 = vmatpush2.bf16.msra.mxu0 0
    %1736 = vmatprep.subr.bf16.mxu0 0
    %1737 = vmatpush2.bf16.msra.mxu0 0
    %1738 = vmatprep.subr.bf16.mxu0 0
    %1739 = vmatpush2.bf16.msra.mxu0 0
    %1740 = vmatprep.subr.bf16.mxu0 0
    %1741 = vmatpush2.bf16.msra.mxu0 0
    %1742 = vmatprep.subr.bf16.mxu0 0
    %1743 = vmatpush2.bf16.msra.mxu0 0
    %1744 = vmatprep.mubr.bf16.mxu0 0
    %1745 = vmatmul.mubr.bf16.gmra.mxu0 0
    %v1746 = vpop.f32.mrf.mxu0
    %v1747 = vadd.f32 0.0, %v1746
    %v1748 = vpop.f32.mrf.mxu0
    %v1749 = vadd.f32 0.0, %v1748
    %v1750 = vpop.f32.mrf.mxu0
    %v1751 = vadd.f32 0.0, %v1750
    %v1752 = vpop.f32.mrf.mxu0
    %v1753 = vadd.f32 0.0, %v1752
    %1754 = vdwg.mxu0
    %1755 = vmatprep.subr.bf16.mxu0 0
    %1756 = vmatpush1.bf16.msra.mxu0 %v1687
    %1757 = vmatprep.subr.bf16.mxu0 0
    %1758 = vmatpush1.bf16.msra.mxu0 %v1684
    %1759 = vmatprep.subr.bf16.mxu0 0
    %1760 = vmatpush1.bf16.msra.mxu0 %v1681
    %1761 = vmatprep.subr.bf16.mxu0 0
    %1762 = vmatpush1.bf16.msra.mxu0 %v1678
    %1763 = vmatprep.subr.bf16.mxu0 0
    %1764 = vmatpush1.bf16.msra.mxu0 %v1675
    %1765 = vmatprep.subr.bf16.mxu0 0
    %1766 = vmatpush1.bf16.msra.mxu0 %v1672
    %1767 = vmatprep.subr.bf16.mxu0 0
    %1768 = vmatpush1.bf16.msra.mxu0 %v1669
    %1769 = vmatprep.subr.bf16.mxu0 0
    %1770 = vmatpush1.bf16.msra.mxu0 %v1666
    %1771 = vmatprep.subr.bf16.mxu0 0
    %1772 = vmatpush2.bf16.msra.mxu0 0
    %1773 = vmatprep.subr.bf16.mxu0 0
    %1774 = vmatpush2.bf16.msra.mxu0 0
    %1775 = vmatprep.subr.bf16.mxu0 0
    %1776 = vmatpush2.bf16.msra.mxu0 0
    %1777 = vmatprep.subr.bf16.mxu0 0
    %1778 = vmatpush2.bf16.msra.mxu0 0
    %1779 = vmatprep.subr.bf16.mxu0 0
    %1780 = vmatpush2.bf16.msra.mxu0 0
    %1781 = vmatprep.subr.bf16.mxu0 0
    %1782 = vmatpush2.bf16.msra.mxu0 0
    %1783 = vmatprep.subr.bf16.mxu0 0
    %1784 = vmatpush2.bf16.msra.mxu0 0
    %1785 = vmatprep.subr.bf16.mxu0 0
    %1786 = vmatpush2.bf16.msra.mxu0 0
    %1787 = vmatprep.mubr.bf16.mxu0 0
    %1788 = vmatmul.mubr.bf16.gmra.mxu0 0
    %v1789 = vpop.f32.mrf.mxu0
    %v1790 = vadd.f32 0.0, %v1789
    %v1791 = vpop.f32.mrf.mxu0
    %v1792 = vpop.f32.mrf.mxu0
    %v1793 = vadd.f32 0.0, %v1792
    %v1794 = vpop.f32.mrf.mxu0
    %1795 = vdwg.mxu0
    %v1796 = vld [vmem:[#allocation2] sm:$0xff]
    %v1797 = vld [vmem:[#allocation2 + $0x8] sm:$0xf]
    %v1798 = vld [vmem:[#allocation2 + $0xc] sm:$0xff]
    %v1799 = vld [vmem:[#allocation2 + $0x14] sm:$0xf]
    %v1800 = vunpack.c.l.bf16 %v1796
    %v1801 = vunpack.c.h.bf16 %v1796
    %v1802 = vunpack.c.l.bf16 %v1797
    %v1803 = vunpack.c.l.bf16 %v1798
    %v1804 = vunpack.c.h.bf16 %v1798
    %v1805 = vunpack.c.l.bf16 %v1799
    %v1806 = vadd.f32 %v1800, %v1535
    %v1807 = vadd.f32 %v1803, %v1539
    %v1808 = vxor.u32 %v1806, 2147483648
    %v1809 = vxor.u32 %v1807, 2147483648
    %v1810 = vmul.f32 %v1808, 1.442695
    %v1811 = vpow.pop %v1810
    %v1812 = vmul.f32 %v1809, 1.442695
    %v1813 = vpow.pop %v1812
    %v1814 = vadd.f32 %v1811, 1.0
    %v1815 = vadd.f32 %v1813, 1.0
    %v1816 = vrcp.pop %v1814
    %v1817 = vmul.f32 1.0, %v1816
    %v1818 = vrcp.pop %v1815
    %v1819 = vmul.f32 1.0, %v1818
    %v1820 = vadd.f32 %v1801, %v1537
    %v1821 = vadd.f32 %v1804, %v1541
    %v1822 = vxor.u32 %v1820, 2147483648
    %v1823 = vxor.u32 %v1821, 2147483648
    %v1824 = vmul.f32 %v1822, 1.442695
    %v1825 = vpow.pop %v1824
    %v1826 = vmul.f32 %v1823, 1.442695
    %v1827 = vpow.pop %v1826
    %v1828 = vadd.f32 %v1825, 1.0
    %v1829 = vadd.f32 %v1827, 1.0
    %v1830 = vrcp.pop %v1828
    %v1831 = vmul.f32 1.0, %v1830
    %v1832 = vrcp.pop %v1829
    %v1833 = vmul.f32 1.0, %v1832
    %v1834 = vadd.f32 %v1578, %v1298
    %v1835 = vadd.f32 %v1581, %v1298
    %v1836 = vmul.f32 %v1817, %v1834
    %v1837 = vmul.f32 %v1819, %v1835
    %v1838 = vadd.f32 %v1802, %v1836
    %v1839 = vadd.f32 %v1805, %v1837
    %v1840 = vtanh.pop %v1838
    %v1841 = vtanh.pop %v1839
    %v1842 = vsub.f32 1.0, %v1831
    %v1843 = vsub.f32 1.0, %v1833
    %v1844 = vmul.f32 %v1842, %v1840
    %v1845 = vmul.f32 %v1843, %v1841
    %v1846 = vmul.f32 %v1831, 0.0
    %v1847 = vmul.f32 %v1833, 0.0
    %v1848 = vadd.f32 %v1844, %v1846
    %v1849 = vadd.f32 %v1845, %v1847
    %s1850 = scalar_lea.vmem [#allocation3], 168
    %v1851 = vld [vmem:[%s1850] sm:$0xff]
    %v1852 = vld [vmem:[%s1850 + $0x8] sm:$0xf]
    %v1853 = vld [vmem:[%s1850 + $0xc] sm:$0xff]
    %v1854 = vld [vmem:[%s1850 + $0x14] sm:$0xf]
    %v1855 = vunpack.c.l.bf16 %v1851
    %v1856 = vunpack.c.h.bf16 %v1851
    %v1857 = vunpack.c.l.bf16 %v1852
    %v1858 = vunpack.c.l.bf16 %v1853
    %v1859 = vunpack.c.h.bf16 %v1853
    %v1860 = vunpack.c.l.bf16 %v1854
    %v1861 = vadd.f32 %v1855, %v1747
    %v1862 = vadd.f32 %v1858, %v1751
    %v1863 = vxor.u32 %v1861, 2147483648
    %v1864 = vxor.u32 %v1862, 2147483648
    %v1865 = vmul.f32 %v1863, 1.442695
    %v1866 = vpow.pop %v1865
    %v1867 = vmul.f32 %v1864, 1.442695
    %v1868 = vpow.pop %v1867
    %v1869 = vadd.f32 %v1866, 1.0
    %v1870 = vadd.f32 %v1868, 1.0
    %v1871 = vrcp.pop %v1869
    %v1872 = vmul.f32 1.0, %v1871
    %v1873 = vrcp.pop %v1870
    %v1874 = vmul.f32 1.0, %v1873
    %v1875 = vadd.f32 %v1856, %v1749
    %v1876 = vadd.f32 %v1859, %v1753
    %v1877 = vxor.u32 %v1875, 2147483648
    %v1878 = vxor.u32 %v1876, 2147483648
    %v1879 = vmul.f32 %v1877, 1.442695
    %v1880 = vpow.pop %v1879
    %v1881 = vmul.f32 %v1878, 1.442695
    %v1882 = vpow.pop %v1881
    %v1883 = vadd.f32 %v1880, 1.0
    %v1884 = vadd.f32 %v1882, 1.0
    %v1885 = vrcp.pop %v1883
    %v1886 = vmul.f32 1.0, %v1885
    %v1887 = vrcp.pop %v1884
    %v1888 = vmul.f32 1.0, %v1887
    %v1889 = vadd.f32 %v1790, %v1305
    %v1890 = vadd.f32 %v1793, %v1305
    %v1891 = vmul.f32 %v1872, %v1889
    %v1892 = vmul.f32 %v1874, %v1890
    %v1893 = vadd.f32 %v1857, %v1891
    %v1894 = vadd.f32 %v1860, %v1892
    %v1895 = vtanh.pop %v1893
    %v1896 = vtanh.pop %v1894
    %v1897 = vsub.f32 1.0, %v1886
    %v1898 = vsub.f32 1.0, %v1888
    %v1899 = vmul.f32 %v1897, %v1895
    %v1900 = vmul.f32 %v1898, %v1896
    %v1901 = vmul.f32 %v1886, 0.0
    %v1902 = vmul.f32 %v1888, 0.0
    %v1903 = vadd.f32 %v1899, %v1901
    %v1904 = vadd.f32 %v1900, %v1902
    %v1905 = vpack.c.bf16 %v1849, %v1848
    %v1907 = vunpack.c.l.b16 %v1905
    %v1908 = vunpack.c.h.b16 %v1905
    %v1909 = vpack.c.b16 %v1907, %v1907
    %v1910 = vpack.c.b16 %v1908, %v1908
    %1913 = vst [vmem:[%s8] sm:$0xf] %v1909
    %1914 = vst [vmem:[%s8 + $0x8] sm:$0xf] %v1910
    %v1915 = vpack.c.bf16 %v1904, %v1903
    %v1917 = vunpack.c.l.b16 %v1915
    %v1918 = vunpack.c.h.b16 %v1915
    %v1919 = vpack.c.b16 %v1917, %v1917
    %v1920 = vpack.c.b16 %v1918, %v1918
    %s1923 = scalar_lea.vmem %s8, 112
    %1924 = vst [vmem:[%s1923 + $0x4] sm:$0xf] %v1919
    %1925 = vst [vmem:[%s1923 + $0xc] sm:$0xf] %v1920
    %1926 = vmatprep.subr.bf16.mxu0 %v1474
    %1927 = vmatpush1.bf16.msra.mxu0 %v1473
    %1928 = vmatprep.subr.bf16.mxu0 %v1471
    %1929 = vmatpush1.bf16.msra.mxu0 %v1470
    %1930 = vmatprep.subr.bf16.mxu0 %v1468
    %1931 = vmatpush1.bf16.msra.mxu0 %v1467
    %1932 = vmatprep.subr.bf16.mxu0 %v1465
    %1933 = vmatpush1.bf16.msra.mxu0 %v1464
    %1934 = vmatprep.subr.bf16.mxu0 %v1462
    %1935 = vmatpush1.bf16.msra.mxu0 %v1461
    %1936 = vmatprep.subr.bf16.mxu0 %v1459
    %1937 = vmatpush1.bf16.msra.mxu0 %v1458
    %1938 = vmatprep.subr.bf16.mxu0 %v1456
    %1939 = vmatpush1.bf16.msra.mxu0 %v1455
    %1940 = vmatprep.subr.bf16.mxu0 %v1453
    %1941 = vmatpush1.bf16.msra.mxu0 %v1452
    %1942 = vmatprep.subr.bf16.mxu0 0
    %1943 = vmatpush2.bf16.msra.mxu0 0
    %1944 = vmatprep.subr.bf16.mxu0 0
    %1945 = vmatpush2.bf16.msra.mxu0 0
    %1946 = vmatprep.subr.bf16.mxu0 0
    %1947 = vmatpush2.bf16.msra.mxu0 0
    %1948 = vmatprep.subr.bf16.mxu0 0
    %1949 = vmatpush2.bf16.msra.mxu0 0
    %1950 = vmatprep.subr.bf16.mxu0 0
    %1951 = vmatpush2.bf16.msra.mxu0 0
    %1952 = vmatprep.subr.bf16.mxu0 0
    %1953 = vmatpush2.bf16.msra.mxu0 0
    %1954 = vmatprep.subr.bf16.mxu0 0
    %1955 = vmatpush2.bf16.msra.mxu0 0
    %1956 = vmatprep.subr.bf16.mxu0 0
    %1957 = vmatpush2.bf16.msra.mxu0 0
    %1958 = vmatprep.mubr.bf16.mxu0 0
    %1959 = vmatmul.mubr.bf16.gmra.mxu0 %v1905
    %v1960 = vpop.f32.mrf.mxu0
    %v1961 = vadd.f32 0.0, %v1960
    %v1962 = vpop.f32.mrf.mxu0
    %v1963 = vadd.f32 0.0, %v1962
    %v1964 = vpop.f32.mrf.mxu0
    %v1965 = vadd.f32 0.0, %v1964
    %v1966 = vpop.f32.mrf.mxu0
    %v1967 = vadd.f32 0.0, %v1966
    %1968 = vdwg.mxu0
    %1969 = vmatprep.subr.bf16.mxu0 0
    %1970 = vmatpush1.bf16.msra.mxu0 %v1475
    %1971 = vmatprep.subr.bf16.mxu0 0
    %1972 = vmatpush1.bf16.msra.mxu0 %v1472
    %1973 = vmatprep.subr.bf16.mxu0 0
    %1974 = vmatpush1.bf16.msra.mxu0 %v1469
    %1975 = vmatprep.subr.bf16.mxu0 0
    %1976 = vmatpush1.bf16.msra.mxu0 %v1466
    %1977 = vmatprep.subr.bf16.mxu0 0
    %1978 = vmatpush1.bf16.msra.mxu0 %v1463
    %1979 = vmatprep.subr.bf16.mxu0 0
    %1980 = vmatpush1.bf16.msra.mxu0 %v1460
    %1981 = vmatprep.subr.bf16.mxu0 0
    %1982 = vmatpush1.bf16.msra.mxu0 %v1457
    %1983 = vmatprep.subr.bf16.mxu0 0
    %1984 = vmatpush1.bf16.msra.mxu0 %v1454
    %1985 = vmatprep.subr.bf16.mxu0 0
    %1986 = vmatpush2.bf16.msra.mxu0 0
    %1987 = vmatprep.subr.bf16.mxu0 0
    %1988 = vmatpush2.bf16.msra.mxu0 0
    %1989 = vmatprep.subr.bf16.mxu0 0
    %1990 = vmatpush2.bf16.msra.mxu0 0
    %1991 = vmatprep.subr.bf16.mxu0 0
    %1992 = vmatpush2.bf16.msra.mxu0 0
    %1993 = vmatprep.subr.bf16.mxu0 0
    %1994 = vmatpush2.bf16.msra.mxu0 0
    %1995 = vmatprep.subr.bf16.mxu0 0
    %1996 = vmatpush2.bf16.msra.mxu0 0
    %1997 = vmatprep.subr.bf16.mxu0 0
    %1998 = vmatpush2.bf16.msra.mxu0 0
    %1999 = vmatprep.subr.bf16.mxu0 0
    %2000 = vmatpush2.bf16.msra.mxu0 0
    %2001 = vmatprep.mubr.bf16.mxu0 0
    %2002 = vmatmul.mubr.bf16.gmra.mxu0 %v1905
    %v2003 = vpop.f32.mrf.mxu0
    %v2004 = vadd.f32 0.0, %v2003
    %v2005 = vpop.f32.mrf.mxu0
    %v2006 = vpop.f32.mrf.mxu0
    %v2007 = vadd.f32 0.0, %v2006
    %v2008 = vpop.f32.mrf.mxu0
    %2009 = vdwg.mxu0
    %2010 = vmatprep.subr.bf16.mxu0 %v1686
    %2011 = vmatpush1.bf16.msra.mxu0 %v1685
    %2012 = vmatprep.subr.bf16.mxu0 %v1683
    %2013 = vmatpush1.bf16.msra.mxu0 %v1682
    %2014 = vmatprep.subr.bf16.mxu0 %v1680
    %2015 = vmatpush1.bf16.msra.mxu0 %v1679
    %2016 = vmatprep.subr.bf16.mxu0 %v1677
    %2017 = vmatpush1.bf16.msra.mxu0 %v1676
    %2018 = vmatprep.subr.bf16.mxu0 %v1674
    %2019 = vmatpush1.bf16.msra.mxu0 %v1673
    %2020 = vmatprep.subr.bf16.mxu0 %v1671
    %2021 = vmatpush1.bf16.msra.mxu0 %v1670
    %2022 = vmatprep.subr.bf16.mxu0 %v1668
    %2023 = vmatpush1.bf16.msra.mxu0 %v1667
    %2024 = vmatprep.subr.bf16.mxu0 %v1665
    %2025 = vmatpush1.bf16.msra.mxu0 %v1664
    %2026 = vmatprep.subr.bf16.mxu0 0
    %2027 = vmatpush2.bf16.msra.mxu0 0
    %2028 = vmatprep.subr.bf16.mxu0 0
    %2029 = vmatpush2.bf16.msra.mxu0 0
    %2030 = vmatprep.subr.bf16.mxu0 0
    %2031 = vmatpush2.bf16.msra.mxu0 0
    %2032 = vmatprep.subr.bf16.mxu0 0
    %2033 = vmatpush2.bf16.msra.mxu0 0
    %2034 = vmatprep.subr.bf16.mxu0 0
    %2035 = vmatpush2.bf16.msra.mxu0 0
    %2036 = vmatprep.subr.bf16.mxu0 0
    %2037 = vmatpush2.bf16.msra.mxu0 0
    %2038 = vmatprep.subr.bf16.mxu0 0
    %2039 = vmatpush2.bf16.msra.mxu0 0
    %2040 = vmatprep.subr.bf16.mxu0 0
    %2041 = vmatpush2.bf16.msra.mxu0 0
    %2042 = vmatprep.mubr.bf16.mxu0 0
    %2043 = vmatmul.mubr.bf16.gmra.mxu0 %v1915
    %v2044 = vpop.f32.mrf.mxu0
    %v2045 = vadd.f32 0.0, %v2044
    %v2046 = vpop.f32.mrf.mxu0
    %v2047 = vadd.f32 0.0, %v2046
    %v2048 = vpop.f32.mrf.mxu0
    %v2049 = vadd.f32 0.0, %v2048
    %v2050 = vpop.f32.mrf.mxu0
    %v2051 = vadd.f32 0.0, %v2050
    %2052 = vdwg.mxu0
    %2053 = vmatprep.subr.bf16.mxu0 0
    %2054 = vmatpush1.bf16.msra.mxu0 %v1687
    %2055 = vmatprep.subr.bf16.mxu0 0
    %2056 = vmatpush1.bf16.msra.mxu0 %v1684
    %2057 = vmatprep.subr.bf16.mxu0 0
    %2058 = vmatpush1.bf16.msra.mxu0 %v1681
    %2059 = vmatprep.subr.bf16.mxu0 0
    %2060 = vmatpush1.bf16.msra.mxu0 %v1678
    %2061 = vmatprep.subr.bf16.mxu0 0
    %2062 = vmatpush1.bf16.msra.mxu0 %v1675
    %2063 = vmatprep.subr.bf16.mxu0 0
    %2064 = vmatpush1.bf16.msra.mxu0 %v1672
    %2065 = vmatprep.subr.bf16.mxu0 0
    %2066 = vmatpush1.bf16.msra.mxu0 %v1669
    %2067 = vmatprep.subr.bf16.mxu0 0
    %2068 = vmatpush1.bf16.msra.mxu0 %v1666
    %2069 = vmatprep.subr.bf16.mxu0 0
    %2070 = vmatpush2.bf16.msra.mxu0 0
    %2071 = vmatprep.subr.bf16.mxu0 0
    %2072 = vmatpush2.bf16.msra.mxu0 0
    %2073 = vmatprep.subr.bf16.mxu0 0
    %2074 = vmatpush2.bf16.msra.mxu0 0
    %2075 = vmatprep.subr.bf16.mxu0 0
    %2076 = vmatpush2.bf16.msra.mxu0 0
    %2077 = vmatprep.subr.bf16.mxu0 0
    %2078 = vmatpush2.bf16.msra.mxu0 0
    %2079 = vmatprep.subr.bf16.mxu0 0
    %2080 = vmatpush2.bf16.msra.mxu0 0
    %2081 = vmatprep.subr.bf16.mxu0 0
    %2082 = vmatpush2.bf16.msra.mxu0 0
    %2083 = vmatprep.subr.bf16.mxu0 0
    %2084 = vmatpush2.bf16.msra.mxu0 0
    %2085 = vmatprep.mubr.bf16.mxu0 0
    %2086 = vmatmul.mubr.bf16.gmra.mxu0 %v1915
    %v2087 = vpop.f32.mrf.mxu0
    %v2088 = vadd.f32 0.0, %v2087
    %v2089 = vpop.f32.mrf.mxu0
    %v2090 = vpop.f32.mrf.mxu0
    %v2091 = vadd.f32 0.0, %v2090
    %v2092 = vpop.f32.mrf.mxu0
    %2093 = vdwg.mxu0
    %s2094 = scalar_lea.vmem [#allocation2], 24
    %v2095 = vld [vmem:[%s2094] sm:$0xff]
    %v2096 = vld [vmem:[%s2094 + $0x8] sm:$0xf]
    %v2097 = vld [vmem:[%s2094 + $0xc] sm:$0xff]
    %v2098 = vld [vmem:[%s2094 + $0x14] sm:$0xf]
    %v2099 = vunpack.c.l.bf16 %v2095
    %v2100 = vunpack.c.h.bf16 %v2095
    %v2101 = vunpack.c.l.bf16 %v2096
    %v2102 = vunpack.c.l.bf16 %v2097
    %v2103 = vunpack.c.h.bf16 %v2097
    %v2104 = vunpack.c.l.bf16 %v2098
    %v2105 = vadd.f32 %v2099, %v1961
    %v2106 = vadd.f32 %v2102, %v1965
    %v2107 = vxor.u32 %v2105, 2147483648
    %v2108 = vxor.u32 %v2106, 2147483648
    %v2109 = vmul.f32 %v2107, 1.442695
    %v2110 = vpow.pop %v2109
    %v2111 = vmul.f32 %v2108, 1.442695
    %v2112 = vpow.pop %v2111
    %v2113 = vadd.f32 %v2110, 1.0
    %v2114 = vadd.f32 %v2112, 1.0
    %v2115 = vrcp.pop %v2113
    %v2116 = vmul.f32 1.0, %v2115
    %v2117 = vrcp.pop %v2114
    %v2118 = vmul.f32 1.0, %v2117
    %v2119 = vadd.f32 %v2100, %v1963
    %v2120 = vadd.f32 %v2103, %v1967
    %v2121 = vxor.u32 %v2119, 2147483648
    %v2122 = vxor.u32 %v2120, 2147483648
    %v2123 = vmul.f32 %v2121, 1.442695
    %v2124 = vpow.pop %v2123
    %v2125 = vmul.f32 %v2122, 1.442695
    %v2126 = vpow.pop %v2125
    %v2127 = vadd.f32 %v2124, 1.0
    %v2128 = vadd.f32 %v2126, 1.0
    %v2129 = vrcp.pop %v2127
    %v2130 = vmul.f32 1.0, %v2129
    %v2131 = vrcp.pop %v2128
    %v2132 = vmul.f32 1.0, %v2131
    %v2133 = vadd.f32 %v2004, %v1298
    %v2134 = vadd.f32 %v2007, %v1298
    %v2135 = vmul.f32 %v2116, %v2133
    %v2136 = vmul.f32 %v2118, %v2134
    %v2137 = vadd.f32 %v2101, %v2135
    %v2138 = vadd.f32 %v2104, %v2136
    %v2139 = vtanh.pop %v2137
    %v2140 = vtanh.pop %v2138
    %v2141 = vsub.f32 1.0, %v2130
    %v2142 = vsub.f32 1.0, %v2132
    %v2143 = vmul.f32 %v2141, %v2139
    %v2144 = vmul.f32 %v2142, %v2140
    %v2145 = vmul.f32 %v2130, %v1848
    %v2146 = vmul.f32 %v2132, %v1849
    %v2147 = vadd.f32 %v2143, %v2145
    %v2148 = vadd.f32 %v2144, %v2146
    %s2149 = scalar_lea.vmem [#allocation3], 144
    %v2150 = vld [vmem:[%s2149] sm:$0xff]
    %v2151 = vld [vmem:[%s2149 + $0x8] sm:$0xf]
    %v2152 = vld [vmem:[%s2149 + $0xc] sm:$0xff]
    %v2153 = vld [vmem:[%s2149 + $0x14] sm:$0xf]
    %v2154 = vunpack.c.l.bf16 %v2150
    %v2155 = vunpack.c.h.bf16 %v2150
    %v2156 = vunpack.c.l.bf16 %v2151
    %v2157 = vunpack.c.l.bf16 %v2152
    %v2158 = vunpack.c.h.bf16 %v2152
    %v2159 = vunpack.c.l.bf16 %v2153
    %v2160 = vadd.f32 %v2154, %v2045
    %v2161 = vadd.f32 %v2157, %v2049
    %v2162 = vxor.u32 %v2160, 2147483648
    %v2163 = vxor.u32 %v2161, 2147483648
    %v2164 = vmul.f32 %v2162, 1.442695
    %v2165 = vpow.pop %v2164
    %v2166 = vmul.f32 %v2163, 1.442695
    %v2167 = vpow.pop %v2166
    %v2168 = vadd.f32 %v2165, 1.0
    %v2169 = vadd.f32 %v2167, 1.0
    %v2170 = vrcp.pop %v2168
    %v2171 = vmul.f32 1.0, %v2170
    %v2172 = vrcp.pop %v2169
    %v2173 = vmul.f32 1.0, %v2172
    %v2174 = vadd.f32 %v2155, %v2047
    %v2175 = vadd.f32 %v2158, %v2051
    %v2176 = vxor.u32 %v2174, 2147483648
    %v2177 = vxor.u32 %v2175, 2147483648
    %v2178 = vmul.f32 %v2176, 1.442695
    %v2179 = vpow.pop %v2178
    %v2180 = vmul.f32 %v2177, 1.442695
    %v2181 = vpow.pop %v2180
    %v2182 = vadd.f32 %v2179, 1.0
    %v2183 = vadd.f32 %v2181, 1.0
    %v2184 = vrcp.pop %v2182
    %v2185 = vmul.f32 1.0, %v2184
    %v2186 = vrcp.pop %v2183
    %v2187 = vmul.f32 1.0, %v2186
    %v2188 = vadd.f32 %v2088, %v1305
    %v2189 = vadd.f32 %v2091, %v1305
    %v2190 = vmul.f32 %v2171, %v2188
    %v2191 = vmul.f32 %v2173, %v2189
    %v2192 = vadd.f32 %v2156, %v2190
    %v2193 = vadd.f32 %v2159, %v2191
    %v2194 = vtanh.pop %v2192
    %v2195 = vtanh.pop %v2193
    %v2196 = vsub.f32 1.0, %v2185
    %v2197 = vsub.f32 1.0, %v2187
    %v2198 = vmul.f32 %v2196, %v2194
    %v2199 = vmul.f32 %v2197, %v2195
    %v2200 = vmul.f32 %v2185, %v1903
    %v2201 = vmul.f32 %v2187, %v1904
    %v2202 = vadd.f32 %v2198, %v2200
    %v2203 = vadd.f32 %v2199, %v2201
    %v2204 = vpack.c.bf16 %v2148, %v2147
    %v2206 = vunpack.c.l.b16 %v2204
    %v2207 = vunpack.c.h.b16 %v2204
    %v2208 = vpack.c.b16 %v2206, %v2206
    %v2209 = vpack.c.b16 %v2207, %v2207
    %s2212 = scalar_lea.vmem %s8, 16
    %2213 = vst [vmem:[%s2212] sm:$0xf] %v2208
    %2214 = vst [vmem:[%s2212 + $0x8] sm:$0xf] %v2209
    %v2215 = vpack.c.bf16 %v2203, %v2202
    %v2217 = vunpack.c.l.b16 %v2215
    %v2218 = vunpack.c.h.b16 %v2215
    %v2219 = vpack.c.b16 %v2217, %v2217
    %v2220 = vpack.c.b16 %v2218, %v2218
    %s2223 = scalar_lea.vmem %s8, 96
    %2224 = vst [vmem:[%s2223 + $0x4] sm:$0xf] %v2219
    %2225 = vst [vmem:[%s2223 + $0xc] sm:$0xf] %v2220
    %2226 = vmatprep.subr.bf16.mxu0 %v1474
    %2227 = vmatpush1.bf16.msra.mxu0 %v1473
    %2228 = vmatprep.subr.bf16.mxu0 %v1471
    %2229 = vmatpush1.bf16.msra.mxu0 %v1470
    %2230 = vmatprep.subr.bf16.mxu0 %v1468
    %2231 = vmatpush1.bf16.msra.mxu0 %v1467
    %2232 = vmatprep.subr.bf16.mxu0 %v1465
    %2233 = vmatpush1.bf16.msra.mxu0 %v1464
    %2234 = vmatprep.subr.bf16.mxu0 %v1462
    %2235 = vmatpush1.bf16.msra.mxu0 %v1461
    %2236 = vmatprep.subr.bf16.mxu0 %v1459
    %2237 = vmatpush1.bf16.msra.mxu0 %v1458
    %2238 = vmatprep.subr.bf16.mxu0 %v1456
    %2239 = vmatpush1.bf16.msra.mxu0 %v1455
    %2240 = vmatprep.subr.bf16.mxu0 %v1453
    %2241 = vmatpush1.bf16.msra.mxu0 %v1452
    %2242 = vmatprep.subr.bf16.mxu0 0
    %2243 = vmatpush2.bf16.msra.mxu0 0
    %2244 = vmatprep.subr.bf16.mxu0 0
    %2245 = vmatpush2.bf16.msra.mxu0 0
    %2246 = vmatprep.subr.bf16.mxu0 0
    %2247 = vmatpush2.bf16.msra.mxu0 0
    %2248 = vmatprep.subr.bf16.mxu0 0
    %2249 = vmatpush2.bf16.msra.mxu0 0
    %2250 = vmatprep.subr.bf16.mxu0 0
    %2251 = vmatpush2.bf16.msra.mxu0 0
    %2252 = vmatprep.subr.bf16.mxu0 0
    %2253 = vmatpush2.bf16.msra.mxu0 0
    %2254 = vmatprep.subr.bf16.mxu0 0
    %2255 = vmatpush2.bf16.msra.mxu0 0
    %2256 = vmatprep.subr.bf16.mxu0 0
    %2257 = vmatpush2.bf16.msra.mxu0 0
    %2258 = vmatprep.mubr.bf16.mxu0 0
    %2259 = vmatmul.mubr.bf16.gmra.mxu0 %v2204
    %v2260 = vpop.f32.mrf.mxu0
    %v2261 = vadd.f32 0.0, %v2260
    %v2262 = vpop.f32.mrf.mxu0
    %v2263 = vadd.f32 0.0, %v2262
    %v2264 = vpop.f32.mrf.mxu0
    %v2265 = vadd.f32 0.0, %v2264
    %v2266 = vpop.f32.mrf.mxu0
    %v2267 = vadd.f32 0.0, %v2266
    %2268 = vdwg.mxu0
    %2269 = vmatprep.subr.bf16.mxu0 0
    %2270 = vmatpush1.bf16.msra.mxu0 %v1475
    %2271 = vmatprep.subr.bf16.mxu0 0
    %2272 = vmatpush1.bf16.msra.mxu0 %v1472
    %2273 = vmatprep.subr.bf16.mxu0 0
    %2274 = vmatpush1.bf16.msra.mxu0 %v1469
    %2275 = vmatprep.subr.bf16.mxu0 0
    %2276 = vmatpush1.bf16.msra.mxu0 %v1466
    %2277 = vmatprep.subr.bf16.mxu0 0
    %2278 = vmatpush1.bf16.msra.mxu0 %v1463
    %2279 = vmatprep.subr.bf16.mxu0 0
    %2280 = vmatpush1.bf16.msra.mxu0 %v1460
    %2281 = vmatprep.subr.bf16.mxu0 0
    %2282 = vmatpush1.bf16.msra.mxu0 %v1457
    %2283 = vmatprep.subr.bf16.mxu0 0
    %2284 = vmatpush1.bf16.msra.mxu0 %v1454
    %2285 = vmatprep.subr.bf16.mxu0 0
    %2286 = vmatpush2.bf16.msra.mxu0 0
    %2287 = vmatprep.subr.bf16.mxu0 0
    %2288 = vmatpush2.bf16.msra.mxu0 0
    %2289 = vmatprep.subr.bf16.mxu0 0
    %2290 = vmatpush2.bf16.msra.mxu0 0
    %2291 = vmatprep.subr.bf16.mxu0 0
    %2292 = vmatpush2.bf16.msra.mxu0 0
    %2293 = vmatprep.subr.bf16.mxu0 0
    %2294 = vmatpush2.bf16.msra.mxu0 0
    %2295 = vmatprep.subr.bf16.mxu0 0
    %2296 = vmatpush2.bf16.msra.mxu0 0
    %2297 = vmatprep.subr.bf16.mxu0 0
    %2298 = vmatpush2.bf16.msra.mxu0 0
    %2299 = vmatprep.subr.bf16.mxu0 0
    %2300 = vmatpush2.bf16.msra.mxu0 0
    %2301 = vmatprep.mubr.bf16.mxu0 0
    %2302 = vmatmul.mubr.bf16.gmra.mxu0 %v2204
    %v2303 = vpop.f32.mrf.mxu0
    %v2304 = vadd.f32 0.0, %v2303
    %v2305 = vpop.f32.mrf.mxu0
    %v2306 = vpop.f32.mrf.mxu0
    %v2307 = vadd.f32 0.0, %v2306
    %v2308 = vpop.f32.mrf.mxu0
    %2309 = vdwg.mxu0
    %2310 = vmatprep.subr.bf16.mxu0 %v1686
    %2311 = vmatpush1.bf16.msra.mxu0 %v1685
    %2312 = vmatprep.subr.bf16.mxu0 %v1683
    %2313 = vmatpush1.bf16.msra.mxu0 %v1682
    %2314 = vmatprep.subr.bf16.mxu0 %v1680
    %2315 = vmatpush1.bf16.msra.mxu0 %v1679
    %2316 = vmatprep.subr.bf16.mxu0 %v1677
    %2317 = vmatpush1.bf16.msra.mxu0 %v1676
    %2318 = vmatprep.subr.bf16.mxu0 %v1674
    %2319 = vmatpush1.bf16.msra.mxu0 %v1673
    %2320 = vmatprep.subr.bf16.mxu0 %v1671
    %2321 = vmatpush1.bf16.msra.mxu0 %v1670
    %2322 = vmatprep.subr.bf16.mxu0 %v1668
    %2323 = vmatpush1.bf16.msra.mxu0 %v1667
    %2324 = vmatprep.subr.bf16.mxu0 %v1665
    %2325 = vmatpush1.bf16.msra.mxu0 %v1664
    %2326 = vmatprep.subr.bf16.mxu0 0
    %2327 = vmatpush2.bf16.msra.mxu0 0
    %2328 = vmatprep.subr.bf16.mxu0 0
    %2329 = vmatpush2.bf16.msra.mxu0 0
    %2330 = vmatprep.subr.bf16.mxu0 0
    %2331 = vmatpush2.bf16.msra.mxu0 0
    %2332 = vmatprep.subr.bf16.mxu0 0
    %2333 = vmatpush2.bf16.msra.mxu0 0
    %2334 = vmatprep.subr.bf16.mxu0 0
    %2335 = vmatpush2.bf16.msra.mxu0 0
    %2336 = vmatprep.subr.bf16.mxu0 0
    %2337 = vmatpush2.bf16.msra.mxu0 0
    %2338 = vmatprep.subr.bf16.mxu0 0
    %2339 = vmatpush2.bf16.msra.mxu0 0
    %2340 = vmatprep.subr.bf16.mxu0 0
    %2341 = vmatpush2.bf16.msra.mxu0 0
    %2342 = vmatprep.mubr.bf16.mxu0 0
    %2343 = vmatmul.mubr.bf16.gmra.mxu0 %v2215
    %v2344 = vpop.f32.mrf.mxu0
    %v2345 = vadd.f32 0.0, %v2344
    %v2346 = vpop.f32.mrf.mxu0
    %v2347 = vadd.f32 0.0, %v2346
    %v2348 = vpop.f32.mrf.mxu0
    %v2349 = vadd.f32 0.0, %v2348
    %v2350 = vpop.f32.mrf.mxu0
    %v2351 = vadd.f32 0.0, %v2350
    %2352 = vdwg.mxu0
    %2353 = vmatprep.subr.bf16.mxu0 0
    %2354 = vmatpush1.bf16.msra.mxu0 %v1687
    %2355 = vmatprep.subr.bf16.mxu0 0
    %2356 = vmatpush1.bf16.msra.mxu0 %v1684
    %2357 = vmatprep.subr.bf16.mxu0 0
    %2358 = vmatpush1.bf16.msra.mxu0 %v1681
    %2359 = vmatprep.subr.bf16.mxu0 0
    %2360 = vmatpush1.bf16.msra.mxu0 %v1678
    %2361 = vmatprep.subr.bf16.mxu0 0
    %2362 = vmatpush1.bf16.msra.mxu0 %v1675
    %2363 = vmatprep.subr.bf16.mxu0 0
    %2364 = vmatpush1.bf16.msra.mxu0 %v1672
    %2365 = vmatprep.subr.bf16.mxu0 0
    %2366 = vmatpush1.bf16.msra.mxu0 %v1669
    %2367 = vmatprep.subr.bf16.mxu0 0
    %2368 = vmatpush1.bf16.msra.mxu0 %v1666
    %2369 = vmatprep.subr.bf16.mxu0 0
    %2370 = vmatpush2.bf16.msra.mxu0 0
    %2371 = vmatprep.subr.bf16.mxu0 0
    %2372 = vmatpush2.bf16.msra.mxu0 0
    %2373 = vmatprep.subr.bf16.mxu0 0
    %2374 = vmatpush2.bf16.msra.mxu0 0
    %2375 = vmatprep.subr.bf16.mxu0 0
    %2376 = vmatpush2.bf16.msra.mxu0 0
    %2377 = vmatprep.subr.bf16.mxu0 0
    %2378 = vmatpush2.bf16.msra.mxu0 0
    %2379 = vmatprep.subr.bf16.mxu0 0
    %2380 = vmatpush2.bf16.msra.mxu0 0
    %2381 = vmatprep.subr.bf16.mxu0 0
    %2382 = vmatpush2.bf16.msra.mxu0 0
    %2383 = vmatprep.subr.bf16.mxu0 0
    %2384 = vmatpush2.bf16.msra.mxu0 0
    %2385 = vmatprep.mubr.bf16.mxu0 0
    %2386 = vmatmul.mubr.bf16.gmra.mxu0 %v2215
    %v2387 = vpop.f32.mrf.mxu0
    %v2388 = vadd.f32 0.0, %v2387
    %v2389 = vpop.f32.mrf.mxu0
    %v2390 = vpop.f32.mrf.mxu0
    %v2391 = vadd.f32 0.0, %v2390
    %v2392 = vpop.f32.mrf.mxu0
    %2393 = vdwg.mxu0
    %s2394 = scalar_lea.vmem [#allocation2], 48
    %v2395 = vld [vmem:[%s2394] sm:$0xff]
    %v2396 = vld [vmem:[%s2394 + $0x8] sm:$0xf]
    %v2397 = vld [vmem:[%s2394 + $0xc] sm:$0xff]
    %v2398 = vld [vmem:[%s2394 + $0x14] sm:$0xf]
    %v2399 = vunpack.c.l.bf16 %v2395
    %v2400 = vunpack.c.h.bf16 %v2395
    %v2401 = vunpack.c.l.bf16 %v2396
    %v2402 = vunpack.c.l.bf16 %v2397
    %v2403 = vunpack.c.h.bf16 %v2397
    %v2404 = vunpack.c.l.bf16 %v2398
    %v2405 = vadd.f32 %v2399, %v2261
    %v2406 = vadd.f32 %v2402, %v2265
    %v2407 = vxor.u32 %v2405, 2147483648
    %v2408 = vxor.u32 %v2406, 2147483648
    %v2409 = vmul.f32 %v2407, 1.442695
    %v2410 = vpow.pop %v2409
    %v2411 = vmul.f32 %v2408, 1.442695
    %v2412 = vpow.pop %v2411
    %v2413 = vadd.f32 %v2410, 1.0
    %v2414 = vadd.f32 %v2412, 1.0
    %v2415 = vrcp.pop %v2413
    %v2416 = vmul.f32 1.0, %v2415
    %v2417 = vrcp.pop %v2414
    %v2418 = vmul.f32 1.0, %v2417
    %v2419 = vadd.f32 %v2400, %v2263
    %v2420 = vadd.f32 %v2403, %v2267
    %v2421 = vxor.u32 %v2419, 2147483648
    %v2422 = vxor.u32 %v2420, 2147483648
    %v2423 = vmul.f32 %v2421, 1.442695
    %v2424 = vpow.pop %v2423
    %v2425 = vmul.f32 %v2422, 1.442695
    %v2426 = vpow.pop %v2425
    %v2427 = vadd.f32 %v2424, 1.0
    %v2428 = vadd.f32 %v2426, 1.0
    %v2429 = vrcp.pop %v2427
    %v2430 = vmul.f32 1.0, %v2429
    %v2431 = vrcp.pop %v2428
    %v2432 = vmul.f32 1.0, %v2431
    %v2433 = vadd.f32 %v2304, %v1298
    %v2434 = vadd.f32 %v2307, %v1298
    %v2435 = vmul.f32 %v2416, %v2433
    %v2436 = vmul.f32 %v2418, %v2434
    %v2437 = vadd.f32 %v2401, %v2435
    %v2438 = vadd.f32 %v2404, %v2436
    %v2439 = vtanh.pop %v2437
    %v2440 = vtanh.pop %v2438
    %v2441 = vsub.f32 1.0, %v2430
    %v2442 = vsub.f32 1.0, %v2432
    %v2443 = vmul.f32 %v2441, %v2439
    %v2444 = vmul.f32 %v2442, %v2440
    %v2445 = vmul.f32 %v2430, %v2147
    %v2446 = vmul.f32 %v2432, %v2148
    %v2447 = vadd.f32 %v2443, %v2445
    %v2448 = vadd.f32 %v2444, %v2446
    %s2449 = scalar_lea.vmem [#allocation3], 120
    %v2450 = vld [vmem:[%s2449] sm:$0xff]
    %v2451 = vld [vmem:[%s2449 + $0x8] sm:$0xf]
    %v2452 = vld [vmem:[%s2449 + $0xc] sm:$0xff]
    %v2453 = vld [vmem:[%s2449 + $0x14] sm:$0xf]
    %v2454 = vunpack.c.l.bf16 %v2450
    %v2455 = vunpack.c.h.bf16 %v2450
    %v2456 = vunpack.c.l.bf16 %v2451
    %v2457 = vunpack.c.l.bf16 %v2452
    %v2458 = vunpack.c.h.bf16 %v2452
    %v2459 = vunpack.c.l.bf16 %v2453
    %v2460 = vadd.f32 %v2454, %v2345
    %v2461 = vadd.f32 %v2457, %v2349
    %v2462 = vxor.u32 %v2460, 2147483648
    %v2463 = vxor.u32 %v2461, 2147483648
    %v2464 = vmul.f32 %v2462, 1.442695
    %v2465 = vpow.pop %v2464
    %v2466 = vmul.f32 %v2463, 1.442695
    %v2467 = vpow.pop %v2466
    %v2468 = vadd.f32 %v2465, 1.0
    %v2469 = vadd.f32 %v2467, 1.0
    %v2470 = vrcp.pop %v2468
    %v2471 = vmul.f32 1.0, %v2470
    %v2472 = vrcp.pop %v2469
    %v2473 = vmul.f32 1.0, %v2472
    %v2474 = vadd.f32 %v2455, %v2347
    %v2475 = vadd.f32 %v2458, %v2351
    %v2476 = vxor.u32 %v2474, 2147483648
    %v2477 = vxor.u32 %v2475, 2147483648
    %v2478 = vmul.f32 %v2476, 1.442695
    %v2479 = vpow.pop %v2478
    %v2480 = vmul.f32 %v2477, 1.442695
    %v2481 = vpow.pop %v2480
    %v2482 = vadd.f32 %v2479, 1.0
    %v2483 = vadd.f32 %v2481, 1.0
    %v2484 = vrcp.pop %v2482
    %v2485 = vmul.f32 1.0, %v2484
    %v2486 = vrcp.pop %v2483
    %v2487 = vmul.f32 1.0, %v2486
    %v2488 = vadd.f32 %v2388, %v1305
    %v2489 = vadd.f32 %v2391, %v1305
    %v2490 = vmul.f32 %v2471, %v2488
    %v2491 = vmul.f32 %v2473, %v2489
    %v2492 = vadd.f32 %v2456, %v2490
    %v2493 = vadd.f32 %v2459, %v2491
    %v2494 = vtanh.pop %v2492
    %v2495 = vtanh.pop %v2493
    %v2496 = vsub.f32 1.0, %v2485
    %v2497 = vsub.f32 1.0, %v2487
    %v2498 = vmul.f32 %v2496, %v2494
    %v2499 = vmul.f32 %v2497, %v2495
    %v2500 = vmul.f32 %v2485, %v2202
    %v2501 = vmul.f32 %v2487, %v2203
    %v2502 = vadd.f32 %v2498, %v2500
    %v2503 = vadd.f32 %v2499, %v2501
    %v2504 = vpack.c.bf16 %v2448, %v2447
    %v2506 = vunpack.c.l.b16 %v2504
    %v2507 = vunpack.c.h.b16 %v2504
    %v2508 = vpack.c.b16 %v2506, %v2506
    %v2509 = vpack.c.b16 %v2507, %v2507
    %s2512 = scalar_lea.vmem %s8, 32
    %2513 = vst [vmem:[%s2512] sm:$0xf] %v2508
    %2514 = vst [vmem:[%s2512 + $0x8] sm:$0xf] %v2509
    %v2515 = vpack.c.bf16 %v2503, %v2502
    %v2517 = vunpack.c.l.b16 %v2515
    %v2518 = vunpack.c.h.b16 %v2515
    %v2519 = vpack.c.b16 %v2517, %v2517
    %v2520 = vpack.c.b16 %v2518, %v2518
    %s2523 = scalar_lea.vmem %s8, 80
    %2524 = vst [vmem:[%s2523 + $0x4] sm:$0xf] %v2519
    %2525 = vst [vmem:[%s2523 + $0xc] sm:$0xf] %v2520
    %2526 = vmatprep.subr.bf16.mxu0 %v1474
    %2527 = vmatpush1.bf16.msra.mxu0 %v1473
    %2528 = vmatprep.subr.bf16.mxu0 %v1471
    %2529 = vmatpush1.bf16.msra.mxu0 %v1470
    %2530 = vmatprep.subr.bf16.mxu0 %v1468
    %2531 = vmatpush1.bf16.msra.mxu0 %v1467
    %2532 = vmatprep.subr.bf16.mxu0 %v1465
    %2533 = vmatpush1.bf16.msra.mxu0 %v1464
    %2534 = vmatprep.subr.bf16.mxu0 %v1462
    %2535 = vmatpush1.bf16.msra.mxu0 %v1461
    %2536 = vmatprep.subr.bf16.mxu0 %v1459
    %2537 = vmatpush1.bf16.msra.mxu0 %v1458
    %2538 = vmatprep.subr.bf16.mxu0 %v1456
    %2539 = vmatpush1.bf16.msra.mxu0 %v1455
    %2540 = vmatprep.subr.bf16.mxu0 %v1453
    %2541 = vmatpush1.bf16.msra.mxu0 %v1452
    %2542 = vmatprep.subr.bf16.mxu0 0
    %2543 = vmatpush2.bf16.msra.mxu0 0
    %2544 = vmatprep.subr.bf16.mxu0 0
    %2545 = vmatpush2.bf16.msra.mxu0 0
    %2546 = vmatprep.subr.bf16.mxu0 0
    %2547 = vmatpush2.bf16.msra.mxu0 0
    %2548 = vmatprep.subr.bf16.mxu0 0
    %2549 = vmatpush2.bf16.msra.mxu0 0
    %2550 = vmatprep.subr.bf16.mxu0 0
    %2551 = vmatpush2.bf16.msra.mxu0 0
    %2552 = vmatprep.subr.bf16.mxu0 0
    %2553 = vmatpush2.bf16.msra.mxu0 0
    %2554 = vmatprep.subr.bf16.mxu0 0
    %2555 = vmatpush2.bf16.msra.mxu0 0
    %2556 = vmatprep.subr.bf16.mxu0 0
    %2557 = vmatpush2.bf16.msra.mxu0 0
    %2558 = vmatprep.mubr.bf16.mxu0 0
    %2559 = vmatmul.mubr.bf16.gmra.mxu0 %v2504
    %v2560 = vpop.f32.mrf.mxu0
    %v2561 = vadd.f32 0.0, %v2560
    %v2562 = vpop.f32.mrf.mxu0
    %v2563 = vadd.f32 0.0, %v2562
    %v2564 = vpop.f32.mrf.mxu0
    %v2565 = vadd.f32 0.0, %v2564
    %v2566 = vpop.f32.mrf.mxu0
    %v2567 = vadd.f32 0.0, %v2566
    %2568 = vdwg.mxu0
    %2569 = vmatprep.subr.bf16.mxu0 0
    %2570 = vmatpush1.bf16.msra.mxu0 %v1475
    %2571 = vmatprep.subr.bf16.mxu0 0
    %2572 = vmatpush1.bf16.msra.mxu0 %v1472
    %2573 = vmatprep.subr.bf16.mxu0 0
    %2574 = vmatpush1.bf16.msra.mxu0 %v1469
    %2575 = vmatprep.subr.bf16.mxu0 0
    %2576 = vmatpush1.bf16.msra.mxu0 %v1466
    %2577 = vmatprep.subr.bf16.mxu0 0
    %2578 = vmatpush1.bf16.msra.mxu0 %v1463
    %2579 = vmatprep.subr.bf16.mxu0 0
    %2580 = vmatpush1.bf16.msra.mxu0 %v1460
    %2581 = vmatprep.subr.bf16.mxu0 0
    %2582 = vmatpush1.bf16.msra.mxu0 %v1457
    %2583 = vmatprep.subr.bf16.mxu0 0
    %2584 = vmatpush1.bf16.msra.mxu0 %v1454
    %2585 = vmatprep.subr.bf16.mxu0 0
    %2586 = vmatpush2.bf16.msra.mxu0 0
    %2587 = vmatprep.subr.bf16.mxu0 0
    %2588 = vmatpush2.bf16.msra.mxu0 0
    %2589 = vmatprep.subr.bf16.mxu0 0
    %2590 = vmatpush2.bf16.msra.mxu0 0
    %2591 = vmatprep.subr.bf16.mxu0 0
    %2592 = vmatpush2.bf16.msra.mxu0 0
    %2593 = vmatprep.subr.bf16.mxu0 0
    %2594 = vmatpush2.bf16.msra.mxu0 0
    %2595 = vmatprep.subr.bf16.mxu0 0
    %2596 = vmatpush2.bf16.msra.mxu0 0
    %2597 = vmatprep.subr.bf16.mxu0 0
    %2598 = vmatpush2.bf16.msra.mxu0 0
    %2599 = vmatprep.subr.bf16.mxu0 0
    %2600 = vmatpush2.bf16.msra.mxu0 0
    %2601 = vmatprep.mubr.bf16.mxu0 0
    %2602 = vmatmul.mubr.bf16.gmra.mxu0 %v2504
    %v2603 = vpop.f32.mrf.mxu0
    %v2604 = vadd.f32 0.0, %v2603
    %v2605 = vpop.f32.mrf.mxu0
    %v2606 = vpop.f32.mrf.mxu0
    %v2607 = vadd.f32 0.0, %v2606
    %v2608 = vpop.f32.mrf.mxu0
    %2609 = vdwg.mxu0
    %2610 = vmatprep.subr.bf16.mxu0 %v1686
    %2611 = vmatpush1.bf16.msra.mxu0 %v1685
    %2612 = vmatprep.subr.bf16.mxu0 %v1683
    %2613 = vmatpush1.bf16.msra.mxu0 %v1682
    %2614 = vmatprep.subr.bf16.mxu0 %v1680
    %2615 = vmatpush1.bf16.msra.mxu0 %v1679
    %2616 = vmatprep.subr.bf16.mxu0 %v1677
    %2617 = vmatpush1.bf16.msra.mxu0 %v1676
    %2618 = vmatprep.subr.bf16.mxu0 %v1674
    %2619 = vmatpush1.bf16.msra.mxu0 %v1673
    %2620 = vmatprep.subr.bf16.mxu0 %v1671
    %2621 = vmatpush1.bf16.msra.mxu0 %v1670
    %2622 = vmatprep.subr.bf16.mxu0 %v1668
    %2623 = vmatpush1.bf16.msra.mxu0 %v1667
    %2624 = vmatprep.subr.bf16.mxu0 %v1665
    %2625 = vmatpush1.bf16.msra.mxu0 %v1664
    %2626 = vmatprep.subr.bf16.mxu0 0
    %2627 = vmatpush2.bf16.msra.mxu0 0
    %2628 = vmatprep.subr.bf16.mxu0 0
    %2629 = vmatpush2.bf16.msra.mxu0 0
    %2630 = vmatprep.subr.bf16.mxu0 0
    %2631 = vmatpush2.bf16.msra.mxu0 0
    %2632 = vmatprep.subr.bf16.mxu0 0
    %2633 = vmatpush2.bf16.msra.mxu0 0
    %2634 = vmatprep.subr.bf16.mxu0 0
    %2635 = vmatpush2.bf16.msra.mxu0 0
    %2636 = vmatprep.subr.bf16.mxu0 0
    %2637 = vmatpush2.bf16.msra.mxu0 0
    %2638 = vmatprep.subr.bf16.mxu0 0
    %2639 = vmatpush2.bf16.msra.mxu0 0
    %2640 = vmatprep.subr.bf16.mxu0 0
    %2641 = vmatpush2.bf16.msra.mxu0 0
    %2642 = vmatprep.mubr.bf16.mxu0 0
    %2643 = vmatmul.mubr.bf16.gmra.mxu0 %v2515
    %v2644 = vpop.f32.mrf.mxu0
    %v2645 = vadd.f32 0.0, %v2644
    %v2646 = vpop.f32.mrf.mxu0
    %v2647 = vadd.f32 0.0, %v2646
    %v2648 = vpop.f32.mrf.mxu0
    %v2649 = vadd.f32 0.0, %v2648
    %v2650 = vpop.f32.mrf.mxu0
    %v2651 = vadd.f32 0.0, %v2650
    %2652 = vdwg.mxu0
    %2653 = vmatprep.subr.bf16.mxu0 0
    %2654 = vmatpush1.bf16.msra.mxu0 %v1687
    %2655 = vmatprep.subr.bf16.mxu0 0
    %2656 = vmatpush1.bf16.msra.mxu0 %v1684
    %2657 = vmatprep.subr.bf16.mxu0 0
    %2658 = vmatpush1.bf16.msra.mxu0 %v1681
    %2659 = vmatprep.subr.bf16.mxu0 0
    %2660 = vmatpush1.bf16.msra.mxu0 %v1678
    %2661 = vmatprep.subr.bf16.mxu0 0
    %2662 = vmatpush1.bf16.msra.mxu0 %v1675
    %2663 = vmatprep.subr.bf16.mxu0 0
    %2664 = vmatpush1.bf16.msra.mxu0 %v1672
    %2665 = vmatprep.subr.bf16.mxu0 0
    %2666 = vmatpush1.bf16.msra.mxu0 %v1669
    %2667 = vmatprep.subr.bf16.mxu0 0
    %2668 = vmatpush1.bf16.msra.mxu0 %v1666
    %2669 = vmatprep.subr.bf16.mxu0 0
    %2670 = vmatpush2.bf16.msra.mxu0 0
    %2671 = vmatprep.subr.bf16.mxu0 0
    %2672 = vmatpush2.bf16.msra.mxu0 0
    %2673 = vmatprep.subr.bf16.mxu0 0
    %2674 = vmatpush2.bf16.msra.mxu0 0
    %2675 = vmatprep.subr.bf16.mxu0 0
    %2676 = vmatpush2.bf16.msra.mxu0 0
    %2677 = vmatprep.subr.bf16.mxu0 0
    %2678 = vmatpush2.bf16.msra.mxu0 0
    %2679 = vmatprep.subr.bf16.mxu0 0
    %2680 = vmatpush2.bf16.msra.mxu0 0
    %2681 = vmatprep.subr.bf16.mxu0 0
    %2682 = vmatpush2.bf16.msra.mxu0 0
    %2683 = vmatprep.subr.bf16.mxu0 0
    %2684 = vmatpush2.bf16.msra.mxu0 0
    %2685 = vmatprep.mubr.bf16.mxu0 0
    %2686 = vmatmul.mubr.bf16.gmra.mxu0 %v2515
    %v2687 = vpop.f32.mrf.mxu0
    %v2688 = vadd.f32 0.0, %v2687
    %v2689 = vpop.f32.mrf.mxu0
    %v2690 = vpop.f32.mrf.mxu0
    %v2691 = vadd.f32 0.0, %v2690
    %v2692 = vpop.f32.mrf.mxu0
    %2693 = vdwg.mxu0
    %s2694 = scalar_lea.vmem [#allocation2], 72
    %v2695 = vld [vmem:[%s2694] sm:$0xff]
    %v2696 = vld [vmem:[%s2694 + $0x8] sm:$0xf]
    %v2697 = vld [vmem:[%s2694 + $0xc] sm:$0xff]
    %v2698 = vld [vmem:[%s2694 + $0x14] sm:$0xf]
    %v2699 = vunpack.c.l.bf16 %v2695
    %v2700 = vunpack.c.h.bf16 %v2695
    %v2701 = vunpack.c.l.bf16 %v2696
    %v2702 = vunpack.c.l.bf16 %v2697
    %v2703 = vunpack.c.h.bf16 %v2697
    %v2704 = vunpack.c.l.bf16 %v2698
    %v2705 = vadd.f32 %v2699, %v2561
    %v2706 = vadd.f32 %v2702, %v2565
    %v2707 = vxor.u32 %v2705, 2147483648
    %v2708 = vxor.u32 %v2706, 2147483648
    %v2709 = vmul.f32 %v2707, 1.442695
    %v2710 = vpow.pop %v2709
    %v2711 = vmul.f32 %v2708, 1.442695
    %v2712 = vpow.pop %v2711
    %v2713 = vadd.f32 %v2710, 1.0
    %v2714 = vadd.f32 %v2712, 1.0
    %v2715 = vrcp.pop %v2713
    %v2716 = vmul.f32 1.0, %v2715
    %v2717 = vrcp.pop %v2714
    %v2718 = vmul.f32 1.0, %v2717
    %v2719 = vadd.f32 %v2700, %v2563
    %v2720 = vadd.f32 %v2703, %v2567
    %v2721 = vxor.u32 %v2719, 2147483648
    %v2722 = vxor.u32 %v2720, 2147483648
    %v2723 = vmul.f32 %v2721, 1.442695
    %v2724 = vpow.pop %v2723
    %v2725 = vmul.f32 %v2722, 1.442695
    %v2726 = vpow.pop %v2725
    %v2727 = vadd.f32 %v2724, 1.0
    %v2728 = vadd.f32 %v2726, 1.0
    %v2729 = vrcp.pop %v2727
    %v2730 = vmul.f32 1.0, %v2729
    %v2731 = vrcp.pop %v2728
    %v2732 = vmul.f32 1.0, %v2731
    %v2733 = vadd.f32 %v2604, %v1298
    %v2734 = vadd.f32 %v2607, %v1298
    %v2735 = vmul.f32 %v2716, %v2733
    %v2736 = vmul.f32 %v2718, %v2734
    %v2737 = vadd.f32 %v2701, %v2735
    %v2738 = vadd.f32 %v2704, %v2736
    %v2739 = vtanh.pop %v2737
    %v2740 = vtanh.pop %v2738
    %v2741 = vsub.f32 1.0, %v2730
    %v2742 = vsub.f32 1.0, %v2732
    %v2743 = vmul.f32 %v2741, %v2739
    %v2744 = vmul.f32 %v2742, %v2740
    %v2745 = vmul.f32 %v2730, %v2447
    %v2746 = vmul.f32 %v2732, %v2448
    %v2747 = vadd.f32 %v2743, %v2745
    %v2748 = vadd.f32 %v2744, %v2746
    %s2749 = scalar_lea.vmem [#allocation3], 96
    %v2750 = vld [vmem:[%s2749] sm:$0xff]
    %v2751 = vld [vmem:[%s2749 + $0x8] sm:$0xf]
    %v2752 = vld [vmem:[%s2749 + $0xc] sm:$0xff]
    %v2753 = vld [vmem:[%s2749 + $0x14] sm:$0xf]
    %v2754 = vunpack.c.l.bf16 %v2750
    %v2755 = vunpack.c.h.bf16 %v2750
    %v2756 = vunpack.c.l.bf16 %v2751
    %v2757 = vunpack.c.l.bf16 %v2752
    %v2758 = vunpack.c.h.bf16 %v2752
    %v2759 = vunpack.c.l.bf16 %v2753
    %v2760 = vadd.f32 %v2754, %v2645
    %v2761 = vadd.f32 %v2757, %v2649
    %v2762 = vxor.u32 %v2760, 2147483648
    %v2763 = vxor.u32 %v2761, 2147483648
    %v2764 = vmul.f32 %v2762, 1.442695
    %v2765 = vpow.pop %v2764
    %v2766 = vmul.f32 %v2763, 1.442695
    %v2767 = vpow.pop %v2766
    %v2768 = vadd.f32 %v2765, 1.0
    %v2769 = vadd.f32 %v2767, 1.0
    %v2770 = vrcp.pop %v2768
    %v2771 = vmul.f32 1.0, %v2770
    %v2772 = vrcp.pop %v2769
    %v2773 = vmul.f32 1.0, %v2772
    %v2774 = vadd.f32 %v2755, %v2647
    %v2775 = vadd.f32 %v2758, %v2651
    %v2776 = vxor.u32 %v2774, 2147483648
    %v2777 = vxor.u32 %v2775, 2147483648
    %v2778 = vmul.f32 %v2776, 1.442695
    %v2779 = vpow.pop %v2778
    %v2780 = vmul.f32 %v2777, 1.442695
    %v2781 = vpow.pop %v2780
    %v2782 = vadd.f32 %v2779, 1.0
    %v2783 = vadd.f32 %v2781, 1.0
    %v2784 = vrcp.pop %v2782
    %v2785 = vmul.f32 1.0, %v2784
    %v2786 = vrcp.pop %v2783
    %v2787 = vmul.f32 1.0, %v2786
    %v2788 = vadd.f32 %v2688, %v1305
    %v2789 = vadd.f32 %v2691, %v1305
    %v2790 = vmul.f32 %v2771, %v2788
    %v2791 = vmul.f32 %v2773, %v2789
    %v2792 = vadd.f32 %v2756, %v2790
    %v2793 = vadd.f32 %v2759, %v2791
    %v2794 = vtanh.pop %v2792
    %v2795 = vtanh.pop %v2793
    %v2796 = vsub.f32 1.0, %v2785
    %v2797 = vsub.f32 1.0, %v2787
    %v2798 = vmul.f32 %v2796, %v2794
    %v2799 = vmul.f32 %v2797, %v2795
    %v2800 = vmul.f32 %v2785, %v2502
    %v2801 = vmul.f32 %v2787, %v2503
    %v2802 = vadd.f32 %v2798, %v2800
    %v2803 = vadd.f32 %v2799, %v2801
    %v2804 = vpack.c.bf16 %v2748, %v2747
    %v2806 = vunpack.c.l.b16 %v2804
    %v2807 = vunpack.c.h.b16 %v2804
    %v2808 = vpack.c.b16 %v2806, %v2806
    %v2809 = vpack.c.b16 %v2807, %v2807
    %s2812 = scalar_lea.vmem %s8, 48
    %2813 = vst [vmem:[%s2812] sm:$0xf] %v2808
    %2814 = vst [vmem:[%s2812 + $0x8] sm:$0xf] %v2809
    %v2815 = vpack.c.bf16 %v2803, %v2802
    %v2817 = vunpack.c.l.b16 %v2815
    %v2818 = vunpack.c.h.b16 %v2815
    %v2819 = vpack.c.b16 %v2817, %v2817
    %v2820 = vpack.c.b16 %v2818, %v2818
    %s2823 = scalar_lea.vmem %s8, 64
    %2824 = vst [vmem:[%s2823 + $0x4] sm:$0xf] %v2819
    %2825 = vst [vmem:[%s2823 + $0xc] sm:$0xf] %v2820
    %2826 = vmatprep.subr.bf16.mxu0 %v1474
    %2827 = vmatpush1.bf16.msra.mxu0 %v1473
    %2828 = vmatprep.subr.bf16.mxu0 %v1471
    %2829 = vmatpush1.bf16.msra.mxu0 %v1470
    %2830 = vmatprep.subr.bf16.mxu0 %v1468
    %2831 = vmatpush1.bf16.msra.mxu0 %v1467
    %2832 = vmatprep.subr.bf16.mxu0 %v1465
    %2833 = vmatpush1.bf16.msra.mxu0 %v1464
    %2834 = vmatprep.subr.bf16.mxu0 %v1462
    %2835 = vmatpush1.bf16.msra.mxu0 %v1461
    %2836 = vmatprep.subr.bf16.mxu0 %v1459
    %2837 = vmatpush1.bf16.msra.mxu0 %v1458
    %2838 = vmatprep.subr.bf16.mxu0 %v1456
    %2839 = vmatpush1.bf16.msra.mxu0 %v1455
    %2840 = vmatprep.subr.bf16.mxu0 %v1453
    %2841 = vmatpush1.bf16.msra.mxu0 %v1452
    %2842 = vmatprep.subr.bf16.mxu0 0
    %2843 = vmatpush2.bf16.msra.mxu0 0
    %2844 = vmatprep.subr.bf16.mxu0 0
    %2845 = vmatpush2.bf16.msra.mxu0 0
    %2846 = vmatprep.subr.bf16.mxu0 0
    %2847 = vmatpush2.bf16.msra.mxu0 0
    %2848 = vmatprep.subr.bf16.mxu0 0
    %2849 = vmatpush2.bf16.msra.mxu0 0
    %2850 = vmatprep.subr.bf16.mxu0 0
    %2851 = vmatpush2.bf16.msra.mxu0 0
    %2852 = vmatprep.subr.bf16.mxu0 0
    %2853 = vmatpush2.bf16.msra.mxu0 0
    %2854 = vmatprep.subr.bf16.mxu0 0
    %2855 = vmatpush2.bf16.msra.mxu0 0
    %2856 = vmatprep.subr.bf16.mxu0 0
    %2857 = vmatpush2.bf16.msra.mxu0 0
    %2858 = vmatprep.mubr.bf16.mxu0 0
    %2859 = vmatmul.mubr.bf16.gmra.mxu0 %v2804
    %v2860 = vpop.f32.mrf.mxu0
    %v2861 = vadd.f32 0.0, %v2860
    %v2862 = vpop.f32.mrf.mxu0
    %v2863 = vadd.f32 0.0, %v2862
    %v2864 = vpop.f32.mrf.mxu0
    %v2865 = vadd.f32 0.0, %v2864
    %v2866 = vpop.f32.mrf.mxu0
    %v2867 = vadd.f32 0.0, %v2866
    %2868 = vdwg.mxu0
    %2869 = vmatprep.subr.bf16.mxu0 0
    %2870 = vmatpush1.bf16.msra.mxu0 %v1475
    %2871 = vmatprep.subr.bf16.mxu0 0
    %2872 = vmatpush1.bf16.msra.mxu0 %v1472
    %2873 = vmatprep.subr.bf16.mxu0 0
    %2874 = vmatpush1.bf16.msra.mxu0 %v1469
    %2875 = vmatprep.subr.bf16.mxu0 0
    %2876 = vmatpush1.bf16.msra.mxu0 %v1466
    %2877 = vmatprep.subr.bf16.mxu0 0
    %2878 = vmatpush1.bf16.msra.mxu0 %v1463
    %2879 = vmatprep.subr.bf16.mxu0 0
    %2880 = vmatpush1.bf16.msra.mxu0 %v1460
    %2881 = vmatprep.subr.bf16.mxu0 0
    %2882 = vmatpush1.bf16.msra.mxu0 %v1457
    %2883 = vmatprep.subr.bf16.mxu0 0
    %2884 = vmatpush1.bf16.msra.mxu0 %v1454
    %2885 = vmatprep.subr.bf16.mxu0 0
    %2886 = vmatpush2.bf16.msra.mxu0 0
    %2887 = vmatprep.subr.bf16.mxu0 0
    %2888 = vmatpush2.bf16.msra.mxu0 0
    %2889 = vmatprep.subr.bf16.mxu0 0
    %2890 = vmatpush2.bf16.msra.mxu0 0
    %2891 = vmatprep.subr.bf16.mxu0 0
    %2892 = vmatpush2.bf16.msra.mxu0 0
    %2893 = vmatprep.subr.bf16.mxu0 0
    %2894 = vmatpush2.bf16.msra.mxu0 0
    %2895 = vmatprep.subr.bf16.mxu0 0
    %2896 = vmatpush2.bf16.msra.mxu0 0
    %2897 = vmatprep.subr.bf16.mxu0 0
    %2898 = vmatpush2.bf16.msra.mxu0 0
    %2899 = vmatprep.subr.bf16.mxu0 0
    %2900 = vmatpush2.bf16.msra.mxu0 0
    %2901 = vmatprep.mubr.bf16.mxu0 0
    %2902 = vmatmul.mubr.bf16.gmra.mxu0 %v2804
    %v2903 = vpop.f32.mrf.mxu0
    %v2904 = vadd.f32 0.0, %v2903
    %v2905 = vpop.f32.mrf.mxu0
    %v2906 = vpop.f32.mrf.mxu0
    %v2907 = vadd.f32 0.0, %v2906
    %v2908 = vpop.f32.mrf.mxu0
    %2909 = vdwg.mxu0
    %2910 = vmatprep.subr.bf16.mxu0 %v1686
    %2911 = vmatpush1.bf16.msra.mxu0 %v1685
    %2912 = vmatprep.subr.bf16.mxu0 %v1683
    %2913 = vmatpush1.bf16.msra.mxu0 %v1682
    %2914 = vmatprep.subr.bf16.mxu0 %v1680
    %2915 = vmatpush1.bf16.msra.mxu0 %v1679
    %2916 = vmatprep.subr.bf16.mxu0 %v1677
    %2917 = vmatpush1.bf16.msra.mxu0 %v1676
    %2918 = vmatprep.subr.bf16.mxu0 %v1674
    %2919 = vmatpush1.bf16.msra.mxu0 %v1673
    %2920 = vmatprep.subr.bf16.mxu0 %v1671
    %2921 = vmatpush1.bf16.msra.mxu0 %v1670
    %2922 = vmatprep.subr.bf16.mxu0 %v1668
    %2923 = vmatpush1.bf16.msra.mxu0 %v1667
    %2924 = vmatprep.subr.bf16.mxu0 %v1665
    %2925 = vmatpush1.bf16.msra.mxu0 %v1664
    %2926 = vmatprep.subr.bf16.mxu0 0
    %2927 = vmatpush2.bf16.msra.mxu0 0
    %2928 = vmatprep.subr.bf16.mxu0 0
    %2929 = vmatpush2.bf16.msra.mxu0 0
    %2930 = vmatprep.subr.bf16.mxu0 0
    %2931 = vmatpush2.bf16.msra.mxu0 0
    %2932 = vmatprep.subr.bf16.mxu0 0
    %2933 = vmatpush2.bf16.msra.mxu0 0
    %2934 = vmatprep.subr.bf16.mxu0 0
    %2935 = vmatpush2.bf16.msra.mxu0 0
    %2936 = vmatprep.subr.bf16.mxu0 0
    %2937 = vmatpush2.bf16.msra.mxu0 0
    %2938 = vmatprep.subr.bf16.mxu0 0
    %2939 = vmatpush2.bf16.msra.mxu0 0
    %2940 = vmatprep.subr.bf16.mxu0 0
    %2941 = vmatpush2.bf16.msra.mxu0 0
    %2942 = vmatprep.mubr.bf16.mxu0 0
    %2943 = vmatmul.mubr.bf16.gmra.mxu0 %v2815
    %v2944 = vpop.f32.mrf.mxu0
    %v2945 = vadd.f32 0.0, %v2944
    %v2946 = vpop.f32.mrf.mxu0
    %v2947 = vadd.f32 0.0, %v2946
    %v2948 = vpop.f32.mrf.mxu0
    %v2949 = vadd.f32 0.0, %v2948
    %v2950 = vpop.f32.mrf.mxu0
    %v2951 = vadd.f32 0.0, %v2950
    %2952 = vdwg.mxu0
    %2953 = vmatprep.subr.bf16.mxu0 0
    %2954 = vmatpush1.bf16.msra.mxu0 %v1687
    %2955 = vmatprep.subr.bf16.mxu0 0
    %2956 = vmatpush1.bf16.msra.mxu0 %v1684
    %2957 = vmatprep.subr.bf16.mxu0 0
    %2958 = vmatpush1.bf16.msra.mxu0 %v1681
    %2959 = vmatprep.subr.bf16.mxu0 0
    %2960 = vmatpush1.bf16.msra.mxu0 %v1678
    %2961 = vmatprep.subr.bf16.mxu0 0
    %2962 = vmatpush1.bf16.msra.mxu0 %v1675
    %2963 = vmatprep.subr.bf16.mxu0 0
    %2964 = vmatpush1.bf16.msra.mxu0 %v1672
    %2965 = vmatprep.subr.bf16.mxu0 0
    %2966 = vmatpush1.bf16.msra.mxu0 %v1669
    %2967 = vmatprep.subr.bf16.mxu0 0
    %2968 = vmatpush1.bf16.msra.mxu0 %v1666
    %2969 = vmatprep.subr.bf16.mxu0 0
    %2970 = vmatpush2.bf16.msra.mxu0 0
    %2971 = vmatprep.subr.bf16.mxu0 0
    %2972 = vmatpush2.bf16.msra.mxu0 0
    %2973 = vmatprep.subr.bf16.mxu0 0
    %2974 = vmatpush2.bf16.msra.mxu0 0
    %2975 = vmatprep.subr.bf16.mxu0 0
    %2976 = vmatpush2.bf16.msra.mxu0 0
    %2977 = vmatprep.subr.bf16.mxu0 0
    %2978 = vmatpush2.bf16.msra.mxu0 0
    %2979 = vmatprep.subr.bf16.mxu0 0
    %2980 = vmatpush2.bf16.msra.mxu0 0
    %2981 = vmatprep.subr.bf16.mxu0 0
    %2982 = vmatpush2.bf16.msra.mxu0 0
    %2983 = vmatprep.subr.bf16.mxu0 0
    %2984 = vmatpush2.bf16.msra.mxu0 0
    %2985 = vmatprep.mubr.bf16.mxu0 0
    %2986 = vmatmul.mubr.bf16.gmra.mxu0 %v2815
    %v2987 = vpop.f32.mrf.mxu0
    %v2988 = vadd.f32 0.0, %v2987
    %v2989 = vpop.f32.mrf.mxu0
    %v2990 = vpop.f32.mrf.mxu0
    %v2991 = vadd.f32 0.0, %v2990
    %v2992 = vpop.f32.mrf.mxu0
    %2993 = vdwg.mxu0
    %s2994 = scalar_lea.vmem [#allocation2], 96
    %v2995 = vld [vmem:[%s2994] sm:$0xff]
    %v2996 = vld [vmem:[%s2994 + $0x8] sm:$0xf]
    %v2997 = vld [vmem:[%s2994 + $0xc] sm:$0xff]
    %v2998 = vld [vmem:[%s2994 + $0x14] sm:$0xf]
    %v2999 = vunpack.c.l.bf16 %v2995
    %v3000 = vunpack.c.h.bf16 %v2995
    %v3001 = vunpack.c.l.bf16 %v2996
    %v3002 = vunpack.c.l.bf16 %v2997
    %v3003 = vunpack.c.h.bf16 %v2997
    %v3004 = vunpack.c.l.bf16 %v2998
    %v3005 = vadd.f32 %v2999, %v2861
    %v3006 = vadd.f32 %v3002, %v2865
    %v3007 = vxor.u32 %v3005, 2147483648
    %v3008 = vxor.u32 %v3006, 2147483648
    %v3009 = vmul.f32 %v3007, 1.442695
    %v3010 = vpow.pop %v3009
    %v3011 = vmul.f32 %v3008, 1.442695
    %v3012 = vpow.pop %v3011
    %v3013 = vadd.f32 %v3010, 1.0
    %v3014 = vadd.f32 %v3012, 1.0
    %v3015 = vrcp.pop %v3013
    %v3016 = vmul.f32 1.0, %v3015
    %v3017 = vrcp.pop %v3014
    %v3018 = vmul.f32 1.0, %v3017
    %v3019 = vadd.f32 %v3000, %v2863
    %v3020 = vadd.f32 %v3003, %v2867
    %v3021 = vxor.u32 %v3019, 2147483648
    %v3022 = vxor.u32 %v3020, 2147483648
    %v3023 = vmul.f32 %v3021, 1.442695
    %v3024 = vpow.pop %v3023
    %v3025 = vmul.f32 %v3022, 1.442695
    %v3026 = vpow.pop %v3025
    %v3027 = vadd.f32 %v3024, 1.0
    %v3028 = vadd.f32 %v3026, 1.0
    %v3029 = vrcp.pop %v3027
    %v3030 = vmul.f32 1.0, %v3029
    %v3031 = vrcp.pop %v3028
    %v3032 = vmul.f32 1.0, %v3031
    %v3033 = vadd.f32 %v2904, %v1298
    %v3034 = vadd.f32 %v2907, %v1298
    %v3035 = vmul.f32 %v3016, %v3033
    %v3036 = vmul.f32 %v3018, %v3034
    %v3037 = vadd.f32 %v3001, %v3035
    %v3038 = vadd.f32 %v3004, %v3036
    %v3039 = vtanh.pop %v3037
    %v3040 = vtanh.pop %v3038
    %v3041 = vsub.f32 1.0, %v3030
    %v3042 = vsub.f32 1.0, %v3032
    %v3043 = vmul.f32 %v3041, %v3039
    %v3044 = vmul.f32 %v3042, %v3040
    %v3045 = vmul.f32 %v3030, %v2747
    %v3046 = vmul.f32 %v3032, %v2748
    %v3047 = vadd.f32 %v3043, %v3045
    %v3048 = vadd.f32 %v3044, %v3046
    %s3049 = scalar_lea.vmem [#allocation3], 72
    %v3050 = vld [vmem:[%s3049] sm:$0xff]
    %v3051 = vld [vmem:[%s3049 + $0x8] sm:$0xf]
    %v3052 = vld [vmem:[%s3049 + $0xc] sm:$0xff]
    %v3053 = vld [vmem:[%s3049 + $0x14] sm:$0xf]
    %v3054 = vunpack.c.l.bf16 %v3050
    %v3055 = vunpack.c.h.bf16 %v3050
    %v3056 = vunpack.c.l.bf16 %v3051
    %v3057 = vunpack.c.l.bf16 %v3052
    %v3058 = vunpack.c.h.bf16 %v3052
    %v3059 = vunpack.c.l.bf16 %v3053
    %v3060 = vadd.f32 %v3054, %v2945
    %v3061 = vadd.f32 %v3057, %v2949
    %v3062 = vxor.u32 %v3060, 2147483648
    %v3063 = vxor.u32 %v3061, 2147483648
    %v3064 = vmul.f32 %v3062, 1.442695
    %v3065 = vpow.pop %v3064
    %v3066 = vmul.f32 %v3063, 1.442695
    %v3067 = vpow.pop %v3066
    %v3068 = vadd.f32 %v3065, 1.0
    %v3069 = vadd.f32 %v3067, 1.0
    %v3070 = vrcp.pop %v3068
    %v3071 = vmul.f32 1.0, %v3070
    %v3072 = vrcp.pop %v3069
    %v3073 = vmul.f32 1.0, %v3072
    %v3074 = vadd.f32 %v3055, %v2947
    %v3075 = vadd.f32 %v3058, %v2951
    %v3076 = vxor.u32 %v3074, 2147483648
    %v3077 = vxor.u32 %v3075, 2147483648
    %v3078 = vmul.f32 %v3076, 1.442695
    %v3079 = vpow.pop %v3078
    %v3080 = vmul.f32 %v3077, 1.442695
    %v3081 = vpow.pop %v3080
    %v3082 = vadd.f32 %v3079, 1.0
    %v3083 = vadd.f32 %v3081, 1.0
    %v3084 = vrcp.pop %v3082
    %v3085 = vmul.f32 1.0, %v3084
    %v3086 = vrcp.pop %v3083
    %v3087 = vmul.f32 1.0, %v3086
    %v3088 = vadd.f32 %v2988, %v1305
    %v3089 = vadd.f32 %v2991, %v1305
    %v3090 = vmul.f32 %v3071, %v3088
    %v3091 = vmul.f32 %v3073, %v3089
    %v3092 = vadd.f32 %v3056, %v3090
    %v3093 = vadd.f32 %v3059, %v3091
    %v3094 = vtanh.pop %v3092
    %v3095 = vtanh.pop %v3093
    %v3096 = vsub.f32 1.0, %v3085
    %v3097 = vsub.f32 1.0, %v3087
    %v3098 = vmul.f32 %v3096, %v3094
    %v3099 = vmul.f32 %v3097, %v3095
    %v3100 = vmul.f32 %v3085, %v2802
    %v3101 = vmul.f32 %v3087, %v2803
    %v3102 = vadd.f32 %v3098, %v3100
    %v3103 = vadd.f32 %v3099, %v3101
    %v3104 = vpack.c.bf16 %v3048, %v3047
    %v3106 = vunpack.c.l.b16 %v3104
    %v3107 = vunpack.c.h.b16 %v3104
    %v3108 = vpack.c.b16 %v3106, %v3106
    %v3109 = vpack.c.b16 %v3107, %v3107
    %3112 = vst [vmem:[%s2823] sm:$0xf] %v3108
    %3113 = vst [vmem:[%s2823 + $0x8] sm:$0xf] %v3109
    %v3114 = vpack.c.bf16 %v3103, %v3102
    %v3116 = vunpack.c.l.b16 %v3114
    %v3117 = vunpack.c.h.b16 %v3114
    %v3118 = vpack.c.b16 %v3116, %v3116
    %v3119 = vpack.c.b16 %v3117, %v3117
    %3122 = vst [vmem:[%s2812 + $0x4] sm:$0xf] %v3118
    %3123 = vst [vmem:[%s2812 + $0xc] sm:$0xf] %v3119
    %3124 = vmatprep.subr.bf16.mxu0 %v1474
    %3125 = vmatpush1.bf16.msra.mxu0 %v1473
    %3126 = vmatprep.subr.bf16.mxu0 %v1471
    %3127 = vmatpush1.bf16.msra.mxu0 %v1470
    %3128 = vmatprep.subr.bf16.mxu0 %v1468
    %3129 = vmatpush1.bf16.msra.mxu0 %v1467
    %3130 = vmatprep.subr.bf16.mxu0 %v1465
    %3131 = vmatpush1.bf16.msra.mxu0 %v1464
    %3132 = vmatprep.subr.bf16.mxu0 %v1462
    %3133 = vmatpush1.bf16.msra.mxu0 %v1461
    %3134 = vmatprep.subr.bf16.mxu0 %v1459
    %3135 = vmatpush1.bf16.msra.mxu0 %v1458
    %3136 = vmatprep.subr.bf16.mxu0 %v1456
    %3137 = vmatpush1.bf16.msra.mxu0 %v1455
    %3138 = vmatprep.subr.bf16.mxu0 %v1453
    %3139 = vmatpush1.bf16.msra.mxu0 %v1452
    %3140 = vmatprep.subr.bf16.mxu0 0
    %3141 = vmatpush2.bf16.msra.mxu0 0
    %3142 = vmatprep.subr.bf16.mxu0 0
    %3143 = vmatpush2.bf16.msra.mxu0 0
    %3144 = vmatprep.subr.bf16.mxu0 0
    %3145 = vmatpush2.bf16.msra.mxu0 0
    %3146 = vmatprep.subr.bf16.mxu0 0
    %3147 = vmatpush2.bf16.msra.mxu0 0
    %3148 = vmatprep.subr.bf16.mxu0 0
    %3149 = vmatpush2.bf16.msra.mxu0 0
    %3150 = vmatprep.subr.bf16.mxu0 0
    %3151 = vmatpush2.bf16.msra.mxu0 0
    %3152 = vmatprep.subr.bf16.mxu0 0
    %3153 = vmatpush2.bf16.msra.mxu0 0
    %3154 = vmatprep.subr.bf16.mxu0 0
    %3155 = vmatpush2.bf16.msra.mxu0 0
    %3156 = vmatprep.mubr.bf16.mxu0 0
    %3157 = vmatmul.mubr.bf16.gmra.mxu0 %v3104
    %v3158 = vpop.f32.mrf.mxu0
    %v3159 = vadd.f32 0.0, %v3158
    %v3160 = vpop.f32.mrf.mxu0
    %v3161 = vadd.f32 0.0, %v3160
    %v3162 = vpop.f32.mrf.mxu0
    %v3163 = vadd.f32 0.0, %v3162
    %v3164 = vpop.f32.mrf.mxu0
    %v3165 = vadd.f32 0.0, %v3164
    %3166 = vdwg.mxu0
    %3167 = vmatprep.subr.bf16.mxu0 0
    %3168 = vmatpush1.bf16.msra.mxu0 %v1475
    %3169 = vmatprep.subr.bf16.mxu0 0
    %3170 = vmatpush1.bf16.msra.mxu0 %v1472
    %3171 = vmatprep.subr.bf16.mxu0 0
    %3172 = vmatpush1.bf16.msra.mxu0 %v1469
    %3173 = vmatprep.subr.bf16.mxu0 0
    %3174 = vmatpush1.bf16.msra.mxu0 %v1466
    %3175 = vmatprep.subr.bf16.mxu0 0
    %3176 = vmatpush1.bf16.msra.mxu0 %v1463
    %3177 = vmatprep.subr.bf16.mxu0 0
    %3178 = vmatpush1.bf16.msra.mxu0 %v1460
    %3179 = vmatprep.subr.bf16.mxu0 0
    %3180 = vmatpush1.bf16.msra.mxu0 %v1457
    %3181 = vmatprep.subr.bf16.mxu0 0
    %3182 = vmatpush1.bf16.msra.mxu0 %v1454
    %3183 = vmatprep.subr.bf16.mxu0 0
    %3184 = vmatpush2.bf16.msra.mxu0 0
    %3185 = vmatprep.subr.bf16.mxu0 0
    %3186 = vmatpush2.bf16.msra.mxu0 0
    %3187 = vmatprep.subr.bf16.mxu0 0
    %3188 = vmatpush2.bf16.msra.mxu0 0
    %3189 = vmatprep.subr.bf16.mxu0 0
    %3190 = vmatpush2.bf16.msra.mxu0 0
    %3191 = vmatprep.subr.bf16.mxu0 0
    %3192 = vmatpush2.bf16.msra.mxu0 0
    %3193 = vmatprep.subr.bf16.mxu0 0
    %3194 = vmatpush2.bf16.msra.mxu0 0
    %3195 = vmatprep.subr.bf16.mxu0 0
    %3196 = vmatpush2.bf16.msra.mxu0 0
    %3197 = vmatprep.subr.bf16.mxu0 0
    %3198 = vmatpush2.bf16.msra.mxu0 0
    %3199 = vmatprep.mubr.bf16.mxu0 0
    %3200 = vmatmul.mubr.bf16.gmra.mxu0 %v3104
    %v3201 = vpop.f32.mrf.mxu0
    %v3202 = vadd.f32 0.0, %v3201
    %v3203 = vpop.f32.mrf.mxu0
    %v3204 = vpop.f32.mrf.mxu0
    %v3205 = vadd.f32 0.0, %v3204
    %v3206 = vpop.f32.mrf.mxu0
    %3207 = vdwg.mxu0
    %3208 = vmatprep.subr.bf16.mxu0 %v1686
    %3209 = vmatpush1.bf16.msra.mxu0 %v1685
    %3210 = vmatprep.subr.bf16.mxu0 %v1683
    %3211 = vmatpush1.bf16.msra.mxu0 %v1682
    %3212 = vmatprep.subr.bf16.mxu0 %v1680
    %3213 = vmatpush1.bf16.msra.mxu0 %v1679
    %3214 = vmatprep.subr.bf16.mxu0 %v1677
    %3215 = vmatpush1.bf16.msra.mxu0 %v1676
    %3216 = vmatprep.subr.bf16.mxu0 %v1674
    %3217 = vmatpush1.bf16.msra.mxu0 %v1673
    %3218 = vmatprep.subr.bf16.mxu0 %v1671
    %3219 = vmatpush1.bf16.msra.mxu0 %v1670
    %3220 = vmatprep.subr.bf16.mxu0 %v1668
    %3221 = vmatpush1.bf16.msra.mxu0 %v1667
    %3222 = vmatprep.subr.bf16.mxu0 %v1665
    %3223 = vmatpush1.bf16.msra.mxu0 %v1664
    %3224 = vmatprep.subr.bf16.mxu0 0
    %3225 = vmatpush2.bf16.msra.mxu0 0
    %3226 = vmatprep.subr.bf16.mxu0 0
    %3227 = vmatpush2.bf16.msra.mxu0 0
    %3228 = vmatprep.subr.bf16.mxu0 0
    %3229 = vmatpush2.bf16.msra.mxu0 0
    %3230 = vmatprep.subr.bf16.mxu0 0
    %3231 = vmatpush2.bf16.msra.mxu0 0
    %3232 = vmatprep.subr.bf16.mxu0 0
    %3233 = vmatpush2.bf16.msra.mxu0 0
    %3234 = vmatprep.subr.bf16.mxu0 0
    %3235 = vmatpush2.bf16.msra.mxu0 0
    %3236 = vmatprep.subr.bf16.mxu0 0
    %3237 = vmatpush2.bf16.msra.mxu0 0
    %3238 = vmatprep.subr.bf16.mxu0 0
    %3239 = vmatpush2.bf16.msra.mxu0 0
    %3240 = vmatprep.mubr.bf16.mxu0 0
    %3241 = vmatmul.mubr.bf16.gmra.mxu0 %v3114
    %v3242 = vpop.f32.mrf.mxu0
    %v3243 = vadd.f32 0.0, %v3242
    %v3244 = vpop.f32.mrf.mxu0
    %v3245 = vadd.f32 0.0, %v3244
    %v3246 = vpop.f32.mrf.mxu0
    %v3247 = vadd.f32 0.0, %v3246
    %v3248 = vpop.f32.mrf.mxu0
    %v3249 = vadd.f32 0.0, %v3248
    %3250 = vdwg.mxu0
    %3251 = vmatprep.subr.bf16.mxu0 0
    %3252 = vmatpush1.bf16.msra.mxu0 %v1687
    %3253 = vmatprep.subr.bf16.mxu0 0
    %3254 = vmatpush1.bf16.msra.mxu0 %v1684
    %3255 = vmatprep.subr.bf16.mxu0 0
    %3256 = vmatpush1.bf16.msra.mxu0 %v1681
    %3257 = vmatprep.subr.bf16.mxu0 0
    %3258 = vmatpush1.bf16.msra.mxu0 %v1678
    %3259 = vmatprep.subr.bf16.mxu0 0
    %3260 = vmatpush1.bf16.msra.mxu0 %v1675
    %3261 = vmatprep.subr.bf16.mxu0 0
    %3262 = vmatpush1.bf16.msra.mxu0 %v1672
    %3263 = vmatprep.subr.bf16.mxu0 0
    %3264 = vmatpush1.bf16.msra.mxu0 %v1669
    %3265 = vmatprep.subr.bf16.mxu0 0
    %3266 = vmatpush1.bf16.msra.mxu0 %v1666
    %3267 = vmatprep.subr.bf16.mxu0 0
    %3268 = vmatpush2.bf16.msra.mxu0 0
    %3269 = vmatprep.subr.bf16.mxu0 0
    %3270 = vmatpush2.bf16.msra.mxu0 0
    %3271 = vmatprep.subr.bf16.mxu0 0
    %3272 = vmatpush2.bf16.msra.mxu0 0
    %3273 = vmatprep.subr.bf16.mxu0 0
    %3274 = vmatpush2.bf16.msra.mxu0 0
    %3275 = vmatprep.subr.bf16.mxu0 0
    %3276 = vmatpush2.bf16.msra.mxu0 0
    %3277 = vmatprep.subr.bf16.mxu0 0
    %3278 = vmatpush2.bf16.msra.mxu0 0
    %3279 = vmatprep.subr.bf16.mxu0 0
    %3280 = vmatpush2.bf16.msra.mxu0 0
    %3281 = vmatprep.subr.bf16.mxu0 0
    %3282 = vmatpush2.bf16.msra.mxu0 0
    %3283 = vmatprep.mubr.bf16.mxu0 0
    %3284 = vmatmul.mubr.bf16.gmra.mxu0 %v3114
    %v3285 = vpop.f32.mrf.mxu0
    %v3286 = vadd.f32 0.0, %v3285
    %v3287 = vpop.f32.mrf.mxu0
    %v3288 = vpop.f32.mrf.mxu0
    %v3289 = vadd.f32 0.0, %v3288
    %v3290 = vpop.f32.mrf.mxu0
    %3291 = vdwg.mxu0
    %s3292 = scalar_lea.vmem [#allocation2], 120
    %v3293 = vld [vmem:[%s3292] sm:$0xff]
    %v3294 = vld [vmem:[%s3292 + $0x8] sm:$0xf]
    %v3295 = vld [vmem:[%s3292 + $0xc] sm:$0xff]
    %v3296 = vld [vmem:[%s3292 + $0x14] sm:$0xf]
    %v3297 = vunpack.c.l.bf16 %v3293
    %v3298 = vunpack.c.h.bf16 %v3293
    %v3299 = vunpack.c.l.bf16 %v3294
    %v3300 = vunpack.c.l.bf16 %v3295
    %v3301 = vunpack.c.h.bf16 %v3295
    %v3302 = vunpack.c.l.bf16 %v3296
    %v3303 = vadd.f32 %v3297, %v3159
    %v3304 = vadd.f32 %v3300, %v3163
    %v3305 = vxor.u32 %v3303, 2147483648
    %v3306 = vxor.u32 %v3304, 2147483648
    %v3307 = vmul.f32 %v3305, 1.442695
    %v3308 = vpow.pop %v3307
    %v3309 = vmul.f32 %v3306, 1.442695
    %v3310 = vpow.pop %v3309
    %v3311 = vadd.f32 %v3308, 1.0
    %v3312 = vadd.f32 %v3310, 1.0
    %v3313 = vrcp.pop %v3311
    %v3314 = vmul.f32 1.0, %v3313
    %v3315 = vrcp.pop %v3312
    %v3316 = vmul.f32 1.0, %v3315
    %v3317 = vadd.f32 %v3298, %v3161
    %v3318 = vadd.f32 %v3301, %v3165
    %v3319 = vxor.u32 %v3317, 2147483648
    %v3320 = vxor.u32 %v3318, 2147483648
    %v3321 = vmul.f32 %v3319, 1.442695
    %v3322 = vpow.pop %v3321
    %v3323 = vmul.f32 %v3320, 1.442695
    %v3324 = vpow.pop %v3323
    %v3325 = vadd.f32 %v3322, 1.0
    %v3326 = vadd.f32 %v3324, 1.0
    %v3327 = vrcp.pop %v3325
    %v3328 = vmul.f32 1.0, %v3327
    %v3329 = vrcp.pop %v3326
    %v3330 = vmul.f32 1.0, %v3329
    %v3331 = vadd.f32 %v3202, %v1298
    %v3332 = vadd.f32 %v3205, %v1298
    %v3333 = vmul.f32 %v3314, %v3331
    %v3334 = vmul.f32 %v3316, %v3332
    %v3335 = vadd.f32 %v3299, %v3333
    %v3336 = vadd.f32 %v3302, %v3334
    %v3337 = vtanh.pop %v3335
    %v3338 = vtanh.pop %v3336
    %v3339 = vsub.f32 1.0, %v3328
    %v3340 = vsub.f32 1.0, %v3330
    %v3341 = vmul.f32 %v3339, %v3337
    %v3342 = vmul.f32 %v3340, %v3338
    %v3343 = vmul.f32 %v3328, %v3047
    %v3344 = vmul.f32 %v3330, %v3048
    %v3345 = vadd.f32 %v3341, %v3343
    %v3346 = vadd.f32 %v3342, %v3344
    %s3347 = scalar_lea.vmem [#allocation3], 48
    %v3348 = vld [vmem:[%s3347] sm:$0xff]
    %v3349 = vld [vmem:[%s3347 + $0x8] sm:$0xf]
    %v3350 = vld [vmem:[%s3347 + $0xc] sm:$0xff]
    %v3351 = vld [vmem:[%s3347 + $0x14] sm:$0xf]
    %v3352 = vunpack.c.l.bf16 %v3348
    %v3353 = vunpack.c.h.bf16 %v3348
    %v3354 = vunpack.c.l.bf16 %v3349
    %v3355 = vunpack.c.l.bf16 %v3350
    %v3356 = vunpack.c.h.bf16 %v3350
    %v3357 = vunpack.c.l.bf16 %v3351
    %v3358 = vadd.f32 %v3352, %v3243
    %v3359 = vadd.f32 %v3355, %v3247
    %v3360 = vxor.u32 %v3358, 2147483648
    %v3361 = vxor.u32 %v3359, 2147483648
    %v3362 = vmul.f32 %v3360, 1.442695
    %v3363 = vpow.pop %v3362
    %v3364 = vmul.f32 %v3361, 1.442695
    %v3365 = vpow.pop %v3364
    %v3366 = vadd.f32 %v3363, 1.0
    %v3367 = vadd.f32 %v3365, 1.0
    %v3368 = vrcp.pop %v3366
    %v3369 = vmul.f32 1.0, %v3368
    %v3370 = vrcp.pop %v3367
    %v3371 = vmul.f32 1.0, %v3370
    %v3372 = vadd.f32 %v3353, %v3245
    %v3373 = vadd.f32 %v3356, %v3249
    %v3374 = vxor.u32 %v3372, 2147483648
    %v3375 = vxor.u32 %v3373, 2147483648
    %v3376 = vmul.f32 %v3374, 1.442695
    %v3377 = vpow.pop %v3376
    %v3378 = vmul.f32 %v3375, 1.442695
    %v3379 = vpow.pop %v3378
    %v3380 = vadd.f32 %v3377, 1.0
    %v3381 = vadd.f32 %v3379, 1.0
    %v3382 = vrcp.pop %v3380
    %v3383 = vmul.f32 1.0, %v3382
    %v3384 = vrcp.pop %v3381
    %v3385 = vmul.f32 1.0, %v3384
    %v3386 = vadd.f32 %v3286, %v1305
    %v3387 = vadd.f32 %v3289, %v1305
    %v3388 = vmul.f32 %v3369, %v3386
    %v3389 = vmul.f32 %v3371, %v3387
    %v3390 = vadd.f32 %v3354, %v3388
    %v3391 = vadd.f32 %v3357, %v3389
    %v3392 = vtanh.pop %v3390
    %v3393 = vtanh.pop %v3391
    %v3394 = vsub.f32 1.0, %v3383
    %v3395 = vsub.f32 1.0, %v3385
    %v3396 = vmul.f32 %v3394, %v3392
    %v3397 = vmul.f32 %v3395, %v3393
    %v3398 = vmul.f32 %v3383, %v3102
    %v3399 = vmul.f32 %v3385, %v3103
    %v3400 = vadd.f32 %v3396, %v3398
    %v3401 = vadd.f32 %v3397, %v3399
    %v3402 = vpack.c.bf16 %v3346, %v3345
    %v3404 = vunpack.c.l.b16 %v3402
    %v3405 = vunpack.c.h.b16 %v3402
    %v3406 = vpack.c.b16 %v3404, %v3404
    %v3407 = vpack.c.b16 %v3405, %v3405
    %3410 = vst [vmem:[%s2523] sm:$0xf] %v3406
    %3411 = vst [vmem:[%s2523 + $0x8] sm:$0xf] %v3407
    %v3412 = vpack.c.bf16 %v3401, %v3400
    %v3414 = vunpack.c.l.b16 %v3412
    %v3415 = vunpack.c.h.b16 %v3412
    %v3416 = vpack.c.b16 %v3414, %v3414
    %v3417 = vpack.c.b16 %v3415, %v3415
    %3420 = vst [vmem:[%s2512 + $0x4] sm:$0xf] %v3416
    %3421 = vst [vmem:[%s2512 + $0xc] sm:$0xf] %v3417
    %3422 = vmatprep.subr.bf16.mxu0 %v1474
    %3423 = vmatpush1.bf16.msra.mxu0 %v1473
    %3424 = vmatprep.subr.bf16.mxu0 %v1471
    %3425 = vmatpush1.bf16.msra.mxu0 %v1470
    %3426 = vmatprep.subr.bf16.mxu0 %v1468
    %3427 = vmatpush1.bf16.msra.mxu0 %v1467
    %3428 = vmatprep.subr.bf16.mxu0 %v1465
    %3429 = vmatpush1.bf16.msra.mxu0 %v1464
    %3430 = vmatprep.subr.bf16.mxu0 %v1462
    %3431 = vmatpush1.bf16.msra.mxu0 %v1461
    %3432 = vmatprep.subr.bf16.mxu0 %v1459
    %3433 = vmatpush1.bf16.msra.mxu0 %v1458
    %3434 = vmatprep.subr.bf16.mxu0 %v1456
    %3435 = vmatpush1.bf16.msra.mxu0 %v1455
    %3436 = vmatprep.subr.bf16.mxu0 %v1453
    %3437 = vmatpush1.bf16.msra.mxu0 %v1452
    %3438 = vmatprep.subr.bf16.mxu0 0
    %3439 = vmatpush2.bf16.msra.mxu0 0
    %3440 = vmatprep.subr.bf16.mxu0 0
    %3441 = vmatpush2.bf16.msra.mxu0 0
    %3442 = vmatprep.subr.bf16.mxu0 0
    %3443 = vmatpush2.bf16.msra.mxu0 0
    %3444 = vmatprep.subr.bf16.mxu0 0
    %3445 = vmatpush2.bf16.msra.mxu0 0
    %3446 = vmatprep.subr.bf16.mxu0 0
    %3447 = vmatpush2.bf16.msra.mxu0 0
    %3448 = vmatprep.subr.bf16.mxu0 0
    %3449 = vmatpush2.bf16.msra.mxu0 0
    %3450 = vmatprep.subr.bf16.mxu0 0
    %3451 = vmatpush2.bf16.msra.mxu0 0
    %3452 = vmatprep.subr.bf16.mxu0 0
    %3453 = vmatpush2.bf16.msra.mxu0 0
    %3454 = vmatprep.mubr.bf16.mxu0 0
    %3455 = vmatmul.mubr.bf16.gmra.mxu0 %v3402
    %v3456 = vpop.f32.mrf.mxu0
    %v3457 = vadd.f32 0.0, %v3456
    %v3458 = vpop.f32.mrf.mxu0
    %v3459 = vadd.f32 0.0, %v3458
    %v3460 = vpop.f32.mrf.mxu0
    %v3461 = vadd.f32 0.0, %v3460
    %v3462 = vpop.f32.mrf.mxu0
    %v3463 = vadd.f32 0.0, %v3462
    %3464 = vdwg.mxu0
    %3465 = vmatprep.subr.bf16.mxu0 0
    %3466 = vmatpush1.bf16.msra.mxu0 %v1475
    %3467 = vmatprep.subr.bf16.mxu0 0
    %3468 = vmatpush1.bf16.msra.mxu0 %v1472
    %3469 = vmatprep.subr.bf16.mxu0 0
    %3470 = vmatpush1.bf16.msra.mxu0 %v1469
    %3471 = vmatprep.subr.bf16.mxu0 0
    %3472 = vmatpush1.bf16.msra.mxu0 %v1466
    %3473 = vmatprep.subr.bf16.mxu0 0
    %3474 = vmatpush1.bf16.msra.mxu0 %v1463
    %3475 = vmatprep.subr.bf16.mxu0 0
    %3476 = vmatpush1.bf16.msra.mxu0 %v1460
    %3477 = vmatprep.subr.bf16.mxu0 0
    %3478 = vmatpush1.bf16.msra.mxu0 %v1457
    %3479 = vmatprep.subr.bf16.mxu0 0
    %3480 = vmatpush1.bf16.msra.mxu0 %v1454
    %3481 = vmatprep.subr.bf16.mxu0 0
    %3482 = vmatpush2.bf16.msra.mxu0 0
    %3483 = vmatprep.subr.bf16.mxu0 0
    %3484 = vmatpush2.bf16.msra.mxu0 0
    %3485 = vmatprep.subr.bf16.mxu0 0
    %3486 = vmatpush2.bf16.msra.mxu0 0
    %3487 = vmatprep.subr.bf16.mxu0 0
    %3488 = vmatpush2.bf16.msra.mxu0 0
    %3489 = vmatprep.subr.bf16.mxu0 0
    %3490 = vmatpush2.bf16.msra.mxu0 0
    %3491 = vmatprep.subr.bf16.mxu0 0
    %3492 = vmatpush2.bf16.msra.mxu0 0
    %3493 = vmatprep.subr.bf16.mxu0 0
    %3494 = vmatpush2.bf16.msra.mxu0 0
    %3495 = vmatprep.subr.bf16.mxu0 0
    %3496 = vmatpush2.bf16.msra.mxu0 0
    %3497 = vmatprep.mubr.bf16.mxu0 0
    %3498 = vmatmul.mubr.bf16.gmra.mxu0 %v3402
    %v3499 = vpop.f32.mrf.mxu0
    %v3500 = vadd.f32 0.0, %v3499
    %v3501 = vpop.f32.mrf.mxu0
    %v3502 = vpop.f32.mrf.mxu0
    %v3503 = vadd.f32 0.0, %v3502
    %v3504 = vpop.f32.mrf.mxu0
    %3505 = vdwg.mxu0
    %3506 = vmatprep.subr.bf16.mxu0 %v1686
    %3507 = vmatpush1.bf16.msra.mxu0 %v1685
    %3508 = vmatprep.subr.bf16.mxu0 %v1683
    %3509 = vmatpush1.bf16.msra.mxu0 %v1682
    %3510 = vmatprep.subr.bf16.mxu0 %v1680
    %3511 = vmatpush1.bf16.msra.mxu0 %v1679
    %3512 = vmatprep.subr.bf16.mxu0 %v1677
    %3513 = vmatpush1.bf16.msra.mxu0 %v1676
    %3514 = vmatprep.subr.bf16.mxu0 %v1674
    %3515 = vmatpush1.bf16.msra.mxu0 %v1673
    %3516 = vmatprep.subr.bf16.mxu0 %v1671
    %3517 = vmatpush1.bf16.msra.mxu0 %v1670
    %3518 = vmatprep.subr.bf16.mxu0 %v1668
    %3519 = vmatpush1.bf16.msra.mxu0 %v1667
    %3520 = vmatprep.subr.bf16.mxu0 %v1665
    %3521 = vmatpush1.bf16.msra.mxu0 %v1664
    %3522 = vmatprep.subr.bf16.mxu0 0
    %3523 = vmatpush2.bf16.msra.mxu0 0
    %3524 = vmatprep.subr.bf16.mxu0 0
    %3525 = vmatpush2.bf16.msra.mxu0 0
    %3526 = vmatprep.subr.bf16.mxu0 0
    %3527 = vmatpush2.bf16.msra.mxu0 0
    %3528 = vmatprep.subr.bf16.mxu0 0
    %3529 = vmatpush2.bf16.msra.mxu0 0
    %3530 = vmatprep.subr.bf16.mxu0 0
    %3531 = vmatpush2.bf16.msra.mxu0 0
    %3532 = vmatprep.subr.bf16.mxu0 0
    %3533 = vmatpush2.bf16.msra.mxu0 0
    %3534 = vmatprep.subr.bf16.mxu0 0
    %3535 = vmatpush2.bf16.msra.mxu0 0
    %3536 = vmatprep.subr.bf16.mxu0 0
    %3537 = vmatpush2.bf16.msra.mxu0 0
    %3538 = vmatprep.mubr.bf16.mxu0 0
    %3539 = vmatmul.mubr.bf16.gmra.mxu0 %v3412
    %v3540 = vpop.f32.mrf.mxu0
    %v3541 = vadd.f32 0.0, %v3540
    %v3542 = vpop.f32.mrf.mxu0
    %v3543 = vadd.f32 0.0, %v3542
    %v3544 = vpop.f32.mrf.mxu0
    %v3545 = vadd.f32 0.0, %v3544
    %v3546 = vpop.f32.mrf.mxu0
    %v3547 = vadd.f32 0.0, %v3546
    %3548 = vdwg.mxu0
    %3549 = vmatprep.subr.bf16.mxu0 0
    %3550 = vmatpush1.bf16.msra.mxu0 %v1687
    %3551 = vmatprep.subr.bf16.mxu0 0
    %3552 = vmatpush1.bf16.msra.mxu0 %v1684
    %3553 = vmatprep.subr.bf16.mxu0 0
    %3554 = vmatpush1.bf16.msra.mxu0 %v1681
    %3555 = vmatprep.subr.bf16.mxu0 0
    %3556 = vmatpush1.bf16.msra.mxu0 %v1678
    %3557 = vmatprep.subr.bf16.mxu0 0
    %3558 = vmatpush1.bf16.msra.mxu0 %v1675
    %3559 = vmatprep.subr.bf16.mxu0 0
    %3560 = vmatpush1.bf16.msra.mxu0 %v1672
    %3561 = vmatprep.subr.bf16.mxu0 0
    %3562 = vmatpush1.bf16.msra.mxu0 %v1669
    %3563 = vmatprep.subr.bf16.mxu0 0
    %3564 = vmatpush1.bf16.msra.mxu0 %v1666
    %3565 = vmatprep.subr.bf16.mxu0 0
    %3566 = vmatpush2.bf16.msra.mxu0 0
    %3567 = vmatprep.subr.bf16.mxu0 0
    %3568 = vmatpush2.bf16.msra.mxu0 0
    %3569 = vmatprep.subr.bf16.mxu0 0
    %3570 = vmatpush2.bf16.msra.mxu0 0
    %3571 = vmatprep.subr.bf16.mxu0 0
    %3572 = vmatpush2.bf16.msra.mxu0 0
    %3573 = vmatprep.subr.bf16.mxu0 0
    %3574 = vmatpush2.bf16.msra.mxu0 0
    %3575 = vmatprep.subr.bf16.mxu0 0
    %3576 = vmatpush2.bf16.msra.mxu0 0
    %3577 = vmatprep.subr.bf16.mxu0 0
    %3578 = vmatpush2.bf16.msra.mxu0 0
    %3579 = vmatprep.subr.bf16.mxu0 0
    %3580 = vmatpush2.bf16.msra.mxu0 0
    %3581 = vmatprep.mubr.bf16.mxu0 0
    %3582 = vmatmul.mubr.bf16.gmra.mxu0 %v3412
    %v3583 = vpop.f32.mrf.mxu0
    %v3584 = vadd.f32 0.0, %v3583
    %v3585 = vpop.f32.mrf.mxu0
    %v3586 = vpop.f32.mrf.mxu0
    %v3587 = vadd.f32 0.0, %v3586
    %v3588 = vpop.f32.mrf.mxu0
    %3589 = vdwg.mxu0
    %s3590 = scalar_lea.vmem [#allocation2], 144
    %v3591 = vld [vmem:[%s3590] sm:$0xff]
    %v3592 = vld [vmem:[%s3590 + $0x8] sm:$0xf]
    %v3593 = vld [vmem:[%s3590 + $0xc] sm:$0xff]
    %v3594 = vld [vmem:[%s3590 + $0x14] sm:$0xf]
    %v3595 = vunpack.c.l.bf16 %v3591
    %v3596 = vunpack.c.h.bf16 %v3591
    %v3597 = vunpack.c.l.bf16 %v3592
    %v3598 = vunpack.c.l.bf16 %v3593
    %v3599 = vunpack.c.h.bf16 %v3593
    %v3600 = vunpack.c.l.bf16 %v3594
    %v3601 = vadd.f32 %v3595, %v3457
    %v3602 = vadd.f32 %v3598, %v3461
    %v3603 = vxor.u32 %v3601, 2147483648
    %v3604 = vxor.u32 %v3602, 2147483648
    %v3605 = vmul.f32 %v3603, 1.442695
    %v3606 = vpow.pop %v3605
    %v3607 = vmul.f32 %v3604, 1.442695
    %v3608 = vpow.pop %v3607
    %v3609 = vadd.f32 %v3606, 1.0
    %v3610 = vadd.f32 %v3608, 1.0
    %v3611 = vrcp.pop %v3609
    %v3612 = vmul.f32 1.0, %v3611
    %v3613 = vrcp.pop %v3610
    %v3614 = vmul.f32 1.0, %v3613
    %v3615 = vadd.f32 %v3596, %v3459
    %v3616 = vadd.f32 %v3599, %v3463
    %v3617 = vxor.u32 %v3615, 2147483648
    %v3618 = vxor.u32 %v3616, 2147483648
    %v3619 = vmul.f32 %v3617, 1.442695
    %v3620 = vpow.pop %v3619
    %v3621 = vmul.f32 %v3618, 1.442695
    %v3622 = vpow.pop %v3621
    %v3623 = vadd.f32 %v3620, 1.0
    %v3624 = vadd.f32 %v3622, 1.0
    %v3625 = vrcp.pop %v3623
    %v3626 = vmul.f32 1.0, %v3625
    %v3627 = vrcp.pop %v3624
    %v3628 = vmul.f32 1.0, %v3627
    %v3629 = vadd.f32 %v3500, %v1298
    %v3630 = vadd.f32 %v3503, %v1298
    %v3631 = vmul.f32 %v3612, %v3629
    %v3632 = vmul.f32 %v3614, %v3630
    %v3633 = vadd.f32 %v3597, %v3631
    %v3634 = vadd.f32 %v3600, %v3632
    %v3635 = vtanh.pop %v3633
    %v3636 = vtanh.pop %v3634
    %v3637 = vsub.f32 1.0, %v3626
    %v3638 = vsub.f32 1.0, %v3628
    %v3639 = vmul.f32 %v3637, %v3635
    %v3640 = vmul.f32 %v3638, %v3636
    %v3641 = vmul.f32 %v3626, %v3345
    %v3642 = vmul.f32 %v3628, %v3346
    %v3643 = vadd.f32 %v3639, %v3641
    %v3644 = vadd.f32 %v3640, %v3642
    %s3645 = scalar_lea.vmem [#allocation3], 24
    %v3646 = vld [vmem:[%s3645] sm:$0xff]
    %v3647 = vld [vmem:[%s3645 + $0x8] sm:$0xf]
    %v3648 = vld [vmem:[%s3645 + $0xc] sm:$0xff]
    %v3649 = vld [vmem:[%s3645 + $0x14] sm:$0xf]
    %v3650 = vunpack.c.l.bf16 %v3646
    %v3651 = vunpack.c.h.bf16 %v3646
    %v3652 = vunpack.c.l.bf16 %v3647
    %v3653 = vunpack.c.l.bf16 %v3648
    %v3654 = vunpack.c.h.bf16 %v3648
    %v3655 = vunpack.c.l.bf16 %v3649
    %v3656 = vadd.f32 %v3650, %v3541
    %v3657 = vadd.f32 %v3653, %v3545
    %v3658 = vxor.u32 %v3656, 2147483648
    %v3659 = vxor.u32 %v3657, 2147483648
    %v3660 = vmul.f32 %v3658, 1.442695
    %v3661 = vpow.pop %v3660
    %v3662 = vmul.f32 %v3659, 1.442695
    %v3663 = vpow.pop %v3662
    %v3664 = vadd.f32 %v3661, 1.0
    %v3665 = vadd.f32 %v3663, 1.0
    %v3666 = vrcp.pop %v3664
    %v3667 = vmul.f32 1.0, %v3666
    %v3668 = vrcp.pop %v3665
    %v3669 = vmul.f32 1.0, %v3668
    %v3670 = vadd.f32 %v3651, %v3543
    %v3671 = vadd.f32 %v3654, %v3547
    %v3672 = vxor.u32 %v3670, 2147483648
    %v3673 = vxor.u32 %v3671, 2147483648
    %v3674 = vmul.f32 %v3672, 1.442695
    %v3675 = vpow.pop %v3674
    %v3676 = vmul.f32 %v3673, 1.442695
    %v3677 = vpow.pop %v3676
    %v3678 = vadd.f32 %v3675, 1.0
    %v3679 = vadd.f32 %v3677, 1.0
    %v3680 = vrcp.pop %v3678
    %v3681 = vmul.f32 1.0, %v3680
    %v3682 = vrcp.pop %v3679
    %v3683 = vmul.f32 1.0, %v3682
    %v3684 = vadd.f32 %v3584, %v1305
    %v3685 = vadd.f32 %v3587, %v1305
    %v3686 = vmul.f32 %v3667, %v3684
    %v3687 = vmul.f32 %v3669, %v3685
    %v3688 = vadd.f32 %v3652, %v3686
    %v3689 = vadd.f32 %v3655, %v3687
    %v3690 = vtanh.pop %v3688
    %v3691 = vtanh.pop %v3689
    %v3692 = vsub.f32 1.0, %v3681
    %v3693 = vsub.f32 1.0, %v3683
    %v3694 = vmul.f32 %v3692, %v3690
    %v3695 = vmul.f32 %v3693, %v3691
    %v3696 = vmul.f32 %v3681, %v3400
    %v3697 = vmul.f32 %v3683, %v3401
    %v3698 = vadd.f32 %v3694, %v3696
    %v3699 = vadd.f32 %v3695, %v3697
    %v3700 = vpack.c.bf16 %v3644, %v3643
    %v3702 = vunpack.c.l.b16 %v3700
    %v3703 = vunpack.c.h.b16 %v3700
    %v3704 = vpack.c.b16 %v3702, %v3702
    %v3705 = vpack.c.b16 %v3703, %v3703
    %3708 = vst [vmem:[%s2223] sm:$0xf] %v3704
    %3709 = vst [vmem:[%s2223 + $0x8] sm:$0xf] %v3705
    %v3710 = vpack.c.bf16 %v3699, %v3698
    %v3712 = vunpack.c.l.b16 %v3710
    %v3713 = vunpack.c.h.b16 %v3710
    %v3714 = vpack.c.b16 %v3712, %v3712
    %v3715 = vpack.c.b16 %v3713, %v3713
    %3718 = vst [vmem:[%s2212 + $0x4] sm:$0xf] %v3714
    %3719 = vst [vmem:[%s2212 + $0xc] sm:$0xf] %v3715
    %3720 = vmatprep.subr.bf16.mxu0 %v1474
    %3721 = vmatpush1.bf16.msra.mxu0 %v1473
    %3722 = vmatprep.subr.bf16.mxu0 %v1471
    %3723 = vmatpush1.bf16.msra.mxu0 %v1470
    %3724 = vmatprep.subr.bf16.mxu0 %v1468
    %3725 = vmatpush1.bf16.msra.mxu0 %v1467
    %3726 = vmatprep.subr.bf16.mxu0 %v1465
    %3727 = vmatpush1.bf16.msra.mxu0 %v1464
    %3728 = vmatprep.subr.bf16.mxu0 %v1462
    %3729 = vmatpush1.bf16.msra.mxu0 %v1461
    %3730 = vmatprep.subr.bf16.mxu0 %v1459
    %3731 = vmatpush1.bf16.msra.mxu0 %v1458
    %3732 = vmatprep.subr.bf16.mxu0 %v1456
    %3733 = vmatpush1.bf16.msra.mxu0 %v1455
    %3734 = vmatprep.subr.bf16.mxu0 %v1453
    %3735 = vmatpush1.bf16.msra.mxu0 %v1452
    %3736 = vmatprep.subr.bf16.mxu0 0
    %3737 = vmatpush2.bf16.msra.mxu0 0
    %3738 = vmatprep.subr.bf16.mxu0 0
    %3739 = vmatpush2.bf16.msra.mxu0 0
    %3740 = vmatprep.subr.bf16.mxu0 0
    %3741 = vmatpush2.bf16.msra.mxu0 0
    %3742 = vmatprep.subr.bf16.mxu0 0
    %3743 = vmatpush2.bf16.msra.mxu0 0
    %3744 = vmatprep.subr.bf16.mxu0 0
    %3745 = vmatpush2.bf16.msra.mxu0 0
    %3746 = vmatprep.subr.bf16.mxu0 0
    %3747 = vmatpush2.bf16.msra.mxu0 0
    %3748 = vmatprep.subr.bf16.mxu0 0
    %3749 = vmatpush2.bf16.msra.mxu0 0
    %3750 = vmatprep.subr.bf16.mxu0 0
    %3751 = vmatpush2.bf16.msra.mxu0 0
    %3752 = vmatprep.mubr.bf16.mxu0 0
    %3753 = vmatmul.mubr.bf16.gmra.mxu0 %v3700
    %v3754 = vpop.f32.mrf.mxu0
    %v3755 = vadd.f32 0.0, %v3754
    %v3756 = vpop.f32.mrf.mxu0
    %v3757 = vadd.f32 0.0, %v3756
    %v3758 = vpop.f32.mrf.mxu0
    %v3759 = vadd.f32 0.0, %v3758
    %v3760 = vpop.f32.mrf.mxu0
    %v3761 = vadd.f32 0.0, %v3760
    %3762 = vdwg.mxu0
    %3763 = vmatprep.subr.bf16.mxu0 0
    %3764 = vmatpush1.bf16.msra.mxu0 %v1475
    %3765 = vmatprep.subr.bf16.mxu0 0
    %3766 = vmatpush1.bf16.msra.mxu0 %v1472
    %3767 = vmatprep.subr.bf16.mxu0 0
    %3768 = vmatpush1.bf16.msra.mxu0 %v1469
    %3769 = vmatprep.subr.bf16.mxu0 0
    %3770 = vmatpush1.bf16.msra.mxu0 %v1466
    %3771 = vmatprep.subr.bf16.mxu0 0
    %3772 = vmatpush1.bf16.msra.mxu0 %v1463
    %3773 = vmatprep.subr.bf16.mxu0 0
    %3774 = vmatpush1.bf16.msra.mxu0 %v1460
    %3775 = vmatprep.subr.bf16.mxu0 0
    %3776 = vmatpush1.bf16.msra.mxu0 %v1457
    %3777 = vmatprep.subr.bf16.mxu0 0
    %3778 = vmatpush1.bf16.msra.mxu0 %v1454
    %3779 = vmatprep.subr.bf16.mxu0 0
    %3780 = vmatpush2.bf16.msra.mxu0 0
    %3781 = vmatprep.subr.bf16.mxu0 0
    %3782 = vmatpush2.bf16.msra.mxu0 0
    %3783 = vmatprep.subr.bf16.mxu0 0
    %3784 = vmatpush2.bf16.msra.mxu0 0
    %3785 = vmatprep.subr.bf16.mxu0 0
    %3786 = vmatpush2.bf16.msra.mxu0 0
    %3787 = vmatprep.subr.bf16.mxu0 0
    %3788 = vmatpush2.bf16.msra.mxu0 0
    %3789 = vmatprep.subr.bf16.mxu0 0
    %3790 = vmatpush2.bf16.msra.mxu0 0
    %3791 = vmatprep.subr.bf16.mxu0 0
    %3792 = vmatpush2.bf16.msra.mxu0 0
    %3793 = vmatprep.subr.bf16.mxu0 0
    %3794 = vmatpush2.bf16.msra.mxu0 0
    %3795 = vmatprep.mubr.bf16.mxu0 0
    %3796 = vmatmul.mubr.bf16.gmra.mxu0 %v3700
    %v3797 = vpop.f32.mrf.mxu0
    %v3798 = vadd.f32 0.0, %v3797
    %v3799 = vpop.f32.mrf.mxu0
    %v3800 = vpop.f32.mrf.mxu0
    %v3801 = vadd.f32 0.0, %v3800
    %v3802 = vpop.f32.mrf.mxu0
    %3803 = vdwg.mxu0
    %3804 = vmatprep.subr.bf16.mxu0 %v1686
    %3805 = vmatpush1.bf16.msra.mxu0 %v1685
    %3806 = vmatprep.subr.bf16.mxu0 %v1683
    %3807 = vmatpush1.bf16.msra.mxu0 %v1682
    %3808 = vmatprep.subr.bf16.mxu0 %v1680
    %3809 = vmatpush1.bf16.msra.mxu0 %v1679
    %3810 = vmatprep.subr.bf16.mxu0 %v1677
    %3811 = vmatpush1.bf16.msra.mxu0 %v1676
    %3812 = vmatprep.subr.bf16.mxu0 %v1674
    %3813 = vmatpush1.bf16.msra.mxu0 %v1673
    %3814 = vmatprep.subr.bf16.mxu0 %v1671
    %3815 = vmatpush1.bf16.msra.mxu0 %v1670
    %3816 = vmatprep.subr.bf16.mxu0 %v1668
    %3817 = vmatpush1.bf16.msra.mxu0 %v1667
    %3818 = vmatprep.subr.bf16.mxu0 %v1665
    %3819 = vmatpush1.bf16.msra.mxu0 %v1664
    %3820 = vmatprep.subr.bf16.mxu0 0
    %3821 = vmatpush2.bf16.msra.mxu0 0
    %3822 = vmatprep.subr.bf16.mxu0 0
    %3823 = vmatpush2.bf16.msra.mxu0 0
    %3824 = vmatprep.subr.bf16.mxu0 0
    %3825 = vmatpush2.bf16.msra.mxu0 0
    %3826 = vmatprep.subr.bf16.mxu0 0
    %3827 = vmatpush2.bf16.msra.mxu0 0
    %3828 = vmatprep.subr.bf16.mxu0 0
    %3829 = vmatpush2.bf16.msra.mxu0 0
    %3830 = vmatprep.subr.bf16.mxu0 0
    %3831 = vmatpush2.bf16.msra.mxu0 0
    %3832 = vmatprep.subr.bf16.mxu0 0
    %3833 = vmatpush2.bf16.msra.mxu0 0
    %3834 = vmatprep.subr.bf16.mxu0 0
    %3835 = vmatpush2.bf16.msra.mxu0 0
    %3836 = vmatprep.mubr.bf16.mxu0 0
    %3837 = vmatmul.mubr.bf16.gmra.mxu0 %v3710
    %v3838 = vpop.f32.mrf.mxu0
    %v3839 = vadd.f32 0.0, %v3838
    %v3840 = vpop.f32.mrf.mxu0
    %v3841 = vadd.f32 0.0, %v3840
    %v3842 = vpop.f32.mrf.mxu0
    %v3843 = vadd.f32 0.0, %v3842
    %v3844 = vpop.f32.mrf.mxu0
    %v3845 = vadd.f32 0.0, %v3844
    %3846 = vdwg.mxu0
    %3847 = vmatprep.subr.bf16.mxu0 0
    %3848 = vmatpush1.bf16.msra.mxu0 %v1687
    %3849 = vmatprep.subr.bf16.mxu0 0
    %3850 = vmatpush1.bf16.msra.mxu0 %v1684
    %3851 = vmatprep.subr.bf16.mxu0 0
    %3852 = vmatpush1.bf16.msra.mxu0 %v1681
    %3853 = vmatprep.subr.bf16.mxu0 0
    %3854 = vmatpush1.bf16.msra.mxu0 %v1678
    %3855 = vmatprep.subr.bf16.mxu0 0
    %3856 = vmatpush1.bf16.msra.mxu0 %v1675
    %3857 = vmatprep.subr.bf16.mxu0 0
    %3858 = vmatpush1.bf16.msra.mxu0 %v1672
    %3859 = vmatprep.subr.bf16.mxu0 0
    %3860 = vmatpush1.bf16.msra.mxu0 %v1669
    %3861 = vmatprep.subr.bf16.mxu0 0
    %3862 = vmatpush1.bf16.msra.mxu0 %v1666
    %3863 = vmatprep.subr.bf16.mxu0 0
    %3864 = vmatpush2.bf16.msra.mxu0 0
    %3865 = vmatprep.subr.bf16.mxu0 0
    %3866 = vmatpush2.bf16.msra.mxu0 0
    %3867 = vmatprep.subr.bf16.mxu0 0
    %3868 = vmatpush2.bf16.msra.mxu0 0
    %3869 = vmatprep.subr.bf16.mxu0 0
    %3870 = vmatpush2.bf16.msra.mxu0 0
    %3871 = vmatprep.subr.bf16.mxu0 0
    %3872 = vmatpush2.bf16.msra.mxu0 0
    %3873 = vmatprep.subr.bf16.mxu0 0
    %3874 = vmatpush2.bf16.msra.mxu0 0
    %3875 = vmatprep.subr.bf16.mxu0 0
    %3876 = vmatpush2.bf16.msra.mxu0 0
    %3877 = vmatprep.subr.bf16.mxu0 0
    %3878 = vmatpush2.bf16.msra.mxu0 0
    %3879 = vmatprep.mubr.bf16.mxu0 0
    %3880 = vmatmul.mubr.bf16.gmra.mxu0 %v3710
    %v3881 = vpop.f32.mrf.mxu0
    %v3882 = vadd.f32 0.0, %v3881
    %v3883 = vpop.f32.mrf.mxu0
    %v3884 = vpop.f32.mrf.mxu0
    %v3885 = vadd.f32 0.0, %v3884
    %v3886 = vpop.f32.mrf.mxu0
    %3887 = vdwg.mxu0
    %s3888 = scalar_lea.vmem [#allocation2], 168
    %v3889 = vld [vmem:[%s3888] sm:$0xff]
    %v3890 = vld [vmem:[%s3888 + $0x8] sm:$0xf]
    %v3891 = vld [vmem:[%s3888 + $0xc] sm:$0xff]
    %v3892 = vld [vmem:[%s3888 + $0x14] sm:$0xf]
    %v3893 = vunpack.c.l.bf16 %v3889
    %v3894 = vunpack.c.h.bf16 %v3889
    %v3895 = vunpack.c.l.bf16 %v3890
    %v3896 = vunpack.c.l.bf16 %v3891
    %v3897 = vunpack.c.h.bf16 %v3891
    %v3898 = vunpack.c.l.bf16 %v3892
    %v3899 = vadd.f32 %v3893, %v3755
    %v3900 = vadd.f32 %v3896, %v3759
    %v3901 = vxor.u32 %v3899, 2147483648
    %v3902 = vxor.u32 %v3900, 2147483648
    %v3903 = vmul.f32 %v3901, 1.442695
    %v3904 = vpow.pop %v3903
    %v3905 = vmul.f32 %v3902, 1.442695
    %v3906 = vpow.pop %v3905
    %v3907 = vadd.f32 %v3904, 1.0
    %v3908 = vadd.f32 %v3906, 1.0
    %v3909 = vrcp.pop %v3907
    %v3910 = vmul.f32 1.0, %v3909
    %v3911 = vrcp.pop %v3908
    %v3912 = vmul.f32 1.0, %v3911
    %v3913 = vadd.f32 %v3894, %v3757
    %v3914 = vadd.f32 %v3897, %v3761
    %v3915 = vxor.u32 %v3913, 2147483648
    %v3916 = vxor.u32 %v3914, 2147483648
    %v3917 = vmul.f32 %v3915, 1.442695
    %v3918 = vpow.pop %v3917
    %v3919 = vmul.f32 %v3916, 1.442695
    %v3920 = vpow.pop %v3919
    %v3921 = vadd.f32 %v3918, 1.0
    %v3922 = vadd.f32 %v3920, 1.0
    %v3923 = vrcp.pop %v3921
    %v3924 = vmul.f32 1.0, %v3923
    %v3925 = vrcp.pop %v3922
    %v3926 = vmul.f32 1.0, %v3925
    %v3927 = vadd.f32 %v3798, %v1298
    %v3928 = vadd.f32 %v3801, %v1298
    %v3929 = vmul.f32 %v3910, %v3927
    %v3930 = vmul.f32 %v3912, %v3928
    %v3931 = vadd.f32 %v3895, %v3929
    %v3932 = vadd.f32 %v3898, %v3930
    %v3933 = vtanh.pop %v3931
    %v3934 = vtanh.pop %v3932
    %v3935 = vsub.f32 1.0, %v3924
    %v3936 = vsub.f32 1.0, %v3926
    %v3937 = vmul.f32 %v3935, %v3933
    %v3938 = vmul.f32 %v3936, %v3934
    %v3939 = vmul.f32 %v3924, %v3643
    %v3940 = vmul.f32 %v3926, %v3644
    %v3941 = vadd.f32 %v3937, %v3939
    %v3942 = vadd.f32 %v3938, %v3940
    %v3943 = vld [vmem:[#allocation3] sm:$0xff]
    %v3944 = vld [vmem:[#allocation3 + $0x8] sm:$0xf]
    %v3945 = vld [vmem:[#allocation3 + $0xc] sm:$0xff]
    %v3946 = vld [vmem:[#allocation3 + $0x14] sm:$0xf]
    %v3947 = vunpack.c.l.bf16 %v3943
    %v3948 = vunpack.c.h.bf16 %v3943
    %v3949 = vunpack.c.l.bf16 %v3944
    %v3950 = vunpack.c.l.bf16 %v3945
    %v3951 = vunpack.c.h.bf16 %v3945
    %v3952 = vunpack.c.l.bf16 %v3946
    %v3953 = vadd.f32 %v3947, %v3839
    %v3954 = vadd.f32 %v3950, %v3843
    %v3955 = vxor.u32 %v3953, 2147483648
    %v3956 = vxor.u32 %v3954, 2147483648
    %v3957 = vmul.f32 %v3955, 1.442695
    %v3958 = vpow.pop %v3957
    %v3959 = vmul.f32 %v3956, 1.442695
    %v3960 = vpow.pop %v3959
    %v3961 = vadd.f32 %v3958, 1.0
    %v3962 = vadd.f32 %v3960, 1.0
    %v3963 = vrcp.pop %v3961
    %v3964 = vmul.f32 1.0, %v3963
    %v3965 = vrcp.pop %v3962
    %v3966 = vmul.f32 1.0, %v3965
    %v3967 = vadd.f32 %v3948, %v3841
    %v3968 = vadd.f32 %v3951, %v3845
    %v3969 = vxor.u32 %v3967, 2147483648
    %v3970 = vxor.u32 %v3968, 2147483648
    %v3971 = vmul.f32 %v3969, 1.442695
    %v3972 = vpow.pop %v3971
    %v3973 = vmul.f32 %v3970, 1.442695
    %v3974 = vpow.pop %v3973
    %v3975 = vadd.f32 %v3972, 1.0
    %v3976 = vadd.f32 %v3974, 1.0
    %v3977 = vrcp.pop %v3975
    %v3978 = vmul.f32 1.0, %v3977
    %v3979 = vrcp.pop %v3976
    %v3980 = vmul.f32 1.0, %v3979
    %v3981 = vadd.f32 %v3882, %v1305
    %v3982 = vadd.f32 %v3885, %v1305
    %v3983 = vmul.f32 %v3964, %v3981
    %v3984 = vmul.f32 %v3966, %v3982
    %v3985 = vadd.f32 %v3949, %v3983
    %v3986 = vadd.f32 %v3952, %v3984
    %v3987 = vtanh.pop %v3985
    %v3988 = vtanh.pop %v3986
    %v3989 = vsub.f32 1.0, %v3978
    %v3990 = vsub.f32 1.0, %v3980
    %v3991 = vmul.f32 %v3989, %v3987
    %v3992 = vmul.f32 %v3990, %v3988
    %v3993 = vmul.f32 %v3978, %v3698
    %v3994 = vmul.f32 %v3980, %v3699
    %v3995 = vadd.f32 %v3991, %v3993
    %v3996 = vadd.f32 %v3992, %v3994
    %v3997 = vpack.c.bf16 %v3942, %v3941
    %v3999 = vunpack.c.l.b16 %v3997
    %v4000 = vunpack.c.h.b16 %v3997
    %v4001 = vpack.c.b16 %v3999, %v3999
    %v4002 = vpack.c.b16 %v4000, %v4000
    %4005 = vst [vmem:[%s1923] sm:$0xf] %v4001
    %4006 = vst [vmem:[%s1923 + $0x8] sm:$0xf] %v4002
    %v4007 = vpack.c.bf16 %v3996, %v3995
    %v4009 = vunpack.c.l.b16 %v4007
    %v4010 = vunpack.c.h.b16 %v4007
    %v4011 = vpack.c.b16 %v4009, %v4009
    %v4012 = vpack.c.b16 %v4010, %v4010
    %4015 = vst [vmem:[%s8 + $0x4] sm:$0xf] %v4011
    %4016 = vst [vmem:[%s8 + $0xc] sm:$0xf] %v4012
    // Predicated region
    $region46: #{bigru_forward.2} parent=1 // pred_check
      _
    $region47: #{bigru_forward.2} parent=1 // pred_check_branch
      %4018 = sbr.rel (0) target = $region49
    $region48: #{bigru_forward.2} parent=1 // pred_region
      _
    $region49: #{bigru_forward.2} parent=1 // pred_fallthru
      _
    // Predicated region
    $region50: #{bigru_forward.2} parent=1 // pred_check
      _
    $region51: #{bigru_forward.2} parent=1 // pred_check_branch
      %4020 = sbr.rel (0) target = $region53
    $region52: #{bigru_forward.2} parent=1 // pred_region
      _
    $region53: #{bigru_forward.2} parent=1 // pred_fallthru
      _
    %4021 = vsyncpa [#allocation5], 1
    %4022 = vsyncpa [#allocation7], 1

// kernel: bigru_forward.3
$region0: #{bigru_forward.3}
  #allocation0 [shape = 'u32[]', space=smem, size = 0x4, offset = 0x4, fixed_abs, tag = 'smem constant byte address 0x4 - core index']
  #allocation1 [shape = 'u32[144,128]{1,0:T(1,128)}', space=vmem, size = 0x12000, scoped, tag = 'internal scratch']
  #allocation2 [shape = 'bf16[8,16,384]{2,1,0:T(8,128)(2,1)}', space=vmem, size = 0x18000, scoped, tag = 'scratch operand']
  %s0 = inlined_call_operand.vmem [shape: bf16[8,16,256], index: 0, kind: input, shape index: {}]
  %s1 = inlined_call_operand.vmem [shape: bf16[256,384], index: 1, kind: input, shape index: {}]
  %s2 = inlined_call_operand.vmem [shape: bf16[256,384], index: 2, kind: input, shape index: {}]
  %s3 = inlined_call_operand.hbm [shape: bf16[2,128,384], index: 3, kind: input, shape index: {}]
  %s4 = inlined_call_operand.vmem [shape: f32[1,384], index: 4, kind: input, shape index: {}]
  %s5 = inlined_call_operand.vmem [shape: f32[1,384], index: 5, kind: input, shape index: {}]
  %s6 = inlined_call_operand.vmem [shape: f32[1,128], index: 6, kind: input, shape index: {}]
  %s7 = inlined_call_operand.vmem [shape: f32[1,128], index: 7, kind: input, shape index: {}]
  %s8 = inlined_call_operand.vmem [shape: bf16[128,128], index: 8, kind: input, shape index: {}]
  %s9 = inlined_call_operand.vmem [shape: bf16[128,128], index: 9, kind: input, shape index: {}]
  %s10 = inlined_call_operand.vmem [shape: f32[1,128], index: 10, kind: input, shape index: {}]
  %s11 = inlined_call_operand.vmem [shape: f32[16,128], index: 11, kind: output, shape index: {}]
  %s12 = sld [smem:[#allocation0]]
  $region58: #{bigru_forward.3} parent=0
    _
  %s14 = ssub.s32 1, %s12
  %s15 = scalar_select 0, %s14, %s12
  $region1: #{bigru_forward.3} parent=0
    #allocation3 [shape = 'u8[196608]{0}', space=vmem, size = 0x30000, scoped, tag = 'input window, operand 3, single buffered']
    #allocation4 [shape = 's32[1]{0}', space=sflag, size = 0x4, scoped, tag = 'scoped memory for bigru_forward.3']
    %16 = vsyncpa [#allocation4], 0
    // Predicated region
    $region2: #{bigru_forward.3} parent=1 // pred_check
      _
    $region3: #{bigru_forward.3} parent=1 // pred_check_branch
      %18 = sbr.rel (0) target = $region5
    $region4: #{bigru_forward.3} parent=1 // pred_region
      _
    $region5: #{bigru_forward.3} parent=1 // pred_fallthru
      _
    // Predicated region
    $region6: #{bigru_forward.3} parent=1 // pred_check
      _
    $region7: #{bigru_forward.3} parent=1 // pred_check_branch
      %20 = sbr.rel (0) target = $region9
    $region8: #{bigru_forward.3} parent=1 // pred_region
      _
    $region9: #{bigru_forward.3} parent=1 // pred_fallthru
      _
    // Predicated region
    $region10: #{bigru_forward.3} parent=1 // pred_check
      _
    $region11: #{bigru_forward.3} parent=1 // pred_check_branch
      %22 = sbr.rel (0) target = $region13
    $region12: #{bigru_forward.3} parent=1 // pred_region
      _
    $region13: #{bigru_forward.3} parent=1 // pred_fallthru
      _
    // Predicated region
    $region14: #{bigru_forward.3} parent=1 // pred_check
      _
    $region15: #{bigru_forward.3} parent=1 // pred_check_branch
      %24 = sbr.rel (0) target = $region17
    $region16: #{bigru_forward.3} parent=1 // pred_region
      %s26 = ssub.s32 6144, 6144
      %27 = vsyncadd [#allocation4], %s26
      %s28 = sshll.u32 [#allocation3], 4
      %s29 = int_to_ptr.vmem [resolvable:$true] %s28
      %34 = dma.hbm_to_vmem [thread:$0]  %s3, 6144, %s29, [#allocation4], 192, 192, 12
    $region17: #{bigru_forward.3} parent=1 // pred_fallthru
      _
    // Predicated region
    $region18: #{bigru_forward.3} parent=1 // pred_check
      _
    $region19: #{bigru_forward.3} parent=1 // pred_check_branch
      %36 = sbr.rel (0) target = $region21
    $region20: #{bigru_forward.3} parent=1 // pred_region
      _
    $region21: #{bigru_forward.3} parent=1 // pred_fallthru
      _
    // Predicated region
    $region22: #{bigru_forward.3} parent=1 // pred_check
      _
    $region23: #{bigru_forward.3} parent=1 // pred_check_branch
      %38 = sbr.rel (0) target = $region25
    $region24: #{bigru_forward.3} parent=1 // pred_region
      _
    $region25: #{bigru_forward.3} parent=1 // pred_fallthru
      _
    // Predicated region
    $region26: #{bigru_forward.3} parent=1 // pred_check
      _
    $region27: #{bigru_forward.3} parent=1 // pred_check_branch
      %40 = sbr.rel (0) target = $region29
    $region28: #{bigru_forward.3} parent=1 // pred_region
      _
    $region29: #{bigru_forward.3} parent=1 // pred_fallthru
      _
    // Predicated region
    $region30: #{bigru_forward.3} parent=1 // pred_check
      _
    $region31: #{bigru_forward.3} parent=1 // pred_check_branch
      %42 = sbr.rel (0) target = $region33
    $region32: #{bigru_forward.3} parent=1 // pred_region
      _
    $region33: #{bigru_forward.3} parent=1 // pred_fallthru
      _
    // Predicated region
    $region34: #{bigru_forward.3} parent=1 // pred_check
      _
    $region35: #{bigru_forward.3} parent=1 // pred_check_branch
      %44 = sbr.rel (0) target = $region37
    $region36: #{bigru_forward.3} parent=1 // pred_region
      _
    $region37: #{bigru_forward.3} parent=1 // pred_fallthru
      _
    // Predicated region
    $region38: #{bigru_forward.3} parent=1 // pred_check
      _
    $region39: #{bigru_forward.3} parent=1 // pred_check_branch
      %46 = sbr.rel (0) target = $region41
    $region40: #{bigru_forward.3} parent=1 // pred_region
      _
    $region41: #{bigru_forward.3} parent=1 // pred_fallthru
      _
    // Predicated region
    $region42: #{bigru_forward.3} parent=1 // pred_check
      _
    $region43: #{bigru_forward.3} parent=1 // pred_check_branch
      %48 = sbr.rel (0) target = $region45
    $region44: #{bigru_forward.3} parent=1 // pred_region
      _
    $region45: #{bigru_forward.3} parent=1 // pred_fallthru
      _
    // Predicated region
    $region46: #{bigru_forward.3} parent=1 // pred_check
      _
    $region47: #{bigru_forward.3} parent=1 // pred_check_branch
      %50 = sbr.rel (0) target = $region49
    $region48: #{bigru_forward.3} parent=1 // pred_region
      %51 = dma.done [#allocation4], 6144
    $region49: #{bigru_forward.3} parent=1 // pred_fallthru
      _
    %v53 = vld [vmem:[%s0] sm:$0xff]
    %v54 = vld [vmem:[%s0 + $0x8] sm:$0xff]
    %v55 = vld [vmem:[%s0 + $0x10] sm:$0xff]
    %v56 = vld [vmem:[%s0 + $0x18] sm:$0xff]
    %v57 = vld [vmem:[%s0 + $0x20] sm:$0xff]
    %v58 = vld [vmem:[%s0 + $0x28] sm:$0xff]
    %v59 = vld [vmem:[%s0 + $0x30] sm:$0xff]
    %v60 = vld [vmem:[%s0 + $0x38] sm:$0xff]
    %v61 = vld [vmem:[%s0 + $0x40] sm:$0xff]
    %v62 = vld [vmem:[%s0 + $0x48] sm:$0xff]
    %v63 = vld [vmem:[%s0 + $0x50] sm:$0xff]
    %v64 = vld [vmem:[%s0 + $0x58] sm:$0xff]
    %v65 = vld [vmem:[%s0 + $0x60] sm:$0xff]
    %v66 = vld [vmem:[%s0 + $0x68] sm:$0xff]
    %v67 = vld [vmem:[%s0 + $0x70] sm:$0xff]
    %v68 = vld [vmem:[%s0 + $0x78] sm:$0xff]
    %v69 = vld [vmem:[%s1] sm:$0xff]
    %v70 = vld [vmem:[%s1 + $0x8] sm:$0xf]
    %v71 = vld [vmem:[%s1 + $0xc] sm:$0xff]
    %v72 = vld [vmem:[%s1 + $0x14] sm:$0xf]
    %v73 = vld [vmem:[%s1 + $0x18] sm:$0xff]
    %v74 = vld [vmem:[%s1 + $0x20] sm:$0xf]
    %v75 = vld [vmem:[%s1 + $0x24] sm:$0xff]
    %v76 = vld [vmem:[%s1 + $0x2c] sm:$0xf]
    %v77 = vld [vmem:[%s1 + $0x30] sm:$0xff]
    %v78 = vld [vmem:[%s1 + $0x38] sm:$0xf]
    %v79 = vld [vmem:[%s1 + $0x3c] sm:$0xff]
    %v80 = vld [vmem:[%s1 + $0x44] sm:$0xf]
    %v81 = vld [vmem:[%s1 + $0x48] sm:$0xff]
    %v82 = vld [vmem:[%s1 + $0x50] sm:$0xf]
    %v83 = vld [vmem:[%s1 + $0x54] sm:$0xff]
    %v84 = vld [vmem:[%s1 + $0x5c] sm:$0xf]
    %v85 = vld [vmem:[%s1 + $0x60] sm:$0xff]
    %v86 = vld [vmem:[%s1 + $0x68] sm:$0xf]
    %v87 = vld [vmem:[%s1 + $0x6c] sm:$0xff]
    %v88 = vld [vmem:[%s1 + $0x74] sm:$0xf]
    %v89 = vld [vmem:[%s1 + $0x78] sm:$0xff]
    %v90 = vld [vmem:[%s1 + $0x80] sm:$0xf]
    %v91 = vld [vmem:[%s1 + $0x84] sm:$0xff]
    %v92 = vld [vmem:[%s1 + $0x8c] sm:$0xf]
    %v93 = vld [vmem:[%s1 + $0x90] sm:$0xff]
    %v94 = vld [vmem:[%s1 + $0x98] sm:$0xf]
    %v95 = vld [vmem:[%s1 + $0x9c] sm:$0xff]
    %v96 = vld [vmem:[%s1 + $0xa4] sm:$0xf]
    %v97 = vld [vmem:[%s1 + $0xa8] sm:$0xff]
    %v98 = vld [vmem:[%s1 + $0xb0] sm:$0xf]
    %v99 = vld [vmem:[%s1 + $0xb4] sm:$0xff]
    %v100 = vld [vmem:[%s1 + $0xbc] sm:$0xf]
    %v101 = vld [vmem:[%s1 + $0xc0] sm:$0xff]
    %v102 = vld [vmem:[%s1 + $0xc8] sm:$0xf]
    %v103 = vld [vmem:[%s1 + $0xcc] sm:$0xff]
    %v104 = vld [vmem:[%s1 + $0xd4] sm:$0xf]
    %v105 = vld [vmem:[%s1 + $0xd8] sm:$0xff]
    %v106 = vld [vmem:[%s1 + $0xe0] sm:$0xf]
    %v107 = vld [vmem:[%s1 + $0xe4] sm:$0xff]
    %v108 = vld [vmem:[%s1 + $0xec] sm:$0xf]
    %v109 = vld [vmem:[%s1 + $0xf0] sm:$0xff]
    %v110 = vld [vmem:[%s1 + $0xf8] sm:$0xf]
    %v111 = vld [vmem:[%s1 + $0xfc] sm:$0xff]
    %v112 = vld [vmem:[%s1 + $0x104] sm:$0xf]
    %v113 = vld [vmem:[%s1 + $0x108] sm:$0xff]
    %v114 = vld [vmem:[%s1 + $0x110] sm:$0xf]
    %v115 = vld [vmem:[%s1 + $0x114] sm:$0xff]
    %v116 = vld [vmem:[%s1 + $0x11c] sm:$0xf]
    %v117 = vld [vmem:[%s1 + $0x120] sm:$0xff]
    %v118 = vld [vmem:[%s1 + $0x128] sm:$0xf]
    %v119 = vld [vmem:[%s1 + $0x12c] sm:$0xff]
    %v120 = vld [vmem:[%s1 + $0x134] sm:$0xf]
    %v121 = vld [vmem:[%s1 + $0x138] sm:$0xff]
    %v122 = vld [vmem:[%s1 + $0x140] sm:$0xf]
    %v123 = vld [vmem:[%s1 + $0x144] sm:$0xff]
    %v124 = vld [vmem:[%s1 + $0x14c] sm:$0xf]
    %v125 = vld [vmem:[%s1 + $0x150] sm:$0xff]
    %v126 = vld [vmem:[%s1 + $0x158] sm:$0xf]
    %v127 = vld [vmem:[%s1 + $0x15c] sm:$0xff]
    %v128 = vld [vmem:[%s1 + $0x164] sm:$0xf]
    %v129 = vld [vmem:[%s1 + $0x168] sm:$0xff]
    %v130 = vld [vmem:[%s1 + $0x170] sm:$0xf]
    %v131 = vld [vmem:[%s1 + $0x174] sm:$0xff]
    %v132 = vld [vmem:[%s1 + $0x17c] sm:$0xf]
    %v133 = vld [vmem:[%s4] sm:$0x7]
    %v135 = vlaneseq
    %v136 = vshrl.u32 %v135, 7
    %v137 = vsub.s32 0, %v136
    %v138 = vrot.slane %v133, %v137
    %v139 = vlaneseq
    %v140 = vshrl.u32 %v139, 7
    %v141 = vsub.s32 1, %v140
    %v142 = vrot.slane %v133, %v141
    %v143 = vlaneseq
    %v144 = vshrl.u32 %v143, 7
    %v145 = vsub.s32 2, %v144
    %v146 = vrot.slane %v133, %v145
    %v166 = vunpack.c.l.b16 %v53
    %v167 = vunpack.c.h.b16 %v53
    %v168 = vunpack.c.l.b16 %v54
    %v169 = vunpack.c.h.b16 %v54
    %v170 = vunpack.c.l.b16 %v55
    %v171 = vunpack.c.h.b16 %v55
    %v172 = vunpack.c.l.b16 %v56
    %v173 = vunpack.c.h.b16 %v56
    %v174 = vunpack.c.l.b16 %v57
    %v175 = vunpack.c.h.b16 %v57
    %v176 = vunpack.c.l.b16 %v58
    %v177 = vunpack.c.h.b16 %v58
    %v178 = vunpack.c.l.b16 %v59
    %v179 = vunpack.c.h.b16 %v59
    %v180 = vunpack.c.l.b16 %v60
    %v181 = vunpack.c.h.b16 %v60
    %v182 = vunpack.c.l.b16 %v61
    %v183 = vunpack.c.h.b16 %v61
    %v184 = vunpack.c.l.b16 %v62
    %v185 = vunpack.c.h.b16 %v62
    %v186 = vunpack.c.l.b16 %v63
    %v187 = vunpack.c.h.b16 %v63
    %v188 = vunpack.c.l.b16 %v64
    %v189 = vunpack.c.h.b16 %v64
    %v190 = vunpack.c.l.b16 %v65
    %v191 = vunpack.c.h.b16 %v65
    %v192 = vunpack.c.l.b16 %v66
    %v193 = vunpack.c.h.b16 %v66
    %v194 = vunpack.c.l.b16 %v67
    %v195 = vunpack.c.h.b16 %v67
    %v196 = vunpack.c.l.b16 %v68
    %v197 = vunpack.c.h.b16 %v68
    %v198 = vpack.c.b16 %v168, %v166
    %v199 = vpack.c.b16 %v169, %v167
    %v200 = vpack.c.b16 %v172, %v170
    %v201 = vpack.c.b16 %v173, %v171
    %v202 = vpack.c.b16 %v176, %v174
    %v203 = vpack.c.b16 %v177, %v175
    %v204 = vpack.c.b16 %v180, %v178
    %v205 = vpack.c.b16 %v181, %v179
    %v206 = vpack.c.b16 %v184, %v182
    %v207 = vpack.c.b16 %v185, %v183
    %v208 = vpack.c.b16 %v188, %v186
    %v209 = vpack.c.b16 %v189, %v187
    %v210 = vpack.c.b16 %v192, %v190
    %v211 = vpack.c.b16 %v193, %v191
    %v212 = vpack.c.b16 %v196, %v194
    %v213 = vpack.c.b16 %v197, %v195
    %v294 = vunpack.c.l.b16 %v69
    %v295 = vunpack.c.h.b16 %v69
    %v296 = vunpack.c.l.b16 %v70
    %v297 = vunpack.c.l.b16 %v71
    %v298 = vunpack.c.h.b16 %v71
    %v299 = vunpack.c.l.b16 %v72
    %v300 = vunpack.c.l.b16 %v73
    %v301 = vunpack.c.h.b16 %v73
    %v302 = vunpack.c.l.b16 %v74
    %v303 = vunpack.c.l.b16 %v75
    %v304 = vunpack.c.h.b16 %v75
    %v305 = vunpack.c.l.b16 %v76
    %v306 = vunpack.c.l.b16 %v77
    %v307 = vunpack.c.h.b16 %v77
    %v308 = vunpack.c.l.b16 %v78
    %v309 = vunpack.c.l.b16 %v79
    %v310 = vunpack.c.h.b16 %v79
    %v311 = vunpack.c.l.b16 %v80
    %v312 = vunpack.c.l.b16 %v81
    %v313 = vunpack.c.h.b16 %v81
    %v314 = vunpack.c.l.b16 %v82
    %v315 = vunpack.c.l.b16 %v83
    %v316 = vunpack.c.h.b16 %v83
    %v317 = vunpack.c.l.b16 %v84
    %v318 = vunpack.c.l.b16 %v85
    %v319 = vunpack.c.h.b16 %v85
    %v320 = vunpack.c.l.b16 %v86
    %v321 = vunpack.c.l.b16 %v87
    %v322 = vunpack.c.h.b16 %v87
    %v323 = vunpack.c.l.b16 %v88
    %v324 = vunpack.c.l.b16 %v89
    %v325 = vunpack.c.h.b16 %v89
    %v326 = vunpack.c.l.b16 %v90
    %v327 = vunpack.c.l.b16 %v91
    %v328 = vunpack.c.h.b16 %v91
    %v329 = vunpack.c.l.b16 %v92
    %v330 = vunpack.c.l.b16 %v93
    %v331 = vunpack.c.h.b16 %v93
    %v332 = vunpack.c.l.b16 %v94
    %v333 = vunpack.c.l.b16 %v95
    %v334 = vunpack.c.h.b16 %v95
    %v335 = vunpack.c.l.b16 %v96
    %v336 = vunpack.c.l.b16 %v97
    %v337 = vunpack.c.h.b16 %v97
    %v338 = vunpack.c.l.b16 %v98
    %v339 = vunpack.c.l.b16 %v99
    %v340 = vunpack.c.h.b16 %v99
    %v341 = vunpack.c.l.b16 %v100
    %v342 = vunpack.c.l.b16 %v101
    %v343 = vunpack.c.h.b16 %v101
    %v344 = vunpack.c.l.b16 %v102
    %v345 = vunpack.c.l.b16 %v103
    %v346 = vunpack.c.h.b16 %v103
    %v347 = vunpack.c.l.b16 %v104
    %v348 = vunpack.c.l.b16 %v105
    %v349 = vunpack.c.h.b16 %v105
    %v350 = vunpack.c.l.b16 %v106
    %v351 = vunpack.c.l.b16 %v107
    %v352 = vunpack.c.h.b16 %v107
    %v353 = vunpack.c.l.b16 %v108
    %v354 = vunpack.c.l.b16 %v109
    %v355 = vunpack.c.h.b16 %v109
    %v356 = vunpack.c.l.b16 %v110
    %v357 = vunpack.c.l.b16 %v111
    %v358 = vunpack.c.h.b16 %v111
    %v359 = vunpack.c.l.b16 %v112
    %v360 = vunpack.c.l.b16 %v113
    %v361 = vunpack.c.h.b16 %v113
    %v362 = vunpack.c.l.b16 %v114
    %v363 = vunpack.c.l.b16 %v115
    %v364 = vunpack.c.h.b16 %v115
    %v365 = vunpack.c.l.b16 %v116
    %v366 = vunpack.c.l.b16 %v117
    %v367 = vunpack.c.h.b16 %v117
    %v368 = vunpack.c.l.b16 %v118
    %v369 = vunpack.c.l.b16 %v119
    %v370 = vunpack.c.h.b16 %v119
    %v371 = vunpack.c.l.b16 %v120
    %v372 = vunpack.c.l.b16 %v121
    %v373 = vunpack.c.h.b16 %v121
    %v374 = vunpack.c.l.b16 %v122
    %v375 = vunpack.c.l.b16 %v123
    %v376 = vunpack.c.h.b16 %v123
    %v377 = vunpack.c.l.b16 %v124
    %v378 = vunpack.c.l.b16 %v125
    %v379 = vunpack.c.h.b16 %v125
    %v380 = vunpack.c.l.b16 %v126
    %v381 = vunpack.c.l.b16 %v127
    %v382 = vunpack.c.h.b16 %v127
    %v383 = vunpack.c.l.b16 %v128
    %v384 = vunpack.c.l.b16 %v129
    %v385 = vunpack.c.h.b16 %v129
    %v386 = vunpack.c.l.b16 %v130
    %v387 = vunpack.c.l.b16 %v131
    %v388 = vunpack.c.h.b16 %v131
    %v389 = vunpack.c.l.b16 %v132
    %v390 = vpack.c.b16 %v297, %v294
    %v391 = vpack.c.b16 %v298, %v295
    %v392 = vpack.c.b16 %v299, %v296
    %v393 = vpack.c.b16 %v303, %v300
    %v394 = vpack.c.b16 %v304, %v301
    %v395 = vpack.c.b16 %v305, %v302
    %v396 = vpack.c.b16 %v309, %v306
    %v397 = vpack.c.b16 %v310, %v307
    %v398 = vpack.c.b16 %v311, %v308
    %v399 = vpack.c.b16 %v315, %v312
    %v400 = vpack.c.b16 %v316, %v313
    %v401 = vpack.c.b16 %v317, %v314
    %v402 = vpack.c.b16 %v321, %v318
    %v403 = vpack.c.b16 %v322, %v319
    %v404 = vpack.c.b16 %v323, %v320
    %v405 = vpack.c.b16 %v327, %v324
    %v406 = vpack.c.b16 %v328, %v325
    %v407 = vpack.c.b16 %v329, %v326
    %v408 = vpack.c.b16 %v333, %v330
    %v409 = vpack.c.b16 %v334, %v331
    %v410 = vpack.c.b16 %v335, %v332
    %v411 = vpack.c.b16 %v339, %v336
    %v412 = vpack.c.b16 %v340, %v337
    %v413 = vpack.c.b16 %v341, %v338
    %v414 = vpack.c.b16 %v345, %v342
    %v415 = vpack.c.b16 %v346, %v343
    %v416 = vpack.c.b16 %v347, %v344
    %v417 = vpack.c.b16 %v351, %v348
    %v418 = vpack.c.b16 %v352, %v349
    %v419 = vpack.c.b16 %v353, %v350
    %v420 = vpack.c.b16 %v357, %v354
    %v421 = vpack.c.b16 %v358, %v355
    %v422 = vpack.c.b16 %v359, %v356
    %v423 = vpack.c.b16 %v363, %v360
    %v424 = vpack.c.b16 %v364, %v361
    %v425 = vpack.c.b16 %v365, %v362
    %v426 = vpack.c.b16 %v369, %v366
    %v427 = vpack.c.b16 %v370, %v367
    %v428 = vpack.c.b16 %v371, %v368
    %v429 = vpack.c.b16 %v375, %v372
    %v430 = vpack.c.b16 %v376, %v373
    %v431 = vpack.c.b16 %v377, %v374
    %v432 = vpack.c.b16 %v381, %v378
    %v433 = vpack.c.b16 %v382, %v379
    %v434 = vpack.c.b16 %v383, %v380
    %v435 = vpack.c.b16 %v387, %v384
    %v436 = vpack.c.b16 %v388, %v385
    %v437 = vpack.c.b16 %v389, %v386
    %486 = vmatprep.subr.bf16.mxu0 %v412
    %487 = vmatpush1.bf16.msra.mxu0 %v411
    %488 = vmatprep.subr.bf16.mxu0 %v409
    %489 = vmatpush1.bf16.msra.mxu0 %v408
    %490 = vmatprep.subr.bf16.mxu0 %v406
    %491 = vmatpush1.bf16.msra.mxu0 %v405
    %492 = vmatprep.subr.bf16.mxu0 %v403
    %493 = vmatpush1.bf16.msra.mxu0 %v402
    %494 = vmatprep.subr.bf16.mxu0 %v400
    %495 = vmatpush1.bf16.msra.mxu0 %v399
    %496 = vmatprep.subr.bf16.mxu0 %v397
    %497 = vmatpush1.bf16.msra.mxu0 %v396
    %498 = vmatprep.subr.bf16.mxu0 %v394
    %499 = vmatpush1.bf16.msra.mxu0 %v393
    %500 = vmatprep.subr.bf16.mxu0 %v391
    %501 = vmatpush1.bf16.msra.mxu0 %v390
    %502 = vmatprep.subr.bf16.mxu0 %v436
    %503 = vmatpush2.bf16.msra.mxu0 %v435
    %504 = vmatprep.subr.bf16.mxu0 %v433
    %505 = vmatpush2.bf16.msra.mxu0 %v432
    %506 = vmatprep.subr.bf16.mxu0 %v430
    %507 = vmatpush2.bf16.msra.mxu0 %v429
    %508 = vmatprep.subr.bf16.mxu0 %v427
    %509 = vmatpush2.bf16.msra.mxu0 %v426
    %510 = vmatprep.subr.bf16.mxu0 %v424
    %511 = vmatpush2.bf16.msra.mxu0 %v423
    %512 = vmatprep.subr.bf16.mxu0 %v421
    %513 = vmatpush2.bf16.msra.mxu0 %v420
    %514 = vmatprep.subr.bf16.mxu0 %v418
    %515 = vmatpush2.bf16.msra.mxu0 %v417
    %516 = vmatprep.subr.bf16.mxu0 %v415
    %517 = vmatpush2.bf16.msra.mxu0 %v414
    %518 = vmatprep.mubr.bf16.mxu0 %v199
    %519 = vmatmul.mubr.bf16.gmra.mxu0 %v198
    %v520 = vpop.f32.mrf.mxu0
    %v521 = vadd.f32 %v138, %v520
    %v522 = vpop.f32.mrf.mxu0
    %v523 = vadd.f32 %v142, %v522
    %v524 = vpop.f32.mrf.mxu0
    %v525 = vadd.f32 %v138, %v524
    %v526 = vpop.f32.mrf.mxu0
    %v527 = vadd.f32 %v142, %v526
    %528 = vmatprep.mubr.bf16.mxu0 %v201
    %529 = vmatmul.mubr.bf16.gmra.mxu0 %v200
    %v530 = vpop.f32.mrf.mxu0
    %v531 = vadd.f32 %v138, %v530
    %v532 = vpop.f32.mrf.mxu0
    %v533 = vadd.f32 %v142, %v532
    %v534 = vpop.f32.mrf.mxu0
    %v535 = vadd.f32 %v138, %v534
    %v536 = vpop.f32.mrf.mxu0
    %v537 = vadd.f32 %v142, %v536
    %538 = vmatprep.mubr.bf16.mxu0 %v203
    %539 = vmatmul.mubr.bf16.gmra.mxu0 %v202
    %v540 = vpop.f32.mrf.mxu0
    %v541 = vadd.f32 %v138, %v540
    %v542 = vpop.f32.mrf.mxu0
    %v543 = vadd.f32 %v142, %v542
    %v544 = vpop.f32.mrf.mxu0
    %v545 = vadd.f32 %v138, %v544
    %v546 = vpop.f32.mrf.mxu0
    %v547 = vadd.f32 %v142, %v546
    %548 = vmatprep.mubr.bf16.mxu0 %v205
    %549 = vmatmul.mubr.bf16.gmra.mxu0 %v204
    %v550 = vpop.f32.mrf.mxu0
    %v551 = vadd.f32 %v138, %v550
    %v552 = vpop.f32.mrf.mxu0
    %v553 = vadd.f32 %v142, %v552
    %v554 = vpop.f32.mrf.mxu0
    %v555 = vadd.f32 %v138, %v554
    %v556 = vpop.f32.mrf.mxu0
    %v557 = vadd.f32 %v142, %v556
    %558 = vmatprep.mubr.bf16.mxu0 %v207
    %559 = vmatmul.mubr.bf16.gmra.mxu0 %v206
    %v560 = vpop.f32.mrf.mxu0
    %v561 = vadd.f32 %v138, %v560
    %v562 = vpop.f32.mrf.mxu0
    %v563 = vadd.f32 %v142, %v562
    %v564 = vpop.f32.mrf.mxu0
    %v565 = vadd.f32 %v138, %v564
    %v566 = vpop.f32.mrf.mxu0
    %v567 = vadd.f32 %v142, %v566
    %568 = vmatprep.mubr.bf16.mxu0 %v209
    %569 = vmatmul.mubr.bf16.gmra.mxu0 %v208
    %v570 = vpop.f32.mrf.mxu0
    %v571 = vadd.f32 %v138, %v570
    %v572 = vpop.f32.mrf.mxu0
    %v573 = vadd.f32 %v142, %v572
    %v574 = vpop.f32.mrf.mxu0
    %v575 = vadd.f32 %v138, %v574
    %v576 = vpop.f32.mrf.mxu0
    %v577 = vadd.f32 %v142, %v576
    %578 = vmatprep.mubr.bf16.mxu0 %v211
    %579 = vmatmul.mubr.bf16.gmra.mxu0 %v210
    %v580 = vpop.f32.mrf.mxu0
    %v581 = vadd.f32 %v138, %v580
    %v582 = vpop.f32.mrf.mxu0
    %v583 = vadd.f32 %v142, %v582
    %v584 = vpop.f32.mrf.mxu0
    %v585 = vadd.f32 %v138, %v584
    %v586 = vpop.f32.mrf.mxu0
    %v587 = vadd.f32 %v142, %v586
    %588 = vmatprep.mubr.bf16.mxu0 %v213
    %589 = vmatmul.mubr.bf16.gmra.mxu0 %v212
    %v590 = vpop.f32.mrf.mxu0
    %v591 = vadd.f32 %v138, %v590
    %v592 = vpop.f32.mrf.mxu0
    %v593 = vadd.f32 %v142, %v592
    %v594 = vpop.f32.mrf.mxu0
    %v595 = vadd.f32 %v138, %v594
    %v596 = vpop.f32.mrf.mxu0
    %v597 = vadd.f32 %v142, %v596
    %598 = vdwg.mxu0
    %599 = vmatprep.subr.bf16.mxu0 0
    %600 = vmatpush1.bf16.msra.mxu0 %v413
    %601 = vmatprep.subr.bf16.mxu0 0
    %602 = vmatpush1.bf16.msra.mxu0 %v410
    %603 = vmatprep.subr.bf16.mxu0 0
    %604 = vmatpush1.bf16.msra.mxu0 %v407
    %605 = vmatprep.subr.bf16.mxu0 0
    %606 = vmatpush1.bf16.msra.mxu0 %v404
    %607 = vmatprep.subr.bf16.mxu0 0
    %608 = vmatpush1.bf16.msra.mxu0 %v401
    %609 = vmatprep.subr.bf16.mxu0 0
    %610 = vmatpush1.bf16.msra.mxu0 %v398
    %611 = vmatprep.subr.bf16.mxu0 0
    %612 = vmatpush1.bf16.msra.mxu0 %v395
    %613 = vmatprep.subr.bf16.mxu0 0
    %614 = vmatpush1.bf16.msra.mxu0 %v392
    %615 = vmatprep.subr.bf16.mxu0 0
    %616 = vmatpush2.bf16.msra.mxu0 %v437
    %617 = vmatprep.subr.bf16.mxu0 0
    %618 = vmatpush2.bf16.msra.mxu0 %v434
    %619 = vmatprep.subr.bf16.mxu0 0
    %620 = vmatpush2.bf16.msra.mxu0 %v431
    %621 = vmatprep.subr.bf16.mxu0 0
    %622 = vmatpush2.bf16.msra.mxu0 %v428
    %623 = vmatprep.subr.bf16.mxu0 0
    %624 = vmatpush2.bf16.msra.mxu0 %v425
    %625 = vmatprep.subr.bf16.mxu0 0
    %626 = vmatpush2.bf16.msra.mxu0 %v422
    %627 = vmatprep.subr.bf16.mxu0 0
    %628 = vmatpush2.bf16.msra.mxu0 %v419
    %629 = vmatprep.subr.bf16.mxu0 0
    %630 = vmatpush2.bf16.msra.mxu0 %v416
    %631 = vmatprep.mubr.bf16.mxu0 %v199
    %632 = vmatmul.mubr.bf16.gmra.mxu0 %v198
    %v633 = vpop.f32.mrf.mxu0
    %v634 = vadd.f32 %v146, %v633
    %v635 = vpop.f32.mrf.mxu0
    %v636 = vpop.f32.mrf.mxu0
    %v637 = vadd.f32 %v146, %v636
    %v638 = vpop.f32.mrf.mxu0
    %639 = vmatprep.mubr.bf16.mxu0 %v201
    %640 = vmatmul.mubr.bf16.gmra.mxu0 %v200
    %v641 = vpop.f32.mrf.mxu0
    %v642 = vadd.f32 %v146, %v641
    %v643 = vpop.f32.mrf.mxu0
    %v644 = vpop.f32.mrf.mxu0
    %v645 = vadd.f32 %v146, %v644
    %v646 = vpop.f32.mrf.mxu0
    %647 = vmatprep.mubr.bf16.mxu0 %v203
    %648 = vmatmul.mubr.bf16.gmra.mxu0 %v202
    %v649 = vpop.f32.mrf.mxu0
    %v650 = vadd.f32 %v146, %v649
    %v651 = vpop.f32.mrf.mxu0
    %v652 = vpop.f32.mrf.mxu0
    %v653 = vadd.f32 %v146, %v652
    %v654 = vpop.f32.mrf.mxu0
    %655 = vmatprep.mubr.bf16.mxu0 %v205
    %656 = vmatmul.mubr.bf16.gmra.mxu0 %v204
    %v657 = vpop.f32.mrf.mxu0
    %v658 = vadd.f32 %v146, %v657
    %v659 = vpop.f32.mrf.mxu0
    %v660 = vpop.f32.mrf.mxu0
    %v661 = vadd.f32 %v146, %v660
    %v662 = vpop.f32.mrf.mxu0
    %663 = vmatprep.mubr.bf16.mxu0 %v207
    %664 = vmatmul.mubr.bf16.gmra.mxu0 %v206
    %v665 = vpop.f32.mrf.mxu0
    %v666 = vadd.f32 %v146, %v665
    %v667 = vpop.f32.mrf.mxu0
    %v668 = vpop.f32.mrf.mxu0
    %v669 = vadd.f32 %v146, %v668
    %v670 = vpop.f32.mrf.mxu0
    %671 = vmatprep.mubr.bf16.mxu0 %v209
    %672 = vmatmul.mubr.bf16.gmra.mxu0 %v208
    %v673 = vpop.f32.mrf.mxu0
    %v674 = vadd.f32 %v146, %v673
    %v675 = vpop.f32.mrf.mxu0
    %v676 = vpop.f32.mrf.mxu0
    %v677 = vadd.f32 %v146, %v676
    %v678 = vpop.f32.mrf.mxu0
    %679 = vmatprep.mubr.bf16.mxu0 %v211
    %680 = vmatmul.mubr.bf16.gmra.mxu0 %v210
    %v681 = vpop.f32.mrf.mxu0
    %v682 = vadd.f32 %v146, %v681
    %v683 = vpop.f32.mrf.mxu0
    %v684 = vpop.f32.mrf.mxu0
    %v685 = vadd.f32 %v146, %v684
    %v686 = vpop.f32.mrf.mxu0
    %687 = vmatprep.mubr.bf16.mxu0 %v213
    %688 = vmatmul.mubr.bf16.gmra.mxu0 %v212
    %v689 = vpop.f32.mrf.mxu0
    %v690 = vadd.f32 %v146, %v689
    %v691 = vpop.f32.mrf.mxu0
    %v692 = vpop.f32.mrf.mxu0
    %v693 = vadd.f32 %v146, %v692
    %v694 = vpop.f32.mrf.mxu0
    %695 = vdwg.mxu0
    %v696 = vpack.c.bf16 %v525, %v521
    %v697 = vpack.c.bf16 %v527, %v523
    %v698 = vpack.c.bf16 %v637, %v634
    %v699 = vpack.c.bf16 %v535, %v531
    %v700 = vpack.c.bf16 %v537, %v533
    %v701 = vpack.c.bf16 %v645, %v642
    %v702 = vpack.c.bf16 %v545, %v541
    %v703 = vpack.c.bf16 %v547, %v543
    %v704 = vpack.c.bf16 %v653, %v650
    %v705 = vpack.c.bf16 %v555, %v551
    %v706 = vpack.c.bf16 %v557, %v553
    %v707 = vpack.c.bf16 %v661, %v658
    %v708 = vpack.c.bf16 %v565, %v561
    %v709 = vpack.c.bf16 %v567, %v563
    %v710 = vpack.c.bf16 %v669, %v666
    %v711 = vpack.c.bf16 %v575, %v571
    %v712 = vpack.c.bf16 %v577, %v573
    %v713 = vpack.c.bf16 %v677, %v674
    %v714 = vpack.c.bf16 %v585, %v581
    %v715 = vpack.c.bf16 %v587, %v583
    %v716 = vpack.c.bf16 %v685, %v682
    %v717 = vpack.c.bf16 %v595, %v591
    %v718 = vpack.c.bf16 %v597, %v593
    %v719 = vpack.c.bf16 %v693, %v690
    %v744 = vunpack.c.l.b16 %v696
    %v745 = vunpack.c.l.b16 %v697
    %v746 = vunpack.c.l.b16 %v698
    %v747 = vunpack.c.h.b16 %v696
    %v748 = vunpack.c.h.b16 %v697
    %v749 = vunpack.c.h.b16 %v698
    %v750 = vunpack.c.l.b16 %v699
    %v751 = vunpack.c.l.b16 %v700
    %v752 = vunpack.c.l.b16 %v701
    %v753 = vunpack.c.h.b16 %v699
    %v754 = vunpack.c.h.b16 %v700
    %v755 = vunpack.c.h.b16 %v701
    %v756 = vunpack.c.l.b16 %v702
    %v757 = vunpack.c.l.b16 %v703
    %v758 = vunpack.c.l.b16 %v704
    %v759 = vunpack.c.h.b16 %v702
    %v760 = vunpack.c.h.b16 %v703
    %v761 = vunpack.c.h.b16 %v704
    %v762 = vunpack.c.l.b16 %v705
    %v763 = vunpack.c.l.b16 %v706
    %v764 = vunpack.c.l.b16 %v707
    %v765 = vunpack.c.h.b16 %v705
    %v766 = vunpack.c.h.b16 %v706
    %v767 = vunpack.c.h.b16 %v707
    %v768 = vunpack.c.l.b16 %v708
    %v769 = vunpack.c.l.b16 %v709
    %v770 = vunpack.c.l.b16 %v710
    %v771 = vunpack.c.h.b16 %v708
    %v772 = vunpack.c.h.b16 %v709
    %v773 = vunpack.c.h.b16 %v710
    %v774 = vunpack.c.l.b16 %v711
    %v775 = vunpack.c.l.b16 %v712
    %v776 = vunpack.c.l.b16 %v713
    %v777 = vunpack.c.h.b16 %v711
    %v778 = vunpack.c.h.b16 %v712
    %v779 = vunpack.c.h.b16 %v713
    %v780 = vunpack.c.l.b16 %v714
    %v781 = vunpack.c.l.b16 %v715
    %v782 = vunpack.c.l.b16 %v716
    %v783 = vunpack.c.h.b16 %v714
    %v784 = vunpack.c.h.b16 %v715
    %v785 = vunpack.c.h.b16 %v716
    %v786 = vunpack.c.l.b16 %v717
    %v787 = vunpack.c.l.b16 %v718
    %v788 = vunpack.c.l.b16 %v719
    %v789 = vunpack.c.h.b16 %v717
    %v790 = vunpack.c.h.b16 %v718
    %v791 = vunpack.c.h.b16 %v719
    %v792 = vpack.c.b16 %v745, %v744
    %v793 = vpack.c.b16 %v746, %v746
    %v794 = vpack.c.b16 %v748, %v747
    %v795 = vpack.c.b16 %v749, %v749
    %v796 = vpack.c.b16 %v751, %v750
    %v797 = vpack.c.b16 %v752, %v752
    %v798 = vpack.c.b16 %v754, %v753
    %v799 = vpack.c.b16 %v755, %v755
    %v800 = vpack.c.b16 %v757, %v756
    %v801 = vpack.c.b16 %v758, %v758
    %v802 = vpack.c.b16 %v760, %v759
    %v803 = vpack.c.b16 %v761, %v761
    %v804 = vpack.c.b16 %v763, %v762
    %v805 = vpack.c.b16 %v764, %v764
    %v806 = vpack.c.b16 %v766, %v765
    %v807 = vpack.c.b16 %v767, %v767
    %v808 = vpack.c.b16 %v769, %v768
    %v809 = vpack.c.b16 %v770, %v770
    %v810 = vpack.c.b16 %v772, %v771
    %v811 = vpack.c.b16 %v773, %v773
    %v812 = vpack.c.b16 %v775, %v774
    %v813 = vpack.c.b16 %v776, %v776
    %v814 = vpack.c.b16 %v778, %v777
    %v815 = vpack.c.b16 %v779, %v779
    %v816 = vpack.c.b16 %v781, %v780
    %v817 = vpack.c.b16 %v782, %v782
    %v818 = vpack.c.b16 %v784, %v783
    %v819 = vpack.c.b16 %v785, %v785
    %v820 = vpack.c.b16 %v787, %v786
    %v821 = vpack.c.b16 %v788, %v788
    %v822 = vpack.c.b16 %v790, %v789
    %v823 = vpack.c.b16 %v791, %v791
    %856 = vst [vmem:[#allocation2] sm:$0xff] %v792
    %857 = vst [vmem:[#allocation2 + $0x8] sm:$0xf] %v793
    %858 = vst [vmem:[#allocation2 + $0xc] sm:$0xff] %v794
    %859 = vst [vmem:[#allocation2 + $0x14] sm:$0xf] %v795
    %860 = vst [vmem:[#allocation2 + $0x18] sm:$0xff] %v796
    %861 = vst [vmem:[#allocation2 + $0x20] sm:$0xf] %v797
    %862 = vst [vmem:[#allocation2 + $0x24] sm:$0xff] %v798
    %863 = vst [vmem:[#allocation2 + $0x2c] sm:$0xf] %v799
    %864 = vst [vmem:[#allocation2 + $0x30] sm:$0xff] %v800
    %865 = vst [vmem:[#allocation2 + $0x38] sm:$0xf] %v801
    %866 = vst [vmem:[#allocation2 + $0x3c] sm:$0xff] %v802
    %867 = vst [vmem:[#allocation2 + $0x44] sm:$0xf] %v803
    %868 = vst [vmem:[#allocation2 + $0x48] sm:$0xff] %v804
    %869 = vst [vmem:[#allocation2 + $0x50] sm:$0xf] %v805
    %870 = vst [vmem:[#allocation2 + $0x54] sm:$0xff] %v806
    %871 = vst [vmem:[#allocation2 + $0x5c] sm:$0xf] %v807
    %872 = vst [vmem:[#allocation2 + $0x60] sm:$0xff] %v808
    %873 = vst [vmem:[#allocation2 + $0x68] sm:$0xf] %v809
    %874 = vst [vmem:[#allocation2 + $0x6c] sm:$0xff] %v810
    %875 = vst [vmem:[#allocation2 + $0x74] sm:$0xf] %v811
    %876 = vst [vmem:[#allocation2 + $0x78] sm:$0xff] %v812
    %877 = vst [vmem:[#allocation2 + $0x80] sm:$0xf] %v813
    %878 = vst [vmem:[#allocation2 + $0x84] sm:$0xff] %v814
    %879 = vst [vmem:[#allocation2 + $0x8c] sm:$0xf] %v815
    %880 = vst [vmem:[#allocation2 + $0x90] sm:$0xff] %v816
    %881 = vst [vmem:[#allocation2 + $0x98] sm:$0xf] %v817
    %882 = vst [vmem:[#allocation2 + $0x9c] sm:$0xff] %v818
    %883 = vst [vmem:[#allocation2 + $0xa4] sm:$0xf] %v819
    %884 = vst [vmem:[#allocation2 + $0xa8] sm:$0xff] %v820
    %885 = vst [vmem:[#allocation2 + $0xb0] sm:$0xf] %v821
    %886 = vst [vmem:[#allocation2 + $0xb4] sm:$0xff] %v822
    %887 = vst [vmem:[#allocation2 + $0xbc] sm:$0xf] %v823
    %v888 = vld [vmem:[%s6] sm:$0x1]
    %v890 = vlaneseq
    %v891 = vshrl.u32 %v890, 7
    %v892 = vsub.s32 0, %v891
    %v893 = vrot.slane %v888, %v892
    %v895 = vld [vmem:[%s7] sm:$0x1]
    %v897 = vlaneseq
    %v898 = vshrl.u32 %v897, 7
    %v899 = vsub.s32 0, %v898
    %v900 = vrot.slane %v895, %v899
    %v902 = vld [vmem:[#allocation3] sm:$0xff]
    %v903 = vld [vmem:[#allocation3 + $0x8] sm:$0xf]
    %v904 = vld [vmem:[#allocation3 + $0xc] sm:$0xff]
    %v905 = vld [vmem:[#allocation3 + $0x14] sm:$0xf]
    %v906 = vld [vmem:[#allocation3 + $0x18] sm:$0xff]
    %v907 = vld [vmem:[#allocation3 + $0x20] sm:$0xf]
    %v908 = vld [vmem:[#allocation3 + $0x24] sm:$0xff]
    %v909 = vld [vmem:[#allocation3 + $0x2c] sm:$0xf]
    %v910 = vld [vmem:[#allocation3 + $0x30] sm:$0xff]
    %v911 = vld [vmem:[#allocation3 + $0x38] sm:$0xf]
    %v912 = vld [vmem:[#allocation3 + $0x3c] sm:$0xff]
    %v913 = vld [vmem:[#allocation3 + $0x44] sm:$0xf]
    %v914 = vld [vmem:[#allocation3 + $0x48] sm:$0xff]
    %v915 = vld [vmem:[#allocation3 + $0x50] sm:$0xf]
    %v916 = vld [vmem:[#allocation3 + $0x54] sm:$0xff]
    %v917 = vld [vmem:[#allocation3 + $0x5c] sm:$0xf]
    %v918 = vld [vmem:[#allocation3 + $0x60] sm:$0xff]
    %v919 = vld [vmem:[#allocation3 + $0x68] sm:$0xf]
    %v920 = vld [vmem:[#allocation3 + $0x6c] sm:$0xff]
    %v921 = vld [vmem:[#allocation3 + $0x74] sm:$0xf]
    %v922 = vld [vmem:[#allocation3 + $0x78] sm:$0xff]
    %v923 = vld [vmem:[#allocation3 + $0x80] sm:$0xf]
    %v924 = vld [vmem:[#allocation3 + $0x84] sm:$0xff]
    %v925 = vld [vmem:[#allocation3 + $0x8c] sm:$0xf]
    %v926 = vld [vmem:[#allocation3 + $0x90] sm:$0xff]
    %v927 = vld [vmem:[#allocation3 + $0x98] sm:$0xf]
    %v928 = vld [vmem:[#allocation3 + $0x9c] sm:$0xff]
    %v929 = vld [vmem:[#allocation3 + $0xa4] sm:$0xf]
    %v930 = vld [vmem:[#allocation3 + $0xa8] sm:$0xff]
    %v931 = vld [vmem:[#allocation3 + $0xb0] sm:$0xf]
    %v932 = vld [vmem:[#allocation3 + $0xb4] sm:$0xff]
    %v933 = vld [vmem:[#allocation3 + $0xbc] sm:$0xf]
    %v966 = vunpack.c.l.b16 %v902
    %v967 = vunpack.c.h.b16 %v902
    %v968 = vunpack.c.l.b16 %v903
    %v969 = vunpack.c.l.b16 %v904
    %v970 = vunpack.c.h.b16 %v904
    %v971 = vunpack.c.l.b16 %v905
    %v972 = vunpack.c.l.b16 %v906
    %v973 = vunpack.c.h.b16 %v906
    %v974 = vunpack.c.l.b16 %v907
    %v975 = vunpack.c.l.b16 %v908
    %v976 = vunpack.c.h.b16 %v908
    %v977 = vunpack.c.l.b16 %v909
    %v978 = vunpack.c.l.b16 %v910
    %v979 = vunpack.c.h.b16 %v910
    %v980 = vunpack.c.l.b16 %v911
    %v981 = vunpack.c.l.b16 %v912
    %v982 = vunpack.c.h.b16 %v912
    %v983 = vunpack.c.l.b16 %v913
    %v984 = vunpack.c.l.b16 %v914
    %v985 = vunpack.c.h.b16 %v914
    %v986 = vunpack.c.l.b16 %v915
    %v987 = vunpack.c.l.b16 %v916
    %v988 = vunpack.c.h.b16 %v916
    %v989 = vunpack.c.l.b16 %v917
    %v990 = vunpack.c.l.b16 %v918
    %v991 = vunpack.c.h.b16 %v918
    %v992 = vunpack.c.l.b16 %v919
    %v993 = vunpack.c.l.b16 %v920
    %v994 = vunpack.c.h.b16 %v920
    %v995 = vunpack.c.l.b16 %v921
    %v996 = vunpack.c.l.b16 %v922
    %v997 = vunpack.c.h.b16 %v922
    %v998 = vunpack.c.l.b16 %v923
    %v999 = vunpack.c.l.b16 %v924
    %v1000 = vunpack.c.h.b16 %v924
    %v1001 = vunpack.c.l.b16 %v925
    %v1002 = vunpack.c.l.b16 %v926
    %v1003 = vunpack.c.h.b16 %v926
    %v1004 = vunpack.c.l.b16 %v927
    %v1005 = vunpack.c.l.b16 %v928
    %v1006 = vunpack.c.h.b16 %v928
    %v1007 = vunpack.c.l.b16 %v929
    %v1008 = vunpack.c.l.b16 %v930
    %v1009 = vunpack.c.h.b16 %v930
    %v1010 = vunpack.c.l.b16 %v931
    %v1011 = vunpack.c.l.b16 %v932
    %v1012 = vunpack.c.h.b16 %v932
    %v1013 = vunpack.c.l.b16 %v933
    %v1014 = vpack.c.b16 %v969, %v966
    %v1015 = vpack.c.b16 %v970, %v967
    %v1016 = vpack.c.b16 %v971, %v968
    %v1017 = vpack.c.b16 %v975, %v972
    %v1018 = vpack.c.b16 %v976, %v973
    %v1019 = vpack.c.b16 %v977, %v974
    %v1020 = vpack.c.b16 %v981, %v978
    %v1021 = vpack.c.b16 %v982, %v979
    %v1022 = vpack.c.b16 %v983, %v980
    %v1023 = vpack.c.b16 %v987, %v984
    %v1024 = vpack.c.b16 %v988, %v985
    %v1025 = vpack.c.b16 %v989, %v986
    %v1026 = vpack.c.b16 %v993, %v990
    %v1027 = vpack.c.b16 %v994, %v991
    %v1028 = vpack.c.b16 %v995, %v992
    %v1029 = vpack.c.b16 %v999, %v996
    %v1030 = vpack.c.b16 %v1000, %v997
    %v1031 = vpack.c.b16 %v1001, %v998
    %v1032 = vpack.c.b16 %v1005, %v1002
    %v1033 = vpack.c.b16 %v1006, %v1003
    %v1034 = vpack.c.b16 %v1007, %v1004
    %v1035 = vpack.c.b16 %v1011, %v1008
    %v1036 = vpack.c.b16 %v1012, %v1009
    %v1037 = vpack.c.b16 %v1013, %v1010
    %1062 = vmatprep.subr.bf16.mxu0 %v1036
    %1063 = vmatpush1.bf16.msra.mxu0 %v1035
    %1064 = vmatprep.subr.bf16.mxu0 %v1033
    %1065 = vmatpush1.bf16.msra.mxu0 %v1032
    %1066 = vmatprep.subr.bf16.mxu0 %v1030
    %1067 = vmatpush1.bf16.msra.mxu0 %v1029
    %1068 = vmatprep.subr.bf16.mxu0 %v1027
    %1069 = vmatpush1.bf16.msra.mxu0 %v1026
    %1070 = vmatprep.subr.bf16.mxu0 %v1024
    %1071 = vmatpush1.bf16.msra.mxu0 %v1023
    %1072 = vmatprep.subr.bf16.mxu0 %v1021
    %1073 = vmatpush1.bf16.msra.mxu0 %v1020
    %1074 = vmatprep.subr.bf16.mxu0 %v1018
    %1075 = vmatpush1.bf16.msra.mxu0 %v1017
    %1076 = vmatprep.subr.bf16.mxu0 %v1015
    %1077 = vmatpush1.bf16.msra.mxu0 %v1014
    %1078 = vmatprep.subr.bf16.mxu0 0
    %1079 = vmatpush2.bf16.msra.mxu0 0
    %1080 = vmatprep.subr.bf16.mxu0 0
    %1081 = vmatpush2.bf16.msra.mxu0 0
    %1082 = vmatprep.subr.bf16.mxu0 0
    %1083 = vmatpush2.bf16.msra.mxu0 0
    %1084 = vmatprep.subr.bf16.mxu0 0
    %1085 = vmatpush2.bf16.msra.mxu0 0
    %1086 = vmatprep.subr.bf16.mxu0 0
    %1087 = vmatpush2.bf16.msra.mxu0 0
    %1088 = vmatprep.subr.bf16.mxu0 0
    %1089 = vmatpush2.bf16.msra.mxu0 0
    %1090 = vmatprep.subr.bf16.mxu0 0
    %1091 = vmatpush2.bf16.msra.mxu0 0
    %1092 = vmatprep.subr.bf16.mxu0 0
    %1093 = vmatpush2.bf16.msra.mxu0 0
    %1094 = vmatprep.mubr.bf16.mxu0 0
    %1095 = vmatmul.mubr.bf16.gmra.mxu0 0
    %v1096 = vpop.f32.mrf.mxu0
    %v1097 = vadd.f32 0.0, %v1096
    %v1098 = vpop.f32.mrf.mxu0
    %v1099 = vadd.f32 0.0, %v1098
    %v1100 = vpop.f32.mrf.mxu0
    %v1101 = vadd.f32 0.0, %v1100
    %v1102 = vpop.f32.mrf.mxu0
    %v1103 = vadd.f32 0.0, %v1102
    %1104 = vdwg.mxu0
    %1105 = vmatprep.subr.bf16.mxu0 0
    %1106 = vmatpush1.bf16.msra.mxu0 %v1037
    %1107 = vmatprep.subr.bf16.mxu0 0
    %1108 = vmatpush1.bf16.msra.mxu0 %v1034
    %1109 = vmatprep.subr.bf16.mxu0 0
    %1110 = vmatpush1.bf16.msra.mxu0 %v1031
    %1111 = vmatprep.subr.bf16.mxu0 0
    %1112 = vmatpush1.bf16.msra.mxu0 %v1028
    %1113 = vmatprep.subr.bf16.mxu0 0
    %1114 = vmatpush1.bf16.msra.mxu0 %v1025
    %1115 = vmatprep.subr.bf16.mxu0 0
    %1116 = vmatpush1.bf16.msra.mxu0 %v1022
    %1117 = vmatprep.subr.bf16.mxu0 0
    %1118 = vmatpush1.bf16.msra.mxu0 %v1019
    %1119 = vmatprep.subr.bf16.mxu0 0
    %1120 = vmatpush1.bf16.msra.mxu0 %v1016
    %1121 = vmatprep.subr.bf16.mxu0 0
    %1122 = vmatpush2.bf16.msra.mxu0 0
    %1123 = vmatprep.subr.bf16.mxu0 0
    %1124 = vmatpush2.bf16.msra.mxu0 0
    %1125 = vmatprep.subr.bf16.mxu0 0
    %1126 = vmatpush2.bf16.msra.mxu0 0
    %1127 = vmatprep.subr.bf16.mxu0 0
    %1128 = vmatpush2.bf16.msra.mxu0 0
    %1129 = vmatprep.subr.bf16.mxu0 0
    %1130 = vmatpush2.bf16.msra.mxu0 0
    %1131 = vmatprep.subr.bf16.mxu0 0
    %1132 = vmatpush2.bf16.msra.mxu0 0
    %1133 = vmatprep.subr.bf16.mxu0 0
    %1134 = vmatpush2.bf16.msra.mxu0 0
    %1135 = vmatprep.subr.bf16.mxu0 0
    %1136 = vmatpush2.bf16.msra.mxu0 0
    %1137 = vmatprep.mubr.bf16.mxu0 0
    %1138 = vmatmul.mubr.bf16.gmra.mxu0 0
    %v1139 = vpop.f32.mrf.mxu0
    %v1140 = vadd.f32 0.0, %v1139
    %v1141 = vpop.f32.mrf.mxu0
    %v1142 = vpop.f32.mrf.mxu0
    %v1143 = vadd.f32 0.0, %v1142
    %v1144 = vpop.f32.mrf.mxu0
    %1145 = vdwg.mxu0
    %v1146 = vld [vmem:[#allocation2] sm:$0xff]
    %v1147 = vld [vmem:[#allocation2 + $0x8] sm:$0xf]
    %v1148 = vld [vmem:[#allocation2 + $0xc] sm:$0xff]
    %v1149 = vld [vmem:[#allocation2 + $0x14] sm:$0xf]
    %v1150 = vunpack.c.l.bf16 %v1146
    %v1151 = vunpack.c.h.bf16 %v1146
    %v1152 = vunpack.c.l.bf16 %v1147
    %v1153 = vunpack.c.l.bf16 %v1148
    %v1154 = vunpack.c.h.bf16 %v1148
    %v1155 = vunpack.c.l.bf16 %v1149
    %v1156 = vadd.f32 %v1150, %v1097
    %v1157 = vadd.f32 %v1153, %v1101
    %v1158 = vxor.u32 %v1156, 2147483648
    %v1159 = vxor.u32 %v1157, 2147483648
    %v1160 = vmul.f32 %v1158, 1.442695
    %v1161 = vpow.pop %v1160
    %v1162 = vmul.f32 %v1159, 1.442695
    %v1163 = vpow.pop %v1162
    %v1164 = vadd.f32 %v1161, 1.0
    %v1165 = vadd.f32 %v1163, 1.0
    %v1166 = vrcp.pop %v1164
    %v1167 = vmul.f32 1.0, %v1166
    %v1168 = vrcp.pop %v1165
    %v1169 = vmul.f32 1.0, %v1168
    %v1170 = vadd.f32 %v1151, %v1099
    %v1171 = vadd.f32 %v1154, %v1103
    %v1172 = vxor.u32 %v1170, 2147483648
    %v1173 = vxor.u32 %v1171, 2147483648
    %v1174 = vmul.f32 %v1172, 1.442695
    %v1175 = vpow.pop %v1174
    %v1176 = vmul.f32 %v1173, 1.442695
    %v1177 = vpow.pop %v1176
    %v1178 = vadd.f32 %v1175, 1.0
    %v1179 = vadd.f32 %v1177, 1.0
    %v1180 = vrcp.pop %v1178
    %v1181 = vmul.f32 1.0, %v1180
    %v1182 = vrcp.pop %v1179
    %v1183 = vmul.f32 1.0, %v1182
    %v1184 = vadd.f32 %v1140, %v893
    %v1185 = vadd.f32 %v1143, %v893
    %v1186 = vmul.f32 %v1167, %v1184
    %v1187 = vmul.f32 %v1169, %v1185
    %v1188 = vadd.f32 %v1152, %v1186
    %v1189 = vadd.f32 %v1155, %v1187
    %v1190 = vtanh.pop %v1188
    %v1191 = vtanh.pop %v1189
    %v1192 = vsub.f32 1.0, %v1181
    %v1193 = vsub.f32 1.0, %v1183
    %v1194 = vmul.f32 %v1192, %v1190
    %v1195 = vmul.f32 %v1193, %v1191
    %v1196 = vmul.f32 %v1181, 0.0
    %v1197 = vmul.f32 %v1183, 0.0
    %v1198 = vadd.f32 %v1194, %v1196
    %v1199 = vadd.f32 %v1195, %v1197
    %v1200 = vpack.c.bf16 %v1199, %v1198
    %1201 = vmatprep.subr.bf16.mxu0 %v1036
    %1202 = vmatpush1.bf16.msra.mxu0 %v1035
    %1203 = vmatprep.subr.bf16.mxu0 %v1033
    %1204 = vmatpush1.bf16.msra.mxu0 %v1032
    %1205 = vmatprep.subr.bf16.mxu0 %v1030
    %1206 = vmatpush1.bf16.msra.mxu0 %v1029
    %1207 = vmatprep.subr.bf16.mxu0 %v1027
    %1208 = vmatpush1.bf16.msra.mxu0 %v1026
    %1209 = vmatprep.subr.bf16.mxu0 %v1024
    %1210 = vmatpush1.bf16.msra.mxu0 %v1023
    %1211 = vmatprep.subr.bf16.mxu0 %v1021
    %1212 = vmatpush1.bf16.msra.mxu0 %v1020
    %1213 = vmatprep.subr.bf16.mxu0 %v1018
    %1214 = vmatpush1.bf16.msra.mxu0 %v1017
    %1215 = vmatprep.subr.bf16.mxu0 %v1015
    %1216 = vmatpush1.bf16.msra.mxu0 %v1014
    %1217 = vmatprep.subr.bf16.mxu0 0
    %1218 = vmatpush2.bf16.msra.mxu0 0
    %1219 = vmatprep.subr.bf16.mxu0 0
    %1220 = vmatpush2.bf16.msra.mxu0 0
    %1221 = vmatprep.subr.bf16.mxu0 0
    %1222 = vmatpush2.bf16.msra.mxu0 0
    %1223 = vmatprep.subr.bf16.mxu0 0
    %1224 = vmatpush2.bf16.msra.mxu0 0
    %1225 = vmatprep.subr.bf16.mxu0 0
    %1226 = vmatpush2.bf16.msra.mxu0 0
    %1227 = vmatprep.subr.bf16.mxu0 0
    %1228 = vmatpush2.bf16.msra.mxu0 0
    %1229 = vmatprep.subr.bf16.mxu0 0
    %1230 = vmatpush2.bf16.msra.mxu0 0
    %1231 = vmatprep.subr.bf16.mxu0 0
    %1232 = vmatpush2.bf16.msra.mxu0 0
    %1233 = vmatprep.mubr.bf16.mxu0 0
    %1234 = vmatmul.mubr.bf16.gmra.mxu0 %v1200
    %v1235 = vpop.f32.mrf.mxu0
    %v1236 = vadd.f32 0.0, %v1235
    %v1237 = vpop.f32.mrf.mxu0
    %v1238 = vadd.f32 0.0, %v1237
    %v1239 = vpop.f32.mrf.mxu0
    %v1240 = vadd.f32 0.0, %v1239
    %v1241 = vpop.f32.mrf.mxu0
    %v1242 = vadd.f32 0.0, %v1241
    %1243 = vdwg.mxu0
    %1244 = vmatprep.subr.bf16.mxu0 0
    %1245 = vmatpush1.bf16.msra.mxu0 %v1037
    %1246 = vmatprep.subr.bf16.mxu0 0
    %1247 = vmatpush1.bf16.msra.mxu0 %v1034
    %1248 = vmatprep.subr.bf16.mxu0 0
    %1249 = vmatpush1.bf16.msra.mxu0 %v1031
    %1250 = vmatprep.subr.bf16.mxu0 0
    %1251 = vmatpush1.bf16.msra.mxu0 %v1028
    %1252 = vmatprep.subr.bf16.mxu0 0
    %1253 = vmatpush1.bf16.msra.mxu0 %v1025
    %1254 = vmatprep.subr.bf16.mxu0 0
    %1255 = vmatpush1.bf16.msra.mxu0 %v1022
    %1256 = vmatprep.subr.bf16.mxu0 0
    %1257 = vmatpush1.bf16.msra.mxu0 %v1019
    %1258 = vmatprep.subr.bf16.mxu0 0
    %1259 = vmatpush1.bf16.msra.mxu0 %v1016
    %1260 = vmatprep.subr.bf16.mxu0 0
    %1261 = vmatpush2.bf16.msra.mxu0 0
    %1262 = vmatprep.subr.bf16.mxu0 0
    %1263 = vmatpush2.bf16.msra.mxu0 0
    %1264 = vmatprep.subr.bf16.mxu0 0
    %1265 = vmatpush2.bf16.msra.mxu0 0
    %1266 = vmatprep.subr.bf16.mxu0 0
    %1267 = vmatpush2.bf16.msra.mxu0 0
    %1268 = vmatprep.subr.bf16.mxu0 0
    %1269 = vmatpush2.bf16.msra.mxu0 0
    %1270 = vmatprep.subr.bf16.mxu0 0
    %1271 = vmatpush2.bf16.msra.mxu0 0
    %1272 = vmatprep.subr.bf16.mxu0 0
    %1273 = vmatpush2.bf16.msra.mxu0 0
    %1274 = vmatprep.subr.bf16.mxu0 0
    %1275 = vmatpush2.bf16.msra.mxu0 0
    %1276 = vmatprep.mubr.bf16.mxu0 0
    %1277 = vmatmul.mubr.bf16.gmra.mxu0 %v1200
    %v1278 = vpop.f32.mrf.mxu0
    %v1279 = vadd.f32 0.0, %v1278
    %v1280 = vpop.f32.mrf.mxu0
    %v1281 = vpop.f32.mrf.mxu0
    %v1282 = vadd.f32 0.0, %v1281
    %v1283 = vpop.f32.mrf.mxu0
    %1284 = vdwg.mxu0
    %s1285 = scalar_lea.vmem [#allocation2], 24
    %v1286 = vld [vmem:[%s1285] sm:$0xff]
    %v1287 = vld [vmem:[%s1285 + $0x8] sm:$0xf]
    %v1288 = vld [vmem:[%s1285 + $0xc] sm:$0xff]
    %v1289 = vld [vmem:[%s1285 + $0x14] sm:$0xf]
    %v1290 = vunpack.c.l.bf16 %v1286
    %v1291 = vunpack.c.h.bf16 %v1286
    %v1292 = vunpack.c.l.bf16 %v1287
    %v1293 = vunpack.c.l.bf16 %v1288
    %v1294 = vunpack.c.h.bf16 %v1288
    %v1295 = vunpack.c.l.bf16 %v1289
    %v1296 = vadd.f32 %v1290, %v1236
    %v1297 = vadd.f32 %v1293, %v1240
    %v1298 = vxor.u32 %v1296, 2147483648
    %v1299 = vxor.u32 %v1297, 2147483648
    %v1300 = vmul.f32 %v1298, 1.442695
    %v1301 = vpow.pop %v1300
    %v1302 = vmul.f32 %v1299, 1.442695
    %v1303 = vpow.pop %v1302
    %v1304 = vadd.f32 %v1301, 1.0
    %v1305 = vadd.f32 %v1303, 1.0
    %v1306 = vrcp.pop %v1304
    %v1307 = vmul.f32 1.0, %v1306
    %v1308 = vrcp.pop %v1305
    %v1309 = vmul.f32 1.0, %v1308
    %v1310 = vadd.f32 %v1291, %v1238
    %v1311 = vadd.f32 %v1294, %v1242
    %v1312 = vxor.u32 %v1310, 2147483648
    %v1313 = vxor.u32 %v1311, 2147483648
    %v1314 = vmul.f32 %v1312, 1.442695
    %v1315 = vpow.pop %v1314
    %v1316 = vmul.f32 %v1313, 1.442695
    %v1317 = vpow.pop %v1316
    %v1318 = vadd.f32 %v1315, 1.0
    %v1319 = vadd.f32 %v1317, 1.0
    %v1320 = vrcp.pop %v1318
    %v1321 = vmul.f32 1.0, %v1320
    %v1322 = vrcp.pop %v1319
    %v1323 = vmul.f32 1.0, %v1322
    %v1324 = vadd.f32 %v1279, %v893
    %v1325 = vadd.f32 %v1282, %v893
    %v1326 = vmul.f32 %v1307, %v1324
    %v1327 = vmul.f32 %v1309, %v1325
    %v1328 = vadd.f32 %v1292, %v1326
    %v1329 = vadd.f32 %v1295, %v1327
    %v1330 = vtanh.pop %v1328
    %v1331 = vtanh.pop %v1329
    %v1332 = vsub.f32 1.0, %v1321
    %v1333 = vsub.f32 1.0, %v1323
    %v1334 = vmul.f32 %v1332, %v1330
    %v1335 = vmul.f32 %v1333, %v1331
    %v1336 = vmul.f32 %v1321, %v1198
    %v1337 = vmul.f32 %v1323, %v1199
    %v1338 = vadd.f32 %v1334, %v1336
    %v1339 = vadd.f32 %v1335, %v1337
    %v1340 = vpack.c.bf16 %v1339, %v1338
    %1341 = vmatprep.subr.bf16.mxu0 %v1036
    %1342 = vmatpush1.bf16.msra.mxu0 %v1035
    %1343 = vmatprep.subr.bf16.mxu0 %v1033
    %1344 = vmatpush1.bf16.msra.mxu0 %v1032
    %1345 = vmatprep.subr.bf16.mxu0 %v1030
    %1346 = vmatpush1.bf16.msra.mxu0 %v1029
    %1347 = vmatprep.subr.bf16.mxu0 %v1027
    %1348 = vmatpush1.bf16.msra.mxu0 %v1026
    %1349 = vmatprep.subr.bf16.mxu0 %v1024
    %1350 = vmatpush1.bf16.msra.mxu0 %v1023
    %1351 = vmatprep.subr.bf16.mxu0 %v1021
    %1352 = vmatpush1.bf16.msra.mxu0 %v1020
    %1353 = vmatprep.subr.bf16.mxu0 %v1018
    %1354 = vmatpush1.bf16.msra.mxu0 %v1017
    %1355 = vmatprep.subr.bf16.mxu0 %v1015
    %1356 = vmatpush1.bf16.msra.mxu0 %v1014
    %1357 = vmatprep.subr.bf16.mxu0 0
    %1358 = vmatpush2.bf16.msra.mxu0 0
    %1359 = vmatprep.subr.bf16.mxu0 0
    %1360 = vmatpush2.bf16.msra.mxu0 0
    %1361 = vmatprep.subr.bf16.mxu0 0
    %1362 = vmatpush2.bf16.msra.mxu0 0
    %1363 = vmatprep.subr.bf16.mxu0 0
    %1364 = vmatpush2.bf16.msra.mxu0 0
    %1365 = vmatprep.subr.bf16.mxu0 0
    %1366 = vmatpush2.bf16.msra.mxu0 0
    %1367 = vmatprep.subr.bf16.mxu0 0
    %1368 = vmatpush2.bf16.msra.mxu0 0
    %1369 = vmatprep.subr.bf16.mxu0 0
    %1370 = vmatpush2.bf16.msra.mxu0 0
    %1371 = vmatprep.subr.bf16.mxu0 0
    %1372 = vmatpush2.bf16.msra.mxu0 0
    %1373 = vmatprep.mubr.bf16.mxu0 0
    %1374 = vmatmul.mubr.bf16.gmra.mxu0 %v1340
    %v1375 = vpop.f32.mrf.mxu0
    %v1376 = vadd.f32 0.0, %v1375
    %v1377 = vpop.f32.mrf.mxu0
    %v1378 = vadd.f32 0.0, %v1377
    %v1379 = vpop.f32.mrf.mxu0
    %v1380 = vadd.f32 0.0, %v1379
    %v1381 = vpop.f32.mrf.mxu0
    %v1382 = vadd.f32 0.0, %v1381
    %1383 = vdwg.mxu0
    %1384 = vmatprep.subr.bf16.mxu0 0
    %1385 = vmatpush1.bf16.msra.mxu0 %v1037
    %1386 = vmatprep.subr.bf16.mxu0 0
    %1387 = vmatpush1.bf16.msra.mxu0 %v1034
    %1388 = vmatprep.subr.bf16.mxu0 0
    %1389 = vmatpush1.bf16.msra.mxu0 %v1031
    %1390 = vmatprep.subr.bf16.mxu0 0
    %1391 = vmatpush1.bf16.msra.mxu0 %v1028
    %1392 = vmatprep.subr.bf16.mxu0 0
    %1393 = vmatpush1.bf16.msra.mxu0 %v1025
    %1394 = vmatprep.subr.bf16.mxu0 0
    %1395 = vmatpush1.bf16.msra.mxu0 %v1022
    %1396 = vmatprep.subr.bf16.mxu0 0
    %1397 = vmatpush1.bf16.msra.mxu0 %v1019
    %1398 = vmatprep.subr.bf16.mxu0 0
    %1399 = vmatpush1.bf16.msra.mxu0 %v1016
    %1400 = vmatprep.subr.bf16.mxu0 0
    %1401 = vmatpush2.bf16.msra.mxu0 0
    %1402 = vmatprep.subr.bf16.mxu0 0
    %1403 = vmatpush2.bf16.msra.mxu0 0
    %1404 = vmatprep.subr.bf16.mxu0 0
    %1405 = vmatpush2.bf16.msra.mxu0 0
    %1406 = vmatprep.subr.bf16.mxu0 0
    %1407 = vmatpush2.bf16.msra.mxu0 0
    %1408 = vmatprep.subr.bf16.mxu0 0
    %1409 = vmatpush2.bf16.msra.mxu0 0
    %1410 = vmatprep.subr.bf16.mxu0 0
    %1411 = vmatpush2.bf16.msra.mxu0 0
    %1412 = vmatprep.subr.bf16.mxu0 0
    %1413 = vmatpush2.bf16.msra.mxu0 0
    %1414 = vmatprep.subr.bf16.mxu0 0
    %1415 = vmatpush2.bf16.msra.mxu0 0
    %1416 = vmatprep.mubr.bf16.mxu0 0
    %1417 = vmatmul.mubr.bf16.gmra.mxu0 %v1340
    %v1418 = vpop.f32.mrf.mxu0
    %v1419 = vadd.f32 0.0, %v1418
    %v1420 = vpop.f32.mrf.mxu0
    %v1421 = vpop.f32.mrf.mxu0
    %v1422 = vadd.f32 0.0, %v1421
    %v1423 = vpop.f32.mrf.mxu0
    %1424 = vdwg.mxu0
    %s1425 = scalar_lea.vmem [#allocation2], 48
    %v1426 = vld [vmem:[%s1425] sm:$0xff]
    %v1427 = vld [vmem:[%s1425 + $0x8] sm:$0xf]
    %v1428 = vld [vmem:[%s1425 + $0xc] sm:$0xff]
    %v1429 = vld [vmem:[%s1425 + $0x14] sm:$0xf]
    %v1430 = vunpack.c.l.bf16 %v1426
    %v1431 = vunpack.c.h.bf16 %v1426
    %v1432 = vunpack.c.l.bf16 %v1427
    %v1433 = vunpack.c.l.bf16 %v1428
    %v1434 = vunpack.c.h.bf16 %v1428
    %v1435 = vunpack.c.l.bf16 %v1429
    %v1436 = vadd.f32 %v1430, %v1376
    %v1437 = vadd.f32 %v1433, %v1380
    %v1438 = vxor.u32 %v1436, 2147483648
    %v1439 = vxor.u32 %v1437, 2147483648
    %v1440 = vmul.f32 %v1438, 1.442695
    %v1441 = vpow.pop %v1440
    %v1442 = vmul.f32 %v1439, 1.442695
    %v1443 = vpow.pop %v1442
    %v1444 = vadd.f32 %v1441, 1.0
    %v1445 = vadd.f32 %v1443, 1.0
    %v1446 = vrcp.pop %v1444
    %v1447 = vmul.f32 1.0, %v1446
    %v1448 = vrcp.pop %v1445
    %v1449 = vmul.f32 1.0, %v1448
    %v1450 = vadd.f32 %v1431, %v1378
    %v1451 = vadd.f32 %v1434, %v1382
    %v1452 = vxor.u32 %v1450, 2147483648
    %v1453 = vxor.u32 %v1451, 2147483648
    %v1454 = vmul.f32 %v1452, 1.442695
    %v1455 = vpow.pop %v1454
    %v1456 = vmul.f32 %v1453, 1.442695
    %v1457 = vpow.pop %v1456
    %v1458 = vadd.f32 %v1455, 1.0
    %v1459 = vadd.f32 %v1457, 1.0
    %v1460 = vrcp.pop %v1458
    %v1461 = vmul.f32 1.0, %v1460
    %v1462 = vrcp.pop %v1459
    %v1463 = vmul.f32 1.0, %v1462
    %v1464 = vadd.f32 %v1419, %v893
    %v1465 = vadd.f32 %v1422, %v893
    %v1466 = vmul.f32 %v1447, %v1464
    %v1467 = vmul.f32 %v1449, %v1465
    %v1468 = vadd.f32 %v1432, %v1466
    %v1469 = vadd.f32 %v1435, %v1467
    %v1470 = vtanh.pop %v1468
    %v1471 = vtanh.pop %v1469
    %v1472 = vsub.f32 1.0, %v1461
    %v1473 = vsub.f32 1.0, %v1463
    %v1474 = vmul.f32 %v1472, %v1470
    %v1475 = vmul.f32 %v1473, %v1471
    %v1476 = vmul.f32 %v1461, %v1338
    %v1477 = vmul.f32 %v1463, %v1339
    %v1478 = vadd.f32 %v1474, %v1476
    %v1479 = vadd.f32 %v1475, %v1477
    %v1480 = vpack.c.bf16 %v1479, %v1478
    %1481 = vmatprep.subr.bf16.mxu0 %v1036
    %1482 = vmatpush1.bf16.msra.mxu0 %v1035
    %1483 = vmatprep.subr.bf16.mxu0 %v1033
    %1484 = vmatpush1.bf16.msra.mxu0 %v1032
    %1485 = vmatprep.subr.bf16.mxu0 %v1030
    %1486 = vmatpush1.bf16.msra.mxu0 %v1029
    %1487 = vmatprep.subr.bf16.mxu0 %v1027
    %1488 = vmatpush1.bf16.msra.mxu0 %v1026
    %1489 = vmatprep.subr.bf16.mxu0 %v1024
    %1490 = vmatpush1.bf16.msra.mxu0 %v1023
    %1491 = vmatprep.subr.bf16.mxu0 %v1021
    %1492 = vmatpush1.bf16.msra.mxu0 %v1020
    %1493 = vmatprep.subr.bf16.mxu0 %v1018
    %1494 = vmatpush1.bf16.msra.mxu0 %v1017
    %1495 = vmatprep.subr.bf16.mxu0 %v1015
    %1496 = vmatpush1.bf16.msra.mxu0 %v1014
    %1497 = vmatprep.subr.bf16.mxu0 0
    %1498 = vmatpush2.bf16.msra.mxu0 0
    %1499 = vmatprep.subr.bf16.mxu0 0
    %1500 = vmatpush2.bf16.msra.mxu0 0
    %1501 = vmatprep.subr.bf16.mxu0 0
    %1502 = vmatpush2.bf16.msra.mxu0 0
    %1503 = vmatprep.subr.bf16.mxu0 0
    %1504 = vmatpush2.bf16.msra.mxu0 0
    %1505 = vmatprep.subr.bf16.mxu0 0
    %1506 = vmatpush2.bf16.msra.mxu0 0
    %1507 = vmatprep.subr.bf16.mxu0 0
    %1508 = vmatpush2.bf16.msra.mxu0 0
    %1509 = vmatprep.subr.bf16.mxu0 0
    %1510 = vmatpush2.bf16.msra.mxu0 0
    %1511 = vmatprep.subr.bf16.mxu0 0
    %1512 = vmatpush2.bf16.msra.mxu0 0
    %1513 = vmatprep.mubr.bf16.mxu0 0
    %1514 = vmatmul.mubr.bf16.gmra.mxu0 %v1480
    %v1515 = vpop.f32.mrf.mxu0
    %v1516 = vadd.f32 0.0, %v1515
    %v1517 = vpop.f32.mrf.mxu0
    %v1518 = vadd.f32 0.0, %v1517
    %v1519 = vpop.f32.mrf.mxu0
    %v1520 = vadd.f32 0.0, %v1519
    %v1521 = vpop.f32.mrf.mxu0
    %v1522 = vadd.f32 0.0, %v1521
    %1523 = vdwg.mxu0
    %1524 = vmatprep.subr.bf16.mxu0 0
    %1525 = vmatpush1.bf16.msra.mxu0 %v1037
    %1526 = vmatprep.subr.bf16.mxu0 0
    %1527 = vmatpush1.bf16.msra.mxu0 %v1034
    %1528 = vmatprep.subr.bf16.mxu0 0
    %1529 = vmatpush1.bf16.msra.mxu0 %v1031
    %1530 = vmatprep.subr.bf16.mxu0 0
    %1531 = vmatpush1.bf16.msra.mxu0 %v1028
    %1532 = vmatprep.subr.bf16.mxu0 0
    %1533 = vmatpush1.bf16.msra.mxu0 %v1025
    %1534 = vmatprep.subr.bf16.mxu0 0
    %1535 = vmatpush1.bf16.msra.mxu0 %v1022
    %1536 = vmatprep.subr.bf16.mxu0 0
    %1537 = vmatpush1.bf16.msra.mxu0 %v1019
    %1538 = vmatprep.subr.bf16.mxu0 0
    %1539 = vmatpush1.bf16.msra.mxu0 %v1016
    %1540 = vmatprep.subr.bf16.mxu0 0
    %1541 = vmatpush2.bf16.msra.mxu0 0
    %1542 = vmatprep.subr.bf16.mxu0 0
    %1543 = vmatpush2.bf16.msra.mxu0 0
    %1544 = vmatprep.subr.bf16.mxu0 0
    %1545 = vmatpush2.bf16.msra.mxu0 0
    %1546 = vmatprep.subr.bf16.mxu0 0
    %1547 = vmatpush2.bf16.msra.mxu0 0
    %1548 = vmatprep.subr.bf16.mxu0 0
    %1549 = vmatpush2.bf16.msra.mxu0 0
    %1550 = vmatprep.subr.bf16.mxu0 0
    %1551 = vmatpush2.bf16.msra.mxu0 0
    %1552 = vmatprep.subr.bf16.mxu0 0
    %1553 = vmatpush2.bf16.msra.mxu0 0
    %1554 = vmatprep.subr.bf16.mxu0 0
    %1555 = vmatpush2.bf16.msra.mxu0 0
    %1556 = vmatprep.mubr.bf16.mxu0 0
    %1557 = vmatmul.mubr.bf16.gmra.mxu0 %v1480
    %v1558 = vpop.f32.mrf.mxu0
    %v1559 = vadd.f32 0.0, %v1558
    %v1560 = vpop.f32.mrf.mxu0
    %v1561 = vpop.f32.mrf.mxu0
    %v1562 = vadd.f32 0.0, %v1561
    %v1563 = vpop.f32.mrf.mxu0
    %1564 = vdwg.mxu0
    %s1565 = scalar_lea.vmem [#allocation2], 72
    %v1566 = vld [vmem:[%s1565] sm:$0xff]
    %v1567 = vld [vmem:[%s1565 + $0x8] sm:$0xf]
    %v1568 = vld [vmem:[%s1565 + $0xc] sm:$0xff]
    %v1569 = vld [vmem:[%s1565 + $0x14] sm:$0xf]
    %v1570 = vunpack.c.l.bf16 %v1566
    %v1571 = vunpack.c.h.bf16 %v1566
    %v1572 = vunpack.c.l.bf16 %v1567
    %v1573 = vunpack.c.l.bf16 %v1568
    %v1574 = vunpack.c.h.bf16 %v1568
    %v1575 = vunpack.c.l.bf16 %v1569
    %v1576 = vadd.f32 %v1570, %v1516
    %v1577 = vadd.f32 %v1573, %v1520
    %v1578 = vxor.u32 %v1576, 2147483648
    %v1579 = vxor.u32 %v1577, 2147483648
    %v1580 = vmul.f32 %v1578, 1.442695
    %v1581 = vpow.pop %v1580
    %v1582 = vmul.f32 %v1579, 1.442695
    %v1583 = vpow.pop %v1582
    %v1584 = vadd.f32 %v1581, 1.0
    %v1585 = vadd.f32 %v1583, 1.0
    %v1586 = vrcp.pop %v1584
    %v1587 = vmul.f32 1.0, %v1586
    %v1588 = vrcp.pop %v1585
    %v1589 = vmul.f32 1.0, %v1588
    %v1590 = vadd.f32 %v1571, %v1518
    %v1591 = vadd.f32 %v1574, %v1522
    %v1592 = vxor.u32 %v1590, 2147483648
    %v1593 = vxor.u32 %v1591, 2147483648
    %v1594 = vmul.f32 %v1592, 1.442695
    %v1595 = vpow.pop %v1594
    %v1596 = vmul.f32 %v1593, 1.442695
    %v1597 = vpow.pop %v1596
    %v1598 = vadd.f32 %v1595, 1.0
    %v1599 = vadd.f32 %v1597, 1.0
    %v1600 = vrcp.pop %v1598
    %v1601 = vmul.f32 1.0, %v1600
    %v1602 = vrcp.pop %v1599
    %v1603 = vmul.f32 1.0, %v1602
    %v1604 = vadd.f32 %v1559, %v893
    %v1605 = vadd.f32 %v1562, %v893
    %v1606 = vmul.f32 %v1587, %v1604
    %v1607 = vmul.f32 %v1589, %v1605
    %v1608 = vadd.f32 %v1572, %v1606
    %v1609 = vadd.f32 %v1575, %v1607
    %v1610 = vtanh.pop %v1608
    %v1611 = vtanh.pop %v1609
    %v1612 = vsub.f32 1.0, %v1601
    %v1613 = vsub.f32 1.0, %v1603
    %v1614 = vmul.f32 %v1612, %v1610
    %v1615 = vmul.f32 %v1613, %v1611
    %v1616 = vmul.f32 %v1601, %v1478
    %v1617 = vmul.f32 %v1603, %v1479
    %v1618 = vadd.f32 %v1614, %v1616
    %v1619 = vadd.f32 %v1615, %v1617
    %v1620 = vpack.c.bf16 %v1619, %v1618
    %1621 = vmatprep.subr.bf16.mxu0 %v1036
    %1622 = vmatpush1.bf16.msra.mxu0 %v1035
    %1623 = vmatprep.subr.bf16.mxu0 %v1033
    %1624 = vmatpush1.bf16.msra.mxu0 %v1032
    %1625 = vmatprep.subr.bf16.mxu0 %v1030
    %1626 = vmatpush1.bf16.msra.mxu0 %v1029
    %1627 = vmatprep.subr.bf16.mxu0 %v1027
    %1628 = vmatpush1.bf16.msra.mxu0 %v1026
    %1629 = vmatprep.subr.bf16.mxu0 %v1024
    %1630 = vmatpush1.bf16.msra.mxu0 %v1023
    %1631 = vmatprep.subr.bf16.mxu0 %v1021
    %1632 = vmatpush1.bf16.msra.mxu0 %v1020
    %1633 = vmatprep.subr.bf16.mxu0 %v1018
    %1634 = vmatpush1.bf16.msra.mxu0 %v1017
    %1635 = vmatprep.subr.bf16.mxu0 %v1015
    %1636 = vmatpush1.bf16.msra.mxu0 %v1014
    %1637 = vmatprep.subr.bf16.mxu0 0
    %1638 = vmatpush2.bf16.msra.mxu0 0
    %1639 = vmatprep.subr.bf16.mxu0 0
    %1640 = vmatpush2.bf16.msra.mxu0 0
    %1641 = vmatprep.subr.bf16.mxu0 0
    %1642 = vmatpush2.bf16.msra.mxu0 0
    %1643 = vmatprep.subr.bf16.mxu0 0
    %1644 = vmatpush2.bf16.msra.mxu0 0
    %1645 = vmatprep.subr.bf16.mxu0 0
    %1646 = vmatpush2.bf16.msra.mxu0 0
    %1647 = vmatprep.subr.bf16.mxu0 0
    %1648 = vmatpush2.bf16.msra.mxu0 0
    %1649 = vmatprep.subr.bf16.mxu0 0
    %1650 = vmatpush2.bf16.msra.mxu0 0
    %1651 = vmatprep.subr.bf16.mxu0 0
    %1652 = vmatpush2.bf16.msra.mxu0 0
    %1653 = vmatprep.mubr.bf16.mxu0 0
    %1654 = vmatmul.mubr.bf16.gmra.mxu0 %v1620
    %v1655 = vpop.f32.mrf.mxu0
    %v1656 = vadd.f32 0.0, %v1655
    %v1657 = vpop.f32.mrf.mxu0
    %v1658 = vadd.f32 0.0, %v1657
    %v1659 = vpop.f32.mrf.mxu0
    %v1660 = vadd.f32 0.0, %v1659
    %v1661 = vpop.f32.mrf.mxu0
    %v1662 = vadd.f32 0.0, %v1661
    %1663 = vdwg.mxu0
    %1664 = vmatprep.subr.bf16.mxu0 0
    %1665 = vmatpush1.bf16.msra.mxu0 %v1037
    %1666 = vmatprep.subr.bf16.mxu0 0
    %1667 = vmatpush1.bf16.msra.mxu0 %v1034
    %1668 = vmatprep.subr.bf16.mxu0 0
    %1669 = vmatpush1.bf16.msra.mxu0 %v1031
    %1670 = vmatprep.subr.bf16.mxu0 0
    %1671 = vmatpush1.bf16.msra.mxu0 %v1028
    %1672 = vmatprep.subr.bf16.mxu0 0
    %1673 = vmatpush1.bf16.msra.mxu0 %v1025
    %1674 = vmatprep.subr.bf16.mxu0 0
    %1675 = vmatpush1.bf16.msra.mxu0 %v1022
    %1676 = vmatprep.subr.bf16.mxu0 0
    %1677 = vmatpush1.bf16.msra.mxu0 %v1019
    %1678 = vmatprep.subr.bf16.mxu0 0
    %1679 = vmatpush1.bf16.msra.mxu0 %v1016
    %1680 = vmatprep.subr.bf16.mxu0 0
    %1681 = vmatpush2.bf16.msra.mxu0 0
    %1682 = vmatprep.subr.bf16.mxu0 0
    %1683 = vmatpush2.bf16.msra.mxu0 0
    %1684 = vmatprep.subr.bf16.mxu0 0
    %1685 = vmatpush2.bf16.msra.mxu0 0
    %1686 = vmatprep.subr.bf16.mxu0 0
    %1687 = vmatpush2.bf16.msra.mxu0 0
    %1688 = vmatprep.subr.bf16.mxu0 0
    %1689 = vmatpush2.bf16.msra.mxu0 0
    %1690 = vmatprep.subr.bf16.mxu0 0
    %1691 = vmatpush2.bf16.msra.mxu0 0
    %1692 = vmatprep.subr.bf16.mxu0 0
    %1693 = vmatpush2.bf16.msra.mxu0 0
    %1694 = vmatprep.subr.bf16.mxu0 0
    %1695 = vmatpush2.bf16.msra.mxu0 0
    %1696 = vmatprep.mubr.bf16.mxu0 0
    %1697 = vmatmul.mubr.bf16.gmra.mxu0 %v1620
    %v1698 = vpop.f32.mrf.mxu0
    %v1699 = vadd.f32 0.0, %v1698
    %v1700 = vpop.f32.mrf.mxu0
    %v1701 = vpop.f32.mrf.mxu0
    %v1702 = vadd.f32 0.0, %v1701
    %v1703 = vpop.f32.mrf.mxu0
    %1704 = vdwg.mxu0
    %s1705 = scalar_lea.vmem [#allocation2], 96
    %v1706 = vld [vmem:[%s1705] sm:$0xff]
    %v1707 = vld [vmem:[%s1705 + $0x8] sm:$0xf]
    %v1708 = vld [vmem:[%s1705 + $0xc] sm:$0xff]
    %v1709 = vld [vmem:[%s1705 + $0x14] sm:$0xf]
    %v1710 = vunpack.c.l.bf16 %v1706
    %v1711 = vunpack.c.h.bf16 %v1706
    %v1712 = vunpack.c.l.bf16 %v1707
    %v1713 = vunpack.c.l.bf16 %v1708
    %v1714 = vunpack.c.h.bf16 %v1708
    %v1715 = vunpack.c.l.bf16 %v1709
    %v1716 = vadd.f32 %v1710, %v1656
    %v1717 = vadd.f32 %v1713, %v1660
    %v1718 = vxor.u32 %v1716, 2147483648
    %v1719 = vxor.u32 %v1717, 2147483648
    %v1720 = vmul.f32 %v1718, 1.442695
    %v1721 = vpow.pop %v1720
    %v1722 = vmul.f32 %v1719, 1.442695
    %v1723 = vpow.pop %v1722
    %v1724 = vadd.f32 %v1721, 1.0
    %v1725 = vadd.f32 %v1723, 1.0
    %v1726 = vrcp.pop %v1724
    %v1727 = vmul.f32 1.0, %v1726
    %v1728 = vrcp.pop %v1725
    %v1729 = vmul.f32 1.0, %v1728
    %v1730 = vadd.f32 %v1711, %v1658
    %v1731 = vadd.f32 %v1714, %v1662
    %v1732 = vxor.u32 %v1730, 2147483648
    %v1733 = vxor.u32 %v1731, 2147483648
    %v1734 = vmul.f32 %v1732, 1.442695
    %v1735 = vpow.pop %v1734
    %v1736 = vmul.f32 %v1733, 1.442695
    %v1737 = vpow.pop %v1736
    %v1738 = vadd.f32 %v1735, 1.0
    %v1739 = vadd.f32 %v1737, 1.0
    %v1740 = vrcp.pop %v1738
    %v1741 = vmul.f32 1.0, %v1740
    %v1742 = vrcp.pop %v1739
    %v1743 = vmul.f32 1.0, %v1742
    %v1744 = vadd.f32 %v1699, %v893
    %v1745 = vadd.f32 %v1702, %v893
    %v1746 = vmul.f32 %v1727, %v1744
    %v1747 = vmul.f32 %v1729, %v1745
    %v1748 = vadd.f32 %v1712, %v1746
    %v1749 = vadd.f32 %v1715, %v1747
    %v1750 = vtanh.pop %v1748
    %v1751 = vtanh.pop %v1749
    %v1752 = vsub.f32 1.0, %v1741
    %v1753 = vsub.f32 1.0, %v1743
    %v1754 = vmul.f32 %v1752, %v1750
    %v1755 = vmul.f32 %v1753, %v1751
    %v1756 = vmul.f32 %v1741, %v1618
    %v1757 = vmul.f32 %v1743, %v1619
    %v1758 = vadd.f32 %v1754, %v1756
    %v1759 = vadd.f32 %v1755, %v1757
    %v1760 = vpack.c.bf16 %v1759, %v1758
    %1761 = vmatprep.subr.bf16.mxu0 %v1036
    %1762 = vmatpush1.bf16.msra.mxu0 %v1035
    %1763 = vmatprep.subr.bf16.mxu0 %v1033
    %1764 = vmatpush1.bf16.msra.mxu0 %v1032
    %1765 = vmatprep.subr.bf16.mxu0 %v1030
    %1766 = vmatpush1.bf16.msra.mxu0 %v1029
    %1767 = vmatprep.subr.bf16.mxu0 %v1027
    %1768 = vmatpush1.bf16.msra.mxu0 %v1026
    %1769 = vmatprep.subr.bf16.mxu0 %v1024
    %1770 = vmatpush1.bf16.msra.mxu0 %v1023
    %1771 = vmatprep.subr.bf16.mxu0 %v1021
    %1772 = vmatpush1.bf16.msra.mxu0 %v1020
    %1773 = vmatprep.subr.bf16.mxu0 %v1018
    %1774 = vmatpush1.bf16.msra.mxu0 %v1017
    %1775 = vmatprep.subr.bf16.mxu0 %v1015
    %1776 = vmatpush1.bf16.msra.mxu0 %v1014
    %1777 = vmatprep.subr.bf16.mxu0 0
    %1778 = vmatpush2.bf16.msra.mxu0 0
    %1779 = vmatprep.subr.bf16.mxu0 0
    %1780 = vmatpush2.bf16.msra.mxu0 0
    %1781 = vmatprep.subr.bf16.mxu0 0
    %1782 = vmatpush2.bf16.msra.mxu0 0
    %1783 = vmatprep.subr.bf16.mxu0 0
    %1784 = vmatpush2.bf16.msra.mxu0 0
    %1785 = vmatprep.subr.bf16.mxu0 0
    %1786 = vmatpush2.bf16.msra.mxu0 0
    %1787 = vmatprep.subr.bf16.mxu0 0
    %1788 = vmatpush2.bf16.msra.mxu0 0
    %1789 = vmatprep.subr.bf16.mxu0 0
    %1790 = vmatpush2.bf16.msra.mxu0 0
    %1791 = vmatprep.subr.bf16.mxu0 0
    %1792 = vmatpush2.bf16.msra.mxu0 0
    %1793 = vmatprep.mubr.bf16.mxu0 0
    %1794 = vmatmul.mubr.bf16.gmra.mxu0 %v1760
    %v1795 = vpop.f32.mrf.mxu0
    %v1796 = vadd.f32 0.0, %v1795
    %v1797 = vpop.f32.mrf.mxu0
    %v1798 = vadd.f32 0.0, %v1797
    %v1799 = vpop.f32.mrf.mxu0
    %v1800 = vadd.f32 0.0, %v1799
    %v1801 = vpop.f32.mrf.mxu0
    %v1802 = vadd.f32 0.0, %v1801
    %1803 = vdwg.mxu0
    %1804 = vmatprep.subr.bf16.mxu0 0
    %1805 = vmatpush1.bf16.msra.mxu0 %v1037
    %1806 = vmatprep.subr.bf16.mxu0 0
    %1807 = vmatpush1.bf16.msra.mxu0 %v1034
    %1808 = vmatprep.subr.bf16.mxu0 0
    %1809 = vmatpush1.bf16.msra.mxu0 %v1031
    %1810 = vmatprep.subr.bf16.mxu0 0
    %1811 = vmatpush1.bf16.msra.mxu0 %v1028
    %1812 = vmatprep.subr.bf16.mxu0 0
    %1813 = vmatpush1.bf16.msra.mxu0 %v1025
    %1814 = vmatprep.subr.bf16.mxu0 0
    %1815 = vmatpush1.bf16.msra.mxu0 %v1022
    %1816 = vmatprep.subr.bf16.mxu0 0
    %1817 = vmatpush1.bf16.msra.mxu0 %v1019
    %1818 = vmatprep.subr.bf16.mxu0 0
    %1819 = vmatpush1.bf16.msra.mxu0 %v1016
    %1820 = vmatprep.subr.bf16.mxu0 0
    %1821 = vmatpush2.bf16.msra.mxu0 0
    %1822 = vmatprep.subr.bf16.mxu0 0
    %1823 = vmatpush2.bf16.msra.mxu0 0
    %1824 = vmatprep.subr.bf16.mxu0 0
    %1825 = vmatpush2.bf16.msra.mxu0 0
    %1826 = vmatprep.subr.bf16.mxu0 0
    %1827 = vmatpush2.bf16.msra.mxu0 0
    %1828 = vmatprep.subr.bf16.mxu0 0
    %1829 = vmatpush2.bf16.msra.mxu0 0
    %1830 = vmatprep.subr.bf16.mxu0 0
    %1831 = vmatpush2.bf16.msra.mxu0 0
    %1832 = vmatprep.subr.bf16.mxu0 0
    %1833 = vmatpush2.bf16.msra.mxu0 0
    %1834 = vmatprep.subr.bf16.mxu0 0
    %1835 = vmatpush2.bf16.msra.mxu0 0
    %1836 = vmatprep.mubr.bf16.mxu0 0
    %1837 = vmatmul.mubr.bf16.gmra.mxu0 %v1760
    %v1838 = vpop.f32.mrf.mxu0
    %v1839 = vadd.f32 0.0, %v1838
    %v1840 = vpop.f32.mrf.mxu0
    %v1841 = vpop.f32.mrf.mxu0
    %v1842 = vadd.f32 0.0, %v1841
    %v1843 = vpop.f32.mrf.mxu0
    %1844 = vdwg.mxu0
    %s1845 = scalar_lea.vmem [#allocation2], 120
    %v1846 = vld [vmem:[%s1845] sm:$0xff]
    %v1847 = vld [vmem:[%s1845 + $0x8] sm:$0xf]
    %v1848 = vld [vmem:[%s1845 + $0xc] sm:$0xff]
    %v1849 = vld [vmem:[%s1845 + $0x14] sm:$0xf]
    %v1850 = vunpack.c.l.bf16 %v1846
    %v1851 = vunpack.c.h.bf16 %v1846
    %v1852 = vunpack.c.l.bf16 %v1847
    %v1853 = vunpack.c.l.bf16 %v1848
    %v1854 = vunpack.c.h.bf16 %v1848
    %v1855 = vunpack.c.l.bf16 %v1849
    %v1856 = vadd.f32 %v1850, %v1796
    %v1857 = vadd.f32 %v1853, %v1800
    %v1858 = vxor.u32 %v1856, 2147483648
    %v1859 = vxor.u32 %v1857, 2147483648
    %v1860 = vmul.f32 %v1858, 1.442695
    %v1861 = vpow.pop %v1860
    %v1862 = vmul.f32 %v1859, 1.442695
    %v1863 = vpow.pop %v1862
    %v1864 = vadd.f32 %v1861, 1.0
    %v1865 = vadd.f32 %v1863, 1.0
    %v1866 = vrcp.pop %v1864
    %v1867 = vmul.f32 1.0, %v1866
    %v1868 = vrcp.pop %v1865
    %v1869 = vmul.f32 1.0, %v1868
    %v1870 = vadd.f32 %v1851, %v1798
    %v1871 = vadd.f32 %v1854, %v1802
    %v1872 = vxor.u32 %v1870, 2147483648
    %v1873 = vxor.u32 %v1871, 2147483648
    %v1874 = vmul.f32 %v1872, 1.442695
    %v1875 = vpow.pop %v1874
    %v1876 = vmul.f32 %v1873, 1.442695
    %v1877 = vpow.pop %v1876
    %v1878 = vadd.f32 %v1875, 1.0
    %v1879 = vadd.f32 %v1877, 1.0
    %v1880 = vrcp.pop %v1878
    %v1881 = vmul.f32 1.0, %v1880
    %v1882 = vrcp.pop %v1879
    %v1883 = vmul.f32 1.0, %v1882
    %v1884 = vadd.f32 %v1839, %v893
    %v1885 = vadd.f32 %v1842, %v893
    %v1886 = vmul.f32 %v1867, %v1884
    %v1887 = vmul.f32 %v1869, %v1885
    %v1888 = vadd.f32 %v1852, %v1886
    %v1889 = vadd.f32 %v1855, %v1887
    %v1890 = vtanh.pop %v1888
    %v1891 = vtanh.pop %v1889
    %v1892 = vsub.f32 1.0, %v1881
    %v1893 = vsub.f32 1.0, %v1883
    %v1894 = vmul.f32 %v1892, %v1890
    %v1895 = vmul.f32 %v1893, %v1891
    %v1896 = vmul.f32 %v1881, %v1758
    %v1897 = vmul.f32 %v1883, %v1759
    %v1898 = vadd.f32 %v1894, %v1896
    %v1899 = vadd.f32 %v1895, %v1897
    %v1900 = vpack.c.bf16 %v1899, %v1898
    %1901 = vmatprep.subr.bf16.mxu0 %v1036
    %1902 = vmatpush1.bf16.msra.mxu0 %v1035
    %1903 = vmatprep.subr.bf16.mxu0 %v1033
    %1904 = vmatpush1.bf16.msra.mxu0 %v1032
    %1905 = vmatprep.subr.bf16.mxu0 %v1030
    %1906 = vmatpush1.bf16.msra.mxu0 %v1029
    %1907 = vmatprep.subr.bf16.mxu0 %v1027
    %1908 = vmatpush1.bf16.msra.mxu0 %v1026
    %1909 = vmatprep.subr.bf16.mxu0 %v1024
    %1910 = vmatpush1.bf16.msra.mxu0 %v1023
    %1911 = vmatprep.subr.bf16.mxu0 %v1021
    %1912 = vmatpush1.bf16.msra.mxu0 %v1020
    %1913 = vmatprep.subr.bf16.mxu0 %v1018
    %1914 = vmatpush1.bf16.msra.mxu0 %v1017
    %1915 = vmatprep.subr.bf16.mxu0 %v1015
    %1916 = vmatpush1.bf16.msra.mxu0 %v1014
    %1917 = vmatprep.subr.bf16.mxu0 0
    %1918 = vmatpush2.bf16.msra.mxu0 0
    %1919 = vmatprep.subr.bf16.mxu0 0
    %1920 = vmatpush2.bf16.msra.mxu0 0
    %1921 = vmatprep.subr.bf16.mxu0 0
    %1922 = vmatpush2.bf16.msra.mxu0 0
    %1923 = vmatprep.subr.bf16.mxu0 0
    %1924 = vmatpush2.bf16.msra.mxu0 0
    %1925 = vmatprep.subr.bf16.mxu0 0
    %1926 = vmatpush2.bf16.msra.mxu0 0
    %1927 = vmatprep.subr.bf16.mxu0 0
    %1928 = vmatpush2.bf16.msra.mxu0 0
    %1929 = vmatprep.subr.bf16.mxu0 0
    %1930 = vmatpush2.bf16.msra.mxu0 0
    %1931 = vmatprep.subr.bf16.mxu0 0
    %1932 = vmatpush2.bf16.msra.mxu0 0
    %1933 = vmatprep.mubr.bf16.mxu0 0
    %1934 = vmatmul.mubr.bf16.gmra.mxu0 %v1900
    %v1935 = vpop.f32.mrf.mxu0
    %v1936 = vadd.f32 0.0, %v1935
    %v1937 = vpop.f32.mrf.mxu0
    %v1938 = vadd.f32 0.0, %v1937
    %v1939 = vpop.f32.mrf.mxu0
    %v1940 = vadd.f32 0.0, %v1939
    %v1941 = vpop.f32.mrf.mxu0
    %v1942 = vadd.f32 0.0, %v1941
    %1943 = vdwg.mxu0
    %1944 = vmatprep.subr.bf16.mxu0 0
    %1945 = vmatpush1.bf16.msra.mxu0 %v1037
    %1946 = vmatprep.subr.bf16.mxu0 0
    %1947 = vmatpush1.bf16.msra.mxu0 %v1034
    %1948 = vmatprep.subr.bf16.mxu0 0
    %1949 = vmatpush1.bf16.msra.mxu0 %v1031
    %1950 = vmatprep.subr.bf16.mxu0 0
    %1951 = vmatpush1.bf16.msra.mxu0 %v1028
    %1952 = vmatprep.subr.bf16.mxu0 0
    %1953 = vmatpush1.bf16.msra.mxu0 %v1025
    %1954 = vmatprep.subr.bf16.mxu0 0
    %1955 = vmatpush1.bf16.msra.mxu0 %v1022
    %1956 = vmatprep.subr.bf16.mxu0 0
    %1957 = vmatpush1.bf16.msra.mxu0 %v1019
    %1958 = vmatprep.subr.bf16.mxu0 0
    %1959 = vmatpush1.bf16.msra.mxu0 %v1016
    %1960 = vmatprep.subr.bf16.mxu0 0
    %1961 = vmatpush2.bf16.msra.mxu0 0
    %1962 = vmatprep.subr.bf16.mxu0 0
    %1963 = vmatpush2.bf16.msra.mxu0 0
    %1964 = vmatprep.subr.bf16.mxu0 0
    %1965 = vmatpush2.bf16.msra.mxu0 0
    %1966 = vmatprep.subr.bf16.mxu0 0
    %1967 = vmatpush2.bf16.msra.mxu0 0
    %1968 = vmatprep.subr.bf16.mxu0 0
    %1969 = vmatpush2.bf16.msra.mxu0 0
    %1970 = vmatprep.subr.bf16.mxu0 0
    %1971 = vmatpush2.bf16.msra.mxu0 0
    %1972 = vmatprep.subr.bf16.mxu0 0
    %1973 = vmatpush2.bf16.msra.mxu0 0
    %1974 = vmatprep.subr.bf16.mxu0 0
    %1975 = vmatpush2.bf16.msra.mxu0 0
    %1976 = vmatprep.mubr.bf16.mxu0 0
    %1977 = vmatmul.mubr.bf16.gmra.mxu0 %v1900
    %v1978 = vpop.f32.mrf.mxu0
    %v1979 = vadd.f32 0.0, %v1978
    %v1980 = vpop.f32.mrf.mxu0
    %v1981 = vpop.f32.mrf.mxu0
    %v1982 = vadd.f32 0.0, %v1981
    %v1983 = vpop.f32.mrf.mxu0
    %1984 = vdwg.mxu0
    %s1985 = scalar_lea.vmem [#allocation2], 144
    %v1986 = vld [vmem:[%s1985] sm:$0xff]
    %v1987 = vld [vmem:[%s1985 + $0x8] sm:$0xf]
    %v1988 = vld [vmem:[%s1985 + $0xc] sm:$0xff]
    %v1989 = vld [vmem:[%s1985 + $0x14] sm:$0xf]
    %v1990 = vunpack.c.l.bf16 %v1986
    %v1991 = vunpack.c.h.bf16 %v1986
    %v1992 = vunpack.c.l.bf16 %v1987
    %v1993 = vunpack.c.l.bf16 %v1988
    %v1994 = vunpack.c.h.bf16 %v1988
    %v1995 = vunpack.c.l.bf16 %v1989
    %v1996 = vadd.f32 %v1990, %v1936
    %v1997 = vadd.f32 %v1993, %v1940
    %v1998 = vxor.u32 %v1996, 2147483648
    %v1999 = vxor.u32 %v1997, 2147483648
    %v2000 = vmul.f32 %v1998, 1.442695
    %v2001 = vpow.pop %v2000
    %v2002 = vmul.f32 %v1999, 1.442695
    %v2003 = vpow.pop %v2002
    %v2004 = vadd.f32 %v2001, 1.0
    %v2005 = vadd.f32 %v2003, 1.0
    %v2006 = vrcp.pop %v2004
    %v2007 = vmul.f32 1.0, %v2006
    %v2008 = vrcp.pop %v2005
    %v2009 = vmul.f32 1.0, %v2008
    %v2010 = vadd.f32 %v1991, %v1938
    %v2011 = vadd.f32 %v1994, %v1942
    %v2012 = vxor.u32 %v2010, 2147483648
    %v2013 = vxor.u32 %v2011, 2147483648
    %v2014 = vmul.f32 %v2012, 1.442695
    %v2015 = vpow.pop %v2014
    %v2016 = vmul.f32 %v2013, 1.442695
    %v2017 = vpow.pop %v2016
    %v2018 = vadd.f32 %v2015, 1.0
    %v2019 = vadd.f32 %v2017, 1.0
    %v2020 = vrcp.pop %v2018
    %v2021 = vmul.f32 1.0, %v2020
    %v2022 = vrcp.pop %v2019
    %v2023 = vmul.f32 1.0, %v2022
    %v2024 = vadd.f32 %v1979, %v893
    %v2025 = vadd.f32 %v1982, %v893
    %v2026 = vmul.f32 %v2007, %v2024
    %v2027 = vmul.f32 %v2009, %v2025
    %v2028 = vadd.f32 %v1992, %v2026
    %v2029 = vadd.f32 %v1995, %v2027
    %v2030 = vtanh.pop %v2028
    %v2031 = vtanh.pop %v2029
    %v2032 = vsub.f32 1.0, %v2021
    %v2033 = vsub.f32 1.0, %v2023
    %v2034 = vmul.f32 %v2032, %v2030
    %v2035 = vmul.f32 %v2033, %v2031
    %v2036 = vmul.f32 %v2021, %v1898
    %v2037 = vmul.f32 %v2023, %v1899
    %v2038 = vadd.f32 %v2034, %v2036
    %v2039 = vadd.f32 %v2035, %v2037
    %v2040 = vpack.c.bf16 %v2039, %v2038
    %2041 = vmatprep.subr.bf16.mxu0 %v1036
    %2042 = vmatpush1.bf16.msra.mxu0 %v1035
    %2043 = vmatprep.subr.bf16.mxu0 %v1033
    %2044 = vmatpush1.bf16.msra.mxu0 %v1032
    %2045 = vmatprep.subr.bf16.mxu0 %v1030
    %2046 = vmatpush1.bf16.msra.mxu0 %v1029
    %2047 = vmatprep.subr.bf16.mxu0 %v1027
    %2048 = vmatpush1.bf16.msra.mxu0 %v1026
    %2049 = vmatprep.subr.bf16.mxu0 %v1024
    %2050 = vmatpush1.bf16.msra.mxu0 %v1023
    %2051 = vmatprep.subr.bf16.mxu0 %v1021
    %2052 = vmatpush1.bf16.msra.mxu0 %v1020
    %2053 = vmatprep.subr.bf16.mxu0 %v1018
    %2054 = vmatpush1.bf16.msra.mxu0 %v1017
    %2055 = vmatprep.subr.bf16.mxu0 %v1015
    %2056 = vmatpush1.bf16.msra.mxu0 %v1014
    %2057 = vmatprep.subr.bf16.mxu0 0
    %2058 = vmatpush2.bf16.msra.mxu0 0
    %2059 = vmatprep.subr.bf16.mxu0 0
    %2060 = vmatpush2.bf16.msra.mxu0 0
    %2061 = vmatprep.subr.bf16.mxu0 0
    %2062 = vmatpush2.bf16.msra.mxu0 0
    %2063 = vmatprep.subr.bf16.mxu0 0
    %2064 = vmatpush2.bf16.msra.mxu0 0
    %2065 = vmatprep.subr.bf16.mxu0 0
    %2066 = vmatpush2.bf16.msra.mxu0 0
    %2067 = vmatprep.subr.bf16.mxu0 0
    %2068 = vmatpush2.bf16.msra.mxu0 0
    %2069 = vmatprep.subr.bf16.mxu0 0
    %2070 = vmatpush2.bf16.msra.mxu0 0
    %2071 = vmatprep.subr.bf16.mxu0 0
    %2072 = vmatpush2.bf16.msra.mxu0 0
    %2073 = vmatprep.mubr.bf16.mxu0 0
    %2074 = vmatmul.mubr.bf16.gmra.mxu0 %v2040
    %v2075 = vpop.f32.mrf.mxu0
    %v2076 = vadd.f32 0.0, %v2075
    %v2077 = vpop.f32.mrf.mxu0
    %v2078 = vadd.f32 0.0, %v2077
    %v2079 = vpop.f32.mrf.mxu0
    %v2080 = vadd.f32 0.0, %v2079
    %v2081 = vpop.f32.mrf.mxu0
    %v2082 = vadd.f32 0.0, %v2081
    %2083 = vdwg.mxu0
    %2084 = vmatprep.subr.bf16.mxu0 0
    %2085 = vmatpush1.bf16.msra.mxu0 %v1037
    %2086 = vmatprep.subr.bf16.mxu0 0
    %2087 = vmatpush1.bf16.msra.mxu0 %v1034
    %2088 = vmatprep.subr.bf16.mxu0 0
    %2089 = vmatpush1.bf16.msra.mxu0 %v1031
    %2090 = vmatprep.subr.bf16.mxu0 0
    %2091 = vmatpush1.bf16.msra.mxu0 %v1028
    %2092 = vmatprep.subr.bf16.mxu0 0
    %2093 = vmatpush1.bf16.msra.mxu0 %v1025
    %2094 = vmatprep.subr.bf16.mxu0 0
    %2095 = vmatpush1.bf16.msra.mxu0 %v1022
    %2096 = vmatprep.subr.bf16.mxu0 0
    %2097 = vmatpush1.bf16.msra.mxu0 %v1019
    %2098 = vmatprep.subr.bf16.mxu0 0
    %2099 = vmatpush1.bf16.msra.mxu0 %v1016
    %2100 = vmatprep.subr.bf16.mxu0 0
    %2101 = vmatpush2.bf16.msra.mxu0 0
    %2102 = vmatprep.subr.bf16.mxu0 0
    %2103 = vmatpush2.bf16.msra.mxu0 0
    %2104 = vmatprep.subr.bf16.mxu0 0
    %2105 = vmatpush2.bf16.msra.mxu0 0
    %2106 = vmatprep.subr.bf16.mxu0 0
    %2107 = vmatpush2.bf16.msra.mxu0 0
    %2108 = vmatprep.subr.bf16.mxu0 0
    %2109 = vmatpush2.bf16.msra.mxu0 0
    %2110 = vmatprep.subr.bf16.mxu0 0
    %2111 = vmatpush2.bf16.msra.mxu0 0
    %2112 = vmatprep.subr.bf16.mxu0 0
    %2113 = vmatpush2.bf16.msra.mxu0 0
    %2114 = vmatprep.subr.bf16.mxu0 0
    %2115 = vmatpush2.bf16.msra.mxu0 0
    %2116 = vmatprep.mubr.bf16.mxu0 0
    %2117 = vmatmul.mubr.bf16.gmra.mxu0 %v2040
    %v2118 = vpop.f32.mrf.mxu0
    %v2119 = vadd.f32 0.0, %v2118
    %v2120 = vpop.f32.mrf.mxu0
    %v2121 = vpop.f32.mrf.mxu0
    %v2122 = vadd.f32 0.0, %v2121
    %v2123 = vpop.f32.mrf.mxu0
    %2124 = vdwg.mxu0
    %s2125 = scalar_lea.vmem [#allocation2], 168
    %v2126 = vld [vmem:[%s2125] sm:$0xff]
    %v2127 = vld [vmem:[%s2125 + $0x8] sm:$0xf]
    %v2128 = vld [vmem:[%s2125 + $0xc] sm:$0xff]
    %v2129 = vld [vmem:[%s2125 + $0x14] sm:$0xf]
    %v2130 = vunpack.c.l.bf16 %v2126
    %v2131 = vunpack.c.h.bf16 %v2126
    %v2132 = vunpack.c.l.bf16 %v2127
    %v2133 = vunpack.c.l.bf16 %v2128
    %v2134 = vunpack.c.h.bf16 %v2128
    %v2135 = vunpack.c.l.bf16 %v2129
    %v2136 = vadd.f32 %v2130, %v2076
    %v2137 = vadd.f32 %v2133, %v2080
    %v2138 = vxor.u32 %v2136, 2147483648
    %v2139 = vxor.u32 %v2137, 2147483648
    %v2140 = vmul.f32 %v2138, 1.442695
    %v2141 = vpow.pop %v2140
    %v2142 = vmul.f32 %v2139, 1.442695
    %v2143 = vpow.pop %v2142
    %v2144 = vadd.f32 %v2141, 1.0
    %v2145 = vadd.f32 %v2143, 1.0
    %v2146 = vrcp.pop %v2144
    %v2147 = vmul.f32 1.0, %v2146
    %v2148 = vrcp.pop %v2145
    %v2149 = vmul.f32 1.0, %v2148
    %v2150 = vadd.f32 %v2131, %v2078
    %v2151 = vadd.f32 %v2134, %v2082
    %v2152 = vxor.u32 %v2150, 2147483648
    %v2153 = vxor.u32 %v2151, 2147483648
    %v2154 = vmul.f32 %v2152, 1.442695
    %v2155 = vpow.pop %v2154
    %v2156 = vmul.f32 %v2153, 1.442695
    %v2157 = vpow.pop %v2156
    %v2158 = vadd.f32 %v2155, 1.0
    %v2159 = vadd.f32 %v2157, 1.0
    %v2160 = vrcp.pop %v2158
    %v2161 = vmul.f32 1.0, %v2160
    %v2162 = vrcp.pop %v2159
    %v2163 = vmul.f32 1.0, %v2162
    %v2164 = vadd.f32 %v2119, %v893
    %v2165 = vadd.f32 %v2122, %v893
    %v2166 = vmul.f32 %v2147, %v2164
    %v2167 = vmul.f32 %v2149, %v2165
    %v2168 = vadd.f32 %v2132, %v2166
    %v2169 = vadd.f32 %v2135, %v2167
    %v2170 = vtanh.pop %v2168
    %v2171 = vtanh.pop %v2169
    %v2172 = vsub.f32 1.0, %v2161
    %v2173 = vsub.f32 1.0, %v2163
    %v2174 = vmul.f32 %v2172, %v2170
    %v2175 = vmul.f32 %v2173, %v2171
    %v2176 = vmul.f32 %v2161, %v2038
    %v2177 = vmul.f32 %v2163, %v2039
    %v2178 = vadd.f32 %v2174, %v2176
    %v2179 = vadd.f32 %v2175, %v2177
    %s2180 = scalar_lea.vmem %s0, 112
    %v2181 = vld [vmem:[%s2180] sm:$0xff]
    %v2182 = vld [vmem:[%s2180 + $0x8] sm:$0xff]
    %v2183 = vld [vmem:[%s2] sm:$0xff]
    %v2184 = vld [vmem:[%s2 + $0x8] sm:$0xf]
    %v2185 = vld [vmem:[%s2 + $0xc] sm:$0xff]
    %v2186 = vld [vmem:[%s2 + $0x14] sm:$0xf]
    %v2187 = vld [vmem:[%s2 + $0x18] sm:$0xff]
    %v2188 = vld [vmem:[%s2 + $0x20] sm:$0xf]
    %v2189 = vld [vmem:[%s2 + $0x24] sm:$0xff]
    %v2190 = vld [vmem:[%s2 + $0x2c] sm:$0xf]
    %v2191 = vld [vmem:[%s2 + $0x30] sm:$0xff]
    %v2192 = vld [vmem:[%s2 + $0x38] sm:$0xf]
    %v2193 = vld [vmem:[%s2 + $0x3c] sm:$0xff]
    %v2194 = vld [vmem:[%s2 + $0x44] sm:$0xf]
    %v2195 = vld [vmem:[%s2 + $0x48] sm:$0xff]
    %v2196 = vld [vmem:[%s2 + $0x50] sm:$0xf]
    %v2197 = vld [vmem:[%s2 + $0x54] sm:$0xff]
    %v2198 = vld [vmem:[%s2 + $0x5c] sm:$0xf]
    %v2199 = vld [vmem:[%s2 + $0x60] sm:$0xff]
    %v2200 = vld [vmem:[%s2 + $0x68] sm:$0xf]
    %v2201 = vld [vmem:[%s2 + $0x6c] sm:$0xff]
    %v2202 = vld [vmem:[%s2 + $0x74] sm:$0xf]
    %v2203 = vld [vmem:[%s2 + $0x78] sm:$0xff]
    %v2204 = vld [vmem:[%s2 + $0x80] sm:$0xf]
    %v2205 = vld [vmem:[%s2 + $0x84] sm:$0xff]
    %v2206 = vld [vmem:[%s2 + $0x8c] sm:$0xf]
    %v2207 = vld [vmem:[%s2 + $0x90] sm:$0xff]
    %v2208 = vld [vmem:[%s2 + $0x98] sm:$0xf]
    %v2209 = vld [vmem:[%s2 + $0x9c] sm:$0xff]
    %v2210 = vld [vmem:[%s2 + $0xa4] sm:$0xf]
    %v2211 = vld [vmem:[%s2 + $0xa8] sm:$0xff]
    %v2212 = vld [vmem:[%s2 + $0xb0] sm:$0xf]
    %v2213 = vld [vmem:[%s2 + $0xb4] sm:$0xff]
    %v2214 = vld [vmem:[%s2 + $0xbc] sm:$0xf]
    %v2215 = vld [vmem:[%s2 + $0xc0] sm:$0xff]
    %v2216 = vld [vmem:[%s2 + $0xc8] sm:$0xf]
    %v2217 = vld [vmem:[%s2 + $0xcc] sm:$0xff]
    %v2218 = vld [vmem:[%s2 + $0xd4] sm:$0xf]
    %v2219 = vld [vmem:[%s2 + $0xd8] sm:$0xff]
    %v2220 = vld [vmem:[%s2 + $0xe0] sm:$0xf]
    %v2221 = vld [vmem:[%s2 + $0xe4] sm:$0xff]
    %v2222 = vld [vmem:[%s2 + $0xec] sm:$0xf]
    %v2223 = vld [vmem:[%s2 + $0xf0] sm:$0xff]
    %v2224 = vld [vmem:[%s2 + $0xf8] sm:$0xf]
    %v2225 = vld [vmem:[%s2 + $0xfc] sm:$0xff]
    %v2226 = vld [vmem:[%s2 + $0x104] sm:$0xf]
    %v2227 = vld [vmem:[%s2 + $0x108] sm:$0xff]
    %v2228 = vld [vmem:[%s2 + $0x110] sm:$0xf]
    %v2229 = vld [vmem:[%s2 + $0x114] sm:$0xff]
    %v2230 = vld [vmem:[%s2 + $0x11c] sm:$0xf]
    %v2231 = vld [vmem:[%s2 + $0x120] sm:$0xff]
    %v2232 = vld [vmem:[%s2 + $0x128] sm:$0xf]
    %v2233 = vld [vmem:[%s2 + $0x12c] sm:$0xff]
    %v2234 = vld [vmem:[%s2 + $0x134] sm:$0xf]
    %v2235 = vld [vmem:[%s2 + $0x138] sm:$0xff]
    %v2236 = vld [vmem:[%s2 + $0x140] sm:$0xf]
    %v2237 = vld [vmem:[%s2 + $0x144] sm:$0xff]
    %v2238 = vld [vmem:[%s2 + $0x14c] sm:$0xf]
    %v2239 = vld [vmem:[%s2 + $0x150] sm:$0xff]
    %v2240 = vld [vmem:[%s2 + $0x158] sm:$0xf]
    %v2241 = vld [vmem:[%s2 + $0x15c] sm:$0xff]
    %v2242 = vld [vmem:[%s2 + $0x164] sm:$0xf]
    %v2243 = vld [vmem:[%s2 + $0x168] sm:$0xff]
    %v2244 = vld [vmem:[%s2 + $0x170] sm:$0xf]
    %v2245 = vld [vmem:[%s2 + $0x174] sm:$0xff]
    %v2246 = vld [vmem:[%s2 + $0x17c] sm:$0xf]
    %v2247 = vld [vmem:[%s5] sm:$0x7]
    %v2249 = vlaneseq
    %v2250 = vshrl.u32 %v2249, 7
    %v2251 = vsub.s32 0, %v2250
    %v2252 = vrot.slane %v2247, %v2251
    %v2253 = vlaneseq
    %v2254 = vshrl.u32 %v2253, 7
    %v2255 = vsub.s32 1, %v2254
    %v2256 = vrot.slane %v2247, %v2255
    %v2257 = vlaneseq
    %v2258 = vshrl.u32 %v2257, 7
    %v2259 = vsub.s32 2, %v2258
    %v2260 = vrot.slane %v2247, %v2259
    %v2266 = vunpack.c.l.b16 %v2181
    %v2267 = vunpack.c.h.b16 %v2181
    %v2268 = vunpack.c.l.b16 %v2182
    %v2269 = vunpack.c.h.b16 %v2182
    %v2270 = vpack.c.b16 %v2268, %v2266
    %v2271 = vpack.c.b16 %v2269, %v2267
    %v2338 = vunpack.c.l.b16 %v2183
    %v2339 = vunpack.c.h.b16 %v2183
    %v2340 = vunpack.c.l.b16 %v2184
    %v2341 = vunpack.c.l.b16 %v2185
    %v2342 = vunpack.c.h.b16 %v2185
    %v2343 = vunpack.c.l.b16 %v2186
    %v2344 = vunpack.c.l.b16 %v2187
    %v2345 = vunpack.c.h.b16 %v2187
    %v2346 = vunpack.c.l.b16 %v2188
    %v2347 = vunpack.c.l.b16 %v2189
    %v2348 = vunpack.c.h.b16 %v2189
    %v2349 = vunpack.c.l.b16 %v2190
    %v2350 = vunpack.c.l.b16 %v2191
    %v2351 = vunpack.c.h.b16 %v2191
    %v2352 = vunpack.c.l.b16 %v2192
    %v2353 = vunpack.c.l.b16 %v2193
    %v2354 = vunpack.c.h.b16 %v2193
    %v2355 = vunpack.c.l.b16 %v2194
    %v2356 = vunpack.c.l.b16 %v2195
    %v2357 = vunpack.c.h.b16 %v2195
    %v2358 = vunpack.c.l.b16 %v2196
    %v2359 = vunpack.c.l.b16 %v2197
    %v2360 = vunpack.c.h.b16 %v2197
    %v2361 = vunpack.c.l.b16 %v2198
    %v2362 = vunpack.c.l.b16 %v2199
    %v2363 = vunpack.c.h.b16 %v2199
    %v2364 = vunpack.c.l.b16 %v2200
    %v2365 = vunpack.c.l.b16 %v2201
    %v2366 = vunpack.c.h.b16 %v2201
    %v2367 = vunpack.c.l.b16 %v2202
    %v2368 = vunpack.c.l.b16 %v2203
    %v2369 = vunpack.c.h.b16 %v2203
    %v2370 = vunpack.c.l.b16 %v2204
    %v2371 = vunpack.c.l.b16 %v2205
    %v2372 = vunpack.c.h.b16 %v2205
    %v2373 = vunpack.c.l.b16 %v2206
    %v2374 = vunpack.c.l.b16 %v2207
    %v2375 = vunpack.c.h.b16 %v2207
    %v2376 = vunpack.c.l.b16 %v2208
    %v2377 = vunpack.c.l.b16 %v2209
    %v2378 = vunpack.c.h.b16 %v2209
    %v2379 = vunpack.c.l.b16 %v2210
    %v2380 = vunpack.c.l.b16 %v2211
    %v2381 = vunpack.c.h.b16 %v2211
    %v2382 = vunpack.c.l.b16 %v2212
    %v2383 = vunpack.c.l.b16 %v2213
    %v2384 = vunpack.c.h.b16 %v2213
    %v2385 = vunpack.c.l.b16 %v2214
    %v2386 = vunpack.c.l.b16 %v2215
    %v2387 = vunpack.c.h.b16 %v2215
    %v2388 = vunpack.c.l.b16 %v2216
    %v2389 = vunpack.c.l.b16 %v2217
    %v2390 = vunpack.c.h.b16 %v2217
    %v2391 = vunpack.c.l.b16 %v2218
    %v2392 = vunpack.c.l.b16 %v2219
    %v2393 = vunpack.c.h.b16 %v2219
    %v2394 = vunpack.c.l.b16 %v2220
    %v2395 = vunpack.c.l.b16 %v2221
    %v2396 = vunpack.c.h.b16 %v2221
    %v2397 = vunpack.c.l.b16 %v2222
    %v2398 = vunpack.c.l.b16 %v2223
    %v2399 = vunpack.c.h.b16 %v2223
    %v2400 = vunpack.c.l.b16 %v2224
    %v2401 = vunpack.c.l.b16 %v2225
    %v2402 = vunpack.c.h.b16 %v2225
    %v2403 = vunpack.c.l.b16 %v2226
    %v2404 = vunpack.c.l.b16 %v2227
    %v2405 = vunpack.c.h.b16 %v2227
    %v2406 = vunpack.c.l.b16 %v2228
    %v2407 = vunpack.c.l.b16 %v2229
    %v2408 = vunpack.c.h.b16 %v2229
    %v2409 = vunpack.c.l.b16 %v2230
    %v2410 = vunpack.c.l.b16 %v2231
    %v2411 = vunpack.c.h.b16 %v2231
    %v2412 = vunpack.c.l.b16 %v2232
    %v2413 = vunpack.c.l.b16 %v2233
    %v2414 = vunpack.c.h.b16 %v2233
    %v2415 = vunpack.c.l.b16 %v2234
    %v2416 = vunpack.c.l.b16 %v2235
    %v2417 = vunpack.c.h.b16 %v2235
    %v2418 = vunpack.c.l.b16 %v2236
    %v2419 = vunpack.c.l.b16 %v2237
    %v2420 = vunpack.c.h.b16 %v2237
    %v2421 = vunpack.c.l.b16 %v2238
    %v2422 = vunpack.c.l.b16 %v2239
    %v2423 = vunpack.c.h.b16 %v2239
    %v2424 = vunpack.c.l.b16 %v2240
    %v2425 = vunpack.c.l.b16 %v2241
    %v2426 = vunpack.c.h.b16 %v2241
    %v2427 = vunpack.c.l.b16 %v2242
    %v2428 = vunpack.c.l.b16 %v2243
    %v2429 = vunpack.c.h.b16 %v2243
    %v2430 = vunpack.c.l.b16 %v2244
    %v2431 = vunpack.c.l.b16 %v2245
    %v2432 = vunpack.c.h.b16 %v2245
    %v2433 = vunpack.c.l.b16 %v2246
    %v2434 = vpack.c.b16 %v2341, %v2338
    %v2435 = vpack.c.b16 %v2342, %v2339
    %v2436 = vpack.c.b16 %v2343, %v2340
    %v2437 = vpack.c.b16 %v2347, %v2344
    %v2438 = vpack.c.b16 %v2348, %v2345
    %v2439 = vpack.c.b16 %v2349, %v2346
    %v2440 = vpack.c.b16 %v2353, %v2350
    %v2441 = vpack.c.b16 %v2354, %v2351
    %v2442 = vpack.c.b16 %v2355, %v2352
    %v2443 = vpack.c.b16 %v2359, %v2356
    %v2444 = vpack.c.b16 %v2360, %v2357
    %v2445 = vpack.c.b16 %v2361, %v2358
    %v2446 = vpack.c.b16 %v2365, %v2362
    %v2447 = vpack.c.b16 %v2366, %v2363
    %v2448 = vpack.c.b16 %v2367, %v2364
    %v2449 = vpack.c.b16 %v2371, %v2368
    %v2450 = vpack.c.b16 %v2372, %v2369
    %v2451 = vpack.c.b16 %v2373, %v2370
    %v2452 = vpack.c.b16 %v2377, %v2374
    %v2453 = vpack.c.b16 %v2378, %v2375
    %v2454 = vpack.c.b16 %v2379, %v2376
    %v2455 = vpack.c.b16 %v2383, %v2380
    %v2456 = vpack.c.b16 %v2384, %v2381
    %v2457 = vpack.c.b16 %v2385, %v2382
    %v2458 = vpack.c.b16 %v2389, %v2386
    %v2459 = vpack.c.b16 %v2390, %v2387
    %v2460 = vpack.c.b16 %v2391, %v2388
    %v2461 = vpack.c.b16 %v2395, %v2392
    %v2462 = vpack.c.b16 %v2396, %v2393
    %v2463 = vpack.c.b16 %v2397, %v2394
    %v2464 = vpack.c.b16 %v2401, %v2398
    %v2465 = vpack.c.b16 %v2402, %v2399
    %v2466 = vpack.c.b16 %v2403, %v2400
    %v2467 = vpack.c.b16 %v2407, %v2404
    %v2468 = vpack.c.b16 %v2408, %v2405
    %v2469 = vpack.c.b16 %v2409, %v2406
    %v2470 = vpack.c.b16 %v2413, %v2410
    %v2471 = vpack.c.b16 %v2414, %v2411
    %v2472 = vpack.c.b16 %v2415, %v2412
    %v2473 = vpack.c.b16 %v2419, %v2416
    %v2474 = vpack.c.b16 %v2420, %v2417
    %v2475 = vpack.c.b16 %v2421, %v2418
    %v2476 = vpack.c.b16 %v2425, %v2422
    %v2477 = vpack.c.b16 %v2426, %v2423
    %v2478 = vpack.c.b16 %v2427, %v2424
    %v2479 = vpack.c.b16 %v2431, %v2428
    %v2480 = vpack.c.b16 %v2432, %v2429
    %v2481 = vpack.c.b16 %v2433, %v2430
    %2530 = vmatprep.subr.bf16.mxu0 %v2456
    %2531 = vmatpush1.bf16.msra.mxu0 %v2455
    %2532 = vmatprep.subr.bf16.mxu0 %v2453
    %2533 = vmatpush1.bf16.msra.mxu0 %v2452
    %2534 = vmatprep.subr.bf16.mxu0 %v2450
    %2535 = vmatpush1.bf16.msra.mxu0 %v2449
    %2536 = vmatprep.subr.bf16.mxu0 %v2447
    %2537 = vmatpush1.bf16.msra.mxu0 %v2446
    %2538 = vmatprep.subr.bf16.mxu0 %v2444
    %2539 = vmatpush1.bf16.msra.mxu0 %v2443
    %2540 = vmatprep.subr.bf16.mxu0 %v2441
    %2541 = vmatpush1.bf16.msra.mxu0 %v2440
    %2542 = vmatprep.subr.bf16.mxu0 %v2438
    %2543 = vmatpush1.bf16.msra.mxu0 %v2437
    %2544 = vmatprep.subr.bf16.mxu0 %v2435
    %2545 = vmatpush1.bf16.msra.mxu0 %v2434
    %2546 = vmatprep.subr.bf16.mxu0 %v2480
    %2547 = vmatpush2.bf16.msra.mxu0 %v2479
    %2548 = vmatprep.subr.bf16.mxu0 %v2477
    %2549 = vmatpush2.bf16.msra.mxu0 %v2476
    %2550 = vmatprep.subr.bf16.mxu0 %v2474
    %2551 = vmatpush2.bf16.msra.mxu0 %v2473
    %2552 = vmatprep.subr.bf16.mxu0 %v2471
    %2553 = vmatpush2.bf16.msra.mxu0 %v2470
    %2554 = vmatprep.subr.bf16.mxu0 %v2468
    %2555 = vmatpush2.bf16.msra.mxu0 %v2467
    %2556 = vmatprep.subr.bf16.mxu0 %v2465
    %2557 = vmatpush2.bf16.msra.mxu0 %v2464
    %2558 = vmatprep.subr.bf16.mxu0 %v2462
    %2559 = vmatpush2.bf16.msra.mxu0 %v2461
    %2560 = vmatprep.subr.bf16.mxu0 %v2459
    %2561 = vmatpush2.bf16.msra.mxu0 %v2458
    %2562 = vmatprep.mubr.bf16.mxu0 %v2271
    %2563 = vmatmul.mubr.bf16.gmra.mxu0 %v2270
    %v2564 = vpop.f32.mrf.mxu0
    %v2565 = vadd.f32 %v2252, %v2564
    %v2566 = vpop.f32.mrf.mxu0
    %v2567 = vadd.f32 %v2256, %v2566
    %v2568 = vpop.f32.mrf.mxu0
    %v2569 = vadd.f32 %v2252, %v2568
    %v2570 = vpop.f32.mrf.mxu0
    %v2571 = vadd.f32 %v2256, %v2570
    %2572 = vdwg.mxu0
    %2573 = vmatprep.subr.bf16.mxu0 0
    %2574 = vmatpush1.bf16.msra.mxu0 %v2457
    %2575 = vmatprep.subr.bf16.mxu0 0
    %2576 = vmatpush1.bf16.msra.mxu0 %v2454
    %2577 = vmatprep.subr.bf16.mxu0 0
    %2578 = vmatpush1.bf16.msra.mxu0 %v2451
    %2579 = vmatprep.subr.bf16.mxu0 0
    %2580 = vmatpush1.bf16.msra.mxu0 %v2448
    %2581 = vmatprep.subr.bf16.mxu0 0
    %2582 = vmatpush1.bf16.msra.mxu0 %v2445
    %2583 = vmatprep.subr.bf16.mxu0 0
    %2584 = vmatpush1.bf16.msra.mxu0 %v2442
    %2585 = vmatprep.subr.bf16.mxu0 0
    %2586 = vmatpush1.bf16.msra.mxu0 %v2439
    %2587 = vmatprep.subr.bf16.mxu0 0
    %2588 = vmatpush1.bf16.msra.mxu0 %v2436
    %2589 = vmatprep.subr.bf16.mxu0 0
    %2590 = vmatpush2.bf16.msra.mxu0 %v2481
    %2591 = vmatprep.subr.bf16.mxu0 0
    %2592 = vmatpush2.bf16.msra.mxu0 %v2478
    %2593 = vmatprep.subr.bf16.mxu0 0
    %2594 = vmatpush2.bf16.msra.mxu0 %v2475
    %2595 = vmatprep.subr.bf16.mxu0 0
    %2596 = vmatpush2.bf16.msra.mxu0 %v2472
    %2597 = vmatprep.subr.bf16.mxu0 0
    %2598 = vmatpush2.bf16.msra.mxu0 %v2469
    %2599 = vmatprep.subr.bf16.mxu0 0
    %2600 = vmatpush2.bf16.msra.mxu0 %v2466
    %2601 = vmatprep.subr.bf16.mxu0 0
    %2602 = vmatpush2.bf16.msra.mxu0 %v2463
    %2603 = vmatprep.subr.bf16.mxu0 0
    %2604 = vmatpush2.bf16.msra.mxu0 %v2460
    %2605 = vmatprep.mubr.bf16.mxu0 %v2271
    %2606 = vmatmul.mubr.bf16.gmra.mxu0 %v2270
    %v2607 = vpop.f32.mrf.mxu0
    %v2608 = vadd.f32 %v2260, %v2607
    %v2609 = vpop.f32.mrf.mxu0
    %v2610 = vpop.f32.mrf.mxu0
    %v2611 = vadd.f32 %v2260, %v2610
    %v2612 = vpop.f32.mrf.mxu0
    %2613 = vdwg.mxu0
    %v2614 = vadd.f32 %v2565, 0.0
    %v2615 = vadd.f32 %v2569, 0.0
    %v2616 = vxor.u32 %v2614, 2147483648
    %v2617 = vxor.u32 %v2615, 2147483648
    %v2618 = vmul.f32 %v2616, 1.442695
    %v2619 = vpow.pop %v2618
    %v2620 = vmul.f32 %v2617, 1.442695
    %v2621 = vpow.pop %v2620
    %v2622 = vadd.f32 %v2619, 1.0
    %v2623 = vadd.f32 %v2621, 1.0
    %v2624 = vrcp.pop %v2622
    %v2625 = vmul.f32 1.0, %v2624
    %v2626 = vrcp.pop %v2623
    %v2627 = vmul.f32 1.0, %v2626
    %v2628 = vadd.f32 %v2567, 0.0
    %v2629 = vadd.f32 %v2571, 0.0
    %v2630 = vxor.u32 %v2628, 2147483648
    %v2631 = vxor.u32 %v2629, 2147483648
    %v2632 = vmul.f32 %v2630, 1.442695
    %v2633 = vpow.pop %v2632
    %v2634 = vmul.f32 %v2631, 1.442695
    %v2635 = vpow.pop %v2634
    %v2636 = vadd.f32 %v2633, 1.0
    %v2637 = vadd.f32 %v2635, 1.0
    %v2638 = vrcp.pop %v2636
    %v2639 = vmul.f32 1.0, %v2638
    %v2640 = vrcp.pop %v2637
    %v2641 = vmul.f32 1.0, %v2640
    %v2642 = vadd.f32 %v900, 0.0
    %v2643 = vmul.f32 %v2625, %v2642
    %v2644 = vmul.f32 %v2627, %v2642
    %v2645 = vadd.f32 %v2608, %v2643
    %v2646 = vadd.f32 %v2611, %v2644
    %v2647 = vtanh.pop %v2645
    %v2648 = vtanh.pop %v2646
    %v2649 = vsub.f32 1.0, %v2639
    %v2650 = vsub.f32 1.0, %v2641
    %v2651 = vmul.f32 %v2649, %v2647
    %v2652 = vmul.f32 %v2650, %v2648
    %v2653 = vmul.f32 %v2639, 0.0
    %v2654 = vmul.f32 %v2641, 0.0
    %v2655 = vadd.f32 %v2651, %v2653
    %v2656 = vadd.f32 %v2652, %v2654
    %v2657 = vpack.c.bf16 %v2179, %v2178
    %v2658 = vld [vmem:[%s8] sm:$0xf]
    %v2659 = vld [vmem:[%s8 + $0x4] sm:$0xf]
    %v2660 = vld [vmem:[%s8 + $0x8] sm:$0xf]
    %v2661 = vld [vmem:[%s8 + $0xc] sm:$0xf]
    %v2662 = vld [vmem:[%s8 + $0x10] sm:$0xf]
    %v2663 = vld [vmem:[%s8 + $0x14] sm:$0xf]
    %v2664 = vld [vmem:[%s8 + $0x18] sm:$0xf]
    %v2665 = vld [vmem:[%s8 + $0x1c] sm:$0xf]
    %v2666 = vld [vmem:[%s8 + $0x20] sm:$0xf]
    %v2667 = vld [vmem:[%s8 + $0x24] sm:$0xf]
    %v2668 = vld [vmem:[%s8 + $0x28] sm:$0xf]
    %v2669 = vld [vmem:[%s8 + $0x2c] sm:$0xf]
    %v2670 = vld [vmem:[%s8 + $0x30] sm:$0xf]
    %v2671 = vld [vmem:[%s8 + $0x34] sm:$0xf]
    %v2672 = vld [vmem:[%s8 + $0x38] sm:$0xf]
    %v2673 = vld [vmem:[%s8 + $0x3c] sm:$0xf]
    %v2674 = vpack.c.bf16 %v2656, %v2655
    %v2675 = vld [vmem:[%s9] sm:$0xf]
    %v2676 = vld [vmem:[%s9 + $0x4] sm:$0xf]
    %v2677 = vld [vmem:[%s9 + $0x8] sm:$0xf]
    %v2678 = vld [vmem:[%s9 + $0xc] sm:$0xf]
    %v2679 = vld [vmem:[%s9 + $0x10] sm:$0xf]
    %v2680 = vld [vmem:[%s9 + $0x14] sm:$0xf]
    %v2681 = vld [vmem:[%s9 + $0x18] sm:$0xf]
    %v2682 = vld [vmem:[%s9 + $0x1c] sm:$0xf]
    %v2683 = vld [vmem:[%s9 + $0x20] sm:$0xf]
    %v2684 = vld [vmem:[%s9 + $0x24] sm:$0xf]
    %v2685 = vld [vmem:[%s9 + $0x28] sm:$0xf]
    %v2686 = vld [vmem:[%s9 + $0x2c] sm:$0xf]
    %v2687 = vld [vmem:[%s9 + $0x30] sm:$0xf]
    %v2688 = vld [vmem:[%s9 + $0x34] sm:$0xf]
    %v2689 = vld [vmem:[%s9 + $0x38] sm:$0xf]
    %v2690 = vld [vmem:[%s9 + $0x3c] sm:$0xf]
    %v2707 = vunpack.c.l.b16 %v2675
    %v2708 = vunpack.c.l.b16 %v2676
    %v2709 = vunpack.c.l.b16 %v2677
    %v2710 = vunpack.c.l.b16 %v2678
    %v2711 = vunpack.c.l.b16 %v2679
    %v2712 = vunpack.c.l.b16 %v2680
    %v2713 = vunpack.c.l.b16 %v2681
    %v2714 = vunpack.c.l.b16 %v2682
    %v2715 = vunpack.c.l.b16 %v2683
    %v2716 = vunpack.c.l.b16 %v2684
    %v2717 = vunpack.c.l.b16 %v2685
    %v2718 = vunpack.c.l.b16 %v2686
    %v2719 = vunpack.c.l.b16 %v2687
    %v2720 = vunpack.c.l.b16 %v2688
    %v2721 = vunpack.c.l.b16 %v2689
    %v2722 = vunpack.c.l.b16 %v2690
    %v2723 = vpack.c.b16 %v2708, %v2707
    %v2724 = vpack.c.b16 %v2710, %v2709
    %v2725 = vpack.c.b16 %v2712, %v2711
    %v2726 = vpack.c.b16 %v2714, %v2713
    %v2727 = vpack.c.b16 %v2716, %v2715
    %v2728 = vpack.c.b16 %v2718, %v2717
    %v2729 = vpack.c.b16 %v2720, %v2719
    %v2730 = vpack.c.b16 %v2722, %v2721
    %2739 = vmatprep.subr.bf16.mxu0 0
    %2740 = vmatpush1.bf16.msra.mxu0 %v2730
    %2741 = vmatprep.subr.bf16.mxu0 0
    %2742 = vmatpush1.bf16.msra.mxu0 %v2729
    %2743 = vmatprep.subr.bf16.mxu0 0
    %2744 = vmatpush1.bf16.msra.mxu0 %v2728
    %2745 = vmatprep.subr.bf16.mxu0 0
    %2746 = vmatpush1.bf16.msra.mxu0 %v2727
    %2747 = vmatprep.subr.bf16.mxu0 0
    %2748 = vmatpush1.bf16.msra.mxu0 %v2726
    %2749 = vmatprep.subr.bf16.mxu0 0
    %2750 = vmatpush1.bf16.msra.mxu0 %v2725
    %2751 = vmatprep.subr.bf16.mxu0 0
    %2752 = vmatpush1.bf16.msra.mxu0 %v2724
    %2753 = vmatprep.subr.bf16.mxu0 0
    %2754 = vmatpush1.bf16.msra.mxu0 %v2723
    %2755 = vmatprep.subr.bf16.mxu0 0
    %2756 = vmatpush2.bf16.msra.mxu0 0
    %2757 = vmatprep.subr.bf16.mxu0 0
    %2758 = vmatpush2.bf16.msra.mxu0 0
    %2759 = vmatprep.subr.bf16.mxu0 0
    %2760 = vmatpush2.bf16.msra.mxu0 0
    %2761 = vmatprep.subr.bf16.mxu0 0
    %2762 = vmatpush2.bf16.msra.mxu0 0
    %2763 = vmatprep.subr.bf16.mxu0 0
    %2764 = vmatpush2.bf16.msra.mxu0 0
    %2765 = vmatprep.subr.bf16.mxu0 0
    %2766 = vmatpush2.bf16.msra.mxu0 0
    %2767 = vmatprep.subr.bf16.mxu0 0
    %2768 = vmatpush2.bf16.msra.mxu0 0
    %2769 = vmatprep.subr.bf16.mxu0 0
    %2770 = vmatpush2.bf16.msra.mxu0 0
    %2771 = vmatprep.mubr.bf16.mxu0 0
    %2772 = vmatmul.mubr.bf16.gmra.mxu0 %v2674
    %v2773 = vpop.f32.mrf.mxu0
    %v2774 = vadd.f32 0.0, %v2773
    %v2775 = vpop.f32.mrf.mxu0
    %v2776 = vpop.f32.mrf.mxu0
    %v2777 = vadd.f32 0.0, %v2776
    %v2778 = vpop.f32.mrf.mxu0
    %2779 = vdwg.mxu0
    %v2796 = vunpack.c.l.b16 %v2658
    %v2797 = vunpack.c.l.b16 %v2659
    %v2798 = vunpack.c.l.b16 %v2660
    %v2799 = vunpack.c.l.b16 %v2661
    %v2800 = vunpack.c.l.b16 %v2662
    %v2801 = vunpack.c.l.b16 %v2663
    %v2802 = vunpack.c.l.b16 %v2664
    %v2803 = vunpack.c.l.b16 %v2665
    %v2804 = vunpack.c.l.b16 %v2666
    %v2805 = vunpack.c.l.b16 %v2667
    %v2806 = vunpack.c.l.b16 %v2668
    %v2807 = vunpack.c.l.b16 %v2669
    %v2808 = vunpack.c.l.b16 %v2670
    %v2809 = vunpack.c.l.b16 %v2671
    %v2810 = vunpack.c.l.b16 %v2672
    %v2811 = vunpack.c.l.b16 %v2673
    %v2812 = vpack.c.b16 %v2797, %v2796
    %v2813 = vpack.c.b16 %v2799, %v2798
    %v2814 = vpack.c.b16 %v2801, %v2800
    %v2815 = vpack.c.b16 %v2803, %v2802
    %v2816 = vpack.c.b16 %v2805, %v2804
    %v2817 = vpack.c.b16 %v2807, %v2806
    %v2818 = vpack.c.b16 %v2809, %v2808
    %v2819 = vpack.c.b16 %v2811, %v2810
    %2828 = vmatprep.subr.bf16.mxu0 0
    %2829 = vmatpush1.bf16.msra.mxu0 %v2819
    %2830 = vmatprep.subr.bf16.mxu0 0
    %2831 = vmatpush1.bf16.msra.mxu0 %v2818
    %2832 = vmatprep.subr.bf16.mxu0 0
    %2833 = vmatpush1.bf16.msra.mxu0 %v2817
    %2834 = vmatprep.subr.bf16.mxu0 0
    %2835 = vmatpush1.bf16.msra.mxu0 %v2816
    %2836 = vmatprep.subr.bf16.mxu0 0
    %2837 = vmatpush1.bf16.msra.mxu0 %v2815
    %2838 = vmatprep.subr.bf16.mxu0 0
    %2839 = vmatpush1.bf16.msra.mxu0 %v2814
    %2840 = vmatprep.subr.bf16.mxu0 0
    %2841 = vmatpush1.bf16.msra.mxu0 %v2813
    %2842 = vmatprep.subr.bf16.mxu0 0
    %2843 = vmatpush1.bf16.msra.mxu0 %v2812
    %2844 = vmatprep.subr.bf16.mxu0 0
    %2845 = vmatpush2.bf16.msra.mxu0 0
    %2846 = vmatprep.subr.bf16.mxu0 0
    %2847 = vmatpush2.bf16.msra.mxu0 0
    %2848 = vmatprep.subr.bf16.mxu0 0
    %2849 = vmatpush2.bf16.msra.mxu0 0
    %2850 = vmatprep.subr.bf16.mxu0 0
    %2851 = vmatpush2.bf16.msra.mxu0 0
    %2852 = vmatprep.subr.bf16.mxu0 0
    %2853 = vmatpush2.bf16.msra.mxu0 0
    %2854 = vmatprep.subr.bf16.mxu0 0
    %2855 = vmatpush2.bf16.msra.mxu0 0
    %2856 = vmatprep.subr.bf16.mxu0 0
    %2857 = vmatpush2.bf16.msra.mxu0 0
    %2858 = vmatprep.subr.bf16.mxu0 0
    %2859 = vmatpush2.bf16.msra.mxu0 0
    %2860 = vmatprep.mubr.bf16.mxu0 0
    %2861 = vmatmul.mubr.bf16.gmra.mxu0 %v2657
    %v2862 = vpop.f32.mrf.mxu0
    %v2863 = vadd.f32 %v2774, %v2862
    %v2864 = vpop.f32.mrf.mxu0
    %v2865 = vpop.f32.mrf.mxu0
    %v2866 = vadd.f32 %v2777, %v2865
    %v2867 = vpop.f32.mrf.mxu0
    %2868 = vdwg.mxu0
    %v2869 = vld [vmem:[%s10] sm:$0x1]
    %v2871 = vlaneseq
    %v2872 = vshrl.u32 %v2871, 7
    %v2873 = vsub.s32 0, %v2872
    %v2874 = vrot.slane %v2869, %v2873
    %v2876 = vadd.f32 %v2863, %v2874
    %v2877 = vadd.f32 %v2866, %v2874
    %2878 = vst [vmem:[%s11] sm:$0xff] %v2876
    %2879 = vst [vmem:[%s11 + $0x8] sm:$0xff] %v2877
    // Predicated region
    $region50: #{bigru_forward.3} parent=1 // pred_check
      _
    $region51: #{bigru_forward.3} parent=1 // pred_check_branch
      %2881 = sbr.rel (0) target = $region53
    $region52: #{bigru_forward.3} parent=1 // pred_region
      _
    $region53: #{bigru_forward.3} parent=1 // pred_fallthru
      _
    // Predicated region
    $region54: #{bigru_forward.3} parent=1 // pred_check
      _
    $region55: #{bigru_forward.3} parent=1 // pred_check_branch
      %2883 = sbr.rel (0) target = $region57
    $region56: #{bigru_forward.3} parent=1 // pred_region
      _
    $region57: #{bigru_forward.3} parent=1 // pred_fallthru
      _
    %2884 = vsyncpa [#allocation4], 1

</llo_original>
